<compile_context>
chip_gen: v7x
topology: tpu7x:2x2x1
jax: 0.10.0
libtpu: 0.0.40
codegen_flags: <defaults>
</compile_context>

<pallas_src>
import jax
import jax.numpy as jnp
from jax.experimental import pallas as pl
from jax.experimental.pallas import tpu as pltpu


def _leaky(x, slope=0.2):
    # LeakyReLU(0.2): for slope < 1 this equals max(x, slope*x)
    return jnp.maximum(x, slope * x)


# ---------------------------------------------------------------------------
# Fused kernel: comm_conv + PoseEach + PoseAll for one batch tile.
#   x:    (TB, J*9)   bf16     (pose, joint-major flatten j*9+ci)
#   w1b:  (J*9, J*32) bf16     block-diag of cw1            b1b: (1, J*32) f32
#   w2b:  (J*32,J*32) bf16     block-diag of cw2            b2b: (1, J*32) f32
#   web:  (J*32, J)   bf16     per-joint Linear(32->1) bank eb:  (1, J)    f32
#   aw1:  (J*32,1024) bf16     rows pre-permuted to joint-major order
#   aw2:  (1024,1024) bf16     aw3: (1024, 1) bf16          ab*: f32
#   outs: each (TB, J) f32, all (TB, 1) f32
# ---------------------------------------------------------------------------
def disc_kernel(x_ref, w1b_ref, b1b_ref, w2b_ref, b2b_ref,
                web_ref, eb_ref,
                aw1_ref, ab1_ref, aw2_ref, ab2_ref, aw3_ref, ab3_ref,
                each_ref, all_ref):
    f32 = jnp.float32
    bf16 = jnp.bfloat16

    # comm_conv: two per-joint 1x1 convs as block-diagonal matmuls.
    h = jnp.dot(x_ref[...], w1b_ref[...], preferred_element_type=f32)
    h = _leaky(h + b1b_ref[...])
    h = jnp.dot(h.astype(bf16), w2b_ref[...], preferred_element_type=f32)
    comm = _leaky(h + b2b_ref[...])                 # (TB, J*32) f32, joint-major
    comm_bf = comm.astype(bf16)

    # PoseEachDiscriminator: per-joint Linear(32 -> 1), all joints in one matmul.
    each = jnp.dot(comm_bf, web_ref[...], preferred_element_type=f32) + eb_ref[...]
    each_ref[...] = each.astype(each_ref.dtype)

    # PoseAllDiscriminator: 672 -> 1024 -> 1024 -> 1 MLP (aw1 rows pre-permuted,
    # so the joint-major comm layout is consumed directly -- no transpose).
    a = jnp.dot(comm_bf, aw1_ref[...], preferred_element_type=f32)
    a = _leaky(a + ab1_ref[...])
    a = jnp.dot(a.astype(bf16), aw2_ref[...], preferred_element_type=f32)
    a = _leaky(a + ab2_ref[...])
    a = jnp.dot(a.astype(bf16), aw3_ref[...], preferred_element_type=f32)
    all_ref[...] = (a + ab3_ref[...]).astype(all_ref.dtype)


# ---------------------------------------------------------------------------
# Base parameters (PyTorch layout / PyTorch default-ish uniform init).
# Weight matrices are rounded through bf16 so kernel & reference share values.
# ---------------------------------------------------------------------------
def init_base_params(key, num_joints=21, hidden_comm=32, hidden_poseall=1024):
    def lin(k, fan_in, shape, round_bf16=True):
        bound = 1.0 / jnp.sqrt(fan_in)
        w = jax.random.uniform(k, shape, jnp.float32, -bound, bound)
        if round_bf16:
            w = w.astype(jnp.bfloat16).astype(jnp.float32)
        return w

    J, C, H = num_joints, hidden_comm, hidden_poseall
    ks = jax.random.split(key, 12)
    p = {}
    # comm_conv: Conv2d(9, 32, 1); Conv2d(32, 32, 1)   (stored in x out)
    p["cw1"] = lin(ks[0], 9, (9, C))
    p["cb1"] = lin(ks[1], 9, (1, C), round_bf16=False)
    p["cw2"] = lin(ks[2], C, (C, C))
    p["cb2"] = lin(ks[3], C, (1, C), round_bf16=False)
    # PoseEach: J independent Linear(32 -> 1)
    p["ew"] = lin(ks[4], C, (J, C))
    p["eb"] = lin(ks[5], C, (1, J), round_bf16=False)
    # PoseAll: Linear(32*J -> H), Linear(H -> H), Linear(H -> 1)
    din = C * J
    p["aw1"] = lin(ks[6], din, (din, H))      # rows in PyTorch flatten order c*J+j
    p["ab1"] = lin(ks[7], din, (1, H), round_bf16=False)
    p["aw2"] = lin(ks[8], H, (H, H))
    p["ab2"] = lin(ks[9], H, (1, H), round_bf16=False)
    p["aw3"] = lin(ks[10], H, (H, 1))
    p["ab3"] = lin(ks[11], H, (1, 1), round_bf16=False)
    return p


# ---------------------------------------------------------------------------
# Derive kernel-layout parameters (block-diagonal comm weights, permuted aw1,
# bf16 weight matrices, f32 biases).  Done once, offline.
# ---------------------------------------------------------------------------
def prepare_kernel_params(p, num_joints=21, hidden_comm=32):
    J, C = num_joints, hidden_comm
    bf16 = jnp.bfloat16
    eye = jnp.eye(J, dtype=jnp.float32)

    kp = {}
    kp["w1b"] = jnp.kron(eye, p["cw1"]).astype(bf16)          # (J*9,  J*C)
    kp["b1b"] = jnp.tile(p["cb1"], (1, J))                    # (1,    J*C)
    kp["w2b"] = jnp.kron(eye, p["cw2"]).astype(bf16)          # (J*C,  J*C)
    kp["b2b"] = jnp.tile(p["cb2"], (1, J))                    # (1,    J*C)

    # per-joint Linear(32->1) bank: web[j*C + c, j] = ew[j, c]
    kp["web"] = (eye[:, None, :] * p["ew"][:, :, None]).reshape(J * C, J).astype(bf16)
    kp["eb"] = p["eb"]                                        # (1, J)

    # aw1: kernel row r = j*C + c  <-  PyTorch row c*J + j
    r = jnp.arange(J * C)
    perm = (r % C) * J + (r // C)
    kp["aw1"] = p["aw1"][perm, :].astype(bf16)
    kp["ab1"] = p["ab1"]
    kp["aw2"] = p["aw2"].astype(bf16)
    kp["ab2"] = p["ab2"]
    kp["aw3"] = p["aw3"].astype(bf16)
    kp["ab3"] = p["ab3"]
    return kp


# ---------------------------------------------------------------------------
# Forward pass: single fused pallas_call, batch-tiled grid.
# ---------------------------------------------------------------------------
def discriminator_forward(pose, kp, *, num_joints=21, hidden_comm=32, block_b=128):
    B = pose.shape[0]
    J, C = num_joints, hidden_comm
    D1 = J * 9

    x = pose.reshape(B, D1).astype(jnp.bfloat16)              # joint-major flatten

    bb = min(block_b, B)
    n_blocks = (B + bb - 1) // bb
    Bp = n_blocks * bb
    if Bp != B:
        x = jnp.pad(x, ((0, Bp - B), (0, 0)))

    def row_spec(cols):
        return pl.BlockSpec((bb, cols), lambda i: (i, 0))

    def resident(arr):
        # Full-array block, constant index_map -> stays VMEM-resident across steps.
        return pl.BlockSpec(arr.shape, lambda i: (0, 0))

    in_arrays = (x, kp["w1b"], kp["b1b"], kp["w2b"], kp["b2b"],
                 kp["web"], kp["eb"],
                 kp["aw1"], kp["ab1"], kp["aw2"], kp["ab2"], kp["aw3"], kp["ab3"])
    in_specs = [row_spec(D1)] + [resident(a) for a in in_arrays[1:]]

    d_each, d_all = pl.pallas_call(
        disc_kernel,
        out_shape=(jax.ShapeDtypeStruct((Bp, J), jnp.float32),
                   jax.ShapeDtypeStruct((Bp, 1), jnp.float32)),
        grid=(n_blocks,),
        in_specs=in_specs,
        out_specs=(row_spec(J), row_spec(1)),
        compiler_params=pltpu.CompilerParams(
            dimension_semantics=("parallel",),
            vmem_limit_bytes=32 * 1024 * 1024),
    )(*in_arrays)

    if Bp != B:
        d_each, d_all = d_each[:B], d_all[:B]
    return {"poseeach": d_each, "poseall": d_all}


# ---------------------------------------------------------------------------
# Pure-JAX f32 reference in the original PyTorch layout (for numerical check).
# ---------------------------------------------------------------------------
def discriminator_ref(pose, p, num_joints=21, hidden_comm=32):
    B, J, C = pose.shape[0], num_joints, hidden_comm
    x = pose.reshape(B * J, 9).astype(jnp.float32)
    h = _leaky(x @ p["cw1"] + p["cb1"])
    h = _leaky(h @ p["cw2"] + p["cb2"])
    comm = h.reshape(B, J, C)                                  # (B, J, C)
    d_each = jnp.einsum("bjc,jc->bj", comm, p["ew"]) + p["eb"]
    flat_pt = jnp.transpose(comm, (0, 2, 1)).reshape(B, C * J)  # PyTorch (B, 32*J)
    a = _leaky(flat_pt @ p["aw1"] + p["ab1"])
    a = _leaky(a @ p["aw2"] + p["ab2"])
    d_all = a @ p["aw3"] + p["ab3"]
    return {"poseeach": d_each, "poseall": d_all}


if __name__ == "__main__":
    NUM_JOINTS = 21
    B = 4

    key = jax.random.PRNGKey(0)
    k_param, k_pose = jax.random.split(key)
    base = init_base_params(k_param, num_joints=NUM_JOINTS)
    kparams = prepare_kernel_params(base, num_joints=NUM_JOINTS)

    # input_type='matrot': pose is (B, num_joints, 9) flattened 3x3 rotations
    pose = jax.random.normal(k_pose, (B, NUM_JOINTS, 9), jnp.float32)

    out = discriminator_forward(pose, kparams, num_joints=NUM_JOINTS)
    out = jax.block_until_ready(out)

    ref = discriminator_ref(pose, base, num_joints=NUM_JOINTS)
    assert out["poseeach"].shape == (B, NUM_JOINTS)
    assert out["poseall"].shape == (B, 1)
    # bf16 activations/weights in the kernel vs f32 reference -> relaxed tolerance.
    assert jnp.allclose(out["poseeach"], ref["poseeach"], atol=1e-2, rtol=1e-2)
    assert jnp.allclose(out["poseall"], ref["poseall"], atol=1e-2, rtol=1e-2)

    print("KERNEL_OK")
</pallas_src>

<mosaic_0001>
module attributes {stable_mosaic.version = 11 : i64} {
  func.func @disc_kernel(%arg0: i32, %arg1: memref<4x189xbf16, #tpu.memory_space<vmem>>, %arg2: memref<189x672xbf16, #tpu.memory_space<vmem>>, %arg3: memref<1x672xf32, #tpu.memory_space<vmem>>, %arg4: memref<672x672xbf16, #tpu.memory_space<vmem>>, %arg5: memref<1x672xf32, #tpu.memory_space<vmem>>, %arg6: memref<672x21xbf16, #tpu.memory_space<vmem>>, %arg7: memref<1x21xf32, #tpu.memory_space<vmem>>, %arg8: memref<672x1024xbf16, #tpu.memory_space<vmem>>, %arg9: memref<1x1024xf32, #tpu.memory_space<vmem>>, %arg10: memref<1024x1024xbf16, #tpu.memory_space<vmem>>, %arg11: memref<1x1024xf32, #tpu.memory_space<vmem>>, %arg12: memref<1024x1xbf16, #tpu.memory_space<vmem>>, %arg13: memref<1x1xf32, #tpu.memory_space<vmem>>, %arg14: memref<4x21xf32, #tpu.memory_space<vmem>>, %arg15: memref<4x1xf32, #tpu.memory_space<vmem>>) attributes {dimension_semantics = [#tpu.dimension_semantics<parallel>], iteration_bounds = array<i64: 1>, scalar_prefetch = 0 : i64, scratch_operands = 0 : i64, tpu.core_type = #tpu.core_type<tc>, window_params = [{transform_indices = @transform_0, window_bounds = array<i64: 4, 189>}, {pipeline_mode = #tpu.pipeline_mode<synchronous>, transform_indices = @transform_1, window_bounds = array<i64: 189, 672>}, {pipeline_mode = #tpu.pipeline_mode<synchronous>, transform_indices = @transform_2, window_bounds = array<i64: 1, 672>}, {pipeline_mode = #tpu.pipeline_mode<synchronous>, transform_indices = @transform_3, window_bounds = array<i64: 672, 672>}, {pipeline_mode = #tpu.pipeline_mode<synchronous>, transform_indices = @transform_4, window_bounds = array<i64: 1, 672>}, {pipeline_mode = #tpu.pipeline_mode<synchronous>, transform_indices = @transform_5, window_bounds = array<i64: 672, 21>}, {pipeline_mode = #tpu.pipeline_mode<synchronous>, transform_indices = @transform_6, window_bounds = array<i64: 1, 21>}, {pipeline_mode = #tpu.pipeline_mode<synchronous>, transform_indices = @transform_7, window_bounds = array<i64: 672, 1024>}, {pipeline_mode = #tpu.pipeline_mode<synchronous>, transform_indices = @transform_8, window_bounds = array<i64: 1, 1024>}, {pipeline_mode = #tpu.pipeline_mode<synchronous>, transform_indices = @transform_9, window_bounds = array<i64: 1024, 1024>}, {pipeline_mode = #tpu.pipeline_mode<synchronous>, transform_indices = @transform_10, window_bounds = array<i64: 1, 1024>}, {pipeline_mode = #tpu.pipeline_mode<synchronous>, transform_indices = @transform_11, window_bounds = array<i64: 1024, 1>}, {pipeline_mode = #tpu.pipeline_mode<synchronous>, transform_indices = @transform_12, window_bounds = array<i64: 1, 1>}, {transform_indices = @transform_13, window_bounds = array<i64: 4, 21>}, {transform_indices = @transform_14, window_bounds = array<i64: 4, 1>}]} {
    %c0 = arith.constant 0 : index
    %c0_0 = arith.constant 0 : index
    %0 = vector.load %arg1[%c0, %c0_0] : memref<4x189xbf16, #tpu.memory_space<vmem>>, vector<4x189xbf16>
    %c0_1 = arith.constant 0 : index
    %c0_2 = arith.constant 0 : index
    %1 = vector.load %arg2[%c0_1, %c0_2] : memref<189x672xbf16, #tpu.memory_space<vmem>>, vector<189x672xbf16>
    %cst = arith.constant dense<0.000000e+00> : vector<4x672xf32>
    %2 = tpu.matmul %0, %1, %cst {dimension_numbers = #tpu.dot_dimension_numbers<[1], [0], [0], [1], [0, 0, 1, 1], [], []>} : vector<4x189xbf16>, vector<189x672xbf16>, vector<4x672xf32> -> vector<4x672xf32>
    %c0_3 = arith.constant 0 : index
    %c0_4 = arith.constant 0 : index
    %3 = vector.load %arg3[%c0_3, %c0_4] : memref<1x672xf32, #tpu.memory_space<vmem>>, vector<1x672xf32>
    %4 = vector.broadcast %3 : vector<1x672xf32> to vector<4x672xf32>
    %5 = arith.addf %2, %4 : vector<4x672xf32>
    %cst_5 = arith.constant 2.000000e-01 : f32
    %6 = vector.broadcast %cst_5 : f32 to vector<4x672xf32>
    %7 = arith.mulf %6, %5 : vector<4x672xf32>
    %8 = arith.maximumf %5, %7 : vector<4x672xf32>
    %9 = arith.truncf %8 : vector<4x672xf32> to vector<4x672xbf16>
    %c0_6 = arith.constant 0 : index
    %c0_7 = arith.constant 0 : index
    %10 = vector.load %arg4[%c0_6, %c0_7] : memref<672x672xbf16, #tpu.memory_space<vmem>>, vector<672x672xbf16>
    %cst_8 = arith.constant dense<0.000000e+00> : vector<4x672xf32>
    %11 = tpu.matmul %9, %10, %cst_8 {dimension_numbers = #tpu.dot_dimension_numbers<[1], [0], [0], [1], [0, 0, 1, 1], [], []>} : vector<4x672xbf16>, vector<672x672xbf16>, vector<4x672xf32> -> vector<4x672xf32>
    %c0_9 = arith.constant 0 : index
    %c0_10 = arith.constant 0 : index
    %12 = vector.load %arg5[%c0_9, %c0_10] : memref<1x672xf32, #tpu.memory_space<vmem>>, vector<1x672xf32>
    %13 = vector.broadcast %12 : vector<1x672xf32> to vector<4x672xf32>
    %14 = arith.addf %11, %13 : vector<4x672xf32>
    %cst_11 = arith.constant 2.000000e-01 : f32
    %15 = vector.broadcast %cst_11 : f32 to vector<4x672xf32>
    %16 = arith.mulf %15, %14 : vector<4x672xf32>
    %17 = arith.maximumf %14, %16 : vector<4x672xf32>
    %18 = arith.truncf %17 : vector<4x672xf32> to vector<4x672xbf16>
    %c0_12 = arith.constant 0 : index
    %c0_13 = arith.constant 0 : index
    %19 = vector.load %arg6[%c0_12, %c0_13] : memref<672x21xbf16, #tpu.memory_space<vmem>>, vector<672x21xbf16>
    %cst_14 = arith.constant dense<0.000000e+00> : vector<4x21xf32>
    %20 = tpu.matmul %18, %19, %cst_14 {dimension_numbers = #tpu.dot_dimension_numbers<[1], [0], [0], [1], [0, 0, 1, 1], [], []>} : vector<4x672xbf16>, vector<672x21xbf16>, vector<4x21xf32> -> vector<4x21xf32>
    %c0_15 = arith.constant 0 : index
    %c0_16 = arith.constant 0 : index
    %21 = vector.load %arg7[%c0_15, %c0_16] : memref<1x21xf32, #tpu.memory_space<vmem>>, vector<1x21xf32>
    %22 = vector.broadcast %21 : vector<1x21xf32> to vector<4x21xf32>
    %23 = arith.addf %20, %22 : vector<4x21xf32>
    %c0_17 = arith.constant 0 : index
    %c0_18 = arith.constant 0 : index
    %24 = vector.load %arg14[%c0_17, %c0_18] : memref<4x21xf32, #tpu.memory_space<vmem>>, vector<4x21xf32>
    tpu.vector_store %arg14[%c0_17, %c0_18], %23 {strides = array<i32>} : memref<4x21xf32, #tpu.memory_space<vmem>>, vector<4x21xf32>,
    %c0_19 = arith.constant 0 : index
    %c0_20 = arith.constant 0 : index
    %25 = vector.load %arg8[%c0_19, %c0_20] : memref<672x1024xbf16, #tpu.memory_space<vmem>>, vector<672x1024xbf16>
    %cst_21 = arith.constant dense<0.000000e+00> : vector<4x1024xf32>
    %26 = tpu.matmul %18, %25, %cst_21 {dimension_numbers = #tpu.dot_dimension_numbers<[1], [0], [0], [1], [0, 0, 1, 1], [], []>} : vector<4x672xbf16>, vector<672x1024xbf16>, vector<4x1024xf32> -> vector<4x1024xf32>
    %c0_22 = arith.constant 0 : index
    %c0_23 = arith.constant 0 : index
    %27 = vector.load %arg9[%c0_22, %c0_23] : memref<1x1024xf32, #tpu.memory_space<vmem>>, vector<1x1024xf32>
    %28 = vector.broadcast %27 : vector<1x1024xf32> to vector<4x1024xf32>
    %29 = arith.addf %26, %28 : vector<4x1024xf32>
    %cst_24 = arith.constant 2.000000e-01 : f32
    %30 = vector.broadcast %cst_24 : f32 to vector<4x1024xf32>
    %31 = arith.mulf %30, %29 : vector<4x1024xf32>
    %32 = arith.maximumf %29, %31 : vector<4x1024xf32>
    %33 = arith.truncf %32 : vector<4x1024xf32> to vector<4x1024xbf16>
    %c0_25 = arith.constant 0 : index
    %c0_26 = arith.constant 0 : index
    %34 = vector.load %arg10[%c0_25, %c0_26] : memref<1024x1024xbf16, #tpu.memory_space<vmem>>, vector<1024x1024xbf16>
    %cst_27 = arith.constant dense<0.000000e+00> : vector<4x1024xf32>
    %35 = tpu.matmul %33, %34, %cst_27 {dimension_numbers = #tpu.dot_dimension_numbers<[1], [0], [0], [1], [0, 0, 1, 1], [], []>} : vector<4x1024xbf16>, vector<1024x1024xbf16>, vector<4x1024xf32> -> vector<4x1024xf32>
    %c0_28 = arith.constant 0 : index
    %c0_29 = arith.constant 0 : index
    %36 = vector.load %arg11[%c0_28, %c0_29] : memref<1x1024xf32, #tpu.memory_space<vmem>>, vector<1x1024xf32>
    %37 = vector.broadcast %36 : vector<1x1024xf32> to vector<4x1024xf32>
    %38 = arith.addf %35, %37 : vector<4x1024xf32>
    %cst_30 = arith.constant 2.000000e-01 : f32
    %39 = vector.broadcast %cst_30 : f32 to vector<4x1024xf32>
    %40 = arith.mulf %39, %38 : vector<4x1024xf32>
    %41 = arith.maximumf %38, %40 : vector<4x1024xf32>
    %42 = arith.truncf %41 : vector<4x1024xf32> to vector<4x1024xbf16>
    %c0_31 = arith.constant 0 : index
    %c0_32 = arith.constant 0 : index
    %43 = vector.load %arg12[%c0_31, %c0_32] : memref<1024x1xbf16, #tpu.memory_space<vmem>>, vector<1024x1xbf16>
    %cst_33 = arith.constant dense<0.000000e+00> : vector<4x1xf32>
    %44 = tpu.matmul %42, %43, %cst_33 {dimension_numbers = #tpu.dot_dimension_numbers<[1], [0], [0], [1], [0, 0, 1, 1], [], []>} : vector<4x1024xbf16>, vector<1024x1xbf16>, vector<4x1xf32> -> vector<4x1xf32>
    %c0_34 = arith.constant 0 : index
    %c0_35 = arith.constant 0 : index
    %45 = vector.load %arg13[%c0_34, %c0_35] : memref<1x1xf32, #tpu.memory_space<vmem>>, vector<1x1xf32>
    %46 = vector.broadcast %45 : vector<1x1xf32> to vector<4x1xf32>
    %47 = arith.addf %44, %46 : vector<4x1xf32>
    %c0_36 = arith.constant 0 : index
    %c0_37 = arith.constant 0 : index
    %48 = vector.load %arg15[%c0_36, %c0_37] : memref<4x1xf32, #tpu.memory_space<vmem>>, vector<4x1xf32>
    tpu.vector_store %arg15[%c0_36, %c0_37], %47 {strides = array<i32>} : memref<4x1xf32, #tpu.memory_space<vmem>>, vector<4x1xf32>,
    return
  }
  func.func @transform_0(%arg0: i32) -> (i32, i32) {
    %c0_i32 = arith.constant 0 : i32
    %c0_i32_0 = arith.constant 0 : i32
    return %arg0, %c0_i32 : i32, i32
  }
  func.func @transform_1(%arg0: i32) -> (i32, i32) {
    %c0_i32 = arith.constant 0 : i32
    %c0_i32_0 = arith.constant 0 : i32
    %c0_i32_1 = arith.constant 0 : i32
    return %c0_i32, %c0_i32_0 : i32, i32
  }
  func.func @transform_2(%arg0: i32) -> (i32, i32) {
    %c0_i32 = arith.constant 0 : i32
    %c0_i32_0 = arith.constant 0 : i32
    %c0_i32_1 = arith.constant 0 : i32
    return %c0_i32, %c0_i32_0 : i32, i32
  }
  func.func @transform_3(%arg0: i32) -> (i32, i32) {
    %c0_i32 = arith.constant 0 : i32
    %c0_i32_0 = arith.constant 0 : i32
    %c0_i32_1 = arith.constant 0 : i32
    return %c0_i32, %c0_i32_0 : i32, i32
  }
  func.func @transform_4(%arg0: i32) -> (i32, i32) {
    %c0_i32 = arith.constant 0 : i32
    %c0_i32_0 = arith.constant 0 : i32
    %c0_i32_1 = arith.constant 0 : i32
    return %c0_i32, %c0_i32_0 : i32, i32
  }
  func.func @transform_5(%arg0: i32) -> (i32, i32) {
    %c0_i32 = arith.constant 0 : i32
    %c0_i32_0 = arith.constant 0 : i32
    %c0_i32_1 = arith.constant 0 : i32
    return %c0_i32, %c0_i32_0 : i32, i32
  }
  func.func @transform_6(%arg0: i32) -> (i32, i32) {
    %c0_i32 = arith.constant 0 : i32
    %c0_i32_0 = arith.constant 0 : i32
    %c0_i32_1 = arith.constant 0 : i32
    return %c0_i32, %c0_i32_0 : i32, i32
  }
  func.func @transform_7(%arg0: i32) -> (i32, i32) {
    %c0_i32 = arith.constant 0 : i32
    %c0_i32_0 = arith.constant 0 : i32
    %c0_i32_1 = arith.constant 0 : i32
    return %c0_i32, %c0_i32_0 : i32, i32
  }
  func.func @transform_8(%arg0: i32) -> (i32, i32) {
    %c0_i32 = arith.constant 0 : i32
    %c0_i32_0 = arith.constant 0 : i32
    %c0_i32_1 = arith.constant 0 : i32
    return %c0_i32, %c0_i32_0 : i32, i32
  }
  func.func @transform_9(%arg0: i32) -> (i32, i32) {
    %c0_i32 = arith.constant 0 : i32
    %c0_i32_0 = arith.constant 0 : i32
    %c0_i32_1 = arith.constant 0 : i32
    return %c0_i32, %c0_i32_0 : i32, i32
  }
  func.func @transform_10(%arg0: i32) -> (i32, i32) {
    %c0_i32 = arith.constant 0 : i32
    %c0_i32_0 = arith.constant 0 : i32
    %c0_i32_1 = arith.constant 0 : i32
    return %c0_i32, %c0_i32_0 : i32, i32
  }
  func.func @transform_11(%arg0: i32) -> (i32, i32) {
    %c0_i32 = arith.constant 0 : i32
    %c0_i32_0 = arith.constant 0 : i32
    %c0_i32_1 = arith.constant 0 : i32
    return %c0_i32, %c0_i32_0 : i32, i32
  }
  func.func @transform_12(%arg0: i32) -> (i32, i32) {
    %c0_i32 = arith.constant 0 : i32
    %c0_i32_0 = arith.constant 0 : i32
    %c0_i32_1 = arith.constant 0 : i32
    return %c0_i32, %c0_i32_0 : i32, i32
  }
  func.func @transform_13(%arg0: i32) -> (i32, i32) {
    %c0_i32 = arith.constant 0 : i32
    %c0_i32_0 = arith.constant 0 : i32
    return %arg0, %c0_i32 : i32, i32
  }
  func.func @transform_14(%arg0: i32) -> (i32, i32) {
    %c0_i32 = arith.constant 0 : i32
    %c0_i32_0 = arith.constant 0 : i32
    return %arg0, %c0_i32 : i32, i32
  }
}

</mosaic_0001>

<llo_original>
// kernel: tpu_custom_call.1
$region0: #{tpu_custom_call.1}
  #allocation0 [shape = 'u32[]', space=smem, size = 0x4, offset = 0x4, fixed_abs, tag = 'smem constant byte address 0x4 - core index']
  #allocation1 [shape = 'u32[144,128]{1,0:T(1,128)}', space=vmem, size = 0x12000, scoped, tag = 'internal scratch']
  #allocation2 [shape = 'f32[1,1]{1,0:T(1,128)S(1)}', space=vmem, size = 0x200, scoped, tag = 'scoped memory for tpu_custom_call.1']
  %s0 = inlined_call_operand.hbm [shape: bf16[4,189], index: 0, kind: input, shape index: {}]
  %s1 = inlined_call_operand.hbm [shape: bf16[189,672], index: 1, kind: input, shape index: {}]
  %s2 = inlined_call_operand.hbm [shape: f32[1,672], index: 2, kind: input, shape index: {}]
  %s3 = inlined_call_operand.hbm [shape: bf16[672,672], index: 3, kind: input, shape index: {}]
  %s4 = inlined_call_operand.hbm [shape: f32[1,672], index: 4, kind: input, shape index: {}]
  %s5 = inlined_call_operand.vmem [shape: bf16[672,21], index: 5, kind: input, shape index: {}]
  %s6 = inlined_call_operand.hbm [shape: f32[1,21], index: 6, kind: input, shape index: {}]
  %s7 = inlined_call_operand.hbm [shape: bf16[672,1024], index: 7, kind: input, shape index: {}]
  %s8 = inlined_call_operand.hbm [shape: f32[1,1024], index: 8, kind: input, shape index: {}]
  %s9 = inlined_call_operand.hbm [shape: bf16[1024,1024], index: 9, kind: input, shape index: {}]
  %s10 = inlined_call_operand.hbm [shape: f32[1,1024], index: 10, kind: input, shape index: {}]
  %s11 = inlined_call_operand.vmem [shape: bf16[1024,1], index: 11, kind: input, shape index: {}]
  %s12 = inlined_call_operand.<no memory space> [shape: f32[1,1], index: 12, kind: input, shape index: {}]
  %s13 = inlined_call_operand.hbm [shape: f32[4,21], index: 13, kind: output, shape index: {0}]
  %s14 = inlined_call_operand.vmem [shape: f32[4,1], index: 14, kind: output, shape index: {1}]
  %15 = xla_tuple %s13, %s14
  %s16 = sld [smem:[#allocation0]]
  $region110: #{tpu_custom_call.1} parent=0
    _
  %s18 = ssub.s32 1, %s16
  %s19 = scalar_select 0, %s18, %s16
  %v20 = vstv %s12
  %21 = vst [vmem:[#allocation2] sm:$0x1] %v20
  $region1: #{tpu_custom_call.1} parent=0
    #allocation3 [shape = 'u8[2048]{0}', space=vmem, size = 0x800, scoped, tag = 'input window, operand 0, single buffered']
    #allocation4 [shape = 's32[1]{0}', space=sflag, size = 0x4, scoped, tag = 'scoped memory for tpu_custom_call.1']
    #allocation5 [shape = 's32[1]{0}', space=sflag, size = 0x4, scoped, tag = 'scoped memory for tpu_custom_call.1']
    #allocation6 [shape = 'u8[294912]{0}', space=vmem, size = 0x48000, scoped, tag = 'input window, operand 1, single buffered']
    #allocation7 [shape = 's32[1]{0}', space=sflag, size = 0x4, scoped, tag = 'scoped memory for tpu_custom_call.1']
    #allocation8 [shape = 'u8[3072]{0}', space=vmem, size = 0xc00, scoped, tag = 'input window, operand 2, single buffered']
    #allocation9 [shape = 'u8[1032192]{0}', space=vmem, size = 0xfc000, scoped, tag = 'input window, operand 3, single buffered']
    #allocation10 [shape = 's32[1]{0}', space=sflag, size = 0x4, scoped, tag = 'scoped memory for tpu_custom_call.1']
    #allocation11 [shape = 'u8[3072]{0}', space=vmem, size = 0xc00, scoped, tag = 'input window, operand 4, single buffered']
    #allocation12 [shape = 'u8[512]{0}', space=vmem, size = 0x400, scoped, tag = 'input window, operand 6, single buffered']
    #allocation13 [shape = 's32[1]{0}', space=sflag, size = 0x4, scoped, tag = 'scoped memory for tpu_custom_call.1']
    #allocation14 [shape = 'u8[1376256]{0}', space=vmem, size = 0x150000, scoped, tag = 'input window, operand 7, single buffered']
    #allocation15 [shape = 'u8[4096]{0}', space=vmem, size = 0x1000, scoped, tag = 'input window, operand 8, single buffered']
    #allocation16 [shape = 's32[1]{0}', space=sflag, size = 0x4, scoped, tag = 'scoped memory for tpu_custom_call.1']
    #allocation17 [shape = 'u8[2097152]{0}', space=vmem, size = 0x200000, scoped, tag = 'input window, operand 9, single buffered']
    #allocation18 [shape = 'u8[4096]{0}', space=vmem, size = 0x1000, scoped, tag = 'input window, operand 10, single buffered']
    #allocation19 [shape = 's32[1]{0}', space=sflag, size = 0x4, scoped, tag = 'scoped memory for tpu_custom_call.1']
    #allocation20 [shape = 'u8[2048]{0}', space=vmem, size = 0x800, scoped, tag = 'output window, operand 0, single buffered']
    %22 = vsyncpa [#allocation4], 0
    %23 = vsyncpa [#allocation7], 0
    %24 = vsyncpa [#allocation10], 0
    %25 = vsyncpa [#allocation13], 0
    %26 = vsyncpa [#allocation16], 0
    %27 = vsyncpa [#allocation19], 0
    %28 = vsyncpa [#allocation5], 0
    // Predicated region
    $region2: #{tpu_custom_call.1} parent=1 // pred_check
      _
    $region3: #{tpu_custom_call.1} parent=1 // pred_check_branch
      %30 = sbr.rel (0) target = $region5
    $region4: #{tpu_custom_call.1} parent=1 // pred_region
      %s32 = ssub.s32 64, 64
      %33 = vsyncadd [#allocation4], %s32
      %s35 = sshll.u32 [#allocation3], 4
      %s36 = int_to_ptr.vmem [resolvable:$true] %s35
      %38 = dma.hbm_to_vmem [thread:$0]  %s0, 64, %s36, [#allocation4]
    $region5: #{tpu_custom_call.1} parent=1 // pred_fallthru
      _
    // Predicated region
    $region6: #{tpu_custom_call.1} parent=1 // pred_check
      _
    $region7: #{tpu_custom_call.1} parent=1 // pred_check_branch
      %40 = sbr.rel (0) target = $region9
    $region8: #{tpu_custom_call.1} parent=1 // pred_region
      %s42 = ssub.s32 9216, 9216
      %43 = vsyncadd [#allocation7], %s42
      %s44 = sshll.u32 [#allocation6], 4
      %s45 = int_to_ptr.vmem [resolvable:$true] %s44
      %50 = dma.hbm_to_vmem [thread:$0]  %s1, 9216, %s45, [#allocation7], 384, 384, 24
    $region9: #{tpu_custom_call.1} parent=1 // pred_fallthru
      _
    // Predicated region
    $region10: #{tpu_custom_call.1} parent=1 // pred_check
      _
    $region11: #{tpu_custom_call.1} parent=1 // pred_check_branch
      %52 = sbr.rel (0) target = $region13
    $region12: #{tpu_custom_call.1} parent=1 // pred_region
      %s54 = ssub.s32 96, 96
      %55 = vsyncadd [#allocation7], %s54
      %s57 = sshll.u32 [#allocation8], 4
      %s58 = int_to_ptr.vmem [resolvable:$true] %s57
      %60 = dma.hbm_to_vmem [thread:$0]  %s2, 96, %s58, [#allocation7]
    $region13: #{tpu_custom_call.1} parent=1 // pred_fallthru
      _
    // Predicated region
    $region14: #{tpu_custom_call.1} parent=1 // pred_check
      _
    $region15: #{tpu_custom_call.1} parent=1 // pred_check_branch
      %62 = sbr.rel (0) target = $region17
    $region16: #{tpu_custom_call.1} parent=1 // pred_region
      %s64 = ssub.s32 32256, 32256
      %65 = vsyncadd [#allocation10], %s64
      %s66 = sshll.u32 [#allocation9], 4
      %s67 = int_to_ptr.vmem [resolvable:$true] %s66
      %72 = dma.hbm_to_vmem [thread:$0]  %s3, 32256, %s67, [#allocation10], 384, 384, 24
    $region17: #{tpu_custom_call.1} parent=1 // pred_fallthru
      _
    // Predicated region
    $region18: #{tpu_custom_call.1} parent=1 // pred_check
      _
    $region19: #{tpu_custom_call.1} parent=1 // pred_check_branch
      %74 = sbr.rel (0) target = $region21
    $region20: #{tpu_custom_call.1} parent=1 // pred_region
      %s76 = ssub.s32 96, 96
      %77 = vsyncadd [#allocation10], %s76
      %s79 = sshll.u32 [#allocation11], 4
      %s80 = int_to_ptr.vmem [resolvable:$true] %s79
      %82 = dma.hbm_to_vmem [thread:$0]  %s4, 96, %s80, [#allocation10]
    $region21: #{tpu_custom_call.1} parent=1 // pred_fallthru
      _
    // Predicated region
    $region22: #{tpu_custom_call.1} parent=1 // pred_check
      _
    $region23: #{tpu_custom_call.1} parent=1 // pred_check_branch
      %84 = sbr.rel (0) target = $region25
    $region24: #{tpu_custom_call.1} parent=1 // pred_region
      _
    $region25: #{tpu_custom_call.1} parent=1 // pred_fallthru
      _
    // Predicated region
    $region26: #{tpu_custom_call.1} parent=1 // pred_check
      _
    $region27: #{tpu_custom_call.1} parent=1 // pred_check_branch
      %86 = sbr.rel (0) target = $region29
    $region28: #{tpu_custom_call.1} parent=1 // pred_region
      %s88 = ssub.s32 16, 16
      %89 = vsyncadd [#allocation13], %s88
      %s91 = sshll.u32 [#allocation12], 4
      %s92 = int_to_ptr.vmem [resolvable:$true] %s91
      %94 = dma.hbm_to_vmem [thread:$0]  %s6, 16, %s92, [#allocation13]
    $region29: #{tpu_custom_call.1} parent=1 // pred_fallthru
      _
    // Predicated region
    $region30: #{tpu_custom_call.1} parent=1 // pred_check
      _
    $region31: #{tpu_custom_call.1} parent=1 // pred_check_branch
      %96 = sbr.rel (0) target = $region33
    $region32: #{tpu_custom_call.1} parent=1 // pred_region
      %s98 = ssub.s32 43008, 43008
      %99 = vsyncadd [#allocation13], %s98
      %s100 = sshll.u32 [#allocation14], 4
      %s101 = int_to_ptr.vmem [resolvable:$true] %s100
      %106 = dma.hbm_to_vmem [thread:$0]  %s7, 43008, %s101, [#allocation13], 512, 512, 32
    $region33: #{tpu_custom_call.1} parent=1 // pred_fallthru
      _
    // Predicated region
    $region34: #{tpu_custom_call.1} parent=1 // pred_check
      _
    $region35: #{tpu_custom_call.1} parent=1 // pred_check_branch
      %108 = sbr.rel (0) target = $region37
    $region36: #{tpu_custom_call.1} parent=1 // pred_region
      %s110 = ssub.s32 128, 128
      %111 = vsyncadd [#allocation16], %s110
      %s113 = sshll.u32 [#allocation15], 4
      %s114 = int_to_ptr.vmem [resolvable:$true] %s113
      %116 = dma.hbm_to_vmem [thread:$0]  %s8, 128, %s114, [#allocation16]
    $region37: #{tpu_custom_call.1} parent=1 // pred_fallthru
      _
    // Predicated region
    $region38: #{tpu_custom_call.1} parent=1 // pred_check
      _
    $region39: #{tpu_custom_call.1} parent=1 // pred_check_branch
      %118 = sbr.rel (0) target = $region41
    $region40: #{tpu_custom_call.1} parent=1 // pred_region
      %s120 = ssub.s32 65536, 65536
      %121 = vsyncadd [#allocation16], %s120
      %s122 = sshll.u32 [#allocation17], 4
      %s123 = int_to_ptr.vmem [resolvable:$true] %s122
      %128 = dma.hbm_to_vmem [thread:$0]  %s9, 65536, %s123, [#allocation16], 512, 512, 32
    $region41: #{tpu_custom_call.1} parent=1 // pred_fallthru
      _
    // Predicated region
    $region42: #{tpu_custom_call.1} parent=1 // pred_check
      _
    $region43: #{tpu_custom_call.1} parent=1 // pred_check_branch
      %130 = sbr.rel (0) target = $region45
    $region44: #{tpu_custom_call.1} parent=1 // pred_region
      %s132 = ssub.s32 128, 128
      %133 = vsyncadd [#allocation19], %s132
      %s135 = sshll.u32 [#allocation18], 4
      %s136 = int_to_ptr.vmem [resolvable:$true] %s135
      %138 = dma.hbm_to_vmem [thread:$0]  %s10, 128, %s136, [#allocation19]
    $region45: #{tpu_custom_call.1} parent=1 // pred_fallthru
      _
    // Predicated region
    $region46: #{tpu_custom_call.1} parent=1 // pred_check
      _
    $region47: #{tpu_custom_call.1} parent=1 // pred_check_branch
      %140 = sbr.rel (0) target = $region49
    $region48: #{tpu_custom_call.1} parent=1 // pred_region
      _
    $region49: #{tpu_custom_call.1} parent=1 // pred_fallthru
      _
    // Predicated region
    $region50: #{tpu_custom_call.1} parent=1 // pred_check
      _
    $region51: #{tpu_custom_call.1} parent=1 // pred_check_branch
      %142 = sbr.rel (0) target = $region53
    $region52: #{tpu_custom_call.1} parent=1 // pred_region
      _
    $region53: #{tpu_custom_call.1} parent=1 // pred_fallthru
      _
    // Predicated region
    $region54: #{tpu_custom_call.1} parent=1 // pred_check
      _
    $region55: #{tpu_custom_call.1} parent=1 // pred_check_branch
      %144 = sbr.rel (0) target = $region57
    $region56: #{tpu_custom_call.1} parent=1 // pred_region
      %145 = dma.done [#allocation4], 64
    $region57: #{tpu_custom_call.1} parent=1 // pred_fallthru
      _
    // Predicated region
    $region58: #{tpu_custom_call.1} parent=1 // pred_check
      _
    $region59: #{tpu_custom_call.1} parent=1 // pred_check_branch
      %147 = sbr.rel (0) target = $region61
    $region60: #{tpu_custom_call.1} parent=1 // pred_region
      %148 = dma.done [#allocation7], 9216
    $region61: #{tpu_custom_call.1} parent=1 // pred_fallthru
      _
    // Predicated region
    $region62: #{tpu_custom_call.1} parent=1 // pred_check
      _
    $region63: #{tpu_custom_call.1} parent=1 // pred_check_branch
      %150 = sbr.rel (0) target = $region65
    $region64: #{tpu_custom_call.1} parent=1 // pred_region
      %151 = dma.done [#allocation7], 96
    $region65: #{tpu_custom_call.1} parent=1 // pred_fallthru
      _
    // Predicated region
    $region66: #{tpu_custom_call.1} parent=1 // pred_check
      _
    $region67: #{tpu_custom_call.1} parent=1 // pred_check_branch
      %153 = sbr.rel (0) target = $region69
    $region68: #{tpu_custom_call.1} parent=1 // pred_region
      %154 = dma.done [#allocation10], 32256
    $region69: #{tpu_custom_call.1} parent=1 // pred_fallthru
      _
    // Predicated region
    $region70: #{tpu_custom_call.1} parent=1 // pred_check
      _
    $region71: #{tpu_custom_call.1} parent=1 // pred_check_branch
      %156 = sbr.rel (0) target = $region73
    $region72: #{tpu_custom_call.1} parent=1 // pred_region
      %157 = dma.done [#allocation10], 96
    $region73: #{tpu_custom_call.1} parent=1 // pred_fallthru
      _
    // Predicated region
    $region74: #{tpu_custom_call.1} parent=1 // pred_check
      _
    $region75: #{tpu_custom_call.1} parent=1 // pred_check_branch
      %159 = sbr.rel (0) target = $region77
    $region76: #{tpu_custom_call.1} parent=1 // pred_region
      %160 = dma.done [#allocation13], 16
    $region77: #{tpu_custom_call.1} parent=1 // pred_fallthru
      _
    // Predicated region
    $region78: #{tpu_custom_call.1} parent=1 // pred_check
      _
    $region79: #{tpu_custom_call.1} parent=1 // pred_check_branch
      %162 = sbr.rel (0) target = $region81
    $region80: #{tpu_custom_call.1} parent=1 // pred_region
      %163 = dma.done [#allocation13], 43008
    $region81: #{tpu_custom_call.1} parent=1 // pred_fallthru
      _
    // Predicated region
    $region82: #{tpu_custom_call.1} parent=1 // pred_check
      _
    $region83: #{tpu_custom_call.1} parent=1 // pred_check_branch
      %165 = sbr.rel (0) target = $region85
    $region84: #{tpu_custom_call.1} parent=1 // pred_region
      %166 = dma.done [#allocation16], 128
    $region85: #{tpu_custom_call.1} parent=1 // pred_fallthru
      _
    // Predicated region
    $region86: #{tpu_custom_call.1} parent=1 // pred_check
      _
    $region87: #{tpu_custom_call.1} parent=1 // pred_check_branch
      %168 = sbr.rel (0) target = $region89
    $region88: #{tpu_custom_call.1} parent=1 // pred_region
      %169 = dma.done [#allocation16], 65536
    $region89: #{tpu_custom_call.1} parent=1 // pred_fallthru
      _
    // Predicated region
    $region90: #{tpu_custom_call.1} parent=1 // pred_check
      _
    $region91: #{tpu_custom_call.1} parent=1 // pred_check_branch
      %171 = sbr.rel (0) target = $region93
    $region92: #{tpu_custom_call.1} parent=1 // pred_region
      %172 = dma.done [#allocation19], 128
    $region93: #{tpu_custom_call.1} parent=1 // pred_fallthru
      _
    %v174 = vld [vmem:[#allocation3] sm:$0xf]
    %v175 = vld [vmem:[#allocation6] sm:$0xff]
    %v176 = vld [vmem:[#allocation6 + $0x8] sm:$0xff]
    %v177 = vld [vmem:[#allocation6 + $0x10] sm:$0xff]
    %v178 = vld [vmem:[#allocation6 + $0x18] sm:$0xff]
    %v179 = vld [vmem:[#allocation6 + $0x20] sm:$0xff]
    %v180 = vld [vmem:[#allocation6 + $0x28] sm:$0xff]
    %v181 = vld [vmem:[#allocation6 + $0x30] sm:$0xff]
    %v182 = vld [vmem:[#allocation6 + $0x38] sm:$0xff]
    %v183 = vld [vmem:[#allocation6 + $0x40] sm:$0xff]
    %v184 = vld [vmem:[#allocation6 + $0x48] sm:$0xff]
    %v185 = vld [vmem:[#allocation6 + $0x50] sm:$0xff]
    %v186 = vld [vmem:[#allocation6 + $0x58] sm:$0xff]
    %v187 = vld [vmem:[#allocation6 + $0x60] sm:$0xff]
    %v188 = vld [vmem:[#allocation6 + $0x68] sm:$0xff]
    %v189 = vld [vmem:[#allocation6 + $0x70] sm:$0xff]
    %v190 = vld [vmem:[#allocation6 + $0x78] sm:$0xff]
    %v191 = vld [vmem:[#allocation6 + $0x80] sm:$0xff]
    %v192 = vld [vmem:[#allocation6 + $0x88] sm:$0xff]
    %v193 = vld [vmem:[#allocation6 + $0x90] sm:$0xff]
    %v194 = vld [vmem:[#allocation6 + $0x98] sm:$0xff]
    %v195 = vld [vmem:[#allocation6 + $0xa0] sm:$0xff]
    %v196 = vld [vmem:[#allocation6 + $0xa8] sm:$0xff]
    %v197 = vld [vmem:[#allocation6 + $0xb0] sm:$0xff]
    %v198 = vld [vmem:[#allocation6 + $0xb8] sm:$0xff]
    %v199 = vld [vmem:[#allocation6 + $0xc0] sm:$0xff]
    %v200 = vld [vmem:[#allocation6 + $0xc8] sm:$0xff]
    %v201 = vld [vmem:[#allocation6 + $0xd0] sm:$0xff]
    %v202 = vld [vmem:[#allocation6 + $0xd8] sm:$0xff]
    %v203 = vld [vmem:[#allocation6 + $0xe0] sm:$0xff]
    %v204 = vld [vmem:[#allocation6 + $0xe8] sm:$0xff]
    %v205 = vld [vmem:[#allocation6 + $0xf0] sm:$0xff]
    %v206 = vld [vmem:[#allocation6 + $0xf8] sm:$0xff]
    %v207 = vld [vmem:[#allocation6 + $0x100] sm:$0xff]
    %v208 = vld [vmem:[#allocation6 + $0x108] sm:$0xff]
    %v209 = vld [vmem:[#allocation6 + $0x110] sm:$0xff]
    %v210 = vld [vmem:[#allocation6 + $0x118] sm:$0xff]
    %v211 = vld [vmem:[#allocation6 + $0x120] sm:$0xff]
    %v212 = vld [vmem:[#allocation6 + $0x128] sm:$0xff]
    %v213 = vld [vmem:[#allocation6 + $0x130] sm:$0xff]
    %v214 = vld [vmem:[#allocation6 + $0x138] sm:$0xff]
    %v215 = vld [vmem:[#allocation6 + $0x140] sm:$0xff]
    %v216 = vld [vmem:[#allocation6 + $0x148] sm:$0xff]
    %v217 = vld [vmem:[#allocation6 + $0x150] sm:$0xff]
    %v218 = vld [vmem:[#allocation6 + $0x158] sm:$0xff]
    %v219 = vld [vmem:[#allocation6 + $0x160] sm:$0xff]
    %v220 = vld [vmem:[#allocation6 + $0x168] sm:$0xff]
    %v221 = vld [vmem:[#allocation6 + $0x170] sm:$0xff]
    %v222 = vld [vmem:[#allocation6 + $0x178] sm:$0xff]
    %v223 = vld [vmem:[#allocation6 + $0x180] sm:$0xff]
    %v224 = vld [vmem:[#allocation6 + $0x188] sm:$0xff]
    %v225 = vld [vmem:[#allocation6 + $0x190] sm:$0xff]
    %v226 = vld [vmem:[#allocation6 + $0x198] sm:$0xff]
    %v227 = vld [vmem:[#allocation6 + $0x1a0] sm:$0xff]
    %v228 = vld [vmem:[#allocation6 + $0x1a8] sm:$0xff]
    %v229 = vld [vmem:[#allocation6 + $0x1b0] sm:$0xff]
    %v230 = vld [vmem:[#allocation6 + $0x1b8] sm:$0xff]
    %v231 = vld [vmem:[#allocation6 + $0x1c0] sm:$0xff]
    %v232 = vld [vmem:[#allocation6 + $0x1c8] sm:$0xff]
    %v233 = vld [vmem:[#allocation6 + $0x1d0] sm:$0xff]
    %v234 = vld [vmem:[#allocation6 + $0x1d8] sm:$0xff]
    %v235 = vld [vmem:[#allocation6 + $0x1e0] sm:$0xff]
    %v236 = vld [vmem:[#allocation6 + $0x1e8] sm:$0xff]
    %v237 = vld [vmem:[#allocation6 + $0x1f0] sm:$0xff]
    %v238 = vld [vmem:[#allocation6 + $0x1f8] sm:$0xff]
    %v239 = vld [vmem:[#allocation6 + $0x200] sm:$0xff]
    %v240 = vld [vmem:[#allocation6 + $0x208] sm:$0xff]
    %v241 = vld [vmem:[#allocation6 + $0x210] sm:$0xff]
    %v242 = vld [vmem:[#allocation6 + $0x218] sm:$0xff]
    %v243 = vld [vmem:[#allocation6 + $0x220] sm:$0xff]
    %v244 = vld [vmem:[#allocation6 + $0x228] sm:$0x77]
    %v245 = vld [vmem:[#allocation6 + $0x230] sm:$0x77]
    %v246 = vld [vmem:[#allocation6 + $0x238] sm:$0x77]
    %v247 = vld [vmem:[#allocation8] sm:$0x3f]
    %v249 = vlaneseq
    %v250 = vshrl.u32 %v249, 7
    %v251 = vsub.s32 0, %v250
    %v252 = vrot.slane %v247, %v251
    %v253 = vlaneseq
    %v254 = vshrl.u32 %v253, 7
    %v255 = vsub.s32 1, %v254
    %v256 = vrot.slane %v247, %v255
    %v257 = vlaneseq
    %v258 = vshrl.u32 %v257, 7
    %v259 = vsub.s32 2, %v258
    %v260 = vrot.slane %v247, %v259
    %v261 = vlaneseq
    %v262 = vshrl.u32 %v261, 7
    %v263 = vsub.s32 3, %v262
    %v264 = vrot.slane %v247, %v263
    %v265 = vlaneseq
    %v266 = vshrl.u32 %v265, 7
    %v267 = vsub.s32 4, %v266
    %v268 = vrot.slane %v247, %v267
    %v269 = vlaneseq
    %v270 = vshrl.u32 %v269, 7
    %v271 = vsub.s32 5, %v270
    %v272 = vrot.slane %v247, %v271
    %v281 = vunpack.c.l.s4 1983009808
    %v282 = vunpack.c.0.s8 %v281
    %v283 = vlaneseq
    %v284 = vshrl.u32 %v283, 7
    %v285 = vsub.s32 %v282, %v284
    %v286 = vrot.slane %v174, %v285
    %v287 = vcombine.high %v286, %v286
    %v361 = vunpack.c.l.b16 %v175
    %v362 = vunpack.c.h.b16 %v175
    %v363 = vunpack.c.l.b16 %v176
    %v364 = vunpack.c.h.b16 %v176
    %v365 = vunpack.c.l.b16 %v177
    %v366 = vunpack.c.h.b16 %v177
    %v367 = vunpack.c.l.b16 %v178
    %v368 = vunpack.c.h.b16 %v178
    %v369 = vunpack.c.l.b16 %v179
    %v370 = vunpack.c.h.b16 %v179
    %v371 = vunpack.c.l.b16 %v180
    %v372 = vunpack.c.h.b16 %v180
    %v373 = vunpack.c.l.b16 %v181
    %v374 = vunpack.c.h.b16 %v181
    %v375 = vunpack.c.l.b16 %v182
    %v376 = vunpack.c.h.b16 %v182
    %v377 = vunpack.c.l.b16 %v183
    %v378 = vunpack.c.h.b16 %v183
    %v379 = vunpack.c.l.b16 %v184
    %v380 = vunpack.c.h.b16 %v184
    %v381 = vunpack.c.l.b16 %v185
    %v382 = vunpack.c.h.b16 %v185
    %v383 = vunpack.c.l.b16 %v186
    %v384 = vunpack.c.h.b16 %v186
    %v385 = vunpack.c.l.b16 %v187
    %v386 = vunpack.c.h.b16 %v187
    %v387 = vunpack.c.l.b16 %v188
    %v388 = vunpack.c.h.b16 %v188
    %v389 = vunpack.c.l.b16 %v189
    %v390 = vunpack.c.h.b16 %v189
    %v391 = vunpack.c.l.b16 %v190
    %v392 = vunpack.c.h.b16 %v190
    %v393 = vunpack.c.l.b16 %v191
    %v394 = vunpack.c.h.b16 %v191
    %v395 = vunpack.c.l.b16 %v192
    %v396 = vunpack.c.h.b16 %v192
    %v397 = vunpack.c.l.b16 %v193
    %v398 = vunpack.c.h.b16 %v193
    %v399 = vunpack.c.l.b16 %v194
    %v400 = vunpack.c.h.b16 %v194
    %v401 = vunpack.c.l.b16 %v195
    %v402 = vunpack.c.h.b16 %v195
    %v403 = vunpack.c.l.b16 %v196
    %v404 = vunpack.c.h.b16 %v196
    %v405 = vunpack.c.l.b16 %v197
    %v406 = vunpack.c.h.b16 %v197
    %v407 = vunpack.c.l.b16 %v198
    %v408 = vunpack.c.h.b16 %v198
    %v409 = vunpack.c.l.b16 %v199
    %v410 = vunpack.c.h.b16 %v199
    %v411 = vunpack.c.l.b16 %v200
    %v412 = vunpack.c.h.b16 %v200
    %v413 = vunpack.c.l.b16 %v201
    %v414 = vunpack.c.h.b16 %v201
    %v415 = vunpack.c.l.b16 %v202
    %v416 = vunpack.c.h.b16 %v202
    %v417 = vunpack.c.l.b16 %v203
    %v418 = vunpack.c.h.b16 %v203
    %v419 = vunpack.c.l.b16 %v204
    %v420 = vunpack.c.h.b16 %v204
    %v421 = vunpack.c.l.b16 %v205
    %v422 = vunpack.c.h.b16 %v205
    %v423 = vunpack.c.l.b16 %v206
    %v424 = vunpack.c.h.b16 %v206
    %v425 = vunpack.c.l.b16 %v207
    %v426 = vunpack.c.h.b16 %v207
    %v427 = vunpack.c.l.b16 %v208
    %v428 = vunpack.c.h.b16 %v208
    %v429 = vunpack.c.l.b16 %v209
    %v430 = vunpack.c.h.b16 %v209
    %v431 = vunpack.c.l.b16 %v210
    %v432 = vunpack.c.h.b16 %v210
    %v433 = vunpack.c.l.b16 %v211
    %v434 = vunpack.c.h.b16 %v211
    %v435 = vunpack.c.l.b16 %v212
    %v436 = vunpack.c.h.b16 %v212
    %v437 = vunpack.c.l.b16 %v213
    %v438 = vunpack.c.h.b16 %v213
    %v439 = vunpack.c.l.b16 %v214
    %v440 = vunpack.c.h.b16 %v214
    %v441 = vunpack.c.l.b16 %v215
    %v442 = vunpack.c.h.b16 %v215
    %v443 = vunpack.c.l.b16 %v216
    %v444 = vunpack.c.h.b16 %v216
    %v445 = vunpack.c.l.b16 %v217
    %v446 = vunpack.c.h.b16 %v217
    %v447 = vunpack.c.l.b16 %v218
    %v448 = vunpack.c.h.b16 %v218
    %v449 = vunpack.c.l.b16 %v219
    %v450 = vunpack.c.h.b16 %v219
    %v451 = vunpack.c.l.b16 %v220
    %v452 = vunpack.c.h.b16 %v220
    %v453 = vunpack.c.l.b16 %v221
    %v454 = vunpack.c.h.b16 %v221
    %v455 = vunpack.c.l.b16 %v222
    %v456 = vunpack.c.h.b16 %v222
    %v457 = vunpack.c.l.b16 %v223
    %v458 = vunpack.c.h.b16 %v223
    %v459 = vunpack.c.l.b16 %v224
    %v460 = vunpack.c.h.b16 %v224
    %v461 = vunpack.c.l.b16 %v225
    %v462 = vunpack.c.h.b16 %v225
    %v463 = vunpack.c.l.b16 %v226
    %v464 = vunpack.c.h.b16 %v226
    %v465 = vunpack.c.l.b16 %v227
    %v466 = vunpack.c.h.b16 %v227
    %v467 = vunpack.c.l.b16 %v228
    %v468 = vunpack.c.h.b16 %v228
    %v469 = vunpack.c.l.b16 %v229
    %v470 = vunpack.c.h.b16 %v229
    %v471 = vunpack.c.l.b16 %v230
    %v472 = vunpack.c.h.b16 %v230
    %v473 = vunpack.c.l.b16 %v231
    %v474 = vunpack.c.h.b16 %v231
    %v475 = vunpack.c.l.b16 %v232
    %v476 = vunpack.c.h.b16 %v232
    %v477 = vunpack.c.l.b16 %v233
    %v478 = vunpack.c.h.b16 %v233
    %v479 = vunpack.c.l.b16 %v234
    %v480 = vunpack.c.h.b16 %v234
    %v481 = vunpack.c.l.b16 %v235
    %v482 = vunpack.c.h.b16 %v235
    %v483 = vunpack.c.l.b16 %v236
    %v484 = vunpack.c.h.b16 %v236
    %v485 = vunpack.c.l.b16 %v237
    %v486 = vunpack.c.h.b16 %v237
    %v487 = vunpack.c.l.b16 %v238
    %v488 = vunpack.c.h.b16 %v238
    %v489 = vunpack.c.l.b16 %v239
    %v490 = vunpack.c.h.b16 %v239
    %v491 = vunpack.c.l.b16 %v240
    %v492 = vunpack.c.h.b16 %v240
    %v493 = vunpack.c.l.b16 %v241
    %v494 = vunpack.c.h.b16 %v241
    %v495 = vunpack.c.l.b16 %v242
    %v496 = vunpack.c.h.b16 %v242
    %v497 = vunpack.c.l.b16 %v243
    %v498 = vunpack.c.h.b16 %v243
    %v499 = vunpack.c.l.b16 %v244
    %v500 = vunpack.c.h.b16 %v244
    %v501 = vunpack.c.l.b16 %v245
    %v502 = vunpack.c.h.b16 %v245
    %v503 = vunpack.c.l.b16 %v246
    %v504 = vunpack.c.h.b16 %v246
    %v505 = vpack.c.b16 %v367, %v361
    %v506 = vpack.c.b16 %v368, %v362
    %v507 = vpack.c.b16 %v369, %v363
    %v508 = vpack.c.b16 %v370, %v364
    %v509 = vpack.c.b16 %v371, %v365
    %v510 = vpack.c.b16 %v372, %v366
    %v511 = vpack.c.b16 %v379, %v373
    %v512 = vpack.c.b16 %v380, %v374
    %v513 = vpack.c.b16 %v381, %v375
    %v514 = vpack.c.b16 %v382, %v376
    %v515 = vpack.c.b16 %v383, %v377
    %v516 = vpack.c.b16 %v384, %v378
    %v517 = vpack.c.b16 %v391, %v385
    %v518 = vpack.c.b16 %v392, %v386
    %v519 = vpack.c.b16 %v393, %v387
    %v520 = vpack.c.b16 %v394, %v388
    %v521 = vpack.c.b16 %v395, %v389
    %v522 = vpack.c.b16 %v396, %v390
    %v523 = vpack.c.b16 %v403, %v397
    %v524 = vpack.c.b16 %v404, %v398
    %v525 = vpack.c.b16 %v405, %v399
    %v526 = vpack.c.b16 %v406, %v400
    %v527 = vpack.c.b16 %v407, %v401
    %v528 = vpack.c.b16 %v408, %v402
    %v529 = vpack.c.b16 %v415, %v409
    %v530 = vpack.c.b16 %v416, %v410
    %v531 = vpack.c.b16 %v417, %v411
    %v532 = vpack.c.b16 %v418, %v412
    %v533 = vpack.c.b16 %v419, %v413
    %v534 = vpack.c.b16 %v420, %v414
    %v535 = vpack.c.b16 %v427, %v421
    %v536 = vpack.c.b16 %v428, %v422
    %v537 = vpack.c.b16 %v429, %v423
    %v538 = vpack.c.b16 %v430, %v424
    %v539 = vpack.c.b16 %v431, %v425
    %v540 = vpack.c.b16 %v432, %v426
    %v541 = vpack.c.b16 %v439, %v433
    %v542 = vpack.c.b16 %v440, %v434
    %v543 = vpack.c.b16 %v441, %v435
    %v544 = vpack.c.b16 %v442, %v436
    %v545 = vpack.c.b16 %v443, %v437
    %v546 = vpack.c.b16 %v444, %v438
    %v547 = vpack.c.b16 %v451, %v445
    %v548 = vpack.c.b16 %v452, %v446
    %v549 = vpack.c.b16 %v453, %v447
    %v550 = vpack.c.b16 %v454, %v448
    %v551 = vpack.c.b16 %v455, %v449
    %v552 = vpack.c.b16 %v456, %v450
    %v553 = vpack.c.b16 %v463, %v457
    %v554 = vpack.c.b16 %v464, %v458
    %v555 = vpack.c.b16 %v465, %v459
    %v556 = vpack.c.b16 %v466, %v460
    %v557 = vpack.c.b16 %v467, %v461
    %v558 = vpack.c.b16 %v468, %v462
    %v559 = vpack.c.b16 %v475, %v469
    %v560 = vpack.c.b16 %v476, %v470
    %v561 = vpack.c.b16 %v477, %v471
    %v562 = vpack.c.b16 %v478, %v472
    %v563 = vpack.c.b16 %v479, %v473
    %v564 = vpack.c.b16 %v480, %v474
    %v565 = vpack.c.b16 %v487, %v481
    %v566 = vpack.c.b16 %v488, %v482
    %v567 = vpack.c.b16 %v489, %v483
    %v568 = vpack.c.b16 %v490, %v484
    %v569 = vpack.c.b16 %v491, %v485
    %v570 = vpack.c.b16 %v492, %v486
    %v571 = vpack.c.b16 %v499, %v493
    %v572 = vpack.c.b16 %v500, %v494
    %v573 = vpack.c.b16 %v501, %v495
    %v574 = vpack.c.b16 %v502, %v496
    %v575 = vpack.c.b16 %v503, %v497
    %v576 = vpack.c.b16 %v504, %v498
    %vm643 = vcmask 498688
    %v645 = vsel %vm643, %v287, 0
    %vm647 = vcmask 1045504
    %vm648 = vcmask 1046528
    %v649 = vsel %vm647, 4294967295, 65535
    %v650 = vsel %vm648, %v649, 0
    %v652 = vand.u32 %v571, %v650
    %v655 = vand.u32 %v572, %v650
    %v658 = vand.u32 %v573, %v650
    %v661 = vand.u32 %v574, %v650
    %v664 = vand.u32 %v575, %v650
    %v667 = vand.u32 %v576, %v650
    %669 = vmatprep.subr.bf16.mxu0 %v506
    %670 = vmatpush1.bf16.msra.mxu0 %v505
    %671 = vmatprep.subr.bf16.mxu0 %v512
    %672 = vmatpush1.bf16.msra.mxu0 %v511
    %673 = vmatprep.subr.bf16.mxu0 %v518
    %674 = vmatpush1.bf16.msra.mxu0 %v517
    %675 = vmatprep.subr.bf16.mxu0 %v524
    %676 = vmatpush1.bf16.msra.mxu0 %v523
    %677 = vmatprep.subr.bf16.mxu0 %v530
    %678 = vmatpush1.bf16.msra.mxu0 %v529
    %679 = vmatprep.subr.bf16.mxu0 %v536
    %680 = vmatpush1.bf16.msra.mxu0 %v535
    %681 = vmatprep.subr.bf16.mxu0 %v542
    %682 = vmatpush1.bf16.msra.mxu0 %v541
    %683 = vmatprep.subr.bf16.mxu0 %v548
    %684 = vmatpush1.bf16.msra.mxu0 %v547
    %685 = vmatprep.subr.bf16.mxu0 %v554
    %686 = vmatpush1.bf16.msra.mxu0 %v553
    %687 = vmatprep.subr.bf16.mxu0 %v560
    %688 = vmatpush1.bf16.msra.mxu0 %v559
    %689 = vmatprep.subr.bf16.mxu0 %v566
    %690 = vmatpush1.bf16.msra.mxu0 %v565
    %691 = vmatprep.subr.bf16.mxu0 %v655
    %692 = vmatpush1.bf16.msra.mxu0 %v652
    %693 = vmatprep.subr.bf16.mxu0 0
    %694 = vmatpush1.bf16.msra.mxu0 0
    %695 = vmatprep.subr.bf16.mxu0 0
    %696 = vmatpush1.bf16.msra.mxu0 0
    %697 = vmatprep.subr.bf16.mxu0 0
    %698 = vmatpush1.bf16.msra.mxu0 0
    %699 = vmatprep.subr.bf16.mxu0 0
    %700 = vmatpush1.bf16.msra.mxu0 0
    %701 = vmatprep.mubr.bf16.mxu0 %v645
    %702 = vmatmul.mubr.bf16.gmra.mrb[0].mxu0 %v286
    %v703 = vpop.f32.mrb[0].mxu0
    %v704 = vadd.f32 %v252, %v703
    %v705 = vpop.f32.mrb[0].mxu0
    %v706 = vadd.f32 %v256, %v705
    %v707 = vpop.f32.mrb[0].mxu0
    %v708 = vpop.f32.mrb[0].mxu0
    %709 = vdwg.mxu0
    %710 = vmatprep.subr.bf16.mxu0 %v508
    %711 = vmatpush1.bf16.msra.mxu0 %v507
    %712 = vmatprep.subr.bf16.mxu0 %v514
    %713 = vmatpush1.bf16.msra.mxu0 %v513
    %714 = vmatprep.subr.bf16.mxu0 %v520
    %715 = vmatpush1.bf16.msra.mxu0 %v519
    %716 = vmatprep.subr.bf16.mxu0 %v526
    %717 = vmatpush1.bf16.msra.mxu0 %v525
    %718 = vmatprep.subr.bf16.mxu0 %v532
    %719 = vmatpush1.bf16.msra.mxu0 %v531
    %720 = vmatprep.subr.bf16.mxu0 %v538
    %721 = vmatpush1.bf16.msra.mxu0 %v537
    %722 = vmatprep.subr.bf16.mxu0 %v544
    %723 = vmatpush1.bf16.msra.mxu0 %v543
    %724 = vmatprep.subr.bf16.mxu0 %v550
    %725 = vmatpush1.bf16.msra.mxu0 %v549
    %726 = vmatprep.subr.bf16.mxu0 %v556
    %727 = vmatpush1.bf16.msra.mxu0 %v555
    %728 = vmatprep.subr.bf16.mxu0 %v562
    %729 = vmatpush1.bf16.msra.mxu0 %v561
    %730 = vmatprep.subr.bf16.mxu0 %v568
    %731 = vmatpush1.bf16.msra.mxu0 %v567
    %732 = vmatprep.subr.bf16.mxu0 %v661
    %733 = vmatpush1.bf16.msra.mxu0 %v658
    %734 = vmatprep.subr.bf16.mxu0 0
    %735 = vmatpush1.bf16.msra.mxu0 0
    %736 = vmatprep.subr.bf16.mxu0 0
    %737 = vmatpush1.bf16.msra.mxu0 0
    %738 = vmatprep.subr.bf16.mxu0 0
    %739 = vmatpush1.bf16.msra.mxu0 0
    %740 = vmatprep.subr.bf16.mxu0 0
    %741 = vmatpush1.bf16.msra.mxu0 0
    %742 = vmatprep.mubr.bf16.mxu0 %v645
    %743 = vmatmul.mubr.bf16.gmra.mrb[0].mxu0 %v286
    %v744 = vpop.f32.mrb[0].mxu0
    %v745 = vadd.f32 %v260, %v744
    %v746 = vpop.f32.mrb[0].mxu0
    %v747 = vadd.f32 %v264, %v746
    %v748 = vpop.f32.mrb[0].mxu0
    %v749 = vpop.f32.mrb[0].mxu0
    %750 = vdwg.mxu0
    %751 = vmatprep.subr.bf16.mxu0 %v510
    %752 = vmatpush1.bf16.msra.mxu0 %v509
    %753 = vmatprep.subr.bf16.mxu0 %v516
    %754 = vmatpush1.bf16.msra.mxu0 %v515
    %755 = vmatprep.subr.bf16.mxu0 %v522
    %756 = vmatpush1.bf16.msra.mxu0 %v521
    %757 = vmatprep.subr.bf16.mxu0 %v528
    %758 = vmatpush1.bf16.msra.mxu0 %v527
    %759 = vmatprep.subr.bf16.mxu0 %v534
    %760 = vmatpush1.bf16.msra.mxu0 %v533
    %761 = vmatprep.subr.bf16.mxu0 %v540
    %762 = vmatpush1.bf16.msra.mxu0 %v539
    %763 = vmatprep.subr.bf16.mxu0 %v546
    %764 = vmatpush1.bf16.msra.mxu0 %v545
    %765 = vmatprep.subr.bf16.mxu0 %v552
    %766 = vmatpush1.bf16.msra.mxu0 %v551
    %767 = vmatprep.subr.bf16.mxu0 %v558
    %768 = vmatpush1.bf16.msra.mxu0 %v557
    %769 = vmatprep.subr.bf16.mxu0 %v564
    %770 = vmatpush1.bf16.msra.mxu0 %v563
    %771 = vmatprep.subr.bf16.mxu0 %v570
    %772 = vmatpush1.bf16.msra.mxu0 %v569
    %773 = vmatprep.subr.bf16.mxu0 %v667
    %774 = vmatpush1.bf16.msra.mxu0 %v664
    %775 = vmatprep.subr.bf16.mxu0 0
    %776 = vmatpush1.bf16.msra.mxu0 0
    %777 = vmatprep.subr.bf16.mxu0 0
    %778 = vmatpush1.bf16.msra.mxu0 0
    %779 = vmatprep.subr.bf16.mxu0 0
    %780 = vmatpush1.bf16.msra.mxu0 0
    %781 = vmatprep.subr.bf16.mxu0 0
    %782 = vmatpush1.bf16.msra.mxu0 0
    %783 = vmatprep.mubr.bf16.mxu0 %v645
    %784 = vmatmul.mubr.bf16.gmra.mrb[0].mxu0 %v286
    %v785 = vpop.f32.mrb[0].mxu0
    %v786 = vadd.f32 %v268, %v785
    %v787 = vpop.f32.mrb[0].mxu0
    %v788 = vadd.f32 %v272, %v787
    %v789 = vpop.f32.mrb[0].mxu0
    %v790 = vpop.f32.mrb[0].mxu0
    %791 = vdwg.mxu0
    %v792 = vmul.f32 %v704, 0.2
    %v793 = vmul.f32 %v706, 0.2
    %v794 = vmul.f32 %v745, 0.2
    %v795 = vmul.f32 %v747, 0.2
    %v796 = vmul.f32 %v786, 0.2
    %v797 = vmul.f32 %v788, 0.2
    %v798 = vmax.f32 %v704, %v792
    %v799 = vmax.f32 %v706, %v793
    %v800 = vmax.f32 %v745, %v794
    %v801 = vmax.f32 %v747, %v795
    %v802 = vmax.f32 %v786, %v796
    %v803 = vmax.f32 %v788, %v797
    %v804 = vpack.c.bf16 %v798, %v798
    %v805 = vpack.c.bf16 %v799, %v799
    %v806 = vpack.c.bf16 %v800, %v800
    %v807 = vpack.c.bf16 %v801, %v801
    %v808 = vpack.c.bf16 %v802, %v802
    %v809 = vpack.c.bf16 %v803, %v803
    %v810 = vld [vmem:[#allocation9] sm:$0xff]
    %v811 = vld [vmem:[#allocation9 + $0x8] sm:$0xff]
    %v812 = vld [vmem:[#allocation9 + $0x10] sm:$0xff]
    %v813 = vld [vmem:[#allocation9 + $0x18] sm:$0xff]
    %v814 = vld [vmem:[#allocation9 + $0x20] sm:$0xff]
    %v815 = vld [vmem:[#allocation9 + $0x28] sm:$0xff]
    %v816 = vld [vmem:[#allocation9 + $0x30] sm:$0xff]
    %v817 = vld [vmem:[#allocation9 + $0x38] sm:$0xff]
    %v818 = vld [vmem:[#allocation9 + $0x40] sm:$0xff]
    %v819 = vld [vmem:[#allocation9 + $0x48] sm:$0xff]
    %v820 = vld [vmem:[#allocation9 + $0x50] sm:$0xff]
    %v821 = vld [vmem:[#allocation9 + $0x58] sm:$0xff]
    %v822 = vld [vmem:[#allocation9 + $0x60] sm:$0xff]
    %v823 = vld [vmem:[#allocation9 + $0x68] sm:$0xff]
    %v824 = vld [vmem:[#allocation9 + $0x70] sm:$0xff]
    %v825 = vld [vmem:[#allocation9 + $0x78] sm:$0xff]
    %v826 = vld [vmem:[#allocation9 + $0x80] sm:$0xff]
    %v827 = vld [vmem:[#allocation9 + $0x88] sm:$0xff]
    %v828 = vld [vmem:[#allocation9 + $0x90] sm:$0xff]
    %v829 = vld [vmem:[#allocation9 + $0x98] sm:$0xff]
    %v830 = vld [vmem:[#allocation9 + $0xa0] sm:$0xff]
    %v831 = vld [vmem:[#allocation9 + $0xa8] sm:$0xff]
    %v832 = vld [vmem:[#allocation9 + $0xb0] sm:$0xff]
    %v833 = vld [vmem:[#allocation9 + $0xb8] sm:$0xff]
    %v834 = vld [vmem:[#allocation9 + $0xc0] sm:$0xff]
    %v835 = vld [vmem:[#allocation9 + $0xc8] sm:$0xff]
    %v836 = vld [vmem:[#allocation9 + $0xd0] sm:$0xff]
    %v837 = vld [vmem:[#allocation9 + $0xd8] sm:$0xff]
    %v838 = vld [vmem:[#allocation9 + $0xe0] sm:$0xff]
    %v839 = vld [vmem:[#allocation9 + $0xe8] sm:$0xff]
    %v840 = vld [vmem:[#allocation9 + $0xf0] sm:$0xff]
    %v841 = vld [vmem:[#allocation9 + $0xf8] sm:$0xff]
    %v842 = vld [vmem:[#allocation9 + $0x100] sm:$0xff]
    %v843 = vld [vmem:[#allocation9 + $0x108] sm:$0xff]
    %v844 = vld [vmem:[#allocation9 + $0x110] sm:$0xff]
    %v845 = vld [vmem:[#allocation9 + $0x118] sm:$0xff]
    %v846 = vld [vmem:[#allocation9 + $0x120] sm:$0xff]
    %v847 = vld [vmem:[#allocation9 + $0x128] sm:$0xff]
    %v848 = vld [vmem:[#allocation9 + $0x130] sm:$0xff]
    %v849 = vld [vmem:[#allocation9 + $0x138] sm:$0xff]
    %v850 = vld [vmem:[#allocation9 + $0x140] sm:$0xff]
    %v851 = vld [vmem:[#allocation9 + $0x148] sm:$0xff]
    %v852 = vld [vmem:[#allocation9 + $0x150] sm:$0xff]
    %v853 = vld [vmem:[#allocation9 + $0x158] sm:$0xff]
    %v854 = vld [vmem:[#allocation9 + $0x160] sm:$0xff]
    %v855 = vld [vmem:[#allocation9 + $0x168] sm:$0xff]
    %v856 = vld [vmem:[#allocation9 + $0x170] sm:$0xff]
    %v857 = vld [vmem:[#allocation9 + $0x178] sm:$0xff]
    %v858 = vld [vmem:[#allocation9 + $0x180] sm:$0xff]
    %v859 = vld [vmem:[#allocation9 + $0x188] sm:$0xff]
    %v860 = vld [vmem:[#allocation9 + $0x190] sm:$0xff]
    %v861 = vld [vmem:[#allocation9 + $0x198] sm:$0xff]
    %v862 = vld [vmem:[#allocation9 + $0x1a0] sm:$0xff]
    %v863 = vld [vmem:[#allocation9 + $0x1a8] sm:$0xff]
    %v864 = vld [vmem:[#allocation9 + $0x1b0] sm:$0xff]
    %v865 = vld [vmem:[#allocation9 + $0x1b8] sm:$0xff]
    %v866 = vld [vmem:[#allocation9 + $0x1c0] sm:$0xff]
    %v867 = vld [vmem:[#allocation9 + $0x1c8] sm:$0xff]
    %v868 = vld [vmem:[#allocation9 + $0x1d0] sm:$0xff]
    %v869 = vld [vmem:[#allocation9 + $0x1d8] sm:$0xff]
    %v870 = vld [vmem:[#allocation9 + $0x1e0] sm:$0xff]
    %v871 = vld [vmem:[#allocation9 + $0x1e8] sm:$0xff]
    %v872 = vld [vmem:[#allocation9 + $0x1f0] sm:$0xff]
    %v873 = vld [vmem:[#allocation9 + $0x1f8] sm:$0xff]
    %v874 = vld [vmem:[#allocation9 + $0x200] sm:$0xff]
    %v875 = vld [vmem:[#allocation9 + $0x208] sm:$0xff]
    %v876 = vld [vmem:[#allocation9 + $0x210] sm:$0xff]
    %v877 = vld [vmem:[#allocation9 + $0x218] sm:$0xff]
    %v878 = vld [vmem:[#allocation9 + $0x220] sm:$0xff]
    %v879 = vld [vmem:[#allocation9 + $0x228] sm:$0xff]
    %v880 = vld [vmem:[#allocation9 + $0x230] sm:$0xff]
    %v881 = vld [vmem:[#allocation9 + $0x238] sm:$0xff]
    %v882 = vld [vmem:[#allocation9 + $0x240] sm:$0xff]
    %v883 = vld [vmem:[#allocation9 + $0x248] sm:$0xff]
    %v884 = vld [vmem:[#allocation9 + $0x250] sm:$0xff]
    %v885 = vld [vmem:[#allocation9 + $0x258] sm:$0xff]
    %v886 = vld [vmem:[#allocation9 + $0x260] sm:$0xff]
    %v887 = vld [vmem:[#allocation9 + $0x268] sm:$0xff]
    %v888 = vld [vmem:[#allocation9 + $0x270] sm:$0xff]
    %v889 = vld [vmem:[#allocation9 + $0x278] sm:$0xff]
    %v890 = vld [vmem:[#allocation9 + $0x280] sm:$0xff]
    %v891 = vld [vmem:[#allocation9 + $0x288] sm:$0xff]
    %v892 = vld [vmem:[#allocation9 + $0x290] sm:$0xff]
    %v893 = vld [vmem:[#allocation9 + $0x298] sm:$0xff]
    %v894 = vld [vmem:[#allocation9 + $0x2a0] sm:$0xff]
    %v895 = vld [vmem:[#allocation9 + $0x2a8] sm:$0xff]
    %v896 = vld [vmem:[#allocation9 + $0x2b0] sm:$0xff]
    %v897 = vld [vmem:[#allocation9 + $0x2b8] sm:$0xff]
    %v898 = vld [vmem:[#allocation9 + $0x2c0] sm:$0xff]
    %v899 = vld [vmem:[#allocation9 + $0x2c8] sm:$0xff]
    %v900 = vld [vmem:[#allocation9 + $0x2d0] sm:$0xff]
    %v901 = vld [vmem:[#allocation9 + $0x2d8] sm:$0xff]
    %v902 = vld [vmem:[#allocation9 + $0x2e0] sm:$0xff]
    %v903 = vld [vmem:[#allocation9 + $0x2e8] sm:$0xff]
    %v904 = vld [vmem:[#allocation9 + $0x2f0] sm:$0xff]
    %v905 = vld [vmem:[#allocation9 + $0x2f8] sm:$0xff]
    %v906 = vld [vmem:[#allocation9 + $0x300] sm:$0xff]
    %v907 = vld [vmem:[#allocation9 + $0x308] sm:$0xff]
    %v908 = vld [vmem:[#allocation9 + $0x310] sm:$0xff]
    %v909 = vld [vmem:[#allocation9 + $0x318] sm:$0xff]
    %v910 = vld [vmem:[#allocation9 + $0x320] sm:$0xff]
    %v911 = vld [vmem:[#allocation9 + $0x328] sm:$0xff]
    %v912 = vld [vmem:[#allocation9 + $0x330] sm:$0xff]
    %v913 = vld [vmem:[#allocation9 + $0x338] sm:$0xff]
    %v914 = vld [vmem:[#allocation9 + $0x340] sm:$0xff]
    %v915 = vld [vmem:[#allocation9 + $0x348] sm:$0xff]
    %v916 = vld [vmem:[#allocation9 + $0x350] sm:$0xff]
    %v917 = vld [vmem:[#allocation9 + $0x358] sm:$0xff]
    %v918 = vld [vmem:[#allocation9 + $0x360] sm:$0xff]
    %v919 = vld [vmem:[#allocation9 + $0x368] sm:$0xff]
    %v920 = vld [vmem:[#allocation9 + $0x370] sm:$0xff]
    %v921 = vld [vmem:[#allocation9 + $0x378] sm:$0xff]
    %v922 = vld [vmem:[#allocation9 + $0x380] sm:$0xff]
    %v923 = vld [vmem:[#allocation9 + $0x388] sm:$0xff]
    %v924 = vld [vmem:[#allocation9 + $0x390] sm:$0xff]
    %v925 = vld [vmem:[#allocation9 + $0x398] sm:$0xff]
    %v926 = vld [vmem:[#allocation9 + $0x3a0] sm:$0xff]
    %v927 = vld [vmem:[#allocation9 + $0x3a8] sm:$0xff]
    %v928 = vld [vmem:[#allocation9 + $0x3b0] sm:$0xff]
    %v929 = vld [vmem:[#allocation9 + $0x3b8] sm:$0xff]
    %v930 = vld [vmem:[#allocation9 + $0x3c0] sm:$0xff]
    %v931 = vld [vmem:[#allocation9 + $0x3c8] sm:$0xff]
    %v932 = vld [vmem:[#allocation9 + $0x3d0] sm:$0xff]
    %v933 = vld [vmem:[#allocation9 + $0x3d8] sm:$0xff]
    %v934 = vld [vmem:[#allocation9 + $0x3e0] sm:$0xff]
    %v935 = vld [vmem:[#allocation9 + $0x3e8] sm:$0xff]
    %v936 = vld [vmem:[#allocation9 + $0x3f0] sm:$0xff]
    %v937 = vld [vmem:[#allocation9 + $0x3f8] sm:$0xff]
    %v938 = vld [vmem:[#allocation9 + $0x400] sm:$0xff]
    %v939 = vld [vmem:[#allocation9 + $0x408] sm:$0xff]
    %v940 = vld [vmem:[#allocation9 + $0x410] sm:$0xff]
    %v941 = vld [vmem:[#allocation9 + $0x418] sm:$0xff]
    %v942 = vld [vmem:[#allocation9 + $0x420] sm:$0xff]
    %v943 = vld [vmem:[#allocation9 + $0x428] sm:$0xff]
    %v944 = vld [vmem:[#allocation9 + $0x430] sm:$0xff]
    %v945 = vld [vmem:[#allocation9 + $0x438] sm:$0xff]
    %v946 = vld [vmem:[#allocation9 + $0x440] sm:$0xff]
    %v947 = vld [vmem:[#allocation9 + $0x448] sm:$0xff]
    %v948 = vld [vmem:[#allocation9 + $0x450] sm:$0xff]
    %v949 = vld [vmem:[#allocation9 + $0x458] sm:$0xff]
    %v950 = vld [vmem:[#allocation9 + $0x460] sm:$0xff]
    %v951 = vld [vmem:[#allocation9 + $0x468] sm:$0xff]
    %v952 = vld [vmem:[#allocation9 + $0x470] sm:$0xff]
    %v953 = vld [vmem:[#allocation9 + $0x478] sm:$0xff]
    %v954 = vld [vmem:[#allocation9 + $0x480] sm:$0xff]
    %v955 = vld [vmem:[#allocation9 + $0x488] sm:$0xff]
    %v956 = vld [vmem:[#allocation9 + $0x490] sm:$0xff]
    %v957 = vld [vmem:[#allocation9 + $0x498] sm:$0xff]
    %v958 = vld [vmem:[#allocation9 + $0x4a0] sm:$0xff]
    %v959 = vld [vmem:[#allocation9 + $0x4a8] sm:$0xff]
    %v960 = vld [vmem:[#allocation9 + $0x4b0] sm:$0xff]
    %v961 = vld [vmem:[#allocation9 + $0x4b8] sm:$0xff]
    %v962 = vld [vmem:[#allocation9 + $0x4c0] sm:$0xff]
    %v963 = vld [vmem:[#allocation9 + $0x4c8] sm:$0xff]
    %v964 = vld [vmem:[#allocation9 + $0x4d0] sm:$0xff]
    %v965 = vld [vmem:[#allocation9 + $0x4d8] sm:$0xff]
    %v966 = vld [vmem:[#allocation9 + $0x4e0] sm:$0xff]
    %v967 = vld [vmem:[#allocation9 + $0x4e8] sm:$0xff]
    %v968 = vld [vmem:[#allocation9 + $0x4f0] sm:$0xff]
    %v969 = vld [vmem:[#allocation9 + $0x4f8] sm:$0xff]
    %v970 = vld [vmem:[#allocation9 + $0x500] sm:$0xff]
    %v971 = vld [vmem:[#allocation9 + $0x508] sm:$0xff]
    %v972 = vld [vmem:[#allocation9 + $0x510] sm:$0xff]
    %v973 = vld [vmem:[#allocation9 + $0x518] sm:$0xff]
    %v974 = vld [vmem:[#allocation9 + $0x520] sm:$0xff]
    %v975 = vld [vmem:[#allocation9 + $0x528] sm:$0xff]
    %v976 = vld [vmem:[#allocation9 + $0x530] sm:$0xff]
    %v977 = vld [vmem:[#allocation9 + $0x538] sm:$0xff]
    %v978 = vld [vmem:[#allocation9 + $0x540] sm:$0xff]
    %v979 = vld [vmem:[#allocation9 + $0x548] sm:$0xff]
    %v980 = vld [vmem:[#allocation9 + $0x550] sm:$0xff]
    %v981 = vld [vmem:[#allocation9 + $0x558] sm:$0xff]
    %v982 = vld [vmem:[#allocation9 + $0x560] sm:$0xff]
    %v983 = vld [vmem:[#allocation9 + $0x568] sm:$0xff]
    %v984 = vld [vmem:[#allocation9 + $0x570] sm:$0xff]
    %v985 = vld [vmem:[#allocation9 + $0x578] sm:$0xff]
    %v986 = vld [vmem:[#allocation9 + $0x580] sm:$0xff]
    %v987 = vld [vmem:[#allocation9 + $0x588] sm:$0xff]
    %v988 = vld [vmem:[#allocation9 + $0x590] sm:$0xff]
    %v989 = vld [vmem:[#allocation9 + $0x598] sm:$0xff]
    %v990 = vld [vmem:[#allocation9 + $0x5a0] sm:$0xff]
    %v991 = vld [vmem:[#allocation9 + $0x5a8] sm:$0xff]
    %v992 = vld [vmem:[#allocation9 + $0x5b0] sm:$0xff]
    %v993 = vld [vmem:[#allocation9 + $0x5b8] sm:$0xff]
    %v994 = vld [vmem:[#allocation9 + $0x5c0] sm:$0xff]
    %v995 = vld [vmem:[#allocation9 + $0x5c8] sm:$0xff]
    %v996 = vld [vmem:[#allocation9 + $0x5d0] sm:$0xff]
    %v997 = vld [vmem:[#allocation9 + $0x5d8] sm:$0xff]
    %v998 = vld [vmem:[#allocation9 + $0x5e0] sm:$0xff]
    %v999 = vld [vmem:[#allocation9 + $0x5e8] sm:$0xff]
    %v1000 = vld [vmem:[#allocation9 + $0x5f0] sm:$0xff]
    %v1001 = vld [vmem:[#allocation9 + $0x5f8] sm:$0xff]
    %v1002 = vld [vmem:[#allocation9 + $0x600] sm:$0xff]
    %v1003 = vld [vmem:[#allocation9 + $0x608] sm:$0xff]
    %v1004 = vld [vmem:[#allocation9 + $0x610] sm:$0xff]
    %v1005 = vld [vmem:[#allocation9 + $0x618] sm:$0xff]
    %v1006 = vld [vmem:[#allocation9 + $0x620] sm:$0xff]
    %v1007 = vld [vmem:[#allocation9 + $0x628] sm:$0xff]
    %v1008 = vld [vmem:[#allocation9 + $0x630] sm:$0xff]
    %v1009 = vld [vmem:[#allocation9 + $0x638] sm:$0xff]
    %v1010 = vld [vmem:[#allocation9 + $0x640] sm:$0xff]
    %v1011 = vld [vmem:[#allocation9 + $0x648] sm:$0xff]
    %v1012 = vld [vmem:[#allocation9 + $0x650] sm:$0xff]
    %v1013 = vld [vmem:[#allocation9 + $0x658] sm:$0xff]
    %v1014 = vld [vmem:[#allocation9 + $0x660] sm:$0xff]
    %v1015 = vld [vmem:[#allocation9 + $0x668] sm:$0xff]
    %v1016 = vld [vmem:[#allocation9 + $0x670] sm:$0xff]
    %v1017 = vld [vmem:[#allocation9 + $0x678] sm:$0xff]
    %v1018 = vld [vmem:[#allocation9 + $0x680] sm:$0xff]
    %v1019 = vld [vmem:[#allocation9 + $0x688] sm:$0xff]
    %v1020 = vld [vmem:[#allocation9 + $0x690] sm:$0xff]
    %v1021 = vld [vmem:[#allocation9 + $0x698] sm:$0xff]
    %v1022 = vld [vmem:[#allocation9 + $0x6a0] sm:$0xff]
    %v1023 = vld [vmem:[#allocation9 + $0x6a8] sm:$0xff]
    %v1024 = vld [vmem:[#allocation9 + $0x6b0] sm:$0xff]
    %v1025 = vld [vmem:[#allocation9 + $0x6b8] sm:$0xff]
    %v1026 = vld [vmem:[#allocation9 + $0x6c0] sm:$0xff]
    %v1027 = vld [vmem:[#allocation9 + $0x6c8] sm:$0xff]
    %v1028 = vld [vmem:[#allocation9 + $0x6d0] sm:$0xff]
    %v1029 = vld [vmem:[#allocation9 + $0x6d8] sm:$0xff]
    %v1030 = vld [vmem:[#allocation9 + $0x6e0] sm:$0xff]
    %v1031 = vld [vmem:[#allocation9 + $0x6e8] sm:$0xff]
    %v1032 = vld [vmem:[#allocation9 + $0x6f0] sm:$0xff]
    %v1033 = vld [vmem:[#allocation9 + $0x6f8] sm:$0xff]
    %v1034 = vld [vmem:[#allocation9 + $0x700] sm:$0xff]
    %v1035 = vld [vmem:[#allocation9 + $0x708] sm:$0xff]
    %v1036 = vld [vmem:[#allocation9 + $0x710] sm:$0xff]
    %v1037 = vld [vmem:[#allocation9 + $0x718] sm:$0xff]
    %v1038 = vld [vmem:[#allocation9 + $0x720] sm:$0xff]
    %v1039 = vld [vmem:[#allocation9 + $0x728] sm:$0xff]
    %v1040 = vld [vmem:[#allocation9 + $0x730] sm:$0xff]
    %v1041 = vld [vmem:[#allocation9 + $0x738] sm:$0xff]
    %v1042 = vld [vmem:[#allocation9 + $0x740] sm:$0xff]
    %v1043 = vld [vmem:[#allocation9 + $0x748] sm:$0xff]
    %v1044 = vld [vmem:[#allocation9 + $0x750] sm:$0xff]
    %v1045 = vld [vmem:[#allocation9 + $0x758] sm:$0xff]
    %v1046 = vld [vmem:[#allocation9 + $0x760] sm:$0xff]
    %v1047 = vld [vmem:[#allocation9 + $0x768] sm:$0xff]
    %v1048 = vld [vmem:[#allocation9 + $0x770] sm:$0xff]
    %v1049 = vld [vmem:[#allocation9 + $0x778] sm:$0xff]
    %v1050 = vld [vmem:[#allocation9 + $0x780] sm:$0xff]
    %v1051 = vld [vmem:[#allocation9 + $0x788] sm:$0xff]
    %v1052 = vld [vmem:[#allocation9 + $0x790] sm:$0xff]
    %v1053 = vld [vmem:[#allocation9 + $0x798] sm:$0xff]
    %v1054 = vld [vmem:[#allocation9 + $0x7a0] sm:$0xff]
    %v1055 = vld [vmem:[#allocation9 + $0x7a8] sm:$0xff]
    %v1056 = vld [vmem:[#allocation9 + $0x7b0] sm:$0xff]
    %v1057 = vld [vmem:[#allocation9 + $0x7b8] sm:$0xff]
    %v1058 = vld [vmem:[#allocation9 + $0x7c0] sm:$0xff]
    %v1059 = vld [vmem:[#allocation9 + $0x7c8] sm:$0xff]
    %v1060 = vld [vmem:[#allocation9 + $0x7d0] sm:$0xff]
    %v1061 = vld [vmem:[#allocation9 + $0x7d8] sm:$0xff]
    %v1062 = vld [vmem:[#allocation11] sm:$0x3f]
    %v1064 = vlaneseq
    %v1065 = vshrl.u32 %v1064, 7
    %v1066 = vsub.s32 0, %v1065
    %v1067 = vrot.slane %v1062, %v1066
    %v1068 = vlaneseq
    %v1069 = vshrl.u32 %v1068, 7
    %v1070 = vsub.s32 1, %v1069
    %v1071 = vrot.slane %v1062, %v1070
    %v1072 = vlaneseq
    %v1073 = vshrl.u32 %v1072, 7
    %v1074 = vsub.s32 2, %v1073
    %v1075 = vrot.slane %v1062, %v1074
    %v1076 = vlaneseq
    %v1077 = vshrl.u32 %v1076, 7
    %v1078 = vsub.s32 3, %v1077
    %v1079 = vrot.slane %v1062, %v1078
    %v1080 = vlaneseq
    %v1081 = vshrl.u32 %v1080, 7
    %v1082 = vsub.s32 4, %v1081
    %v1083 = vrot.slane %v1062, %v1082
    %v1084 = vlaneseq
    %v1085 = vshrl.u32 %v1084, 7
    %v1086 = vsub.s32 5, %v1085
    %v1087 = vrot.slane %v1062, %v1086
    %v1346 = vunpack.c.l.b16 %v810
    %v1347 = vunpack.c.h.b16 %v810
    %v1348 = vunpack.c.l.b16 %v811
    %v1349 = vunpack.c.h.b16 %v811
    %v1350 = vunpack.c.l.b16 %v812
    %v1351 = vunpack.c.h.b16 %v812
    %v1352 = vunpack.c.l.b16 %v813
    %v1353 = vunpack.c.h.b16 %v813
    %v1354 = vunpack.c.l.b16 %v814
    %v1355 = vunpack.c.h.b16 %v814
    %v1356 = vunpack.c.l.b16 %v815
    %v1357 = vunpack.c.h.b16 %v815
    %v1358 = vunpack.c.l.b16 %v816
    %v1359 = vunpack.c.h.b16 %v816
    %v1360 = vunpack.c.l.b16 %v817
    %v1361 = vunpack.c.h.b16 %v817
    %v1362 = vunpack.c.l.b16 %v818
    %v1363 = vunpack.c.h.b16 %v818
    %v1364 = vunpack.c.l.b16 %v819
    %v1365 = vunpack.c.h.b16 %v819
    %v1366 = vunpack.c.l.b16 %v820
    %v1367 = vunpack.c.h.b16 %v820
    %v1368 = vunpack.c.l.b16 %v821
    %v1369 = vunpack.c.h.b16 %v821
    %v1370 = vunpack.c.l.b16 %v822
    %v1371 = vunpack.c.h.b16 %v822
    %v1372 = vunpack.c.l.b16 %v823
    %v1373 = vunpack.c.h.b16 %v823
    %v1374 = vunpack.c.l.b16 %v824
    %v1375 = vunpack.c.h.b16 %v824
    %v1376 = vunpack.c.l.b16 %v825
    %v1377 = vunpack.c.h.b16 %v825
    %v1378 = vunpack.c.l.b16 %v826
    %v1379 = vunpack.c.h.b16 %v826
    %v1380 = vunpack.c.l.b16 %v827
    %v1381 = vunpack.c.h.b16 %v827
    %v1382 = vunpack.c.l.b16 %v828
    %v1383 = vunpack.c.h.b16 %v828
    %v1384 = vunpack.c.l.b16 %v829
    %v1385 = vunpack.c.h.b16 %v829
    %v1386 = vunpack.c.l.b16 %v830
    %v1387 = vunpack.c.h.b16 %v830
    %v1388 = vunpack.c.l.b16 %v831
    %v1389 = vunpack.c.h.b16 %v831
    %v1390 = vunpack.c.l.b16 %v832
    %v1391 = vunpack.c.h.b16 %v832
    %v1392 = vunpack.c.l.b16 %v833
    %v1393 = vunpack.c.h.b16 %v833
    %v1394 = vunpack.c.l.b16 %v834
    %v1395 = vunpack.c.h.b16 %v834
    %v1396 = vunpack.c.l.b16 %v835
    %v1397 = vunpack.c.h.b16 %v835
    %v1398 = vunpack.c.l.b16 %v836
    %v1399 = vunpack.c.h.b16 %v836
    %v1400 = vunpack.c.l.b16 %v837
    %v1401 = vunpack.c.h.b16 %v837
    %v1402 = vunpack.c.l.b16 %v838
    %v1403 = vunpack.c.h.b16 %v838
    %v1404 = vunpack.c.l.b16 %v839
    %v1405 = vunpack.c.h.b16 %v839
    %v1406 = vunpack.c.l.b16 %v840
    %v1407 = vunpack.c.h.b16 %v840
    %v1408 = vunpack.c.l.b16 %v841
    %v1409 = vunpack.c.h.b16 %v841
    %v1410 = vunpack.c.l.b16 %v842
    %v1411 = vunpack.c.h.b16 %v842
    %v1412 = vunpack.c.l.b16 %v843
    %v1413 = vunpack.c.h.b16 %v843
    %v1414 = vunpack.c.l.b16 %v844
    %v1415 = vunpack.c.h.b16 %v844
    %v1416 = vunpack.c.l.b16 %v845
    %v1417 = vunpack.c.h.b16 %v845
    %v1418 = vunpack.c.l.b16 %v846
    %v1419 = vunpack.c.h.b16 %v846
    %v1420 = vunpack.c.l.b16 %v847
    %v1421 = vunpack.c.h.b16 %v847
    %v1422 = vunpack.c.l.b16 %v848
    %v1423 = vunpack.c.h.b16 %v848
    %v1424 = vunpack.c.l.b16 %v849
    %v1425 = vunpack.c.h.b16 %v849
    %v1426 = vunpack.c.l.b16 %v850
    %v1427 = vunpack.c.h.b16 %v850
    %v1428 = vunpack.c.l.b16 %v851
    %v1429 = vunpack.c.h.b16 %v851
    %v1430 = vunpack.c.l.b16 %v852
    %v1431 = vunpack.c.h.b16 %v852
    %v1432 = vunpack.c.l.b16 %v853
    %v1433 = vunpack.c.h.b16 %v853
    %v1434 = vunpack.c.l.b16 %v854
    %v1435 = vunpack.c.h.b16 %v854
    %v1436 = vunpack.c.l.b16 %v855
    %v1437 = vunpack.c.h.b16 %v855
    %v1438 = vunpack.c.l.b16 %v856
    %v1439 = vunpack.c.h.b16 %v856
    %v1440 = vunpack.c.l.b16 %v857
    %v1441 = vunpack.c.h.b16 %v857
    %v1442 = vunpack.c.l.b16 %v858
    %v1443 = vunpack.c.h.b16 %v858
    %v1444 = vunpack.c.l.b16 %v859
    %v1445 = vunpack.c.h.b16 %v859
    %v1446 = vunpack.c.l.b16 %v860
    %v1447 = vunpack.c.h.b16 %v860
    %v1448 = vunpack.c.l.b16 %v861
    %v1449 = vunpack.c.h.b16 %v861
    %v1450 = vunpack.c.l.b16 %v862
    %v1451 = vunpack.c.h.b16 %v862
    %v1452 = vunpack.c.l.b16 %v863
    %v1453 = vunpack.c.h.b16 %v863
    %v1454 = vunpack.c.l.b16 %v864
    %v1455 = vunpack.c.h.b16 %v864
    %v1456 = vunpack.c.l.b16 %v865
    %v1457 = vunpack.c.h.b16 %v865
    %v1458 = vunpack.c.l.b16 %v866
    %v1459 = vunpack.c.h.b16 %v866
    %v1460 = vunpack.c.l.b16 %v867
    %v1461 = vunpack.c.h.b16 %v867
    %v1462 = vunpack.c.l.b16 %v868
    %v1463 = vunpack.c.h.b16 %v868
    %v1464 = vunpack.c.l.b16 %v869
    %v1465 = vunpack.c.h.b16 %v869
    %v1466 = vunpack.c.l.b16 %v870
    %v1467 = vunpack.c.h.b16 %v870
    %v1468 = vunpack.c.l.b16 %v871
    %v1469 = vunpack.c.h.b16 %v871
    %v1470 = vunpack.c.l.b16 %v872
    %v1471 = vunpack.c.h.b16 %v872
    %v1472 = vunpack.c.l.b16 %v873
    %v1473 = vunpack.c.h.b16 %v873
    %v1474 = vunpack.c.l.b16 %v874
    %v1475 = vunpack.c.h.b16 %v874
    %v1476 = vunpack.c.l.b16 %v875
    %v1477 = vunpack.c.h.b16 %v875
    %v1478 = vunpack.c.l.b16 %v876
    %v1479 = vunpack.c.h.b16 %v876
    %v1480 = vunpack.c.l.b16 %v877
    %v1481 = vunpack.c.h.b16 %v877
    %v1482 = vunpack.c.l.b16 %v878
    %v1483 = vunpack.c.h.b16 %v878
    %v1484 = vunpack.c.l.b16 %v879
    %v1485 = vunpack.c.h.b16 %v879
    %v1486 = vunpack.c.l.b16 %v880
    %v1487 = vunpack.c.h.b16 %v880
    %v1488 = vunpack.c.l.b16 %v881
    %v1489 = vunpack.c.h.b16 %v881
    %v1490 = vunpack.c.l.b16 %v882
    %v1491 = vunpack.c.h.b16 %v882
    %v1492 = vunpack.c.l.b16 %v883
    %v1493 = vunpack.c.h.b16 %v883
    %v1494 = vunpack.c.l.b16 %v884
    %v1495 = vunpack.c.h.b16 %v884
    %v1496 = vunpack.c.l.b16 %v885
    %v1497 = vunpack.c.h.b16 %v885
    %v1498 = vunpack.c.l.b16 %v886
    %v1499 = vunpack.c.h.b16 %v886
    %v1500 = vunpack.c.l.b16 %v887
    %v1501 = vunpack.c.h.b16 %v887
    %v1502 = vunpack.c.l.b16 %v888
    %v1503 = vunpack.c.h.b16 %v888
    %v1504 = vunpack.c.l.b16 %v889
    %v1505 = vunpack.c.h.b16 %v889
    %v1506 = vunpack.c.l.b16 %v890
    %v1507 = vunpack.c.h.b16 %v890
    %v1508 = vunpack.c.l.b16 %v891
    %v1509 = vunpack.c.h.b16 %v891
    %v1510 = vunpack.c.l.b16 %v892
    %v1511 = vunpack.c.h.b16 %v892
    %v1512 = vunpack.c.l.b16 %v893
    %v1513 = vunpack.c.h.b16 %v893
    %v1514 = vunpack.c.l.b16 %v894
    %v1515 = vunpack.c.h.b16 %v894
    %v1516 = vunpack.c.l.b16 %v895
    %v1517 = vunpack.c.h.b16 %v895
    %v1518 = vunpack.c.l.b16 %v896
    %v1519 = vunpack.c.h.b16 %v896
    %v1520 = vunpack.c.l.b16 %v897
    %v1521 = vunpack.c.h.b16 %v897
    %v1522 = vunpack.c.l.b16 %v898
    %v1523 = vunpack.c.h.b16 %v898
    %v1524 = vunpack.c.l.b16 %v899
    %v1525 = vunpack.c.h.b16 %v899
    %v1526 = vunpack.c.l.b16 %v900
    %v1527 = vunpack.c.h.b16 %v900
    %v1528 = vunpack.c.l.b16 %v901
    %v1529 = vunpack.c.h.b16 %v901
    %v1530 = vunpack.c.l.b16 %v902
    %v1531 = vunpack.c.h.b16 %v902
    %v1532 = vunpack.c.l.b16 %v903
    %v1533 = vunpack.c.h.b16 %v903
    %v1534 = vunpack.c.l.b16 %v904
    %v1535 = vunpack.c.h.b16 %v904
    %v1536 = vunpack.c.l.b16 %v905
    %v1537 = vunpack.c.h.b16 %v905
    %v1538 = vunpack.c.l.b16 %v906
    %v1539 = vunpack.c.h.b16 %v906
    %v1540 = vunpack.c.l.b16 %v907
    %v1541 = vunpack.c.h.b16 %v907
    %v1542 = vunpack.c.l.b16 %v908
    %v1543 = vunpack.c.h.b16 %v908
    %v1544 = vunpack.c.l.b16 %v909
    %v1545 = vunpack.c.h.b16 %v909
    %v1546 = vunpack.c.l.b16 %v910
    %v1547 = vunpack.c.h.b16 %v910
    %v1548 = vunpack.c.l.b16 %v911
    %v1549 = vunpack.c.h.b16 %v911
    %v1550 = vunpack.c.l.b16 %v912
    %v1551 = vunpack.c.h.b16 %v912
    %v1552 = vunpack.c.l.b16 %v913
    %v1553 = vunpack.c.h.b16 %v913
    %v1554 = vunpack.c.l.b16 %v914
    %v1555 = vunpack.c.h.b16 %v914
    %v1556 = vunpack.c.l.b16 %v915
    %v1557 = vunpack.c.h.b16 %v915
    %v1558 = vunpack.c.l.b16 %v916
    %v1559 = vunpack.c.h.b16 %v916
    %v1560 = vunpack.c.l.b16 %v917
    %v1561 = vunpack.c.h.b16 %v917
    %v1562 = vunpack.c.l.b16 %v918
    %v1563 = vunpack.c.h.b16 %v918
    %v1564 = vunpack.c.l.b16 %v919
    %v1565 = vunpack.c.h.b16 %v919
    %v1566 = vunpack.c.l.b16 %v920
    %v1567 = vunpack.c.h.b16 %v920
    %v1568 = vunpack.c.l.b16 %v921
    %v1569 = vunpack.c.h.b16 %v921
    %v1570 = vunpack.c.l.b16 %v922
    %v1571 = vunpack.c.h.b16 %v922
    %v1572 = vunpack.c.l.b16 %v923
    %v1573 = vunpack.c.h.b16 %v923
    %v1574 = vunpack.c.l.b16 %v924
    %v1575 = vunpack.c.h.b16 %v924
    %v1576 = vunpack.c.l.b16 %v925
    %v1577 = vunpack.c.h.b16 %v925
    %v1578 = vunpack.c.l.b16 %v926
    %v1579 = vunpack.c.h.b16 %v926
    %v1580 = vunpack.c.l.b16 %v927
    %v1581 = vunpack.c.h.b16 %v927
    %v1582 = vunpack.c.l.b16 %v928
    %v1583 = vunpack.c.h.b16 %v928
    %v1584 = vunpack.c.l.b16 %v929
    %v1585 = vunpack.c.h.b16 %v929
    %v1586 = vunpack.c.l.b16 %v930
    %v1587 = vunpack.c.h.b16 %v930
    %v1588 = vunpack.c.l.b16 %v931
    %v1589 = vunpack.c.h.b16 %v931
    %v1590 = vunpack.c.l.b16 %v932
    %v1591 = vunpack.c.h.b16 %v932
    %v1592 = vunpack.c.l.b16 %v933
    %v1593 = vunpack.c.h.b16 %v933
    %v1594 = vunpack.c.l.b16 %v934
    %v1595 = vunpack.c.h.b16 %v934
    %v1596 = vunpack.c.l.b16 %v935
    %v1597 = vunpack.c.h.b16 %v935
    %v1598 = vunpack.c.l.b16 %v936
    %v1599 = vunpack.c.h.b16 %v936
    %v1600 = vunpack.c.l.b16 %v937
    %v1601 = vunpack.c.h.b16 %v937
    %v1602 = vunpack.c.l.b16 %v938
    %v1603 = vunpack.c.h.b16 %v938
    %v1604 = vunpack.c.l.b16 %v939
    %v1605 = vunpack.c.h.b16 %v939
    %v1606 = vunpack.c.l.b16 %v940
    %v1607 = vunpack.c.h.b16 %v940
    %v1608 = vunpack.c.l.b16 %v941
    %v1609 = vunpack.c.h.b16 %v941
    %v1610 = vunpack.c.l.b16 %v942
    %v1611 = vunpack.c.h.b16 %v942
    %v1612 = vunpack.c.l.b16 %v943
    %v1613 = vunpack.c.h.b16 %v943
    %v1614 = vunpack.c.l.b16 %v944
    %v1615 = vunpack.c.h.b16 %v944
    %v1616 = vunpack.c.l.b16 %v945
    %v1617 = vunpack.c.h.b16 %v945
    %v1618 = vunpack.c.l.b16 %v946
    %v1619 = vunpack.c.h.b16 %v946
    %v1620 = vunpack.c.l.b16 %v947
    %v1621 = vunpack.c.h.b16 %v947
    %v1622 = vunpack.c.l.b16 %v948
    %v1623 = vunpack.c.h.b16 %v948
    %v1624 = vunpack.c.l.b16 %v949
    %v1625 = vunpack.c.h.b16 %v949
    %v1626 = vunpack.c.l.b16 %v950
    %v1627 = vunpack.c.h.b16 %v950
    %v1628 = vunpack.c.l.b16 %v951
    %v1629 = vunpack.c.h.b16 %v951
    %v1630 = vunpack.c.l.b16 %v952
    %v1631 = vunpack.c.h.b16 %v952
    %v1632 = vunpack.c.l.b16 %v953
    %v1633 = vunpack.c.h.b16 %v953
    %v1634 = vunpack.c.l.b16 %v954
    %v1635 = vunpack.c.h.b16 %v954
    %v1636 = vunpack.c.l.b16 %v955
    %v1637 = vunpack.c.h.b16 %v955
    %v1638 = vunpack.c.l.b16 %v956
    %v1639 = vunpack.c.h.b16 %v956
    %v1640 = vunpack.c.l.b16 %v957
    %v1641 = vunpack.c.h.b16 %v957
    %v1642 = vunpack.c.l.b16 %v958
    %v1643 = vunpack.c.h.b16 %v958
    %v1644 = vunpack.c.l.b16 %v959
    %v1645 = vunpack.c.h.b16 %v959
    %v1646 = vunpack.c.l.b16 %v960
    %v1647 = vunpack.c.h.b16 %v960
    %v1648 = vunpack.c.l.b16 %v961
    %v1649 = vunpack.c.h.b16 %v961
    %v1650 = vunpack.c.l.b16 %v962
    %v1651 = vunpack.c.h.b16 %v962
    %v1652 = vunpack.c.l.b16 %v963
    %v1653 = vunpack.c.h.b16 %v963
    %v1654 = vunpack.c.l.b16 %v964
    %v1655 = vunpack.c.h.b16 %v964
    %v1656 = vunpack.c.l.b16 %v965
    %v1657 = vunpack.c.h.b16 %v965
    %v1658 = vunpack.c.l.b16 %v966
    %v1659 = vunpack.c.h.b16 %v966
    %v1660 = vunpack.c.l.b16 %v967
    %v1661 = vunpack.c.h.b16 %v967
    %v1662 = vunpack.c.l.b16 %v968
    %v1663 = vunpack.c.h.b16 %v968
    %v1664 = vunpack.c.l.b16 %v969
    %v1665 = vunpack.c.h.b16 %v969
    %v1666 = vunpack.c.l.b16 %v970
    %v1667 = vunpack.c.h.b16 %v970
    %v1668 = vunpack.c.l.b16 %v971
    %v1669 = vunpack.c.h.b16 %v971
    %v1670 = vunpack.c.l.b16 %v972
    %v1671 = vunpack.c.h.b16 %v972
    %v1672 = vunpack.c.l.b16 %v973
    %v1673 = vunpack.c.h.b16 %v973
    %v1674 = vunpack.c.l.b16 %v974
    %v1675 = vunpack.c.h.b16 %v974
    %v1676 = vunpack.c.l.b16 %v975
    %v1677 = vunpack.c.h.b16 %v975
    %v1678 = vunpack.c.l.b16 %v976
    %v1679 = vunpack.c.h.b16 %v976
    %v1680 = vunpack.c.l.b16 %v977
    %v1681 = vunpack.c.h.b16 %v977
    %v1682 = vunpack.c.l.b16 %v978
    %v1683 = vunpack.c.h.b16 %v978
    %v1684 = vunpack.c.l.b16 %v979
    %v1685 = vunpack.c.h.b16 %v979
    %v1686 = vunpack.c.l.b16 %v980
    %v1687 = vunpack.c.h.b16 %v980
    %v1688 = vunpack.c.l.b16 %v981
    %v1689 = vunpack.c.h.b16 %v981
    %v1690 = vunpack.c.l.b16 %v982
    %v1691 = vunpack.c.h.b16 %v982
    %v1692 = vunpack.c.l.b16 %v983
    %v1693 = vunpack.c.h.b16 %v983
    %v1694 = vunpack.c.l.b16 %v984
    %v1695 = vunpack.c.h.b16 %v984
    %v1696 = vunpack.c.l.b16 %v985
    %v1697 = vunpack.c.h.b16 %v985
    %v1698 = vunpack.c.l.b16 %v986
    %v1699 = vunpack.c.h.b16 %v986
    %v1700 = vunpack.c.l.b16 %v987
    %v1701 = vunpack.c.h.b16 %v987
    %v1702 = vunpack.c.l.b16 %v988
    %v1703 = vunpack.c.h.b16 %v988
    %v1704 = vunpack.c.l.b16 %v989
    %v1705 = vunpack.c.h.b16 %v989
    %v1706 = vunpack.c.l.b16 %v990
    %v1707 = vunpack.c.h.b16 %v990
    %v1708 = vunpack.c.l.b16 %v991
    %v1709 = vunpack.c.h.b16 %v991
    %v1710 = vunpack.c.l.b16 %v992
    %v1711 = vunpack.c.h.b16 %v992
    %v1712 = vunpack.c.l.b16 %v993
    %v1713 = vunpack.c.h.b16 %v993
    %v1714 = vunpack.c.l.b16 %v994
    %v1715 = vunpack.c.h.b16 %v994
    %v1716 = vunpack.c.l.b16 %v995
    %v1717 = vunpack.c.h.b16 %v995
    %v1718 = vunpack.c.l.b16 %v996
    %v1719 = vunpack.c.h.b16 %v996
    %v1720 = vunpack.c.l.b16 %v997
    %v1721 = vunpack.c.h.b16 %v997
    %v1722 = vunpack.c.l.b16 %v998
    %v1723 = vunpack.c.h.b16 %v998
    %v1724 = vunpack.c.l.b16 %v999
    %v1725 = vunpack.c.h.b16 %v999
    %v1726 = vunpack.c.l.b16 %v1000
    %v1727 = vunpack.c.h.b16 %v1000
    %v1728 = vunpack.c.l.b16 %v1001
    %v1729 = vunpack.c.h.b16 %v1001
    %v1730 = vunpack.c.l.b16 %v1002
    %v1731 = vunpack.c.h.b16 %v1002
    %v1732 = vunpack.c.l.b16 %v1003
    %v1733 = vunpack.c.h.b16 %v1003
    %v1734 = vunpack.c.l.b16 %v1004
    %v1735 = vunpack.c.h.b16 %v1004
    %v1736 = vunpack.c.l.b16 %v1005
    %v1737 = vunpack.c.h.b16 %v1005
    %v1738 = vunpack.c.l.b16 %v1006
    %v1739 = vunpack.c.h.b16 %v1006
    %v1740 = vunpack.c.l.b16 %v1007
    %v1741 = vunpack.c.h.b16 %v1007
    %v1742 = vunpack.c.l.b16 %v1008
    %v1743 = vunpack.c.h.b16 %v1008
    %v1744 = vunpack.c.l.b16 %v1009
    %v1745 = vunpack.c.h.b16 %v1009
    %v1746 = vunpack.c.l.b16 %v1010
    %v1747 = vunpack.c.h.b16 %v1010
    %v1748 = vunpack.c.l.b16 %v1011
    %v1749 = vunpack.c.h.b16 %v1011
    %v1750 = vunpack.c.l.b16 %v1012
    %v1751 = vunpack.c.h.b16 %v1012
    %v1752 = vunpack.c.l.b16 %v1013
    %v1753 = vunpack.c.h.b16 %v1013
    %v1754 = vunpack.c.l.b16 %v1014
    %v1755 = vunpack.c.h.b16 %v1014
    %v1756 = vunpack.c.l.b16 %v1015
    %v1757 = vunpack.c.h.b16 %v1015
    %v1758 = vunpack.c.l.b16 %v1016
    %v1759 = vunpack.c.h.b16 %v1016
    %v1760 = vunpack.c.l.b16 %v1017
    %v1761 = vunpack.c.h.b16 %v1017
    %v1762 = vunpack.c.l.b16 %v1018
    %v1763 = vunpack.c.h.b16 %v1018
    %v1764 = vunpack.c.l.b16 %v1019
    %v1765 = vunpack.c.h.b16 %v1019
    %v1766 = vunpack.c.l.b16 %v1020
    %v1767 = vunpack.c.h.b16 %v1020
    %v1768 = vunpack.c.l.b16 %v1021
    %v1769 = vunpack.c.h.b16 %v1021
    %v1770 = vunpack.c.l.b16 %v1022
    %v1771 = vunpack.c.h.b16 %v1022
    %v1772 = vunpack.c.l.b16 %v1023
    %v1773 = vunpack.c.h.b16 %v1023
    %v1774 = vunpack.c.l.b16 %v1024
    %v1775 = vunpack.c.h.b16 %v1024
    %v1776 = vunpack.c.l.b16 %v1025
    %v1777 = vunpack.c.h.b16 %v1025
    %v1778 = vunpack.c.l.b16 %v1026
    %v1779 = vunpack.c.h.b16 %v1026
    %v1780 = vunpack.c.l.b16 %v1027
    %v1781 = vunpack.c.h.b16 %v1027
    %v1782 = vunpack.c.l.b16 %v1028
    %v1783 = vunpack.c.h.b16 %v1028
    %v1784 = vunpack.c.l.b16 %v1029
    %v1785 = vunpack.c.h.b16 %v1029
    %v1786 = vunpack.c.l.b16 %v1030
    %v1787 = vunpack.c.h.b16 %v1030
    %v1788 = vunpack.c.l.b16 %v1031
    %v1789 = vunpack.c.h.b16 %v1031
    %v1790 = vunpack.c.l.b16 %v1032
    %v1791 = vunpack.c.h.b16 %v1032
    %v1792 = vunpack.c.l.b16 %v1033
    %v1793 = vunpack.c.h.b16 %v1033
    %v1794 = vunpack.c.l.b16 %v1034
    %v1795 = vunpack.c.h.b16 %v1034
    %v1796 = vunpack.c.l.b16 %v1035
    %v1797 = vunpack.c.h.b16 %v1035
    %v1798 = vunpack.c.l.b16 %v1036
    %v1799 = vunpack.c.h.b16 %v1036
    %v1800 = vunpack.c.l.b16 %v1037
    %v1801 = vunpack.c.h.b16 %v1037
    %v1802 = vunpack.c.l.b16 %v1038
    %v1803 = vunpack.c.h.b16 %v1038
    %v1804 = vunpack.c.l.b16 %v1039
    %v1805 = vunpack.c.h.b16 %v1039
    %v1806 = vunpack.c.l.b16 %v1040
    %v1807 = vunpack.c.h.b16 %v1040
    %v1808 = vunpack.c.l.b16 %v1041
    %v1809 = vunpack.c.h.b16 %v1041
    %v1810 = vunpack.c.l.b16 %v1042
    %v1811 = vunpack.c.h.b16 %v1042
    %v1812 = vunpack.c.l.b16 %v1043
    %v1813 = vunpack.c.h.b16 %v1043
    %v1814 = vunpack.c.l.b16 %v1044
    %v1815 = vunpack.c.h.b16 %v1044
    %v1816 = vunpack.c.l.b16 %v1045
    %v1817 = vunpack.c.h.b16 %v1045
    %v1818 = vunpack.c.l.b16 %v1046
    %v1819 = vunpack.c.h.b16 %v1046
    %v1820 = vunpack.c.l.b16 %v1047
    %v1821 = vunpack.c.h.b16 %v1047
    %v1822 = vunpack.c.l.b16 %v1048
    %v1823 = vunpack.c.h.b16 %v1048
    %v1824 = vunpack.c.l.b16 %v1049
    %v1825 = vunpack.c.h.b16 %v1049
    %v1826 = vunpack.c.l.b16 %v1050
    %v1827 = vunpack.c.h.b16 %v1050
    %v1828 = vunpack.c.l.b16 %v1051
    %v1829 = vunpack.c.h.b16 %v1051
    %v1830 = vunpack.c.l.b16 %v1052
    %v1831 = vunpack.c.h.b16 %v1052
    %v1832 = vunpack.c.l.b16 %v1053
    %v1833 = vunpack.c.h.b16 %v1053
    %v1834 = vunpack.c.l.b16 %v1054
    %v1835 = vunpack.c.h.b16 %v1054
    %v1836 = vunpack.c.l.b16 %v1055
    %v1837 = vunpack.c.h.b16 %v1055
    %v1838 = vunpack.c.l.b16 %v1056
    %v1839 = vunpack.c.h.b16 %v1056
    %v1840 = vunpack.c.l.b16 %v1057
    %v1841 = vunpack.c.h.b16 %v1057
    %v1842 = vunpack.c.l.b16 %v1058
    %v1843 = vunpack.c.h.b16 %v1058
    %v1844 = vunpack.c.l.b16 %v1059
    %v1845 = vunpack.c.h.b16 %v1059
    %v1846 = vunpack.c.l.b16 %v1060
    %v1847 = vunpack.c.h.b16 %v1060
    %v1848 = vunpack.c.l.b16 %v1061
    %v1849 = vunpack.c.h.b16 %v1061
    %v1850 = vpack.c.b16 %v1352, %v1346
    %v1851 = vpack.c.b16 %v1353, %v1347
    %v1852 = vpack.c.b16 %v1354, %v1348
    %v1853 = vpack.c.b16 %v1355, %v1349
    %v1854 = vpack.c.b16 %v1356, %v1350
    %v1855 = vpack.c.b16 %v1357, %v1351
    %v1856 = vpack.c.b16 %v1364, %v1358
    %v1857 = vpack.c.b16 %v1365, %v1359
    %v1858 = vpack.c.b16 %v1366, %v1360
    %v1859 = vpack.c.b16 %v1367, %v1361
    %v1860 = vpack.c.b16 %v1368, %v1362
    %v1861 = vpack.c.b16 %v1369, %v1363
    %v1862 = vpack.c.b16 %v1376, %v1370
    %v1863 = vpack.c.b16 %v1377, %v1371
    %v1864 = vpack.c.b16 %v1378, %v1372
    %v1865 = vpack.c.b16 %v1379, %v1373
    %v1866 = vpack.c.b16 %v1380, %v1374
    %v1867 = vpack.c.b16 %v1381, %v1375
    %v1868 = vpack.c.b16 %v1388, %v1382
    %v1869 = vpack.c.b16 %v1389, %v1383
    %v1870 = vpack.c.b16 %v1390, %v1384
    %v1871 = vpack.c.b16 %v1391, %v1385
    %v1872 = vpack.c.b16 %v1392, %v1386
    %v1873 = vpack.c.b16 %v1393, %v1387
    %v1874 = vpack.c.b16 %v1400, %v1394
    %v1875 = vpack.c.b16 %v1401, %v1395
    %v1876 = vpack.c.b16 %v1402, %v1396
    %v1877 = vpack.c.b16 %v1403, %v1397
    %v1878 = vpack.c.b16 %v1404, %v1398
    %v1879 = vpack.c.b16 %v1405, %v1399
    %v1880 = vpack.c.b16 %v1412, %v1406
    %v1881 = vpack.c.b16 %v1413, %v1407
    %v1882 = vpack.c.b16 %v1414, %v1408
    %v1883 = vpack.c.b16 %v1415, %v1409
    %v1884 = vpack.c.b16 %v1416, %v1410
    %v1885 = vpack.c.b16 %v1417, %v1411
    %v1886 = vpack.c.b16 %v1424, %v1418
    %v1887 = vpack.c.b16 %v1425, %v1419
    %v1888 = vpack.c.b16 %v1426, %v1420
    %v1889 = vpack.c.b16 %v1427, %v1421
    %v1890 = vpack.c.b16 %v1428, %v1422
    %v1891 = vpack.c.b16 %v1429, %v1423
    %v1892 = vpack.c.b16 %v1436, %v1430
    %v1893 = vpack.c.b16 %v1437, %v1431
    %v1894 = vpack.c.b16 %v1438, %v1432
    %v1895 = vpack.c.b16 %v1439, %v1433
    %v1896 = vpack.c.b16 %v1440, %v1434
    %v1897 = vpack.c.b16 %v1441, %v1435
    %v1898 = vpack.c.b16 %v1448, %v1442
    %v1899 = vpack.c.b16 %v1449, %v1443
    %v1900 = vpack.c.b16 %v1450, %v1444
    %v1901 = vpack.c.b16 %v1451, %v1445
    %v1902 = vpack.c.b16 %v1452, %v1446
    %v1903 = vpack.c.b16 %v1453, %v1447
    %v1904 = vpack.c.b16 %v1460, %v1454
    %v1905 = vpack.c.b16 %v1461, %v1455
    %v1906 = vpack.c.b16 %v1462, %v1456
    %v1907 = vpack.c.b16 %v1463, %v1457
    %v1908 = vpack.c.b16 %v1464, %v1458
    %v1909 = vpack.c.b16 %v1465, %v1459
    %v1910 = vpack.c.b16 %v1472, %v1466
    %v1911 = vpack.c.b16 %v1473, %v1467
    %v1912 = vpack.c.b16 %v1474, %v1468
    %v1913 = vpack.c.b16 %v1475, %v1469
    %v1914 = vpack.c.b16 %v1476, %v1470
    %v1915 = vpack.c.b16 %v1477, %v1471
    %v1916 = vpack.c.b16 %v1484, %v1478
    %v1917 = vpack.c.b16 %v1485, %v1479
    %v1918 = vpack.c.b16 %v1486, %v1480
    %v1919 = vpack.c.b16 %v1487, %v1481
    %v1920 = vpack.c.b16 %v1488, %v1482
    %v1921 = vpack.c.b16 %v1489, %v1483
    %v1922 = vpack.c.b16 %v1496, %v1490
    %v1923 = vpack.c.b16 %v1497, %v1491
    %v1924 = vpack.c.b16 %v1498, %v1492
    %v1925 = vpack.c.b16 %v1499, %v1493
    %v1926 = vpack.c.b16 %v1500, %v1494
    %v1927 = vpack.c.b16 %v1501, %v1495
    %v1928 = vpack.c.b16 %v1508, %v1502
    %v1929 = vpack.c.b16 %v1509, %v1503
    %v1930 = vpack.c.b16 %v1510, %v1504
    %v1931 = vpack.c.b16 %v1511, %v1505
    %v1932 = vpack.c.b16 %v1512, %v1506
    %v1933 = vpack.c.b16 %v1513, %v1507
    %v1934 = vpack.c.b16 %v1520, %v1514
    %v1935 = vpack.c.b16 %v1521, %v1515
    %v1936 = vpack.c.b16 %v1522, %v1516
    %v1937 = vpack.c.b16 %v1523, %v1517
    %v1938 = vpack.c.b16 %v1524, %v1518
    %v1939 = vpack.c.b16 %v1525, %v1519
    %v1940 = vpack.c.b16 %v1532, %v1526
    %v1941 = vpack.c.b16 %v1533, %v1527
    %v1942 = vpack.c.b16 %v1534, %v1528
    %v1943 = vpack.c.b16 %v1535, %v1529
    %v1944 = vpack.c.b16 %v1536, %v1530
    %v1945 = vpack.c.b16 %v1537, %v1531
    %v1946 = vpack.c.b16 %v1544, %v1538
    %v1947 = vpack.c.b16 %v1545, %v1539
    %v1948 = vpack.c.b16 %v1546, %v1540
    %v1949 = vpack.c.b16 %v1547, %v1541
    %v1950 = vpack.c.b16 %v1548, %v1542
    %v1951 = vpack.c.b16 %v1549, %v1543
    %v1952 = vpack.c.b16 %v1556, %v1550
    %v1953 = vpack.c.b16 %v1557, %v1551
    %v1954 = vpack.c.b16 %v1558, %v1552
    %v1955 = vpack.c.b16 %v1559, %v1553
    %v1956 = vpack.c.b16 %v1560, %v1554
    %v1957 = vpack.c.b16 %v1561, %v1555
    %v1958 = vpack.c.b16 %v1568, %v1562
    %v1959 = vpack.c.b16 %v1569, %v1563
    %v1960 = vpack.c.b16 %v1570, %v1564
    %v1961 = vpack.c.b16 %v1571, %v1565
    %v1962 = vpack.c.b16 %v1572, %v1566
    %v1963 = vpack.c.b16 %v1573, %v1567
    %v1964 = vpack.c.b16 %v1580, %v1574
    %v1965 = vpack.c.b16 %v1581, %v1575
    %v1966 = vpack.c.b16 %v1582, %v1576
    %v1967 = vpack.c.b16 %v1583, %v1577
    %v1968 = vpack.c.b16 %v1584, %v1578
    %v1969 = vpack.c.b16 %v1585, %v1579
    %v1970 = vpack.c.b16 %v1592, %v1586
    %v1971 = vpack.c.b16 %v1593, %v1587
    %v1972 = vpack.c.b16 %v1594, %v1588
    %v1973 = vpack.c.b16 %v1595, %v1589
    %v1974 = vpack.c.b16 %v1596, %v1590
    %v1975 = vpack.c.b16 %v1597, %v1591
    %v1976 = vpack.c.b16 %v1604, %v1598
    %v1977 = vpack.c.b16 %v1605, %v1599
    %v1978 = vpack.c.b16 %v1606, %v1600
    %v1979 = vpack.c.b16 %v1607, %v1601
    %v1980 = vpack.c.b16 %v1608, %v1602
    %v1981 = vpack.c.b16 %v1609, %v1603
    %v1982 = vpack.c.b16 %v1616, %v1610
    %v1983 = vpack.c.b16 %v1617, %v1611
    %v1984 = vpack.c.b16 %v1618, %v1612
    %v1985 = vpack.c.b16 %v1619, %v1613
    %v1986 = vpack.c.b16 %v1620, %v1614
    %v1987 = vpack.c.b16 %v1621, %v1615
    %v1988 = vpack.c.b16 %v1628, %v1622
    %v1989 = vpack.c.b16 %v1629, %v1623
    %v1990 = vpack.c.b16 %v1630, %v1624
    %v1991 = vpack.c.b16 %v1631, %v1625
    %v1992 = vpack.c.b16 %v1632, %v1626
    %v1993 = vpack.c.b16 %v1633, %v1627
    %v1994 = vpack.c.b16 %v1640, %v1634
    %v1995 = vpack.c.b16 %v1641, %v1635
    %v1996 = vpack.c.b16 %v1642, %v1636
    %v1997 = vpack.c.b16 %v1643, %v1637
    %v1998 = vpack.c.b16 %v1644, %v1638
    %v1999 = vpack.c.b16 %v1645, %v1639
    %v2000 = vpack.c.b16 %v1652, %v1646
    %v2001 = vpack.c.b16 %v1653, %v1647
    %v2002 = vpack.c.b16 %v1654, %v1648
    %v2003 = vpack.c.b16 %v1655, %v1649
    %v2004 = vpack.c.b16 %v1656, %v1650
    %v2005 = vpack.c.b16 %v1657, %v1651
    %v2006 = vpack.c.b16 %v1664, %v1658
    %v2007 = vpack.c.b16 %v1665, %v1659
    %v2008 = vpack.c.b16 %v1666, %v1660
    %v2009 = vpack.c.b16 %v1667, %v1661
    %v2010 = vpack.c.b16 %v1668, %v1662
    %v2011 = vpack.c.b16 %v1669, %v1663
    %v2012 = vpack.c.b16 %v1676, %v1670
    %v2013 = vpack.c.b16 %v1677, %v1671
    %v2014 = vpack.c.b16 %v1678, %v1672
    %v2015 = vpack.c.b16 %v1679, %v1673
    %v2016 = vpack.c.b16 %v1680, %v1674
    %v2017 = vpack.c.b16 %v1681, %v1675
    %v2018 = vpack.c.b16 %v1688, %v1682
    %v2019 = vpack.c.b16 %v1689, %v1683
    %v2020 = vpack.c.b16 %v1690, %v1684
    %v2021 = vpack.c.b16 %v1691, %v1685
    %v2022 = vpack.c.b16 %v1692, %v1686
    %v2023 = vpack.c.b16 %v1693, %v1687
    %v2024 = vpack.c.b16 %v1700, %v1694
    %v2025 = vpack.c.b16 %v1701, %v1695
    %v2026 = vpack.c.b16 %v1702, %v1696
    %v2027 = vpack.c.b16 %v1703, %v1697
    %v2028 = vpack.c.b16 %v1704, %v1698
    %v2029 = vpack.c.b16 %v1705, %v1699
    %v2030 = vpack.c.b16 %v1712, %v1706
    %v2031 = vpack.c.b16 %v1713, %v1707
    %v2032 = vpack.c.b16 %v1714, %v1708
    %v2033 = vpack.c.b16 %v1715, %v1709
    %v2034 = vpack.c.b16 %v1716, %v1710
    %v2035 = vpack.c.b16 %v1717, %v1711
    %v2036 = vpack.c.b16 %v1724, %v1718
    %v2037 = vpack.c.b16 %v1725, %v1719
    %v2038 = vpack.c.b16 %v1726, %v1720
    %v2039 = vpack.c.b16 %v1727, %v1721
    %v2040 = vpack.c.b16 %v1728, %v1722
    %v2041 = vpack.c.b16 %v1729, %v1723
    %v2042 = vpack.c.b16 %v1736, %v1730
    %v2043 = vpack.c.b16 %v1737, %v1731
    %v2044 = vpack.c.b16 %v1738, %v1732
    %v2045 = vpack.c.b16 %v1739, %v1733
    %v2046 = vpack.c.b16 %v1740, %v1734
    %v2047 = vpack.c.b16 %v1741, %v1735
    %v2048 = vpack.c.b16 %v1748, %v1742
    %v2049 = vpack.c.b16 %v1749, %v1743
    %v2050 = vpack.c.b16 %v1750, %v1744
    %v2051 = vpack.c.b16 %v1751, %v1745
    %v2052 = vpack.c.b16 %v1752, %v1746
    %v2053 = vpack.c.b16 %v1753, %v1747
    %v2054 = vpack.c.b16 %v1760, %v1754
    %v2055 = vpack.c.b16 %v1761, %v1755
    %v2056 = vpack.c.b16 %v1762, %v1756
    %v2057 = vpack.c.b16 %v1763, %v1757
    %v2058 = vpack.c.b16 %v1764, %v1758
    %v2059 = vpack.c.b16 %v1765, %v1759
    %v2060 = vpack.c.b16 %v1772, %v1766
    %v2061 = vpack.c.b16 %v1773, %v1767
    %v2062 = vpack.c.b16 %v1774, %v1768
    %v2063 = vpack.c.b16 %v1775, %v1769
    %v2064 = vpack.c.b16 %v1776, %v1770
    %v2065 = vpack.c.b16 %v1777, %v1771
    %v2066 = vpack.c.b16 %v1784, %v1778
    %v2067 = vpack.c.b16 %v1785, %v1779
    %v2068 = vpack.c.b16 %v1786, %v1780
    %v2069 = vpack.c.b16 %v1787, %v1781
    %v2070 = vpack.c.b16 %v1788, %v1782
    %v2071 = vpack.c.b16 %v1789, %v1783
    %v2072 = vpack.c.b16 %v1796, %v1790
    %v2073 = vpack.c.b16 %v1797, %v1791
    %v2074 = vpack.c.b16 %v1798, %v1792
    %v2075 = vpack.c.b16 %v1799, %v1793
    %v2076 = vpack.c.b16 %v1800, %v1794
    %v2077 = vpack.c.b16 %v1801, %v1795
    %v2078 = vpack.c.b16 %v1808, %v1802
    %v2079 = vpack.c.b16 %v1809, %v1803
    %v2080 = vpack.c.b16 %v1810, %v1804
    %v2081 = vpack.c.b16 %v1811, %v1805
    %v2082 = vpack.c.b16 %v1812, %v1806
    %v2083 = vpack.c.b16 %v1813, %v1807
    %v2084 = vpack.c.b16 %v1820, %v1814
    %v2085 = vpack.c.b16 %v1821, %v1815
    %v2086 = vpack.c.b16 %v1822, %v1816
    %v2087 = vpack.c.b16 %v1823, %v1817
    %v2088 = vpack.c.b16 %v1824, %v1818
    %v2089 = vpack.c.b16 %v1825, %v1819
    %v2090 = vpack.c.b16 %v1832, %v1826
    %v2091 = vpack.c.b16 %v1833, %v1827
    %v2092 = vpack.c.b16 %v1834, %v1828
    %v2093 = vpack.c.b16 %v1835, %v1829
    %v2094 = vpack.c.b16 %v1836, %v1830
    %v2095 = vpack.c.b16 %v1837, %v1831
    %v2096 = vpack.c.b16 %v1844, %v1838
    %v2097 = vpack.c.b16 %v1845, %v1839
    %v2098 = vpack.c.b16 %v1846, %v1840
    %v2099 = vpack.c.b16 %v1847, %v1841
    %v2100 = vpack.c.b16 %v1848, %v1842
    %v2101 = vpack.c.b16 %v1849, %v1843
    %vm2354 = vcmask 261120
    %v2356 = vsel %vm2354, %v809, 0
    %2358 = vmatprep.subr.bf16.mxu0 %v1851
    %2359 = vmatpush1.bf16.msra.mxu0 %v1850
    %2360 = vmatprep.subr.bf16.mxu0 %v1857
    %2361 = vmatpush1.bf16.msra.mxu0 %v1856
    %2362 = vmatprep.subr.bf16.mxu0 %v1863
    %2363 = vmatpush1.bf16.msra.mxu0 %v1862
    %2364 = vmatprep.subr.bf16.mxu0 %v1869
    %2365 = vmatpush1.bf16.msra.mxu0 %v1868
    %2366 = vmatprep.subr.bf16.mxu0 %v1875
    %2367 = vmatpush1.bf16.msra.mxu0 %v1874
    %2368 = vmatprep.subr.bf16.mxu0 %v1881
    %2369 = vmatpush1.bf16.msra.mxu0 %v1880
    %2370 = vmatprep.subr.bf16.mxu0 %v1887
    %2371 = vmatpush1.bf16.msra.mxu0 %v1886
    %2372 = vmatprep.subr.bf16.mxu0 %v1893
    %2373 = vmatpush1.bf16.msra.mxu0 %v1892
    %2374 = vmatprep.subr.bf16.mxu0 %v1899
    %2375 = vmatpush1.bf16.msra.mxu0 %v1898
    %2376 = vmatprep.subr.bf16.mxu0 %v1905
    %2377 = vmatpush1.bf16.msra.mxu0 %v1904
    %2378 = vmatprep.subr.bf16.mxu0 %v1911
    %2379 = vmatpush1.bf16.msra.mxu0 %v1910
    %2380 = vmatprep.subr.bf16.mxu0 %v1917
    %2381 = vmatpush1.bf16.msra.mxu0 %v1916
    %2382 = vmatprep.subr.bf16.mxu0 %v1923
    %2383 = vmatpush1.bf16.msra.mxu0 %v1922
    %2384 = vmatprep.subr.bf16.mxu0 %v1929
    %2385 = vmatpush1.bf16.msra.mxu0 %v1928
    %2386 = vmatprep.subr.bf16.mxu0 %v1935
    %2387 = vmatpush1.bf16.msra.mxu0 %v1934
    %2388 = vmatprep.subr.bf16.mxu0 %v1941
    %2389 = vmatpush1.bf16.msra.mxu0 %v1940
    %2390 = vmatprep.mubr.bf16.mxu0 %v805
    %2391 = vmatmul.mubr.bf16.gmra.mrb[0].mxu0 %v804
    %v2392 = vpop.f32.mrb[0].mxu0
    %v2393 = vadd.f32 %v1067, %v2392
    %v2394 = vpop.f32.mrb[0].mxu0
    %v2395 = vadd.f32 %v1071, %v2394
    %v2396 = vpop.f32.mrb[0].mxu0
    %v2397 = vpop.f32.mrb[0].mxu0
    %2398 = vdwg.mxu0
    %2399 = vmatprep.subr.bf16.mxu0 %v1947
    %2400 = vmatpush1.bf16.msra.mxu0 %v1946
    %2401 = vmatprep.subr.bf16.mxu0 %v1953
    %2402 = vmatpush1.bf16.msra.mxu0 %v1952
    %2403 = vmatprep.subr.bf16.mxu0 %v1959
    %2404 = vmatpush1.bf16.msra.mxu0 %v1958
    %2405 = vmatprep.subr.bf16.mxu0 %v1965
    %2406 = vmatpush1.bf16.msra.mxu0 %v1964
    %2407 = vmatprep.subr.bf16.mxu0 %v1971
    %2408 = vmatpush1.bf16.msra.mxu0 %v1970
    %2409 = vmatprep.subr.bf16.mxu0 %v1977
    %2410 = vmatpush1.bf16.msra.mxu0 %v1976
    %2411 = vmatprep.subr.bf16.mxu0 %v1983
    %2412 = vmatpush1.bf16.msra.mxu0 %v1982
    %2413 = vmatprep.subr.bf16.mxu0 %v1989
    %2414 = vmatpush1.bf16.msra.mxu0 %v1988
    %2415 = vmatprep.subr.bf16.mxu0 %v1995
    %2416 = vmatpush1.bf16.msra.mxu0 %v1994
    %2417 = vmatprep.subr.bf16.mxu0 %v2001
    %2418 = vmatpush1.bf16.msra.mxu0 %v2000
    %2419 = vmatprep.subr.bf16.mxu0 %v2007
    %2420 = vmatpush1.bf16.msra.mxu0 %v2006
    %2421 = vmatprep.subr.bf16.mxu0 %v2013
    %2422 = vmatpush1.bf16.msra.mxu0 %v2012
    %2423 = vmatprep.subr.bf16.mxu0 %v2019
    %2424 = vmatpush1.bf16.msra.mxu0 %v2018
    %2425 = vmatprep.subr.bf16.mxu0 %v2025
    %2426 = vmatpush1.bf16.msra.mxu0 %v2024
    %2427 = vmatprep.subr.bf16.mxu0 %v2031
    %2428 = vmatpush1.bf16.msra.mxu0 %v2030
    %2429 = vmatprep.subr.bf16.mxu0 %v2037
    %2430 = vmatpush1.bf16.msra.mxu0 %v2036
    %2431 = vmatprep.mubr.bf16.mxu0 %v807
    %2432 = vmatmul.mubr.bf16.gmra.mrb[0].mxu0 %v806
    %v2433 = vpop.f32.mrb[0].mxu0
    %v2434 = vadd.f32 %v2393, %v2433
    %v2435 = vpop.f32.mrb[0].mxu0
    %v2436 = vadd.f32 %v2395, %v2435
    %v2437 = vpop.f32.mrb[0].mxu0
    %v2438 = vpop.f32.mrb[0].mxu0
    %2439 = vdwg.mxu0
    %2440 = vmatprep.subr.bf16.mxu0 %v2043
    %2441 = vmatpush1.bf16.msra.mxu0 %v2042
    %2442 = vmatprep.subr.bf16.mxu0 %v2049
    %2443 = vmatpush1.bf16.msra.mxu0 %v2048
    %2444 = vmatprep.subr.bf16.mxu0 %v2055
    %2445 = vmatpush1.bf16.msra.mxu0 %v2054
    %2446 = vmatprep.subr.bf16.mxu0 %v2061
    %2447 = vmatpush1.bf16.msra.mxu0 %v2060
    %2448 = vmatprep.subr.bf16.mxu0 %v2067
    %2449 = vmatpush1.bf16.msra.mxu0 %v2066
    %2450 = vmatprep.subr.bf16.mxu0 %v2073
    %2451 = vmatpush1.bf16.msra.mxu0 %v2072
    %2452 = vmatprep.subr.bf16.mxu0 %v2079
    %2453 = vmatpush1.bf16.msra.mxu0 %v2078
    %2454 = vmatprep.subr.bf16.mxu0 %v2085
    %2455 = vmatpush1.bf16.msra.mxu0 %v2084
    %2456 = vmatprep.subr.bf16.mxu0 %v2091
    %2457 = vmatpush1.bf16.msra.mxu0 %v2090
    %2458 = vmatprep.subr.bf16.mxu0 %v2097
    %2459 = vmatpush1.bf16.msra.mxu0 %v2096
    %2460 = vmatprep.subr.bf16.mxu0 0
    %2461 = vmatpush1.bf16.msra.mxu0 0
    %2462 = vmatprep.subr.bf16.mxu0 0
    %2463 = vmatpush1.bf16.msra.mxu0 0
    %2464 = vmatprep.subr.bf16.mxu0 0
    %2465 = vmatpush1.bf16.msra.mxu0 0
    %2466 = vmatprep.subr.bf16.mxu0 0
    %2467 = vmatpush1.bf16.msra.mxu0 0
    %2468 = vmatprep.subr.bf16.mxu0 0
    %2469 = vmatpush1.bf16.msra.mxu0 0
    %2470 = vmatprep.subr.bf16.mxu0 0
    %2471 = vmatpush1.bf16.msra.mxu0 0
    %2472 = vmatprep.mubr.bf16.mxu0 %v2356
    %2473 = vmatmul.mubr.bf16.gmra.mrb[0].mxu0 %v808
    %v2474 = vpop.f32.mrb[0].mxu0
    %v2475 = vadd.f32 %v2434, %v2474
    %v2476 = vpop.f32.mrb[0].mxu0
    %v2477 = vadd.f32 %v2436, %v2476
    %v2478 = vpop.f32.mrb[0].mxu0
    %v2479 = vpop.f32.mrb[0].mxu0
    %2480 = vdwg.mxu0
    %2481 = vmatprep.subr.bf16.mxu0 %v1853
    %2482 = vmatpush1.bf16.msra.mxu0 %v1852
    %2483 = vmatprep.subr.bf16.mxu0 %v1859
    %2484 = vmatpush1.bf16.msra.mxu0 %v1858
    %2485 = vmatprep.subr.bf16.mxu0 %v1865
    %2486 = vmatpush1.bf16.msra.mxu0 %v1864
    %2487 = vmatprep.subr.bf16.mxu0 %v1871
    %2488 = vmatpush1.bf16.msra.mxu0 %v1870
    %2489 = vmatprep.subr.bf16.mxu0 %v1877
    %2490 = vmatpush1.bf16.msra.mxu0 %v1876
    %2491 = vmatprep.subr.bf16.mxu0 %v1883
    %2492 = vmatpush1.bf16.msra.mxu0 %v1882
    %2493 = vmatprep.subr.bf16.mxu0 %v1889
    %2494 = vmatpush1.bf16.msra.mxu0 %v1888
    %2495 = vmatprep.subr.bf16.mxu0 %v1895
    %2496 = vmatpush1.bf16.msra.mxu0 %v1894
    %2497 = vmatprep.subr.bf16.mxu0 %v1901
    %2498 = vmatpush1.bf16.msra.mxu0 %v1900
    %2499 = vmatprep.subr.bf16.mxu0 %v1907
    %2500 = vmatpush1.bf16.msra.mxu0 %v1906
    %2501 = vmatprep.subr.bf16.mxu0 %v1913
    %2502 = vmatpush1.bf16.msra.mxu0 %v1912
    %2503 = vmatprep.subr.bf16.mxu0 %v1919
    %2504 = vmatpush1.bf16.msra.mxu0 %v1918
    %2505 = vmatprep.subr.bf16.mxu0 %v1925
    %2506 = vmatpush1.bf16.msra.mxu0 %v1924
    %2507 = vmatprep.subr.bf16.mxu0 %v1931
    %2508 = vmatpush1.bf16.msra.mxu0 %v1930
    %2509 = vmatprep.subr.bf16.mxu0 %v1937
    %2510 = vmatpush1.bf16.msra.mxu0 %v1936
    %2511 = vmatprep.subr.bf16.mxu0 %v1943
    %2512 = vmatpush1.bf16.msra.mxu0 %v1942
    %2513 = vmatprep.mubr.bf16.mxu0 %v805
    %2514 = vmatmul.mubr.bf16.gmra.mrb[0].mxu0 %v804
    %v2515 = vpop.f32.mrb[0].mxu0
    %v2516 = vadd.f32 %v1075, %v2515
    %v2517 = vpop.f32.mrb[0].mxu0
    %v2518 = vadd.f32 %v1079, %v2517
    %v2519 = vpop.f32.mrb[0].mxu0
    %v2520 = vpop.f32.mrb[0].mxu0
    %2521 = vdwg.mxu0
    %2522 = vmatprep.subr.bf16.mxu0 %v1949
    %2523 = vmatpush1.bf16.msra.mxu0 %v1948
    %2524 = vmatprep.subr.bf16.mxu0 %v1955
    %2525 = vmatpush1.bf16.msra.mxu0 %v1954
    %2526 = vmatprep.subr.bf16.mxu0 %v1961
    %2527 = vmatpush1.bf16.msra.mxu0 %v1960
    %2528 = vmatprep.subr.bf16.mxu0 %v1967
    %2529 = vmatpush1.bf16.msra.mxu0 %v1966
    %2530 = vmatprep.subr.bf16.mxu0 %v1973
    %2531 = vmatpush1.bf16.msra.mxu0 %v1972
    %2532 = vmatprep.subr.bf16.mxu0 %v1979
    %2533 = vmatpush1.bf16.msra.mxu0 %v1978
    %2534 = vmatprep.subr.bf16.mxu0 %v1985
    %2535 = vmatpush1.bf16.msra.mxu0 %v1984
    %2536 = vmatprep.subr.bf16.mxu0 %v1991
    %2537 = vmatpush1.bf16.msra.mxu0 %v1990
    %2538 = vmatprep.subr.bf16.mxu0 %v1997
    %2539 = vmatpush1.bf16.msra.mxu0 %v1996
    %2540 = vmatprep.subr.bf16.mxu0 %v2003
    %2541 = vmatpush1.bf16.msra.mxu0 %v2002
    %2542 = vmatprep.subr.bf16.mxu0 %v2009
    %2543 = vmatpush1.bf16.msra.mxu0 %v2008
    %2544 = vmatprep.subr.bf16.mxu0 %v2015
    %2545 = vmatpush1.bf16.msra.mxu0 %v2014
    %2546 = vmatprep.subr.bf16.mxu0 %v2021
    %2547 = vmatpush1.bf16.msra.mxu0 %v2020
    %2548 = vmatprep.subr.bf16.mxu0 %v2027
    %2549 = vmatpush1.bf16.msra.mxu0 %v2026
    %2550 = vmatprep.subr.bf16.mxu0 %v2033
    %2551 = vmatpush1.bf16.msra.mxu0 %v2032
    %2552 = vmatprep.subr.bf16.mxu0 %v2039
    %2553 = vmatpush1.bf16.msra.mxu0 %v2038
    %2554 = vmatprep.mubr.bf16.mxu0 %v807
    %2555 = vmatmul.mubr.bf16.gmra.mrb[0].mxu0 %v806
    %v2556 = vpop.f32.mrb[0].mxu0
    %v2557 = vadd.f32 %v2516, %v2556
    %v2558 = vpop.f32.mrb[0].mxu0
    %v2559 = vadd.f32 %v2518, %v2558
    %v2560 = vpop.f32.mrb[0].mxu0
    %v2561 = vpop.f32.mrb[0].mxu0
    %2562 = vdwg.mxu0
    %2563 = vmatprep.subr.bf16.mxu0 %v2045
    %2564 = vmatpush1.bf16.msra.mxu0 %v2044
    %2565 = vmatprep.subr.bf16.mxu0 %v2051
    %2566 = vmatpush1.bf16.msra.mxu0 %v2050
    %2567 = vmatprep.subr.bf16.mxu0 %v2057
    %2568 = vmatpush1.bf16.msra.mxu0 %v2056
    %2569 = vmatprep.subr.bf16.mxu0 %v2063
    %2570 = vmatpush1.bf16.msra.mxu0 %v2062
    %2571 = vmatprep.subr.bf16.mxu0 %v2069
    %2572 = vmatpush1.bf16.msra.mxu0 %v2068
    %2573 = vmatprep.subr.bf16.mxu0 %v2075
    %2574 = vmatpush1.bf16.msra.mxu0 %v2074
    %2575 = vmatprep.subr.bf16.mxu0 %v2081
    %2576 = vmatpush1.bf16.msra.mxu0 %v2080
    %2577 = vmatprep.subr.bf16.mxu0 %v2087
    %2578 = vmatpush1.bf16.msra.mxu0 %v2086
    %2579 = vmatprep.subr.bf16.mxu0 %v2093
    %2580 = vmatpush1.bf16.msra.mxu0 %v2092
    %2581 = vmatprep.subr.bf16.mxu0 %v2099
    %2582 = vmatpush1.bf16.msra.mxu0 %v2098
    %2583 = vmatprep.subr.bf16.mxu0 0
    %2584 = vmatpush1.bf16.msra.mxu0 0
    %2585 = vmatprep.subr.bf16.mxu0 0
    %2586 = vmatpush1.bf16.msra.mxu0 0
    %2587 = vmatprep.subr.bf16.mxu0 0
    %2588 = vmatpush1.bf16.msra.mxu0 0
    %2589 = vmatprep.subr.bf16.mxu0 0
    %2590 = vmatpush1.bf16.msra.mxu0 0
    %2591 = vmatprep.subr.bf16.mxu0 0
    %2592 = vmatpush1.bf16.msra.mxu0 0
    %2593 = vmatprep.subr.bf16.mxu0 0
    %2594 = vmatpush1.bf16.msra.mxu0 0
    %2595 = vmatprep.mubr.bf16.mxu0 %v2356
    %2596 = vmatmul.mubr.bf16.gmra.mrb[0].mxu0 %v808
    %v2597 = vpop.f32.mrb[0].mxu0
    %v2598 = vadd.f32 %v2557, %v2597
    %v2599 = vpop.f32.mrb[0].mxu0
    %v2600 = vadd.f32 %v2559, %v2599
    %v2601 = vpop.f32.mrb[0].mxu0
    %v2602 = vpop.f32.mrb[0].mxu0
    %2603 = vdwg.mxu0
    %2604 = vmatprep.subr.bf16.mxu0 %v1855
    %2605 = vmatpush1.bf16.msra.mxu0 %v1854
    %2606 = vmatprep.subr.bf16.mxu0 %v1861
    %2607 = vmatpush1.bf16.msra.mxu0 %v1860
    %2608 = vmatprep.subr.bf16.mxu0 %v1867
    %2609 = vmatpush1.bf16.msra.mxu0 %v1866
    %2610 = vmatprep.subr.bf16.mxu0 %v1873
    %2611 = vmatpush1.bf16.msra.mxu0 %v1872
    %2612 = vmatprep.subr.bf16.mxu0 %v1879
    %2613 = vmatpush1.bf16.msra.mxu0 %v1878
    %2614 = vmatprep.subr.bf16.mxu0 %v1885
    %2615 = vmatpush1.bf16.msra.mxu0 %v1884
    %2616 = vmatprep.subr.bf16.mxu0 %v1891
    %2617 = vmatpush1.bf16.msra.mxu0 %v1890
    %2618 = vmatprep.subr.bf16.mxu0 %v1897
    %2619 = vmatpush1.bf16.msra.mxu0 %v1896
    %2620 = vmatprep.subr.bf16.mxu0 %v1903
    %2621 = vmatpush1.bf16.msra.mxu0 %v1902
    %2622 = vmatprep.subr.bf16.mxu0 %v1909
    %2623 = vmatpush1.bf16.msra.mxu0 %v1908
    %2624 = vmatprep.subr.bf16.mxu0 %v1915
    %2625 = vmatpush1.bf16.msra.mxu0 %v1914
    %2626 = vmatprep.subr.bf16.mxu0 %v1921
    %2627 = vmatpush1.bf16.msra.mxu0 %v1920
    %2628 = vmatprep.subr.bf16.mxu0 %v1927
    %2629 = vmatpush1.bf16.msra.mxu0 %v1926
    %2630 = vmatprep.subr.bf16.mxu0 %v1933
    %2631 = vmatpush1.bf16.msra.mxu0 %v1932
    %2632 = vmatprep.subr.bf16.mxu0 %v1939
    %2633 = vmatpush1.bf16.msra.mxu0 %v1938
    %2634 = vmatprep.subr.bf16.mxu0 %v1945
    %2635 = vmatpush1.bf16.msra.mxu0 %v1944
    %2636 = vmatprep.mubr.bf16.mxu0 %v805
    %2637 = vmatmul.mubr.bf16.gmra.mrb[0].mxu0 %v804
    %v2638 = vpop.f32.mrb[0].mxu0
    %v2639 = vadd.f32 %v1083, %v2638
    %v2640 = vpop.f32.mrb[0].mxu0
    %v2641 = vadd.f32 %v1087, %v2640
    %v2642 = vpop.f32.mrb[0].mxu0
    %v2643 = vpop.f32.mrb[0].mxu0
    %2644 = vdwg.mxu0
    %2645 = vmatprep.subr.bf16.mxu0 %v1951
    %2646 = vmatpush1.bf16.msra.mxu0 %v1950
    %2647 = vmatprep.subr.bf16.mxu0 %v1957
    %2648 = vmatpush1.bf16.msra.mxu0 %v1956
    %2649 = vmatprep.subr.bf16.mxu0 %v1963
    %2650 = vmatpush1.bf16.msra.mxu0 %v1962
    %2651 = vmatprep.subr.bf16.mxu0 %v1969
    %2652 = vmatpush1.bf16.msra.mxu0 %v1968
    %2653 = vmatprep.subr.bf16.mxu0 %v1975
    %2654 = vmatpush1.bf16.msra.mxu0 %v1974
    %2655 = vmatprep.subr.bf16.mxu0 %v1981
    %2656 = vmatpush1.bf16.msra.mxu0 %v1980
    %2657 = vmatprep.subr.bf16.mxu0 %v1987
    %2658 = vmatpush1.bf16.msra.mxu0 %v1986
    %2659 = vmatprep.subr.bf16.mxu0 %v1993
    %2660 = vmatpush1.bf16.msra.mxu0 %v1992
    %2661 = vmatprep.subr.bf16.mxu0 %v1999
    %2662 = vmatpush1.bf16.msra.mxu0 %v1998
    %2663 = vmatprep.subr.bf16.mxu0 %v2005
    %2664 = vmatpush1.bf16.msra.mxu0 %v2004
    %2665 = vmatprep.subr.bf16.mxu0 %v2011
    %2666 = vmatpush1.bf16.msra.mxu0 %v2010
    %2667 = vmatprep.subr.bf16.mxu0 %v2017
    %2668 = vmatpush1.bf16.msra.mxu0 %v2016
    %2669 = vmatprep.subr.bf16.mxu0 %v2023
    %2670 = vmatpush1.bf16.msra.mxu0 %v2022
    %2671 = vmatprep.subr.bf16.mxu0 %v2029
    %2672 = vmatpush1.bf16.msra.mxu0 %v2028
    %2673 = vmatprep.subr.bf16.mxu0 %v2035
    %2674 = vmatpush1.bf16.msra.mxu0 %v2034
    %2675 = vmatprep.subr.bf16.mxu0 %v2041
    %2676 = vmatpush1.bf16.msra.mxu0 %v2040
    %2677 = vmatprep.mubr.bf16.mxu0 %v807
    %2678 = vmatmul.mubr.bf16.gmra.mrb[0].mxu0 %v806
    %v2679 = vpop.f32.mrb[0].mxu0
    %v2680 = vadd.f32 %v2639, %v2679
    %v2681 = vpop.f32.mrb[0].mxu0
    %v2682 = vadd.f32 %v2641, %v2681
    %v2683 = vpop.f32.mrb[0].mxu0
    %v2684 = vpop.f32.mrb[0].mxu0
    %2685 = vdwg.mxu0
    %2686 = vmatprep.subr.bf16.mxu0 %v2047
    %2687 = vmatpush1.bf16.msra.mxu0 %v2046
    %2688 = vmatprep.subr.bf16.mxu0 %v2053
    %2689 = vmatpush1.bf16.msra.mxu0 %v2052
    %2690 = vmatprep.subr.bf16.mxu0 %v2059
    %2691 = vmatpush1.bf16.msra.mxu0 %v2058
    %2692 = vmatprep.subr.bf16.mxu0 %v2065
    %2693 = vmatpush1.bf16.msra.mxu0 %v2064
    %2694 = vmatprep.subr.bf16.mxu0 %v2071
    %2695 = vmatpush1.bf16.msra.mxu0 %v2070
    %2696 = vmatprep.subr.bf16.mxu0 %v2077
    %2697 = vmatpush1.bf16.msra.mxu0 %v2076
    %2698 = vmatprep.subr.bf16.mxu0 %v2083
    %2699 = vmatpush1.bf16.msra.mxu0 %v2082
    %2700 = vmatprep.subr.bf16.mxu0 %v2089
    %2701 = vmatpush1.bf16.msra.mxu0 %v2088
    %2702 = vmatprep.subr.bf16.mxu0 %v2095
    %2703 = vmatpush1.bf16.msra.mxu0 %v2094
    %2704 = vmatprep.subr.bf16.mxu0 %v2101
    %2705 = vmatpush1.bf16.msra.mxu0 %v2100
    %2706 = vmatprep.subr.bf16.mxu0 0
    %2707 = vmatpush1.bf16.msra.mxu0 0
    %2708 = vmatprep.subr.bf16.mxu0 0
    %2709 = vmatpush1.bf16.msra.mxu0 0
    %2710 = vmatprep.subr.bf16.mxu0 0
    %2711 = vmatpush1.bf16.msra.mxu0 0
    %2712 = vmatprep.subr.bf16.mxu0 0
    %2713 = vmatpush1.bf16.msra.mxu0 0
    %2714 = vmatprep.subr.bf16.mxu0 0
    %2715 = vmatpush1.bf16.msra.mxu0 0
    %2716 = vmatprep.subr.bf16.mxu0 0
    %2717 = vmatpush1.bf16.msra.mxu0 0
    %2718 = vmatprep.mubr.bf16.mxu0 %v2356
    %2719 = vmatmul.mubr.bf16.gmra.mrb[0].mxu0 %v808
    %v2720 = vpop.f32.mrb[0].mxu0
    %v2721 = vadd.f32 %v2680, %v2720
    %v2722 = vpop.f32.mrb[0].mxu0
    %v2723 = vadd.f32 %v2682, %v2722
    %v2724 = vpop.f32.mrb[0].mxu0
    %v2725 = vpop.f32.mrb[0].mxu0
    %2726 = vdwg.mxu0
    %v2727 = vmul.f32 %v2475, 0.2
    %v2728 = vmul.f32 %v2477, 0.2
    %v2729 = vmul.f32 %v2598, 0.2
    %v2730 = vmul.f32 %v2600, 0.2
    %v2731 = vmul.f32 %v2721, 0.2
    %v2732 = vmul.f32 %v2723, 0.2
    %v2733 = vmax.f32 %v2475, %v2727
    %v2734 = vmax.f32 %v2477, %v2728
    %v2735 = vmax.f32 %v2598, %v2729
    %v2736 = vmax.f32 %v2600, %v2730
    %v2737 = vmax.f32 %v2721, %v2731
    %v2738 = vmax.f32 %v2723, %v2732
    %v2739 = vpack.c.bf16 %v2733, %v2733
    %v2740 = vpack.c.bf16 %v2734, %v2734
    %v2741 = vpack.c.bf16 %v2735, %v2735
    %v2742 = vpack.c.bf16 %v2736, %v2736
    %v2743 = vpack.c.bf16 %v2737, %v2737
    %v2744 = vpack.c.bf16 %v2738, %v2738
    %v2745 = vld [vmem:[%s5] sm:$0xf]
    %v2746 = vld [vmem:[%s5 + $0x4] sm:$0xf]
    %v2747 = vld [vmem:[%s5 + $0x8] sm:$0xf]
    %v2748 = vld [vmem:[%s5 + $0xc] sm:$0xf]
    %v2749 = vld [vmem:[%s5 + $0x10] sm:$0xf]
    %v2750 = vld [vmem:[%s5 + $0x14] sm:$0xf]
    %v2751 = vld [vmem:[%s5 + $0x18] sm:$0xf]
    %v2752 = vld [vmem:[%s5 + $0x1c] sm:$0xf]
    %v2753 = vld [vmem:[%s5 + $0x20] sm:$0xf]
    %v2754 = vld [vmem:[%s5 + $0x24] sm:$0xf]
    %v2755 = vld [vmem:[%s5 + $0x28] sm:$0xf]
    %v2756 = vld [vmem:[%s5 + $0x2c] sm:$0xf]
    %v2757 = vld [vmem:[%s5 + $0x30] sm:$0xf]
    %v2758 = vld [vmem:[%s5 + $0x34] sm:$0xf]
    %v2759 = vld [vmem:[%s5 + $0x38] sm:$0xf]
    %v2760 = vld [vmem:[%s5 + $0x3c] sm:$0xf]
    %v2761 = vld [vmem:[%s5 + $0x40] sm:$0xf]
    %v2762 = vld [vmem:[%s5 + $0x44] sm:$0xf]
    %v2763 = vld [vmem:[%s5 + $0x48] sm:$0xf]
    %v2764 = vld [vmem:[%s5 + $0x4c] sm:$0xf]
    %v2765 = vld [vmem:[%s5 + $0x50] sm:$0xf]
    %v2766 = vld [vmem:[%s5 + $0x54] sm:$0xf]
    %v2767 = vld [vmem:[%s5 + $0x58] sm:$0xf]
    %v2768 = vld [vmem:[%s5 + $0x5c] sm:$0xf]
    %v2769 = vld [vmem:[%s5 + $0x60] sm:$0xf]
    %v2770 = vld [vmem:[%s5 + $0x64] sm:$0xf]
    %v2771 = vld [vmem:[%s5 + $0x68] sm:$0xf]
    %v2772 = vld [vmem:[%s5 + $0x6c] sm:$0xf]
    %v2773 = vld [vmem:[%s5 + $0x70] sm:$0xf]
    %v2774 = vld [vmem:[%s5 + $0x74] sm:$0xf]
    %v2775 = vld [vmem:[%s5 + $0x78] sm:$0xf]
    %v2776 = vld [vmem:[%s5 + $0x7c] sm:$0xf]
    %v2777 = vld [vmem:[%s5 + $0x80] sm:$0xf]
    %v2778 = vld [vmem:[%s5 + $0x84] sm:$0xf]
    %v2779 = vld [vmem:[%s5 + $0x88] sm:$0xf]
    %v2780 = vld [vmem:[%s5 + $0x8c] sm:$0xf]
    %v2781 = vld [vmem:[%s5 + $0x90] sm:$0xf]
    %v2782 = vld [vmem:[%s5 + $0x94] sm:$0xf]
    %v2783 = vld [vmem:[%s5 + $0x98] sm:$0xf]
    %v2784 = vld [vmem:[%s5 + $0x9c] sm:$0xf]
    %v2785 = vld [vmem:[%s5 + $0xa0] sm:$0xf]
    %v2786 = vld [vmem:[%s5 + $0xa4] sm:$0xf]
    %v2787 = vld [vmem:[%s5 + $0xa8] sm:$0xf]
    %v2788 = vld [vmem:[%s5 + $0xac] sm:$0xf]
    %v2789 = vld [vmem:[%s5 + $0xb0] sm:$0xf]
    %v2790 = vld [vmem:[%s5 + $0xb4] sm:$0xf]
    %v2791 = vld [vmem:[%s5 + $0xb8] sm:$0xf]
    %v2792 = vld [vmem:[%s5 + $0xbc] sm:$0xf]
    %v2793 = vld [vmem:[%s5 + $0xc0] sm:$0xf]
    %v2794 = vld [vmem:[%s5 + $0xc4] sm:$0xf]
    %v2795 = vld [vmem:[%s5 + $0xc8] sm:$0xf]
    %v2796 = vld [vmem:[%s5 + $0xcc] sm:$0xf]
    %v2797 = vld [vmem:[%s5 + $0xd0] sm:$0xf]
    %v2798 = vld [vmem:[%s5 + $0xd4] sm:$0xf]
    %v2799 = vld [vmem:[%s5 + $0xd8] sm:$0xf]
    %v2800 = vld [vmem:[%s5 + $0xdc] sm:$0xf]
    %v2801 = vld [vmem:[%s5 + $0xe0] sm:$0xf]
    %v2802 = vld [vmem:[%s5 + $0xe4] sm:$0xf]
    %v2803 = vld [vmem:[%s5 + $0xe8] sm:$0xf]
    %v2804 = vld [vmem:[%s5 + $0xec] sm:$0xf]
    %v2805 = vld [vmem:[%s5 + $0xf0] sm:$0xf]
    %v2806 = vld [vmem:[%s5 + $0xf4] sm:$0xf]
    %v2807 = vld [vmem:[%s5 + $0xf8] sm:$0xf]
    %v2808 = vld [vmem:[%s5 + $0xfc] sm:$0xf]
    %v2809 = vld [vmem:[%s5 + $0x100] sm:$0xf]
    %v2810 = vld [vmem:[%s5 + $0x104] sm:$0xf]
    %v2811 = vld [vmem:[%s5 + $0x108] sm:$0xf]
    %v2812 = vld [vmem:[%s5 + $0x10c] sm:$0xf]
    %v2813 = vld [vmem:[%s5 + $0x110] sm:$0xf]
    %v2814 = vld [vmem:[%s5 + $0x114] sm:$0xf]
    %v2815 = vld [vmem:[%s5 + $0x118] sm:$0xf]
    %v2816 = vld [vmem:[%s5 + $0x11c] sm:$0xf]
    %v2817 = vld [vmem:[%s5 + $0x120] sm:$0xf]
    %v2818 = vld [vmem:[%s5 + $0x124] sm:$0xf]
    %v2819 = vld [vmem:[%s5 + $0x128] sm:$0xf]
    %v2820 = vld [vmem:[%s5 + $0x12c] sm:$0xf]
    %v2821 = vld [vmem:[%s5 + $0x130] sm:$0xf]
    %v2822 = vld [vmem:[%s5 + $0x134] sm:$0xf]
    %v2823 = vld [vmem:[%s5 + $0x138] sm:$0xf]
    %v2824 = vld [vmem:[%s5 + $0x13c] sm:$0xf]
    %v2825 = vld [vmem:[%s5 + $0x140] sm:$0xf]
    %v2826 = vld [vmem:[%s5 + $0x144] sm:$0xf]
    %v2827 = vld [vmem:[%s5 + $0x148] sm:$0xf]
    %v2828 = vld [vmem:[%s5 + $0x14c] sm:$0xf]
    %v2829 = vld [vmem:[#allocation12] sm:$0x1]
    %v2831 = vlaneseq
    %v2832 = vshrl.u32 %v2831, 7
    %v2833 = vsub.s32 0, %v2832
    %v2834 = vrot.slane %v2829, %v2833
    %v2920 = vunpack.c.l.b16 %v2745
    %v2921 = vunpack.c.l.b16 %v2746
    %v2922 = vunpack.c.l.b16 %v2747
    %v2923 = vunpack.c.l.b16 %v2748
    %v2924 = vunpack.c.l.b16 %v2749
    %v2925 = vunpack.c.l.b16 %v2750
    %v2926 = vunpack.c.l.b16 %v2751
    %v2927 = vunpack.c.l.b16 %v2752
    %v2928 = vunpack.c.l.b16 %v2753
    %v2929 = vunpack.c.l.b16 %v2754
    %v2930 = vunpack.c.l.b16 %v2755
    %v2931 = vunpack.c.l.b16 %v2756
    %v2932 = vunpack.c.l.b16 %v2757
    %v2933 = vunpack.c.l.b16 %v2758
    %v2934 = vunpack.c.l.b16 %v2759
    %v2935 = vunpack.c.l.b16 %v2760
    %v2936 = vunpack.c.l.b16 %v2761
    %v2937 = vunpack.c.l.b16 %v2762
    %v2938 = vunpack.c.l.b16 %v2763
    %v2939 = vunpack.c.l.b16 %v2764
    %v2940 = vunpack.c.l.b16 %v2765
    %v2941 = vunpack.c.l.b16 %v2766
    %v2942 = vunpack.c.l.b16 %v2767
    %v2943 = vunpack.c.l.b16 %v2768
    %v2944 = vunpack.c.l.b16 %v2769
    %v2945 = vunpack.c.l.b16 %v2770
    %v2946 = vunpack.c.l.b16 %v2771
    %v2947 = vunpack.c.l.b16 %v2772
    %v2948 = vunpack.c.l.b16 %v2773
    %v2949 = vunpack.c.l.b16 %v2774
    %v2950 = vunpack.c.l.b16 %v2775
    %v2951 = vunpack.c.l.b16 %v2776
    %v2952 = vunpack.c.l.b16 %v2777
    %v2953 = vunpack.c.l.b16 %v2778
    %v2954 = vunpack.c.l.b16 %v2779
    %v2955 = vunpack.c.l.b16 %v2780
    %v2956 = vunpack.c.l.b16 %v2781
    %v2957 = vunpack.c.l.b16 %v2782
    %v2958 = vunpack.c.l.b16 %v2783
    %v2959 = vunpack.c.l.b16 %v2784
    %v2960 = vunpack.c.l.b16 %v2785
    %v2961 = vunpack.c.l.b16 %v2786
    %v2962 = vunpack.c.l.b16 %v2787
    %v2963 = vunpack.c.l.b16 %v2788
    %v2964 = vunpack.c.l.b16 %v2789
    %v2965 = vunpack.c.l.b16 %v2790
    %v2966 = vunpack.c.l.b16 %v2791
    %v2967 = vunpack.c.l.b16 %v2792
    %v2968 = vunpack.c.l.b16 %v2793
    %v2969 = vunpack.c.l.b16 %v2794
    %v2970 = vunpack.c.l.b16 %v2795
    %v2971 = vunpack.c.l.b16 %v2796
    %v2972 = vunpack.c.l.b16 %v2797
    %v2973 = vunpack.c.l.b16 %v2798
    %v2974 = vunpack.c.l.b16 %v2799
    %v2975 = vunpack.c.l.b16 %v2800
    %v2976 = vunpack.c.l.b16 %v2801
    %v2977 = vunpack.c.l.b16 %v2802
    %v2978 = vunpack.c.l.b16 %v2803
    %v2979 = vunpack.c.l.b16 %v2804
    %v2980 = vunpack.c.l.b16 %v2805
    %v2981 = vunpack.c.l.b16 %v2806
    %v2982 = vunpack.c.l.b16 %v2807
    %v2983 = vunpack.c.l.b16 %v2808
    %v2984 = vunpack.c.l.b16 %v2809
    %v2985 = vunpack.c.l.b16 %v2810
    %v2986 = vunpack.c.l.b16 %v2811
    %v2987 = vunpack.c.l.b16 %v2812
    %v2988 = vunpack.c.l.b16 %v2813
    %v2989 = vunpack.c.l.b16 %v2814
    %v2990 = vunpack.c.l.b16 %v2815
    %v2991 = vunpack.c.l.b16 %v2816
    %v2992 = vunpack.c.l.b16 %v2817
    %v2993 = vunpack.c.l.b16 %v2818
    %v2994 = vunpack.c.l.b16 %v2819
    %v2995 = vunpack.c.l.b16 %v2820
    %v2996 = vunpack.c.l.b16 %v2821
    %v2997 = vunpack.c.l.b16 %v2822
    %v2998 = vunpack.c.l.b16 %v2823
    %v2999 = vunpack.c.l.b16 %v2824
    %v3000 = vunpack.c.l.b16 %v2825
    %v3001 = vunpack.c.l.b16 %v2826
    %v3002 = vunpack.c.l.b16 %v2827
    %v3003 = vunpack.c.l.b16 %v2828
    %v3004 = vpack.c.b16 %v2921, %v2920
    %v3005 = vpack.c.b16 %v2923, %v2922
    %v3006 = vpack.c.b16 %v2925, %v2924
    %v3007 = vpack.c.b16 %v2927, %v2926
    %v3008 = vpack.c.b16 %v2929, %v2928
    %v3009 = vpack.c.b16 %v2931, %v2930
    %v3010 = vpack.c.b16 %v2933, %v2932
    %v3011 = vpack.c.b16 %v2935, %v2934
    %v3012 = vpack.c.b16 %v2937, %v2936
    %v3013 = vpack.c.b16 %v2939, %v2938
    %v3014 = vpack.c.b16 %v2941, %v2940
    %v3015 = vpack.c.b16 %v2943, %v2942
    %v3016 = vpack.c.b16 %v2945, %v2944
    %v3017 = vpack.c.b16 %v2947, %v2946
    %v3018 = vpack.c.b16 %v2949, %v2948
    %v3019 = vpack.c.b16 %v2951, %v2950
    %v3020 = vpack.c.b16 %v2953, %v2952
    %v3021 = vpack.c.b16 %v2955, %v2954
    %v3022 = vpack.c.b16 %v2957, %v2956
    %v3023 = vpack.c.b16 %v2959, %v2958
    %v3024 = vpack.c.b16 %v2961, %v2960
    %v3025 = vpack.c.b16 %v2963, %v2962
    %v3026 = vpack.c.b16 %v2965, %v2964
    %v3027 = vpack.c.b16 %v2967, %v2966
    %v3028 = vpack.c.b16 %v2969, %v2968
    %v3029 = vpack.c.b16 %v2971, %v2970
    %v3030 = vpack.c.b16 %v2973, %v2972
    %v3031 = vpack.c.b16 %v2975, %v2974
    %v3032 = vpack.c.b16 %v2977, %v2976
    %v3033 = vpack.c.b16 %v2979, %v2978
    %v3034 = vpack.c.b16 %v2981, %v2980
    %v3035 = vpack.c.b16 %v2983, %v2982
    %v3036 = vpack.c.b16 %v2985, %v2984
    %v3037 = vpack.c.b16 %v2987, %v2986
    %v3038 = vpack.c.b16 %v2989, %v2988
    %v3039 = vpack.c.b16 %v2991, %v2990
    %v3040 = vpack.c.b16 %v2993, %v2992
    %v3041 = vpack.c.b16 %v2995, %v2994
    %v3042 = vpack.c.b16 %v2997, %v2996
    %v3043 = vpack.c.b16 %v2999, %v2998
    %v3044 = vpack.c.b16 %v3001, %v3000
    %v3045 = vpack.c.b16 %v3003, %v3002
    %v3089 = vsel %vm2354, %v2744, 0
    %3091 = vmatprep.subr.bf16.mxu0 0
    %3092 = vmatpush1.bf16.msra.mxu0 %v3004
    %3093 = vmatprep.subr.bf16.mxu0 0
    %3094 = vmatpush1.bf16.msra.mxu0 %v3005
    %3095 = vmatprep.subr.bf16.mxu0 0
    %3096 = vmatpush1.bf16.msra.mxu0 %v3006
    %3097 = vmatprep.subr.bf16.mxu0 0
    %3098 = vmatpush1.bf16.msra.mxu0 %v3007
    %3099 = vmatprep.subr.bf16.mxu0 0
    %3100 = vmatpush1.bf16.msra.mxu0 %v3008
    %3101 = vmatprep.subr.bf16.mxu0 0
    %3102 = vmatpush1.bf16.msra.mxu0 %v3009
    %3103 = vmatprep.subr.bf16.mxu0 0
    %3104 = vmatpush1.bf16.msra.mxu0 %v3010
    %3105 = vmatprep.subr.bf16.mxu0 0
    %3106 = vmatpush1.bf16.msra.mxu0 %v3011
    %3107 = vmatprep.subr.bf16.mxu0 0
    %3108 = vmatpush1.bf16.msra.mxu0 %v3012
    %3109 = vmatprep.subr.bf16.mxu0 0
    %3110 = vmatpush1.bf16.msra.mxu0 %v3013
    %3111 = vmatprep.subr.bf16.mxu0 0
    %3112 = vmatpush1.bf16.msra.mxu0 %v3014
    %3113 = vmatprep.subr.bf16.mxu0 0
    %3114 = vmatpush1.bf16.msra.mxu0 %v3015
    %3115 = vmatprep.subr.bf16.mxu0 0
    %3116 = vmatpush1.bf16.msra.mxu0 %v3016
    %3117 = vmatprep.subr.bf16.mxu0 0
    %3118 = vmatpush1.bf16.msra.mxu0 %v3017
    %3119 = vmatprep.subr.bf16.mxu0 0
    %3120 = vmatpush1.bf16.msra.mxu0 %v3018
    %3121 = vmatprep.subr.bf16.mxu0 0
    %3122 = vmatpush1.bf16.msra.mxu0 %v3019
    %3123 = vmatprep.mubr.bf16.mxu0 %v2740
    %3124 = vmatmul.mubr.bf16.gmra.mrb[0].mxu0 %v2739
    %v3125 = vpop.f32.mrb[0].mxu0
    %v3126 = vadd.f32 %v2834, %v3125
    %v3127 = vpop.f32.mrb[0].mxu0
    %v3128 = vpop.f32.mrb[0].mxu0
    %v3129 = vpop.f32.mrb[0].mxu0
    %3130 = vdwg.mxu0
    %3131 = vmatprep.subr.bf16.mxu0 0
    %3132 = vmatpush1.bf16.msra.mxu0 %v3020
    %3133 = vmatprep.subr.bf16.mxu0 0
    %3134 = vmatpush1.bf16.msra.mxu0 %v3021
    %3135 = vmatprep.subr.bf16.mxu0 0
    %3136 = vmatpush1.bf16.msra.mxu0 %v3022
    %3137 = vmatprep.subr.bf16.mxu0 0
    %3138 = vmatpush1.bf16.msra.mxu0 %v3023
    %3139 = vmatprep.subr.bf16.mxu0 0
    %3140 = vmatpush1.bf16.msra.mxu0 %v3024
    %3141 = vmatprep.subr.bf16.mxu0 0
    %3142 = vmatpush1.bf16.msra.mxu0 %v3025
    %3143 = vmatprep.subr.bf16.mxu0 0
    %3144 = vmatpush1.bf16.msra.mxu0 %v3026
    %3145 = vmatprep.subr.bf16.mxu0 0
    %3146 = vmatpush1.bf16.msra.mxu0 %v3027
    %3147 = vmatprep.subr.bf16.mxu0 0
    %3148 = vmatpush1.bf16.msra.mxu0 %v3028
    %3149 = vmatprep.subr.bf16.mxu0 0
    %3150 = vmatpush1.bf16.msra.mxu0 %v3029
    %3151 = vmatprep.subr.bf16.mxu0 0
    %3152 = vmatpush1.bf16.msra.mxu0 %v3030
    %3153 = vmatprep.subr.bf16.mxu0 0
    %3154 = vmatpush1.bf16.msra.mxu0 %v3031
    %3155 = vmatprep.subr.bf16.mxu0 0
    %3156 = vmatpush1.bf16.msra.mxu0 %v3032
    %3157 = vmatprep.subr.bf16.mxu0 0
    %3158 = vmatpush1.bf16.msra.mxu0 %v3033
    %3159 = vmatprep.subr.bf16.mxu0 0
    %3160 = vmatpush1.bf16.msra.mxu0 %v3034
    %3161 = vmatprep.subr.bf16.mxu0 0
    %3162 = vmatpush1.bf16.msra.mxu0 %v3035
    %3163 = vmatprep.mubr.bf16.mxu0 %v2742
    %3164 = vmatmul.mubr.bf16.gmra.mrb[0].mxu0 %v2741
    %v3165 = vpop.f32.mrb[0].mxu0
    %v3166 = vadd.f32 %v3126, %v3165
    %v3167 = vpop.f32.mrb[0].mxu0
    %v3168 = vpop.f32.mrb[0].mxu0
    %v3169 = vpop.f32.mrb[0].mxu0
    %3170 = vdwg.mxu0
    %3171 = vmatprep.subr.bf16.mxu0 0
    %3172 = vmatpush1.bf16.msra.mxu0 %v3036
    %3173 = vmatprep.subr.bf16.mxu0 0
    %3174 = vmatpush1.bf16.msra.mxu0 %v3037
    %3175 = vmatprep.subr.bf16.mxu0 0
    %3176 = vmatpush1.bf16.msra.mxu0 %v3038
    %3177 = vmatprep.subr.bf16.mxu0 0
    %3178 = vmatpush1.bf16.msra.mxu0 %v3039
    %3179 = vmatprep.subr.bf16.mxu0 0
    %3180 = vmatpush1.bf16.msra.mxu0 %v3040
    %3181 = vmatprep.subr.bf16.mxu0 0
    %3182 = vmatpush1.bf16.msra.mxu0 %v3041
    %3183 = vmatprep.subr.bf16.mxu0 0
    %3184 = vmatpush1.bf16.msra.mxu0 %v3042
    %3185 = vmatprep.subr.bf16.mxu0 0
    %3186 = vmatpush1.bf16.msra.mxu0 %v3043
    %3187 = vmatprep.subr.bf16.mxu0 0
    %3188 = vmatpush1.bf16.msra.mxu0 %v3044
    %3189 = vmatprep.subr.bf16.mxu0 0
    %3190 = vmatpush1.bf16.msra.mxu0 %v3045
    %3191 = vmatprep.subr.bf16.mxu0 0
    %3192 = vmatpush1.bf16.msra.mxu0 0
    %3193 = vmatprep.subr.bf16.mxu0 0
    %3194 = vmatpush1.bf16.msra.mxu0 0
    %3195 = vmatprep.subr.bf16.mxu0 0
    %3196 = vmatpush1.bf16.msra.mxu0 0
    %3197 = vmatprep.subr.bf16.mxu0 0
    %3198 = vmatpush1.bf16.msra.mxu0 0
    %3199 = vmatprep.subr.bf16.mxu0 0
    %3200 = vmatpush1.bf16.msra.mxu0 0
    %3201 = vmatprep.subr.bf16.mxu0 0
    %3202 = vmatpush1.bf16.msra.mxu0 0
    %3203 = vmatprep.mubr.bf16.mxu0 %v3089
    %3204 = vmatmul.mubr.bf16.gmra.mrb[0].mxu0 %v2743
    %v3205 = vpop.f32.mrb[0].mxu0
    %v3206 = vadd.f32 %v3166, %v3205
    %v3207 = vpop.f32.mrb[0].mxu0
    %v3208 = vpop.f32.mrb[0].mxu0
    %v3209 = vpop.f32.mrb[0].mxu0
    %3210 = vdwg.mxu0
    %vm3211 = vcmask 166912
    %3212 = vst.msk [vmem:[#allocation20] sm:$0xf] %vm3211, %v3206
    %v3213 = vld [vmem:[#allocation14] sm:$0xff]
    %v3214 = vld [vmem:[#allocation14 + $0x8] sm:$0xff]
    %v3215 = vld [vmem:[#allocation14 + $0x10] sm:$0xff]
    %v3216 = vld [vmem:[#allocation14 + $0x18] sm:$0xff]
    %v3217 = vld [vmem:[#allocation14 + $0x20] sm:$0xff]
    %v3218 = vld [vmem:[#allocation14 + $0x28] sm:$0xff]
    %v3219 = vld [vmem:[#allocation14 + $0x30] sm:$0xff]
    %v3220 = vld [vmem:[#allocation14 + $0x38] sm:$0xff]
    %v3221 = vld [vmem:[#allocation14 + $0x40] sm:$0xff]
    %v3222 = vld [vmem:[#allocation14 + $0x48] sm:$0xff]
    %v3223 = vld [vmem:[#allocation14 + $0x50] sm:$0xff]
    %v3224 = vld [vmem:[#allocation14 + $0x58] sm:$0xff]
    %v3225 = vld [vmem:[#allocation14 + $0x60] sm:$0xff]
    %v3226 = vld [vmem:[#allocation14 + $0x68] sm:$0xff]
    %v3227 = vld [vmem:[#allocation14 + $0x70] sm:$0xff]
    %v3228 = vld [vmem:[#allocation14 + $0x78] sm:$0xff]
    %v3229 = vld [vmem:[#allocation14 + $0x80] sm:$0xff]
    %v3230 = vld [vmem:[#allocation14 + $0x88] sm:$0xff]
    %v3231 = vld [vmem:[#allocation14 + $0x90] sm:$0xff]
    %v3232 = vld [vmem:[#allocation14 + $0x98] sm:$0xff]
    %v3233 = vld [vmem:[#allocation14 + $0xa0] sm:$0xff]
    %v3234 = vld [vmem:[#allocation14 + $0xa8] sm:$0xff]
    %v3235 = vld [vmem:[#allocation14 + $0xb0] sm:$0xff]
    %v3236 = vld [vmem:[#allocation14 + $0xb8] sm:$0xff]
    %v3237 = vld [vmem:[#allocation14 + $0xc0] sm:$0xff]
    %v3238 = vld [vmem:[#allocation14 + $0xc8] sm:$0xff]
    %v3239 = vld [vmem:[#allocation14 + $0xd0] sm:$0xff]
    %v3240 = vld [vmem:[#allocation14 + $0xd8] sm:$0xff]
    %v3241 = vld [vmem:[#allocation14 + $0xe0] sm:$0xff]
    %v3242 = vld [vmem:[#allocation14 + $0xe8] sm:$0xff]
    %v3243 = vld [vmem:[#allocation14 + $0xf0] sm:$0xff]
    %v3244 = vld [vmem:[#allocation14 + $0xf8] sm:$0xff]
    %v3245 = vld [vmem:[#allocation14 + $0x100] sm:$0xff]
    %v3246 = vld [vmem:[#allocation14 + $0x108] sm:$0xff]
    %v3247 = vld [vmem:[#allocation14 + $0x110] sm:$0xff]
    %v3248 = vld [vmem:[#allocation14 + $0x118] sm:$0xff]
    %v3249 = vld [vmem:[#allocation14 + $0x120] sm:$0xff]
    %v3250 = vld [vmem:[#allocation14 + $0x128] sm:$0xff]
    %v3251 = vld [vmem:[#allocation14 + $0x130] sm:$0xff]
    %v3252 = vld [vmem:[#allocation14 + $0x138] sm:$0xff]
    %v3253 = vld [vmem:[#allocation14 + $0x140] sm:$0xff]
    %v3254 = vld [vmem:[#allocation14 + $0x148] sm:$0xff]
    %v3255 = vld [vmem:[#allocation14 + $0x150] sm:$0xff]
    %v3256 = vld [vmem:[#allocation14 + $0x158] sm:$0xff]
    %v3257 = vld [vmem:[#allocation14 + $0x160] sm:$0xff]
    %v3258 = vld [vmem:[#allocation14 + $0x168] sm:$0xff]
    %v3259 = vld [vmem:[#allocation14 + $0x170] sm:$0xff]
    %v3260 = vld [vmem:[#allocation14 + $0x178] sm:$0xff]
    %v3261 = vld [vmem:[#allocation14 + $0x180] sm:$0xff]
    %v3262 = vld [vmem:[#allocation14 + $0x188] sm:$0xff]
    %v3263 = vld [vmem:[#allocation14 + $0x190] sm:$0xff]
    %v3264 = vld [vmem:[#allocation14 + $0x198] sm:$0xff]
    %v3265 = vld [vmem:[#allocation14 + $0x1a0] sm:$0xff]
    %v3266 = vld [vmem:[#allocation14 + $0x1a8] sm:$0xff]
    %v3267 = vld [vmem:[#allocation14 + $0x1b0] sm:$0xff]
    %v3268 = vld [vmem:[#allocation14 + $0x1b8] sm:$0xff]
    %v3269 = vld [vmem:[#allocation14 + $0x1c0] sm:$0xff]
    %v3270 = vld [vmem:[#allocation14 + $0x1c8] sm:$0xff]
    %v3271 = vld [vmem:[#allocation14 + $0x1d0] sm:$0xff]
    %v3272 = vld [vmem:[#allocation14 + $0x1d8] sm:$0xff]
    %v3273 = vld [vmem:[#allocation14 + $0x1e0] sm:$0xff]
    %v3274 = vld [vmem:[#allocation14 + $0x1e8] sm:$0xff]
    %v3275 = vld [vmem:[#allocation14 + $0x1f0] sm:$0xff]
    %v3276 = vld [vmem:[#allocation14 + $0x1f8] sm:$0xff]
    %v3277 = vld [vmem:[#allocation14 + $0x200] sm:$0xff]
    %v3278 = vld [vmem:[#allocation14 + $0x208] sm:$0xff]
    %v3279 = vld [vmem:[#allocation14 + $0x210] sm:$0xff]
    %v3280 = vld [vmem:[#allocation14 + $0x218] sm:$0xff]
    %v3281 = vld [vmem:[#allocation14 + $0x220] sm:$0xff]
    %v3282 = vld [vmem:[#allocation14 + $0x228] sm:$0xff]
    %v3283 = vld [vmem:[#allocation14 + $0x230] sm:$0xff]
    %v3284 = vld [vmem:[#allocation14 + $0x238] sm:$0xff]
    %v3285 = vld [vmem:[#allocation14 + $0x240] sm:$0xff]
    %v3286 = vld [vmem:[#allocation14 + $0x248] sm:$0xff]
    %v3287 = vld [vmem:[#allocation14 + $0x250] sm:$0xff]
    %v3288 = vld [vmem:[#allocation14 + $0x258] sm:$0xff]
    %v3289 = vld [vmem:[#allocation14 + $0x260] sm:$0xff]
    %v3290 = vld [vmem:[#allocation14 + $0x268] sm:$0xff]
    %v3291 = vld [vmem:[#allocation14 + $0x270] sm:$0xff]
    %v3292 = vld [vmem:[#allocation14 + $0x278] sm:$0xff]
    %v3293 = vld [vmem:[#allocation14 + $0x280] sm:$0xff]
    %v3294 = vld [vmem:[#allocation14 + $0x288] sm:$0xff]
    %v3295 = vld [vmem:[#allocation14 + $0x290] sm:$0xff]
    %v3296 = vld [vmem:[#allocation14 + $0x298] sm:$0xff]
    %v3297 = vld [vmem:[#allocation14 + $0x2a0] sm:$0xff]
    %v3298 = vld [vmem:[#allocation14 + $0x2a8] sm:$0xff]
    %v3299 = vld [vmem:[#allocation14 + $0x2b0] sm:$0xff]
    %v3300 = vld [vmem:[#allocation14 + $0x2b8] sm:$0xff]
    %v3301 = vld [vmem:[#allocation14 + $0x2c0] sm:$0xff]
    %v3302 = vld [vmem:[#allocation14 + $0x2c8] sm:$0xff]
    %v3303 = vld [vmem:[#allocation14 + $0x2d0] sm:$0xff]
    %v3304 = vld [vmem:[#allocation14 + $0x2d8] sm:$0xff]
    %v3305 = vld [vmem:[#allocation14 + $0x2e0] sm:$0xff]
    %v3306 = vld [vmem:[#allocation14 + $0x2e8] sm:$0xff]
    %v3307 = vld [vmem:[#allocation14 + $0x2f0] sm:$0xff]
    %v3308 = vld [vmem:[#allocation14 + $0x2f8] sm:$0xff]
    %v3309 = vld [vmem:[#allocation14 + $0x300] sm:$0xff]
    %v3310 = vld [vmem:[#allocation14 + $0x308] sm:$0xff]
    %v3311 = vld [vmem:[#allocation14 + $0x310] sm:$0xff]
    %v3312 = vld [vmem:[#allocation14 + $0x318] sm:$0xff]
    %v3313 = vld [vmem:[#allocation14 + $0x320] sm:$0xff]
    %v3314 = vld [vmem:[#allocation14 + $0x328] sm:$0xff]
    %v3315 = vld [vmem:[#allocation14 + $0x330] sm:$0xff]
    %v3316 = vld [vmem:[#allocation14 + $0x338] sm:$0xff]
    %v3317 = vld [vmem:[#allocation14 + $0x340] sm:$0xff]
    %v3318 = vld [vmem:[#allocation14 + $0x348] sm:$0xff]
    %v3319 = vld [vmem:[#allocation14 + $0x350] sm:$0xff]
    %v3320 = vld [vmem:[#allocation14 + $0x358] sm:$0xff]
    %v3321 = vld [vmem:[#allocation14 + $0x360] sm:$0xff]
    %v3322 = vld [vmem:[#allocation14 + $0x368] sm:$0xff]
    %v3323 = vld [vmem:[#allocation14 + $0x370] sm:$0xff]
    %v3324 = vld [vmem:[#allocation14 + $0x378] sm:$0xff]
    %v3325 = vld [vmem:[#allocation14 + $0x380] sm:$0xff]
    %v3326 = vld [vmem:[#allocation14 + $0x388] sm:$0xff]
    %v3327 = vld [vmem:[#allocation14 + $0x390] sm:$0xff]
    %v3328 = vld [vmem:[#allocation14 + $0x398] sm:$0xff]
    %v3329 = vld [vmem:[#allocation14 + $0x3a0] sm:$0xff]
    %v3330 = vld [vmem:[#allocation14 + $0x3a8] sm:$0xff]
    %v3331 = vld [vmem:[#allocation14 + $0x3b0] sm:$0xff]
    %v3332 = vld [vmem:[#allocation14 + $0x3b8] sm:$0xff]
    %v3333 = vld [vmem:[#allocation14 + $0x3c0] sm:$0xff]
    %v3334 = vld [vmem:[#allocation14 + $0x3c8] sm:$0xff]
    %v3335 = vld [vmem:[#allocation14 + $0x3d0] sm:$0xff]
    %v3336 = vld [vmem:[#allocation14 + $0x3d8] sm:$0xff]
    %v3337 = vld [vmem:[#allocation14 + $0x3e0] sm:$0xff]
    %v3338 = vld [vmem:[#allocation14 + $0x3e8] sm:$0xff]
    %v3339 = vld [vmem:[#allocation14 + $0x3f0] sm:$0xff]
    %v3340 = vld [vmem:[#allocation14 + $0x3f8] sm:$0xff]
    %v3341 = vld [vmem:[#allocation14 + $0x400] sm:$0xff]
    %v3342 = vld [vmem:[#allocation14 + $0x408] sm:$0xff]
    %v3343 = vld [vmem:[#allocation14 + $0x410] sm:$0xff]
    %v3344 = vld [vmem:[#allocation14 + $0x418] sm:$0xff]
    %v3345 = vld [vmem:[#allocation14 + $0x420] sm:$0xff]
    %v3346 = vld [vmem:[#allocation14 + $0x428] sm:$0xff]
    %v3347 = vld [vmem:[#allocation14 + $0x430] sm:$0xff]
    %v3348 = vld [vmem:[#allocation14 + $0x438] sm:$0xff]
    %v3349 = vld [vmem:[#allocation14 + $0x440] sm:$0xff]
    %v3350 = vld [vmem:[#allocation14 + $0x448] sm:$0xff]
    %v3351 = vld [vmem:[#allocation14 + $0x450] sm:$0xff]
    %v3352 = vld [vmem:[#allocation14 + $0x458] sm:$0xff]
    %v3353 = vld [vmem:[#allocation14 + $0x460] sm:$0xff]
    %v3354 = vld [vmem:[#allocation14 + $0x468] sm:$0xff]
    %v3355 = vld [vmem:[#allocation14 + $0x470] sm:$0xff]
    %v3356 = vld [vmem:[#allocation14 + $0x478] sm:$0xff]
    %v3357 = vld [vmem:[#allocation14 + $0x480] sm:$0xff]
    %v3358 = vld [vmem:[#allocation14 + $0x488] sm:$0xff]
    %v3359 = vld [vmem:[#allocation14 + $0x490] sm:$0xff]
    %v3360 = vld [vmem:[#allocation14 + $0x498] sm:$0xff]
    %v3361 = vld [vmem:[#allocation14 + $0x4a0] sm:$0xff]
    %v3362 = vld [vmem:[#allocation14 + $0x4a8] sm:$0xff]
    %v3363 = vld [vmem:[#allocation14 + $0x4b0] sm:$0xff]
    %v3364 = vld [vmem:[#allocation14 + $0x4b8] sm:$0xff]
    %v3365 = vld [vmem:[#allocation14 + $0x4c0] sm:$0xff]
    %v3366 = vld [vmem:[#allocation14 + $0x4c8] sm:$0xff]
    %v3367 = vld [vmem:[#allocation14 + $0x4d0] sm:$0xff]
    %v3368 = vld [vmem:[#allocation14 + $0x4d8] sm:$0xff]
    %v3369 = vld [vmem:[#allocation14 + $0x4e0] sm:$0xff]
    %v3370 = vld [vmem:[#allocation14 + $0x4e8] sm:$0xff]
    %v3371 = vld [vmem:[#allocation14 + $0x4f0] sm:$0xff]
    %v3372 = vld [vmem:[#allocation14 + $0x4f8] sm:$0xff]
    %v3373 = vld [vmem:[#allocation14 + $0x500] sm:$0xff]
    %v3374 = vld [vmem:[#allocation14 + $0x508] sm:$0xff]
    %v3375 = vld [vmem:[#allocation14 + $0x510] sm:$0xff]
    %v3376 = vld [vmem:[#allocation14 + $0x518] sm:$0xff]
    %v3377 = vld [vmem:[#allocation14 + $0x520] sm:$0xff]
    %v3378 = vld [vmem:[#allocation14 + $0x528] sm:$0xff]
    %v3379 = vld [vmem:[#allocation14 + $0x530] sm:$0xff]
    %v3380 = vld [vmem:[#allocation14 + $0x538] sm:$0xff]
    %v3381 = vld [vmem:[#allocation14 + $0x540] sm:$0xff]
    %v3382 = vld [vmem:[#allocation14 + $0x548] sm:$0xff]
    %v3383 = vld [vmem:[#allocation14 + $0x550] sm:$0xff]
    %v3384 = vld [vmem:[#allocation14 + $0x558] sm:$0xff]
    %v3385 = vld [vmem:[#allocation14 + $0x560] sm:$0xff]
    %v3386 = vld [vmem:[#allocation14 + $0x568] sm:$0xff]
    %v3387 = vld [vmem:[#allocation14 + $0x570] sm:$0xff]
    %v3388 = vld [vmem:[#allocation14 + $0x578] sm:$0xff]
    %v3389 = vld [vmem:[#allocation14 + $0x580] sm:$0xff]
    %v3390 = vld [vmem:[#allocation14 + $0x588] sm:$0xff]
    %v3391 = vld [vmem:[#allocation14 + $0x590] sm:$0xff]
    %v3392 = vld [vmem:[#allocation14 + $0x598] sm:$0xff]
    %v3393 = vld [vmem:[#allocation14 + $0x5a0] sm:$0xff]
    %v3394 = vld [vmem:[#allocation14 + $0x5a8] sm:$0xff]
    %v3395 = vld [vmem:[#allocation14 + $0x5b0] sm:$0xff]
    %v3396 = vld [vmem:[#allocation14 + $0x5b8] sm:$0xff]
    %v3397 = vld [vmem:[#allocation14 + $0x5c0] sm:$0xff]
    %v3398 = vld [vmem:[#allocation14 + $0x5c8] sm:$0xff]
    %v3399 = vld [vmem:[#allocation14 + $0x5d0] sm:$0xff]
    %v3400 = vld [vmem:[#allocation14 + $0x5d8] sm:$0xff]
    %v3401 = vld [vmem:[#allocation14 + $0x5e0] sm:$0xff]
    %v3402 = vld [vmem:[#allocation14 + $0x5e8] sm:$0xff]
    %v3403 = vld [vmem:[#allocation14 + $0x5f0] sm:$0xff]
    %v3404 = vld [vmem:[#allocation14 + $0x5f8] sm:$0xff]
    %v3405 = vld [vmem:[#allocation14 + $0x600] sm:$0xff]
    %v3406 = vld [vmem:[#allocation14 + $0x608] sm:$0xff]
    %v3407 = vld [vmem:[#allocation14 + $0x610] sm:$0xff]
    %v3408 = vld [vmem:[#allocation14 + $0x618] sm:$0xff]
    %v3409 = vld [vmem:[#allocation14 + $0x620] sm:$0xff]
    %v3410 = vld [vmem:[#allocation14 + $0x628] sm:$0xff]
    %v3411 = vld [vmem:[#allocation14 + $0x630] sm:$0xff]
    %v3412 = vld [vmem:[#allocation14 + $0x638] sm:$0xff]
    %v3413 = vld [vmem:[#allocation14 + $0x640] sm:$0xff]
    %v3414 = vld [vmem:[#allocation14 + $0x648] sm:$0xff]
    %v3415 = vld [vmem:[#allocation14 + $0x650] sm:$0xff]
    %v3416 = vld [vmem:[#allocation14 + $0x658] sm:$0xff]
    %v3417 = vld [vmem:[#allocation14 + $0x660] sm:$0xff]
    %v3418 = vld [vmem:[#allocation14 + $0x668] sm:$0xff]
    %v3419 = vld [vmem:[#allocation14 + $0x670] sm:$0xff]
    %v3420 = vld [vmem:[#allocation14 + $0x678] sm:$0xff]
    %v3421 = vld [vmem:[#allocation14 + $0x680] sm:$0xff]
    %v3422 = vld [vmem:[#allocation14 + $0x688] sm:$0xff]
    %v3423 = vld [vmem:[#allocation14 + $0x690] sm:$0xff]
    %v3424 = vld [vmem:[#allocation14 + $0x698] sm:$0xff]
    %v3425 = vld [vmem:[#allocation14 + $0x6a0] sm:$0xff]
    %v3426 = vld [vmem:[#allocation14 + $0x6a8] sm:$0xff]
    %v3427 = vld [vmem:[#allocation14 + $0x6b0] sm:$0xff]
    %v3428 = vld [vmem:[#allocation14 + $0x6b8] sm:$0xff]
    %v3429 = vld [vmem:[#allocation14 + $0x6c0] sm:$0xff]
    %v3430 = vld [vmem:[#allocation14 + $0x6c8] sm:$0xff]
    %v3431 = vld [vmem:[#allocation14 + $0x6d0] sm:$0xff]
    %v3432 = vld [vmem:[#allocation14 + $0x6d8] sm:$0xff]
    %v3433 = vld [vmem:[#allocation14 + $0x6e0] sm:$0xff]
    %v3434 = vld [vmem:[#allocation14 + $0x6e8] sm:$0xff]
    %v3435 = vld [vmem:[#allocation14 + $0x6f0] sm:$0xff]
    %v3436 = vld [vmem:[#allocation14 + $0x6f8] sm:$0xff]
    %v3437 = vld [vmem:[#allocation14 + $0x700] sm:$0xff]
    %v3438 = vld [vmem:[#allocation14 + $0x708] sm:$0xff]
    %v3439 = vld [vmem:[#allocation14 + $0x710] sm:$0xff]
    %v3440 = vld [vmem:[#allocation14 + $0x718] sm:$0xff]
    %v3441 = vld [vmem:[#allocation14 + $0x720] sm:$0xff]
    %v3442 = vld [vmem:[#allocation14 + $0x728] sm:$0xff]
    %v3443 = vld [vmem:[#allocation14 + $0x730] sm:$0xff]
    %v3444 = vld [vmem:[#allocation14 + $0x738] sm:$0xff]
    %v3445 = vld [vmem:[#allocation14 + $0x740] sm:$0xff]
    %v3446 = vld [vmem:[#allocation14 + $0x748] sm:$0xff]
    %v3447 = vld [vmem:[#allocation14 + $0x750] sm:$0xff]
    %v3448 = vld [vmem:[#allocation14 + $0x758] sm:$0xff]
    %v3449 = vld [vmem:[#allocation14 + $0x760] sm:$0xff]
    %v3450 = vld [vmem:[#allocation14 + $0x768] sm:$0xff]
    %v3451 = vld [vmem:[#allocation14 + $0x770] sm:$0xff]
    %v3452 = vld [vmem:[#allocation14 + $0x778] sm:$0xff]
    %v3453 = vld [vmem:[#allocation14 + $0x780] sm:$0xff]
    %v3454 = vld [vmem:[#allocation14 + $0x788] sm:$0xff]
    %v3455 = vld [vmem:[#allocation14 + $0x790] sm:$0xff]
    %v3456 = vld [vmem:[#allocation14 + $0x798] sm:$0xff]
    %v3457 = vld [vmem:[#allocation14 + $0x7a0] sm:$0xff]
    %v3458 = vld [vmem:[#allocation14 + $0x7a8] sm:$0xff]
    %v3459 = vld [vmem:[#allocation14 + $0x7b0] sm:$0xff]
    %v3460 = vld [vmem:[#allocation14 + $0x7b8] sm:$0xff]
    %v3461 = vld [vmem:[#allocation14 + $0x7c0] sm:$0xff]
    %v3462 = vld [vmem:[#allocation14 + $0x7c8] sm:$0xff]
    %v3463 = vld [vmem:[#allocation14 + $0x7d0] sm:$0xff]
    %v3464 = vld [vmem:[#allocation14 + $0x7d8] sm:$0xff]
    %v3465 = vld [vmem:[#allocation14 + $0x7e0] sm:$0xff]
    %v3466 = vld [vmem:[#allocation14 + $0x7e8] sm:$0xff]
    %v3467 = vld [vmem:[#allocation14 + $0x7f0] sm:$0xff]
    %v3468 = vld [vmem:[#allocation14 + $0x7f8] sm:$0xff]
    %v3469 = vld [vmem:[#allocation14 + $0x800] sm:$0xff]
    %v3470 = vld [vmem:[#allocation14 + $0x808] sm:$0xff]
    %v3471 = vld [vmem:[#allocation14 + $0x810] sm:$0xff]
    %v3472 = vld [vmem:[#allocation14 + $0x818] sm:$0xff]
    %v3473 = vld [vmem:[#allocation14 + $0x820] sm:$0xff]
    %v3474 = vld [vmem:[#allocation14 + $0x828] sm:$0xff]
    %v3475 = vld [vmem:[#allocation14 + $0x830] sm:$0xff]
    %v3476 = vld [vmem:[#allocation14 + $0x838] sm:$0xff]
    %v3477 = vld [vmem:[#allocation14 + $0x840] sm:$0xff]
    %v3478 = vld [vmem:[#allocation14 + $0x848] sm:$0xff]
    %v3479 = vld [vmem:[#allocation14 + $0x850] sm:$0xff]
    %v3480 = vld [vmem:[#allocation14 + $0x858] sm:$0xff]
    %v3481 = vld [vmem:[#allocation14 + $0x860] sm:$0xff]
    %v3482 = vld [vmem:[#allocation14 + $0x868] sm:$0xff]
    %v3483 = vld [vmem:[#allocation14 + $0x870] sm:$0xff]
    %v3484 = vld [vmem:[#allocation14 + $0x878] sm:$0xff]
    %v3485 = vld [vmem:[#allocation14 + $0x880] sm:$0xff]
    %v3486 = vld [vmem:[#allocation14 + $0x888] sm:$0xff]
    %v3487 = vld [vmem:[#allocation14 + $0x890] sm:$0xff]
    %v3488 = vld [vmem:[#allocation14 + $0x898] sm:$0xff]
    %v3489 = vld [vmem:[#allocation14 + $0x8a0] sm:$0xff]
    %v3490 = vld [vmem:[#allocation14 + $0x8a8] sm:$0xff]
    %v3491 = vld [vmem:[#allocation14 + $0x8b0] sm:$0xff]
    %v3492 = vld [vmem:[#allocation14 + $0x8b8] sm:$0xff]
    %v3493 = vld [vmem:[#allocation14 + $0x8c0] sm:$0xff]
    %v3494 = vld [vmem:[#allocation14 + $0x8c8] sm:$0xff]
    %v3495 = vld [vmem:[#allocation14 + $0x8d0] sm:$0xff]
    %v3496 = vld [vmem:[#allocation14 + $0x8d8] sm:$0xff]
    %v3497 = vld [vmem:[#allocation14 + $0x8e0] sm:$0xff]
    %v3498 = vld [vmem:[#allocation14 + $0x8e8] sm:$0xff]
    %v3499 = vld [vmem:[#allocation14 + $0x8f0] sm:$0xff]
    %v3500 = vld [vmem:[#allocation14 + $0x8f8] sm:$0xff]
    %v3501 = vld [vmem:[#allocation14 + $0x900] sm:$0xff]
    %v3502 = vld [vmem:[#allocation14 + $0x908] sm:$0xff]
    %v3503 = vld [vmem:[#allocation14 + $0x910] sm:$0xff]
    %v3504 = vld [vmem:[#allocation14 + $0x918] sm:$0xff]
    %v3505 = vld [vmem:[#allocation14 + $0x920] sm:$0xff]
    %v3506 = vld [vmem:[#allocation14 + $0x928] sm:$0xff]
    %v3507 = vld [vmem:[#allocation14 + $0x930] sm:$0xff]
    %v3508 = vld [vmem:[#allocation14 + $0x938] sm:$0xff]
    %v3509 = vld [vmem:[#allocation14 + $0x940] sm:$0xff]
    %v3510 = vld [vmem:[#allocation14 + $0x948] sm:$0xff]
    %v3511 = vld [vmem:[#allocation14 + $0x950] sm:$0xff]
    %v3512 = vld [vmem:[#allocation14 + $0x958] sm:$0xff]
    %v3513 = vld [vmem:[#allocation14 + $0x960] sm:$0xff]
    %v3514 = vld [vmem:[#allocation14 + $0x968] sm:$0xff]
    %v3515 = vld [vmem:[#allocation14 + $0x970] sm:$0xff]
    %v3516 = vld [vmem:[#allocation14 + $0x978] sm:$0xff]
    %v3517 = vld [vmem:[#allocation14 + $0x980] sm:$0xff]
    %v3518 = vld [vmem:[#allocation14 + $0x988] sm:$0xff]
    %v3519 = vld [vmem:[#allocation14 + $0x990] sm:$0xff]
    %v3520 = vld [vmem:[#allocation14 + $0x998] sm:$0xff]
    %v3521 = vld [vmem:[#allocation14 + $0x9a0] sm:$0xff]
    %v3522 = vld [vmem:[#allocation14 + $0x9a8] sm:$0xff]
    %v3523 = vld [vmem:[#allocation14 + $0x9b0] sm:$0xff]
    %v3524 = vld [vmem:[#allocation14 + $0x9b8] sm:$0xff]
    %v3525 = vld [vmem:[#allocation14 + $0x9c0] sm:$0xff]
    %v3526 = vld [vmem:[#allocation14 + $0x9c8] sm:$0xff]
    %v3527 = vld [vmem:[#allocation14 + $0x9d0] sm:$0xff]
    %v3528 = vld [vmem:[#allocation14 + $0x9d8] sm:$0xff]
    %v3529 = vld [vmem:[#allocation14 + $0x9e0] sm:$0xff]
    %v3530 = vld [vmem:[#allocation14 + $0x9e8] sm:$0xff]
    %v3531 = vld [vmem:[#allocation14 + $0x9f0] sm:$0xff]
    %v3532 = vld [vmem:[#allocation14 + $0x9f8] sm:$0xff]
    %v3533 = vld [vmem:[#allocation14 + $0xa00] sm:$0xff]
    %v3534 = vld [vmem:[#allocation14 + $0xa08] sm:$0xff]
    %v3535 = vld [vmem:[#allocation14 + $0xa10] sm:$0xff]
    %v3536 = vld [vmem:[#allocation14 + $0xa18] sm:$0xff]
    %v3537 = vld [vmem:[#allocation14 + $0xa20] sm:$0xff]
    %v3538 = vld [vmem:[#allocation14 + $0xa28] sm:$0xff]
    %v3539 = vld [vmem:[#allocation14 + $0xa30] sm:$0xff]
    %v3540 = vld [vmem:[#allocation14 + $0xa38] sm:$0xff]
    %v3541 = vld [vmem:[#allocation14 + $0xa40] sm:$0xff]
    %v3542 = vld [vmem:[#allocation14 + $0xa48] sm:$0xff]
    %v3543 = vld [vmem:[#allocation14 + $0xa50] sm:$0xff]
    %v3544 = vld [vmem:[#allocation14 + $0xa58] sm:$0xff]
    %v3545 = vld [vmem:[#allocation14 + $0xa60] sm:$0xff]
    %v3546 = vld [vmem:[#allocation14 + $0xa68] sm:$0xff]
    %v3547 = vld [vmem:[#allocation14 + $0xa70] sm:$0xff]
    %v3548 = vld [vmem:[#allocation14 + $0xa78] sm:$0xff]
    %v3549 = vld [vmem:[#allocation15] sm:$0xff]
    %v3551 = vlaneseq
    %v3552 = vshrl.u32 %v3551, 7
    %v3553 = vsub.s32 0, %v3552
    %v3554 = vrot.slane %v3549, %v3553
    %v3555 = vlaneseq
    %v3556 = vshrl.u32 %v3555, 7
    %v3557 = vsub.s32 1, %v3556
    %v3558 = vrot.slane %v3549, %v3557
    %v3559 = vlaneseq
    %v3560 = vshrl.u32 %v3559, 7
    %v3561 = vsub.s32 2, %v3560
    %v3562 = vrot.slane %v3549, %v3561
    %v3563 = vlaneseq
    %v3564 = vshrl.u32 %v3563, 7
    %v3565 = vsub.s32 3, %v3564
    %v3566 = vrot.slane %v3549, %v3565
    %v3567 = vlaneseq
    %v3568 = vshrl.u32 %v3567, 7
    %v3569 = vsub.s32 4, %v3568
    %v3570 = vrot.slane %v3549, %v3569
    %v3571 = vlaneseq
    %v3572 = vshrl.u32 %v3571, 7
    %v3573 = vsub.s32 5, %v3572
    %v3574 = vrot.slane %v3549, %v3573
    %v3575 = vlaneseq
    %v3576 = vshrl.u32 %v3575, 7
    %v3577 = vsub.s32 6, %v3576
    %v3578 = vrot.slane %v3549, %v3577
    %v3579 = vlaneseq
    %v3580 = vshrl.u32 %v3579, 7
    %v3581 = vsub.s32 7, %v3580
    %v3582 = vrot.slane %v3549, %v3581
    %v3927 = vunpack.c.l.b16 %v3213
    %v3928 = vunpack.c.h.b16 %v3213
    %v3929 = vunpack.c.l.b16 %v3214
    %v3930 = vunpack.c.h.b16 %v3214
    %v3931 = vunpack.c.l.b16 %v3215
    %v3932 = vunpack.c.h.b16 %v3215
    %v3933 = vunpack.c.l.b16 %v3216
    %v3934 = vunpack.c.h.b16 %v3216
    %v3935 = vunpack.c.l.b16 %v3217
    %v3936 = vunpack.c.h.b16 %v3217
    %v3937 = vunpack.c.l.b16 %v3218
    %v3938 = vunpack.c.h.b16 %v3218
    %v3939 = vunpack.c.l.b16 %v3219
    %v3940 = vunpack.c.h.b16 %v3219
    %v3941 = vunpack.c.l.b16 %v3220
    %v3942 = vunpack.c.h.b16 %v3220
    %v3943 = vunpack.c.l.b16 %v3221
    %v3944 = vunpack.c.h.b16 %v3221
    %v3945 = vunpack.c.l.b16 %v3222
    %v3946 = vunpack.c.h.b16 %v3222
    %v3947 = vunpack.c.l.b16 %v3223
    %v3948 = vunpack.c.h.b16 %v3223
    %v3949 = vunpack.c.l.b16 %v3224
    %v3950 = vunpack.c.h.b16 %v3224
    %v3951 = vunpack.c.l.b16 %v3225
    %v3952 = vunpack.c.h.b16 %v3225
    %v3953 = vunpack.c.l.b16 %v3226
    %v3954 = vunpack.c.h.b16 %v3226
    %v3955 = vunpack.c.l.b16 %v3227
    %v3956 = vunpack.c.h.b16 %v3227
    %v3957 = vunpack.c.l.b16 %v3228
    %v3958 = vunpack.c.h.b16 %v3228
    %v3959 = vunpack.c.l.b16 %v3229
    %v3960 = vunpack.c.h.b16 %v3229
    %v3961 = vunpack.c.l.b16 %v3230
    %v3962 = vunpack.c.h.b16 %v3230
    %v3963 = vunpack.c.l.b16 %v3231
    %v3964 = vunpack.c.h.b16 %v3231
    %v3965 = vunpack.c.l.b16 %v3232
    %v3966 = vunpack.c.h.b16 %v3232
    %v3967 = vunpack.c.l.b16 %v3233
    %v3968 = vunpack.c.h.b16 %v3233
    %v3969 = vunpack.c.l.b16 %v3234
    %v3970 = vunpack.c.h.b16 %v3234
    %v3971 = vunpack.c.l.b16 %v3235
    %v3972 = vunpack.c.h.b16 %v3235
    %v3973 = vunpack.c.l.b16 %v3236
    %v3974 = vunpack.c.h.b16 %v3236
    %v3975 = vunpack.c.l.b16 %v3237
    %v3976 = vunpack.c.h.b16 %v3237
    %v3977 = vunpack.c.l.b16 %v3238
    %v3978 = vunpack.c.h.b16 %v3238
    %v3979 = vunpack.c.l.b16 %v3239
    %v3980 = vunpack.c.h.b16 %v3239
    %v3981 = vunpack.c.l.b16 %v3240
    %v3982 = vunpack.c.h.b16 %v3240
    %v3983 = vunpack.c.l.b16 %v3241
    %v3984 = vunpack.c.h.b16 %v3241
    %v3985 = vunpack.c.l.b16 %v3242
    %v3986 = vunpack.c.h.b16 %v3242
    %v3987 = vunpack.c.l.b16 %v3243
    %v3988 = vunpack.c.h.b16 %v3243
    %v3989 = vunpack.c.l.b16 %v3244
    %v3990 = vunpack.c.h.b16 %v3244
    %v3991 = vunpack.c.l.b16 %v3245
    %v3992 = vunpack.c.h.b16 %v3245
    %v3993 = vunpack.c.l.b16 %v3246
    %v3994 = vunpack.c.h.b16 %v3246
    %v3995 = vunpack.c.l.b16 %v3247
    %v3996 = vunpack.c.h.b16 %v3247
    %v3997 = vunpack.c.l.b16 %v3248
    %v3998 = vunpack.c.h.b16 %v3248
    %v3999 = vunpack.c.l.b16 %v3249
    %v4000 = vunpack.c.h.b16 %v3249
    %v4001 = vunpack.c.l.b16 %v3250
    %v4002 = vunpack.c.h.b16 %v3250
    %v4003 = vunpack.c.l.b16 %v3251
    %v4004 = vunpack.c.h.b16 %v3251
    %v4005 = vunpack.c.l.b16 %v3252
    %v4006 = vunpack.c.h.b16 %v3252
    %v4007 = vunpack.c.l.b16 %v3253
    %v4008 = vunpack.c.h.b16 %v3253
    %v4009 = vunpack.c.l.b16 %v3254
    %v4010 = vunpack.c.h.b16 %v3254
    %v4011 = vunpack.c.l.b16 %v3255
    %v4012 = vunpack.c.h.b16 %v3255
    %v4013 = vunpack.c.l.b16 %v3256
    %v4014 = vunpack.c.h.b16 %v3256
    %v4015 = vunpack.c.l.b16 %v3257
    %v4016 = vunpack.c.h.b16 %v3257
    %v4017 = vunpack.c.l.b16 %v3258
    %v4018 = vunpack.c.h.b16 %v3258
    %v4019 = vunpack.c.l.b16 %v3259
    %v4020 = vunpack.c.h.b16 %v3259
    %v4021 = vunpack.c.l.b16 %v3260
    %v4022 = vunpack.c.h.b16 %v3260
    %v4023 = vunpack.c.l.b16 %v3261
    %v4024 = vunpack.c.h.b16 %v3261
    %v4025 = vunpack.c.l.b16 %v3262
    %v4026 = vunpack.c.h.b16 %v3262
    %v4027 = vunpack.c.l.b16 %v3263
    %v4028 = vunpack.c.h.b16 %v3263
    %v4029 = vunpack.c.l.b16 %v3264
    %v4030 = vunpack.c.h.b16 %v3264
    %v4031 = vunpack.c.l.b16 %v3265
    %v4032 = vunpack.c.h.b16 %v3265
    %v4033 = vunpack.c.l.b16 %v3266
    %v4034 = vunpack.c.h.b16 %v3266
    %v4035 = vunpack.c.l.b16 %v3267
    %v4036 = vunpack.c.h.b16 %v3267
    %v4037 = vunpack.c.l.b16 %v3268
    %v4038 = vunpack.c.h.b16 %v3268
    %v4039 = vunpack.c.l.b16 %v3269
    %v4040 = vunpack.c.h.b16 %v3269
    %v4041 = vunpack.c.l.b16 %v3270
    %v4042 = vunpack.c.h.b16 %v3270
    %v4043 = vunpack.c.l.b16 %v3271
    %v4044 = vunpack.c.h.b16 %v3271
    %v4045 = vunpack.c.l.b16 %v3272
    %v4046 = vunpack.c.h.b16 %v3272
    %v4047 = vunpack.c.l.b16 %v3273
    %v4048 = vunpack.c.h.b16 %v3273
    %v4049 = vunpack.c.l.b16 %v3274
    %v4050 = vunpack.c.h.b16 %v3274
    %v4051 = vunpack.c.l.b16 %v3275
    %v4052 = vunpack.c.h.b16 %v3275
    %v4053 = vunpack.c.l.b16 %v3276
    %v4054 = vunpack.c.h.b16 %v3276
    %v4055 = vunpack.c.l.b16 %v3277
    %v4056 = vunpack.c.h.b16 %v3277
    %v4057 = vunpack.c.l.b16 %v3278
    %v4058 = vunpack.c.h.b16 %v3278
    %v4059 = vunpack.c.l.b16 %v3279
    %v4060 = vunpack.c.h.b16 %v3279
    %v4061 = vunpack.c.l.b16 %v3280
    %v4062 = vunpack.c.h.b16 %v3280
    %v4063 = vunpack.c.l.b16 %v3281
    %v4064 = vunpack.c.h.b16 %v3281
    %v4065 = vunpack.c.l.b16 %v3282
    %v4066 = vunpack.c.h.b16 %v3282
    %v4067 = vunpack.c.l.b16 %v3283
    %v4068 = vunpack.c.h.b16 %v3283
    %v4069 = vunpack.c.l.b16 %v3284
    %v4070 = vunpack.c.h.b16 %v3284
    %v4071 = vunpack.c.l.b16 %v3285
    %v4072 = vunpack.c.h.b16 %v3285
    %v4073 = vunpack.c.l.b16 %v3286
    %v4074 = vunpack.c.h.b16 %v3286
    %v4075 = vunpack.c.l.b16 %v3287
    %v4076 = vunpack.c.h.b16 %v3287
    %v4077 = vunpack.c.l.b16 %v3288
    %v4078 = vunpack.c.h.b16 %v3288
    %v4079 = vunpack.c.l.b16 %v3289
    %v4080 = vunpack.c.h.b16 %v3289
    %v4081 = vunpack.c.l.b16 %v3290
    %v4082 = vunpack.c.h.b16 %v3290
    %v4083 = vunpack.c.l.b16 %v3291
    %v4084 = vunpack.c.h.b16 %v3291
    %v4085 = vunpack.c.l.b16 %v3292
    %v4086 = vunpack.c.h.b16 %v3292
    %v4087 = vunpack.c.l.b16 %v3293
    %v4088 = vunpack.c.h.b16 %v3293
    %v4089 = vunpack.c.l.b16 %v3294
    %v4090 = vunpack.c.h.b16 %v3294
    %v4091 = vunpack.c.l.b16 %v3295
    %v4092 = vunpack.c.h.b16 %v3295
    %v4093 = vunpack.c.l.b16 %v3296
    %v4094 = vunpack.c.h.b16 %v3296
    %v4095 = vunpack.c.l.b16 %v3297
    %v4096 = vunpack.c.h.b16 %v3297
    %v4097 = vunpack.c.l.b16 %v3298
    %v4098 = vunpack.c.h.b16 %v3298
    %v4099 = vunpack.c.l.b16 %v3299
    %v4100 = vunpack.c.h.b16 %v3299
    %v4101 = vunpack.c.l.b16 %v3300
    %v4102 = vunpack.c.h.b16 %v3300
    %v4103 = vunpack.c.l.b16 %v3301
    %v4104 = vunpack.c.h.b16 %v3301
    %v4105 = vunpack.c.l.b16 %v3302
    %v4106 = vunpack.c.h.b16 %v3302
    %v4107 = vunpack.c.l.b16 %v3303
    %v4108 = vunpack.c.h.b16 %v3303
    %v4109 = vunpack.c.l.b16 %v3304
    %v4110 = vunpack.c.h.b16 %v3304
    %v4111 = vunpack.c.l.b16 %v3305
    %v4112 = vunpack.c.h.b16 %v3305
    %v4113 = vunpack.c.l.b16 %v3306
    %v4114 = vunpack.c.h.b16 %v3306
    %v4115 = vunpack.c.l.b16 %v3307
    %v4116 = vunpack.c.h.b16 %v3307
    %v4117 = vunpack.c.l.b16 %v3308
    %v4118 = vunpack.c.h.b16 %v3308
    %v4119 = vunpack.c.l.b16 %v3309
    %v4120 = vunpack.c.h.b16 %v3309
    %v4121 = vunpack.c.l.b16 %v3310
    %v4122 = vunpack.c.h.b16 %v3310
    %v4123 = vunpack.c.l.b16 %v3311
    %v4124 = vunpack.c.h.b16 %v3311
    %v4125 = vunpack.c.l.b16 %v3312
    %v4126 = vunpack.c.h.b16 %v3312
    %v4127 = vunpack.c.l.b16 %v3313
    %v4128 = vunpack.c.h.b16 %v3313
    %v4129 = vunpack.c.l.b16 %v3314
    %v4130 = vunpack.c.h.b16 %v3314
    %v4131 = vunpack.c.l.b16 %v3315
    %v4132 = vunpack.c.h.b16 %v3315
    %v4133 = vunpack.c.l.b16 %v3316
    %v4134 = vunpack.c.h.b16 %v3316
    %v4135 = vunpack.c.l.b16 %v3317
    %v4136 = vunpack.c.h.b16 %v3317
    %v4137 = vunpack.c.l.b16 %v3318
    %v4138 = vunpack.c.h.b16 %v3318
    %v4139 = vunpack.c.l.b16 %v3319
    %v4140 = vunpack.c.h.b16 %v3319
    %v4141 = vunpack.c.l.b16 %v3320
    %v4142 = vunpack.c.h.b16 %v3320
    %v4143 = vunpack.c.l.b16 %v3321
    %v4144 = vunpack.c.h.b16 %v3321
    %v4145 = vunpack.c.l.b16 %v3322
    %v4146 = vunpack.c.h.b16 %v3322
    %v4147 = vunpack.c.l.b16 %v3323
    %v4148 = vunpack.c.h.b16 %v3323
    %v4149 = vunpack.c.l.b16 %v3324
    %v4150 = vunpack.c.h.b16 %v3324
    %v4151 = vunpack.c.l.b16 %v3325
    %v4152 = vunpack.c.h.b16 %v3325
    %v4153 = vunpack.c.l.b16 %v3326
    %v4154 = vunpack.c.h.b16 %v3326
    %v4155 = vunpack.c.l.b16 %v3327
    %v4156 = vunpack.c.h.b16 %v3327
    %v4157 = vunpack.c.l.b16 %v3328
    %v4158 = vunpack.c.h.b16 %v3328
    %v4159 = vunpack.c.l.b16 %v3329
    %v4160 = vunpack.c.h.b16 %v3329
    %v4161 = vunpack.c.l.b16 %v3330
    %v4162 = vunpack.c.h.b16 %v3330
    %v4163 = vunpack.c.l.b16 %v3331
    %v4164 = vunpack.c.h.b16 %v3331
    %v4165 = vunpack.c.l.b16 %v3332
    %v4166 = vunpack.c.h.b16 %v3332
    %v4167 = vunpack.c.l.b16 %v3333
    %v4168 = vunpack.c.h.b16 %v3333
    %v4169 = vunpack.c.l.b16 %v3334
    %v4170 = vunpack.c.h.b16 %v3334
    %v4171 = vunpack.c.l.b16 %v3335
    %v4172 = vunpack.c.h.b16 %v3335
    %v4173 = vunpack.c.l.b16 %v3336
    %v4174 = vunpack.c.h.b16 %v3336
    %v4175 = vunpack.c.l.b16 %v3337
    %v4176 = vunpack.c.h.b16 %v3337
    %v4177 = vunpack.c.l.b16 %v3338
    %v4178 = vunpack.c.h.b16 %v3338
    %v4179 = vunpack.c.l.b16 %v3339
    %v4180 = vunpack.c.h.b16 %v3339
    %v4181 = vunpack.c.l.b16 %v3340
    %v4182 = vunpack.c.h.b16 %v3340
    %v4183 = vunpack.c.l.b16 %v3341
    %v4184 = vunpack.c.h.b16 %v3341
    %v4185 = vunpack.c.l.b16 %v3342
    %v4186 = vunpack.c.h.b16 %v3342
    %v4187 = vunpack.c.l.b16 %v3343
    %v4188 = vunpack.c.h.b16 %v3343
    %v4189 = vunpack.c.l.b16 %v3344
    %v4190 = vunpack.c.h.b16 %v3344
    %v4191 = vunpack.c.l.b16 %v3345
    %v4192 = vunpack.c.h.b16 %v3345
    %v4193 = vunpack.c.l.b16 %v3346
    %v4194 = vunpack.c.h.b16 %v3346
    %v4195 = vunpack.c.l.b16 %v3347
    %v4196 = vunpack.c.h.b16 %v3347
    %v4197 = vunpack.c.l.b16 %v3348
    %v4198 = vunpack.c.h.b16 %v3348
    %v4199 = vunpack.c.l.b16 %v3349
    %v4200 = vunpack.c.h.b16 %v3349
    %v4201 = vunpack.c.l.b16 %v3350
    %v4202 = vunpack.c.h.b16 %v3350
    %v4203 = vunpack.c.l.b16 %v3351
    %v4204 = vunpack.c.h.b16 %v3351
    %v4205 = vunpack.c.l.b16 %v3352
    %v4206 = vunpack.c.h.b16 %v3352
    %v4207 = vunpack.c.l.b16 %v3353
    %v4208 = vunpack.c.h.b16 %v3353
    %v4209 = vunpack.c.l.b16 %v3354
    %v4210 = vunpack.c.h.b16 %v3354
    %v4211 = vunpack.c.l.b16 %v3355
    %v4212 = vunpack.c.h.b16 %v3355
    %v4213 = vunpack.c.l.b16 %v3356
    %v4214 = vunpack.c.h.b16 %v3356
    %v4215 = vunpack.c.l.b16 %v3357
    %v4216 = vunpack.c.h.b16 %v3357
    %v4217 = vunpack.c.l.b16 %v3358
    %v4218 = vunpack.c.h.b16 %v3358
    %v4219 = vunpack.c.l.b16 %v3359
    %v4220 = vunpack.c.h.b16 %v3359
    %v4221 = vunpack.c.l.b16 %v3360
    %v4222 = vunpack.c.h.b16 %v3360
    %v4223 = vunpack.c.l.b16 %v3361
    %v4224 = vunpack.c.h.b16 %v3361
    %v4225 = vunpack.c.l.b16 %v3362
    %v4226 = vunpack.c.h.b16 %v3362
    %v4227 = vunpack.c.l.b16 %v3363
    %v4228 = vunpack.c.h.b16 %v3363
    %v4229 = vunpack.c.l.b16 %v3364
    %v4230 = vunpack.c.h.b16 %v3364
    %v4231 = vunpack.c.l.b16 %v3365
    %v4232 = vunpack.c.h.b16 %v3365
    %v4233 = vunpack.c.l.b16 %v3366
    %v4234 = vunpack.c.h.b16 %v3366
    %v4235 = vunpack.c.l.b16 %v3367
    %v4236 = vunpack.c.h.b16 %v3367
    %v4237 = vunpack.c.l.b16 %v3368
    %v4238 = vunpack.c.h.b16 %v3368
    %v4239 = vunpack.c.l.b16 %v3369
    %v4240 = vunpack.c.h.b16 %v3369
    %v4241 = vunpack.c.l.b16 %v3370
    %v4242 = vunpack.c.h.b16 %v3370
    %v4243 = vunpack.c.l.b16 %v3371
    %v4244 = vunpack.c.h.b16 %v3371
    %v4245 = vunpack.c.l.b16 %v3372
    %v4246 = vunpack.c.h.b16 %v3372
    %v4247 = vunpack.c.l.b16 %v3373
    %v4248 = vunpack.c.h.b16 %v3373
    %v4249 = vunpack.c.l.b16 %v3374
    %v4250 = vunpack.c.h.b16 %v3374
    %v4251 = vunpack.c.l.b16 %v3375
    %v4252 = vunpack.c.h.b16 %v3375
    %v4253 = vunpack.c.l.b16 %v3376
    %v4254 = vunpack.c.h.b16 %v3376
    %v4255 = vunpack.c.l.b16 %v3377
    %v4256 = vunpack.c.h.b16 %v3377
    %v4257 = vunpack.c.l.b16 %v3378
    %v4258 = vunpack.c.h.b16 %v3378
    %v4259 = vunpack.c.l.b16 %v3379
    %v4260 = vunpack.c.h.b16 %v3379
    %v4261 = vunpack.c.l.b16 %v3380
    %v4262 = vunpack.c.h.b16 %v3380
    %v4263 = vunpack.c.l.b16 %v3381
    %v4264 = vunpack.c.h.b16 %v3381
    %v4265 = vunpack.c.l.b16 %v3382
    %v4266 = vunpack.c.h.b16 %v3382
    %v4267 = vunpack.c.l.b16 %v3383
    %v4268 = vunpack.c.h.b16 %v3383
    %v4269 = vunpack.c.l.b16 %v3384
    %v4270 = vunpack.c.h.b16 %v3384
    %v4271 = vunpack.c.l.b16 %v3385
    %v4272 = vunpack.c.h.b16 %v3385
    %v4273 = vunpack.c.l.b16 %v3386
    %v4274 = vunpack.c.h.b16 %v3386
    %v4275 = vunpack.c.l.b16 %v3387
    %v4276 = vunpack.c.h.b16 %v3387
    %v4277 = vunpack.c.l.b16 %v3388
    %v4278 = vunpack.c.h.b16 %v3388
    %v4279 = vunpack.c.l.b16 %v3389
    %v4280 = vunpack.c.h.b16 %v3389
    %v4281 = vunpack.c.l.b16 %v3390
    %v4282 = vunpack.c.h.b16 %v3390
    %v4283 = vunpack.c.l.b16 %v3391
    %v4284 = vunpack.c.h.b16 %v3391
    %v4285 = vunpack.c.l.b16 %v3392
    %v4286 = vunpack.c.h.b16 %v3392
    %v4287 = vunpack.c.l.b16 %v3393
    %v4288 = vunpack.c.h.b16 %v3393
    %v4289 = vunpack.c.l.b16 %v3394
    %v4290 = vunpack.c.h.b16 %v3394
    %v4291 = vunpack.c.l.b16 %v3395
    %v4292 = vunpack.c.h.b16 %v3395
    %v4293 = vunpack.c.l.b16 %v3396
    %v4294 = vunpack.c.h.b16 %v3396
    %v4295 = vunpack.c.l.b16 %v3397
    %v4296 = vunpack.c.h.b16 %v3397
    %v4297 = vunpack.c.l.b16 %v3398
    %v4298 = vunpack.c.h.b16 %v3398
    %v4299 = vunpack.c.l.b16 %v3399
    %v4300 = vunpack.c.h.b16 %v3399
    %v4301 = vunpack.c.l.b16 %v3400
    %v4302 = vunpack.c.h.b16 %v3400
    %v4303 = vunpack.c.l.b16 %v3401
    %v4304 = vunpack.c.h.b16 %v3401
    %v4305 = vunpack.c.l.b16 %v3402
    %v4306 = vunpack.c.h.b16 %v3402
    %v4307 = vunpack.c.l.b16 %v3403
    %v4308 = vunpack.c.h.b16 %v3403
    %v4309 = vunpack.c.l.b16 %v3404
    %v4310 = vunpack.c.h.b16 %v3404
    %v4311 = vunpack.c.l.b16 %v3405
    %v4312 = vunpack.c.h.b16 %v3405
    %v4313 = vunpack.c.l.b16 %v3406
    %v4314 = vunpack.c.h.b16 %v3406
    %v4315 = vunpack.c.l.b16 %v3407
    %v4316 = vunpack.c.h.b16 %v3407
    %v4317 = vunpack.c.l.b16 %v3408
    %v4318 = vunpack.c.h.b16 %v3408
    %v4319 = vunpack.c.l.b16 %v3409
    %v4320 = vunpack.c.h.b16 %v3409
    %v4321 = vunpack.c.l.b16 %v3410
    %v4322 = vunpack.c.h.b16 %v3410
    %v4323 = vunpack.c.l.b16 %v3411
    %v4324 = vunpack.c.h.b16 %v3411
    %v4325 = vunpack.c.l.b16 %v3412
    %v4326 = vunpack.c.h.b16 %v3412
    %v4327 = vunpack.c.l.b16 %v3413
    %v4328 = vunpack.c.h.b16 %v3413
    %v4329 = vunpack.c.l.b16 %v3414
    %v4330 = vunpack.c.h.b16 %v3414
    %v4331 = vunpack.c.l.b16 %v3415
    %v4332 = vunpack.c.h.b16 %v3415
    %v4333 = vunpack.c.l.b16 %v3416
    %v4334 = vunpack.c.h.b16 %v3416
    %v4335 = vunpack.c.l.b16 %v3417
    %v4336 = vunpack.c.h.b16 %v3417
    %v4337 = vunpack.c.l.b16 %v3418
    %v4338 = vunpack.c.h.b16 %v3418
    %v4339 = vunpack.c.l.b16 %v3419
    %v4340 = vunpack.c.h.b16 %v3419
    %v4341 = vunpack.c.l.b16 %v3420
    %v4342 = vunpack.c.h.b16 %v3420
    %v4343 = vunpack.c.l.b16 %v3421
    %v4344 = vunpack.c.h.b16 %v3421
    %v4345 = vunpack.c.l.b16 %v3422
    %v4346 = vunpack.c.h.b16 %v3422
    %v4347 = vunpack.c.l.b16 %v3423
    %v4348 = vunpack.c.h.b16 %v3423
    %v4349 = vunpack.c.l.b16 %v3424
    %v4350 = vunpack.c.h.b16 %v3424
    %v4351 = vunpack.c.l.b16 %v3425
    %v4352 = vunpack.c.h.b16 %v3425
    %v4353 = vunpack.c.l.b16 %v3426
    %v4354 = vunpack.c.h.b16 %v3426
    %v4355 = vunpack.c.l.b16 %v3427
    %v4356 = vunpack.c.h.b16 %v3427
    %v4357 = vunpack.c.l.b16 %v3428
    %v4358 = vunpack.c.h.b16 %v3428
    %v4359 = vunpack.c.l.b16 %v3429
    %v4360 = vunpack.c.h.b16 %v3429
    %v4361 = vunpack.c.l.b16 %v3430
    %v4362 = vunpack.c.h.b16 %v3430
    %v4363 = vunpack.c.l.b16 %v3431
    %v4364 = vunpack.c.h.b16 %v3431
    %v4365 = vunpack.c.l.b16 %v3432
    %v4366 = vunpack.c.h.b16 %v3432
    %v4367 = vunpack.c.l.b16 %v3433
    %v4368 = vunpack.c.h.b16 %v3433
    %v4369 = vunpack.c.l.b16 %v3434
    %v4370 = vunpack.c.h.b16 %v3434
    %v4371 = vunpack.c.l.b16 %v3435
    %v4372 = vunpack.c.h.b16 %v3435
    %v4373 = vunpack.c.l.b16 %v3436
    %v4374 = vunpack.c.h.b16 %v3436
    %v4375 = vunpack.c.l.b16 %v3437
    %v4376 = vunpack.c.h.b16 %v3437
    %v4377 = vunpack.c.l.b16 %v3438
    %v4378 = vunpack.c.h.b16 %v3438
    %v4379 = vunpack.c.l.b16 %v3439
    %v4380 = vunpack.c.h.b16 %v3439
    %v4381 = vunpack.c.l.b16 %v3440
    %v4382 = vunpack.c.h.b16 %v3440
    %v4383 = vunpack.c.l.b16 %v3441
    %v4384 = vunpack.c.h.b16 %v3441
    %v4385 = vunpack.c.l.b16 %v3442
    %v4386 = vunpack.c.h.b16 %v3442
    %v4387 = vunpack.c.l.b16 %v3443
    %v4388 = vunpack.c.h.b16 %v3443
    %v4389 = vunpack.c.l.b16 %v3444
    %v4390 = vunpack.c.h.b16 %v3444
    %v4391 = vunpack.c.l.b16 %v3445
    %v4392 = vunpack.c.h.b16 %v3445
    %v4393 = vunpack.c.l.b16 %v3446
    %v4394 = vunpack.c.h.b16 %v3446
    %v4395 = vunpack.c.l.b16 %v3447
    %v4396 = vunpack.c.h.b16 %v3447
    %v4397 = vunpack.c.l.b16 %v3448
    %v4398 = vunpack.c.h.b16 %v3448
    %v4399 = vunpack.c.l.b16 %v3449
    %v4400 = vunpack.c.h.b16 %v3449
    %v4401 = vunpack.c.l.b16 %v3450
    %v4402 = vunpack.c.h.b16 %v3450
    %v4403 = vunpack.c.l.b16 %v3451
    %v4404 = vunpack.c.h.b16 %v3451
    %v4405 = vunpack.c.l.b16 %v3452
    %v4406 = vunpack.c.h.b16 %v3452
    %v4407 = vunpack.c.l.b16 %v3453
    %v4408 = vunpack.c.h.b16 %v3453
    %v4409 = vunpack.c.l.b16 %v3454
    %v4410 = vunpack.c.h.b16 %v3454
    %v4411 = vunpack.c.l.b16 %v3455
    %v4412 = vunpack.c.h.b16 %v3455
    %v4413 = vunpack.c.l.b16 %v3456
    %v4414 = vunpack.c.h.b16 %v3456
    %v4415 = vunpack.c.l.b16 %v3457
    %v4416 = vunpack.c.h.b16 %v3457
    %v4417 = vunpack.c.l.b16 %v3458
    %v4418 = vunpack.c.h.b16 %v3458
    %v4419 = vunpack.c.l.b16 %v3459
    %v4420 = vunpack.c.h.b16 %v3459
    %v4421 = vunpack.c.l.b16 %v3460
    %v4422 = vunpack.c.h.b16 %v3460
    %v4423 = vunpack.c.l.b16 %v3461
    %v4424 = vunpack.c.h.b16 %v3461
    %v4425 = vunpack.c.l.b16 %v3462
    %v4426 = vunpack.c.h.b16 %v3462
    %v4427 = vunpack.c.l.b16 %v3463
    %v4428 = vunpack.c.h.b16 %v3463
    %v4429 = vunpack.c.l.b16 %v3464
    %v4430 = vunpack.c.h.b16 %v3464
    %v4431 = vunpack.c.l.b16 %v3465
    %v4432 = vunpack.c.h.b16 %v3465
    %v4433 = vunpack.c.l.b16 %v3466
    %v4434 = vunpack.c.h.b16 %v3466
    %v4435 = vunpack.c.l.b16 %v3467
    %v4436 = vunpack.c.h.b16 %v3467
    %v4437 = vunpack.c.l.b16 %v3468
    %v4438 = vunpack.c.h.b16 %v3468
    %v4439 = vunpack.c.l.b16 %v3469
    %v4440 = vunpack.c.h.b16 %v3469
    %v4441 = vunpack.c.l.b16 %v3470
    %v4442 = vunpack.c.h.b16 %v3470
    %v4443 = vunpack.c.l.b16 %v3471
    %v4444 = vunpack.c.h.b16 %v3471
    %v4445 = vunpack.c.l.b16 %v3472
    %v4446 = vunpack.c.h.b16 %v3472
    %v4447 = vunpack.c.l.b16 %v3473
    %v4448 = vunpack.c.h.b16 %v3473
    %v4449 = vunpack.c.l.b16 %v3474
    %v4450 = vunpack.c.h.b16 %v3474
    %v4451 = vunpack.c.l.b16 %v3475
    %v4452 = vunpack.c.h.b16 %v3475
    %v4453 = vunpack.c.l.b16 %v3476
    %v4454 = vunpack.c.h.b16 %v3476
    %v4455 = vunpack.c.l.b16 %v3477
    %v4456 = vunpack.c.h.b16 %v3477
    %v4457 = vunpack.c.l.b16 %v3478
    %v4458 = vunpack.c.h.b16 %v3478
    %v4459 = vunpack.c.l.b16 %v3479
    %v4460 = vunpack.c.h.b16 %v3479
    %v4461 = vunpack.c.l.b16 %v3480
    %v4462 = vunpack.c.h.b16 %v3480
    %v4463 = vunpack.c.l.b16 %v3481
    %v4464 = vunpack.c.h.b16 %v3481
    %v4465 = vunpack.c.l.b16 %v3482
    %v4466 = vunpack.c.h.b16 %v3482
    %v4467 = vunpack.c.l.b16 %v3483
    %v4468 = vunpack.c.h.b16 %v3483
    %v4469 = vunpack.c.l.b16 %v3484
    %v4470 = vunpack.c.h.b16 %v3484
    %v4471 = vunpack.c.l.b16 %v3485
    %v4472 = vunpack.c.h.b16 %v3485
    %v4473 = vunpack.c.l.b16 %v3486
    %v4474 = vunpack.c.h.b16 %v3486
    %v4475 = vunpack.c.l.b16 %v3487
    %v4476 = vunpack.c.h.b16 %v3487
    %v4477 = vunpack.c.l.b16 %v3488
    %v4478 = vunpack.c.h.b16 %v3488
    %v4479 = vunpack.c.l.b16 %v3489
    %v4480 = vunpack.c.h.b16 %v3489
    %v4481 = vunpack.c.l.b16 %v3490
    %v4482 = vunpack.c.h.b16 %v3490
    %v4483 = vunpack.c.l.b16 %v3491
    %v4484 = vunpack.c.h.b16 %v3491
    %v4485 = vunpack.c.l.b16 %v3492
    %v4486 = vunpack.c.h.b16 %v3492
    %v4487 = vunpack.c.l.b16 %v3493
    %v4488 = vunpack.c.h.b16 %v3493
    %v4489 = vunpack.c.l.b16 %v3494
    %v4490 = vunpack.c.h.b16 %v3494
    %v4491 = vunpack.c.l.b16 %v3495
    %v4492 = vunpack.c.h.b16 %v3495
    %v4493 = vunpack.c.l.b16 %v3496
    %v4494 = vunpack.c.h.b16 %v3496
    %v4495 = vunpack.c.l.b16 %v3497
    %v4496 = vunpack.c.h.b16 %v3497
    %v4497 = vunpack.c.l.b16 %v3498
    %v4498 = vunpack.c.h.b16 %v3498
    %v4499 = vunpack.c.l.b16 %v3499
    %v4500 = vunpack.c.h.b16 %v3499
    %v4501 = vunpack.c.l.b16 %v3500
    %v4502 = vunpack.c.h.b16 %v3500
    %v4503 = vunpack.c.l.b16 %v3501
    %v4504 = vunpack.c.h.b16 %v3501
    %v4505 = vunpack.c.l.b16 %v3502
    %v4506 = vunpack.c.h.b16 %v3502
    %v4507 = vunpack.c.l.b16 %v3503
    %v4508 = vunpack.c.h.b16 %v3503
    %v4509 = vunpack.c.l.b16 %v3504
    %v4510 = vunpack.c.h.b16 %v3504
    %v4511 = vunpack.c.l.b16 %v3505
    %v4512 = vunpack.c.h.b16 %v3505
    %v4513 = vunpack.c.l.b16 %v3506
    %v4514 = vunpack.c.h.b16 %v3506
    %v4515 = vunpack.c.l.b16 %v3507
    %v4516 = vunpack.c.h.b16 %v3507
    %v4517 = vunpack.c.l.b16 %v3508
    %v4518 = vunpack.c.h.b16 %v3508
    %v4519 = vunpack.c.l.b16 %v3509
    %v4520 = vunpack.c.h.b16 %v3509
    %v4521 = vunpack.c.l.b16 %v3510
    %v4522 = vunpack.c.h.b16 %v3510
    %v4523 = vunpack.c.l.b16 %v3511
    %v4524 = vunpack.c.h.b16 %v3511
    %v4525 = vunpack.c.l.b16 %v3512
    %v4526 = vunpack.c.h.b16 %v3512
    %v4527 = vunpack.c.l.b16 %v3513
    %v4528 = vunpack.c.h.b16 %v3513
    %v4529 = vunpack.c.l.b16 %v3514
    %v4530 = vunpack.c.h.b16 %v3514
    %v4531 = vunpack.c.l.b16 %v3515
    %v4532 = vunpack.c.h.b16 %v3515
    %v4533 = vunpack.c.l.b16 %v3516
    %v4534 = vunpack.c.h.b16 %v3516
    %v4535 = vunpack.c.l.b16 %v3517
    %v4536 = vunpack.c.h.b16 %v3517
    %v4537 = vunpack.c.l.b16 %v3518
    %v4538 = vunpack.c.h.b16 %v3518
    %v4539 = vunpack.c.l.b16 %v3519
    %v4540 = vunpack.c.h.b16 %v3519
    %v4541 = vunpack.c.l.b16 %v3520
    %v4542 = vunpack.c.h.b16 %v3520
    %v4543 = vunpack.c.l.b16 %v3521
    %v4544 = vunpack.c.h.b16 %v3521
    %v4545 = vunpack.c.l.b16 %v3522
    %v4546 = vunpack.c.h.b16 %v3522
    %v4547 = vunpack.c.l.b16 %v3523
    %v4548 = vunpack.c.h.b16 %v3523
    %v4549 = vunpack.c.l.b16 %v3524
    %v4550 = vunpack.c.h.b16 %v3524
    %v4551 = vunpack.c.l.b16 %v3525
    %v4552 = vunpack.c.h.b16 %v3525
    %v4553 = vunpack.c.l.b16 %v3526
    %v4554 = vunpack.c.h.b16 %v3526
    %v4555 = vunpack.c.l.b16 %v3527
    %v4556 = vunpack.c.h.b16 %v3527
    %v4557 = vunpack.c.l.b16 %v3528
    %v4558 = vunpack.c.h.b16 %v3528
    %v4559 = vunpack.c.l.b16 %v3529
    %v4560 = vunpack.c.h.b16 %v3529
    %v4561 = vunpack.c.l.b16 %v3530
    %v4562 = vunpack.c.h.b16 %v3530
    %v4563 = vunpack.c.l.b16 %v3531
    %v4564 = vunpack.c.h.b16 %v3531
    %v4565 = vunpack.c.l.b16 %v3532
    %v4566 = vunpack.c.h.b16 %v3532
    %v4567 = vunpack.c.l.b16 %v3533
    %v4568 = vunpack.c.h.b16 %v3533
    %v4569 = vunpack.c.l.b16 %v3534
    %v4570 = vunpack.c.h.b16 %v3534
    %v4571 = vunpack.c.l.b16 %v3535
    %v4572 = vunpack.c.h.b16 %v3535
    %v4573 = vunpack.c.l.b16 %v3536
    %v4574 = vunpack.c.h.b16 %v3536
    %v4575 = vunpack.c.l.b16 %v3537
    %v4576 = vunpack.c.h.b16 %v3537
    %v4577 = vunpack.c.l.b16 %v3538
    %v4578 = vunpack.c.h.b16 %v3538
    %v4579 = vunpack.c.l.b16 %v3539
    %v4580 = vunpack.c.h.b16 %v3539
    %v4581 = vunpack.c.l.b16 %v3540
    %v4582 = vunpack.c.h.b16 %v3540
    %v4583 = vunpack.c.l.b16 %v3541
    %v4584 = vunpack.c.h.b16 %v3541
    %v4585 = vunpack.c.l.b16 %v3542
    %v4586 = vunpack.c.h.b16 %v3542
    %v4587 = vunpack.c.l.b16 %v3543
    %v4588 = vunpack.c.h.b16 %v3543
    %v4589 = vunpack.c.l.b16 %v3544
    %v4590 = vunpack.c.h.b16 %v3544
    %v4591 = vunpack.c.l.b16 %v3545
    %v4592 = vunpack.c.h.b16 %v3545
    %v4593 = vunpack.c.l.b16 %v3546
    %v4594 = vunpack.c.h.b16 %v3546
    %v4595 = vunpack.c.l.b16 %v3547
    %v4596 = vunpack.c.h.b16 %v3547
    %v4597 = vunpack.c.l.b16 %v3548
    %v4598 = vunpack.c.h.b16 %v3548
    %v4599 = vpack.c.b16 %v3935, %v3927
    %v4600 = vpack.c.b16 %v3936, %v3928
    %v4601 = vpack.c.b16 %v3937, %v3929
    %v4602 = vpack.c.b16 %v3938, %v3930
    %v4603 = vpack.c.b16 %v3939, %v3931
    %v4604 = vpack.c.b16 %v3940, %v3932
    %v4605 = vpack.c.b16 %v3941, %v3933
    %v4606 = vpack.c.b16 %v3942, %v3934
    %v4607 = vpack.c.b16 %v3951, %v3943
    %v4608 = vpack.c.b16 %v3952, %v3944
    %v4609 = vpack.c.b16 %v3953, %v3945
    %v4610 = vpack.c.b16 %v3954, %v3946
    %v4611 = vpack.c.b16 %v3955, %v3947
    %v4612 = vpack.c.b16 %v3956, %v3948
    %v4613 = vpack.c.b16 %v3957, %v3949
    %v4614 = vpack.c.b16 %v3958, %v3950
    %v4615 = vpack.c.b16 %v3967, %v3959
    %v4616 = vpack.c.b16 %v3968, %v3960
    %v4617 = vpack.c.b16 %v3969, %v3961
    %v4618 = vpack.c.b16 %v3970, %v3962
    %v4619 = vpack.c.b16 %v3971, %v3963
    %v4620 = vpack.c.b16 %v3972, %v3964
    %v4621 = vpack.c.b16 %v3973, %v3965
    %v4622 = vpack.c.b16 %v3974, %v3966
    %v4623 = vpack.c.b16 %v3983, %v3975
    %v4624 = vpack.c.b16 %v3984, %v3976
    %v4625 = vpack.c.b16 %v3985, %v3977
    %v4626 = vpack.c.b16 %v3986, %v3978
    %v4627 = vpack.c.b16 %v3987, %v3979
    %v4628 = vpack.c.b16 %v3988, %v3980
    %v4629 = vpack.c.b16 %v3989, %v3981
    %v4630 = vpack.c.b16 %v3990, %v3982
    %v4631 = vpack.c.b16 %v3999, %v3991
    %v4632 = vpack.c.b16 %v4000, %v3992
    %v4633 = vpack.c.b16 %v4001, %v3993
    %v4634 = vpack.c.b16 %v4002, %v3994
    %v4635 = vpack.c.b16 %v4003, %v3995
    %v4636 = vpack.c.b16 %v4004, %v3996
    %v4637 = vpack.c.b16 %v4005, %v3997
    %v4638 = vpack.c.b16 %v4006, %v3998
    %v4639 = vpack.c.b16 %v4015, %v4007
    %v4640 = vpack.c.b16 %v4016, %v4008
    %v4641 = vpack.c.b16 %v4017, %v4009
    %v4642 = vpack.c.b16 %v4018, %v4010
    %v4643 = vpack.c.b16 %v4019, %v4011
    %v4644 = vpack.c.b16 %v4020, %v4012
    %v4645 = vpack.c.b16 %v4021, %v4013
    %v4646 = vpack.c.b16 %v4022, %v4014
    %v4647 = vpack.c.b16 %v4031, %v4023
    %v4648 = vpack.c.b16 %v4032, %v4024
    %v4649 = vpack.c.b16 %v4033, %v4025
    %v4650 = vpack.c.b16 %v4034, %v4026
    %v4651 = vpack.c.b16 %v4035, %v4027
    %v4652 = vpack.c.b16 %v4036, %v4028
    %v4653 = vpack.c.b16 %v4037, %v4029
    %v4654 = vpack.c.b16 %v4038, %v4030
    %v4655 = vpack.c.b16 %v4047, %v4039
    %v4656 = vpack.c.b16 %v4048, %v4040
    %v4657 = vpack.c.b16 %v4049, %v4041
    %v4658 = vpack.c.b16 %v4050, %v4042
    %v4659 = vpack.c.b16 %v4051, %v4043
    %v4660 = vpack.c.b16 %v4052, %v4044
    %v4661 = vpack.c.b16 %v4053, %v4045
    %v4662 = vpack.c.b16 %v4054, %v4046
    %v4663 = vpack.c.b16 %v4063, %v4055
    %v4664 = vpack.c.b16 %v4064, %v4056
    %v4665 = vpack.c.b16 %v4065, %v4057
    %v4666 = vpack.c.b16 %v4066, %v4058
    %v4667 = vpack.c.b16 %v4067, %v4059
    %v4668 = vpack.c.b16 %v4068, %v4060
    %v4669 = vpack.c.b16 %v4069, %v4061
    %v4670 = vpack.c.b16 %v4070, %v4062
    %v4671 = vpack.c.b16 %v4079, %v4071
    %v4672 = vpack.c.b16 %v4080, %v4072
    %v4673 = vpack.c.b16 %v4081, %v4073
    %v4674 = vpack.c.b16 %v4082, %v4074
    %v4675 = vpack.c.b16 %v4083, %v4075
    %v4676 = vpack.c.b16 %v4084, %v4076
    %v4677 = vpack.c.b16 %v4085, %v4077
    %v4678 = vpack.c.b16 %v4086, %v4078
    %v4679 = vpack.c.b16 %v4095, %v4087
    %v4680 = vpack.c.b16 %v4096, %v4088
    %v4681 = vpack.c.b16 %v4097, %v4089
    %v4682 = vpack.c.b16 %v4098, %v4090
    %v4683 = vpack.c.b16 %v4099, %v4091
    %v4684 = vpack.c.b16 %v4100, %v4092
    %v4685 = vpack.c.b16 %v4101, %v4093
    %v4686 = vpack.c.b16 %v4102, %v4094
    %v4687 = vpack.c.b16 %v4111, %v4103
    %v4688 = vpack.c.b16 %v4112, %v4104
    %v4689 = vpack.c.b16 %v4113, %v4105
    %v4690 = vpack.c.b16 %v4114, %v4106
    %v4691 = vpack.c.b16 %v4115, %v4107
    %v4692 = vpack.c.b16 %v4116, %v4108
    %v4693 = vpack.c.b16 %v4117, %v4109
    %v4694 = vpack.c.b16 %v4118, %v4110
    %v4695 = vpack.c.b16 %v4127, %v4119
    %v4696 = vpack.c.b16 %v4128, %v4120
    %v4697 = vpack.c.b16 %v4129, %v4121
    %v4698 = vpack.c.b16 %v4130, %v4122
    %v4699 = vpack.c.b16 %v4131, %v4123
    %v4700 = vpack.c.b16 %v4132, %v4124
    %v4701 = vpack.c.b16 %v4133, %v4125
    %v4702 = vpack.c.b16 %v4134, %v4126
    %v4703 = vpack.c.b16 %v4143, %v4135
    %v4704 = vpack.c.b16 %v4144, %v4136
    %v4705 = vpack.c.b16 %v4145, %v4137
    %v4706 = vpack.c.b16 %v4146, %v4138
    %v4707 = vpack.c.b16 %v4147, %v4139
    %v4708 = vpack.c.b16 %v4148, %v4140
    %v4709 = vpack.c.b16 %v4149, %v4141
    %v4710 = vpack.c.b16 %v4150, %v4142
    %v4711 = vpack.c.b16 %v4159, %v4151
    %v4712 = vpack.c.b16 %v4160, %v4152
    %v4713 = vpack.c.b16 %v4161, %v4153
    %v4714 = vpack.c.b16 %v4162, %v4154
    %v4715 = vpack.c.b16 %v4163, %v4155
    %v4716 = vpack.c.b16 %v4164, %v4156
    %v4717 = vpack.c.b16 %v4165, %v4157
    %v4718 = vpack.c.b16 %v4166, %v4158
    %v4719 = vpack.c.b16 %v4175, %v4167
    %v4720 = vpack.c.b16 %v4176, %v4168
    %v4721 = vpack.c.b16 %v4177, %v4169
    %v4722 = vpack.c.b16 %v4178, %v4170
    %v4723 = vpack.c.b16 %v4179, %v4171
    %v4724 = vpack.c.b16 %v4180, %v4172
    %v4725 = vpack.c.b16 %v4181, %v4173
    %v4726 = vpack.c.b16 %v4182, %v4174
    %v4727 = vpack.c.b16 %v4191, %v4183
    %v4728 = vpack.c.b16 %v4192, %v4184
    %v4729 = vpack.c.b16 %v4193, %v4185
    %v4730 = vpack.c.b16 %v4194, %v4186
    %v4731 = vpack.c.b16 %v4195, %v4187
    %v4732 = vpack.c.b16 %v4196, %v4188
    %v4733 = vpack.c.b16 %v4197, %v4189
    %v4734 = vpack.c.b16 %v4198, %v4190
    %v4735 = vpack.c.b16 %v4207, %v4199
    %v4736 = vpack.c.b16 %v4208, %v4200
    %v4737 = vpack.c.b16 %v4209, %v4201
    %v4738 = vpack.c.b16 %v4210, %v4202
    %v4739 = vpack.c.b16 %v4211, %v4203
    %v4740 = vpack.c.b16 %v4212, %v4204
    %v4741 = vpack.c.b16 %v4213, %v4205
    %v4742 = vpack.c.b16 %v4214, %v4206
    %v4743 = vpack.c.b16 %v4223, %v4215
    %v4744 = vpack.c.b16 %v4224, %v4216
    %v4745 = vpack.c.b16 %v4225, %v4217
    %v4746 = vpack.c.b16 %v4226, %v4218
    %v4747 = vpack.c.b16 %v4227, %v4219
    %v4748 = vpack.c.b16 %v4228, %v4220
    %v4749 = vpack.c.b16 %v4229, %v4221
    %v4750 = vpack.c.b16 %v4230, %v4222
    %v4751 = vpack.c.b16 %v4239, %v4231
    %v4752 = vpack.c.b16 %v4240, %v4232
    %v4753 = vpack.c.b16 %v4241, %v4233
    %v4754 = vpack.c.b16 %v4242, %v4234
    %v4755 = vpack.c.b16 %v4243, %v4235
    %v4756 = vpack.c.b16 %v4244, %v4236
    %v4757 = vpack.c.b16 %v4245, %v4237
    %v4758 = vpack.c.b16 %v4246, %v4238
    %v4759 = vpack.c.b16 %v4255, %v4247
    %v4760 = vpack.c.b16 %v4256, %v4248
    %v4761 = vpack.c.b16 %v4257, %v4249
    %v4762 = vpack.c.b16 %v4258, %v4250
    %v4763 = vpack.c.b16 %v4259, %v4251
    %v4764 = vpack.c.b16 %v4260, %v4252
    %v4765 = vpack.c.b16 %v4261, %v4253
    %v4766 = vpack.c.b16 %v4262, %v4254
    %v4767 = vpack.c.b16 %v4271, %v4263
    %v4768 = vpack.c.b16 %v4272, %v4264
    %v4769 = vpack.c.b16 %v4273, %v4265
    %v4770 = vpack.c.b16 %v4274, %v4266
    %v4771 = vpack.c.b16 %v4275, %v4267
    %v4772 = vpack.c.b16 %v4276, %v4268
    %v4773 = vpack.c.b16 %v4277, %v4269
    %v4774 = vpack.c.b16 %v4278, %v4270
    %v4775 = vpack.c.b16 %v4287, %v4279
    %v4776 = vpack.c.b16 %v4288, %v4280
    %v4777 = vpack.c.b16 %v4289, %v4281
    %v4778 = vpack.c.b16 %v4290, %v4282
    %v4779 = vpack.c.b16 %v4291, %v4283
    %v4780 = vpack.c.b16 %v4292, %v4284
    %v4781 = vpack.c.b16 %v4293, %v4285
    %v4782 = vpack.c.b16 %v4294, %v4286
    %v4783 = vpack.c.b16 %v4303, %v4295
    %v4784 = vpack.c.b16 %v4304, %v4296
    %v4785 = vpack.c.b16 %v4305, %v4297
    %v4786 = vpack.c.b16 %v4306, %v4298
    %v4787 = vpack.c.b16 %v4307, %v4299
    %v4788 = vpack.c.b16 %v4308, %v4300
    %v4789 = vpack.c.b16 %v4309, %v4301
    %v4790 = vpack.c.b16 %v4310, %v4302
    %v4791 = vpack.c.b16 %v4319, %v4311
    %v4792 = vpack.c.b16 %v4320, %v4312
    %v4793 = vpack.c.b16 %v4321, %v4313
    %v4794 = vpack.c.b16 %v4322, %v4314
    %v4795 = vpack.c.b16 %v4323, %v4315
    %v4796 = vpack.c.b16 %v4324, %v4316
    %v4797 = vpack.c.b16 %v4325, %v4317
    %v4798 = vpack.c.b16 %v4326, %v4318
    %v4799 = vpack.c.b16 %v4335, %v4327
    %v4800 = vpack.c.b16 %v4336, %v4328
    %v4801 = vpack.c.b16 %v4337, %v4329
    %v4802 = vpack.c.b16 %v4338, %v4330
    %v4803 = vpack.c.b16 %v4339, %v4331
    %v4804 = vpack.c.b16 %v4340, %v4332
    %v4805 = vpack.c.b16 %v4341, %v4333
    %v4806 = vpack.c.b16 %v4342, %v4334
    %v4807 = vpack.c.b16 %v4351, %v4343
    %v4808 = vpack.c.b16 %v4352, %v4344
    %v4809 = vpack.c.b16 %v4353, %v4345
    %v4810 = vpack.c.b16 %v4354, %v4346
    %v4811 = vpack.c.b16 %v4355, %v4347
    %v4812 = vpack.c.b16 %v4356, %v4348
    %v4813 = vpack.c.b16 %v4357, %v4349
    %v4814 = vpack.c.b16 %v4358, %v4350
    %v4815 = vpack.c.b16 %v4367, %v4359
    %v4816 = vpack.c.b16 %v4368, %v4360
    %v4817 = vpack.c.b16 %v4369, %v4361
    %v4818 = vpack.c.b16 %v4370, %v4362
    %v4819 = vpack.c.b16 %v4371, %v4363
    %v4820 = vpack.c.b16 %v4372, %v4364
    %v4821 = vpack.c.b16 %v4373, %v4365
    %v4822 = vpack.c.b16 %v4374, %v4366
    %v4823 = vpack.c.b16 %v4383, %v4375
    %v4824 = vpack.c.b16 %v4384, %v4376
    %v4825 = vpack.c.b16 %v4385, %v4377
    %v4826 = vpack.c.b16 %v4386, %v4378
    %v4827 = vpack.c.b16 %v4387, %v4379
    %v4828 = vpack.c.b16 %v4388, %v4380
    %v4829 = vpack.c.b16 %v4389, %v4381
    %v4830 = vpack.c.b16 %v4390, %v4382
    %v4831 = vpack.c.b16 %v4399, %v4391
    %v4832 = vpack.c.b16 %v4400, %v4392
    %v4833 = vpack.c.b16 %v4401, %v4393
    %v4834 = vpack.c.b16 %v4402, %v4394
    %v4835 = vpack.c.b16 %v4403, %v4395
    %v4836 = vpack.c.b16 %v4404, %v4396
    %v4837 = vpack.c.b16 %v4405, %v4397
    %v4838 = vpack.c.b16 %v4406, %v4398
    %v4839 = vpack.c.b16 %v4415, %v4407
    %v4840 = vpack.c.b16 %v4416, %v4408
    %v4841 = vpack.c.b16 %v4417, %v4409
    %v4842 = vpack.c.b16 %v4418, %v4410
    %v4843 = vpack.c.b16 %v4419, %v4411
    %v4844 = vpack.c.b16 %v4420, %v4412
    %v4845 = vpack.c.b16 %v4421, %v4413
    %v4846 = vpack.c.b16 %v4422, %v4414
    %v4847 = vpack.c.b16 %v4431, %v4423
    %v4848 = vpack.c.b16 %v4432, %v4424
    %v4849 = vpack.c.b16 %v4433, %v4425
    %v4850 = vpack.c.b16 %v4434, %v4426
    %v4851 = vpack.c.b16 %v4435, %v4427
    %v4852 = vpack.c.b16 %v4436, %v4428
    %v4853 = vpack.c.b16 %v4437, %v4429
    %v4854 = vpack.c.b16 %v4438, %v4430
    %v4855 = vpack.c.b16 %v4447, %v4439
    %v4856 = vpack.c.b16 %v4448, %v4440
    %v4857 = vpack.c.b16 %v4449, %v4441
    %v4858 = vpack.c.b16 %v4450, %v4442
    %v4859 = vpack.c.b16 %v4451, %v4443
    %v4860 = vpack.c.b16 %v4452, %v4444
    %v4861 = vpack.c.b16 %v4453, %v4445
    %v4862 = vpack.c.b16 %v4454, %v4446
    %v4863 = vpack.c.b16 %v4463, %v4455
    %v4864 = vpack.c.b16 %v4464, %v4456
    %v4865 = vpack.c.b16 %v4465, %v4457
    %v4866 = vpack.c.b16 %v4466, %v4458
    %v4867 = vpack.c.b16 %v4467, %v4459
    %v4868 = vpack.c.b16 %v4468, %v4460
    %v4869 = vpack.c.b16 %v4469, %v4461
    %v4870 = vpack.c.b16 %v4470, %v4462
    %v4871 = vpack.c.b16 %v4479, %v4471
    %v4872 = vpack.c.b16 %v4480, %v4472
    %v4873 = vpack.c.b16 %v4481, %v4473
    %v4874 = vpack.c.b16 %v4482, %v4474
    %v4875 = vpack.c.b16 %v4483, %v4475
    %v4876 = vpack.c.b16 %v4484, %v4476
    %v4877 = vpack.c.b16 %v4485, %v4477
    %v4878 = vpack.c.b16 %v4486, %v4478
    %v4879 = vpack.c.b16 %v4495, %v4487
    %v4880 = vpack.c.b16 %v4496, %v4488
    %v4881 = vpack.c.b16 %v4497, %v4489
    %v4882 = vpack.c.b16 %v4498, %v4490
    %v4883 = vpack.c.b16 %v4499, %v4491
    %v4884 = vpack.c.b16 %v4500, %v4492
    %v4885 = vpack.c.b16 %v4501, %v4493
    %v4886 = vpack.c.b16 %v4502, %v4494
    %v4887 = vpack.c.b16 %v4511, %v4503
    %v4888 = vpack.c.b16 %v4512, %v4504
    %v4889 = vpack.c.b16 %v4513, %v4505
    %v4890 = vpack.c.b16 %v4514, %v4506
    %v4891 = vpack.c.b16 %v4515, %v4507
    %v4892 = vpack.c.b16 %v4516, %v4508
    %v4893 = vpack.c.b16 %v4517, %v4509
    %v4894 = vpack.c.b16 %v4518, %v4510
    %v4895 = vpack.c.b16 %v4527, %v4519
    %v4896 = vpack.c.b16 %v4528, %v4520
    %v4897 = vpack.c.b16 %v4529, %v4521
    %v4898 = vpack.c.b16 %v4530, %v4522
    %v4899 = vpack.c.b16 %v4531, %v4523
    %v4900 = vpack.c.b16 %v4532, %v4524
    %v4901 = vpack.c.b16 %v4533, %v4525
    %v4902 = vpack.c.b16 %v4534, %v4526
    %v4903 = vpack.c.b16 %v4543, %v4535
    %v4904 = vpack.c.b16 %v4544, %v4536
    %v4905 = vpack.c.b16 %v4545, %v4537
    %v4906 = vpack.c.b16 %v4546, %v4538
    %v4907 = vpack.c.b16 %v4547, %v4539
    %v4908 = vpack.c.b16 %v4548, %v4540
    %v4909 = vpack.c.b16 %v4549, %v4541
    %v4910 = vpack.c.b16 %v4550, %v4542
    %v4911 = vpack.c.b16 %v4559, %v4551
    %v4912 = vpack.c.b16 %v4560, %v4552
    %v4913 = vpack.c.b16 %v4561, %v4553
    %v4914 = vpack.c.b16 %v4562, %v4554
    %v4915 = vpack.c.b16 %v4563, %v4555
    %v4916 = vpack.c.b16 %v4564, %v4556
    %v4917 = vpack.c.b16 %v4565, %v4557
    %v4918 = vpack.c.b16 %v4566, %v4558
    %v4919 = vpack.c.b16 %v4575, %v4567
    %v4920 = vpack.c.b16 %v4576, %v4568
    %v4921 = vpack.c.b16 %v4577, %v4569
    %v4922 = vpack.c.b16 %v4578, %v4570
    %v4923 = vpack.c.b16 %v4579, %v4571
    %v4924 = vpack.c.b16 %v4580, %v4572
    %v4925 = vpack.c.b16 %v4581, %v4573
    %v4926 = vpack.c.b16 %v4582, %v4574
    %v4927 = vpack.c.b16 %v4591, %v4583
    %v4928 = vpack.c.b16 %v4592, %v4584
    %v4929 = vpack.c.b16 %v4593, %v4585
    %v4930 = vpack.c.b16 %v4594, %v4586
    %v4931 = vpack.c.b16 %v4595, %v4587
    %v4932 = vpack.c.b16 %v4596, %v4588
    %v4933 = vpack.c.b16 %v4597, %v4589
    %v4934 = vpack.c.b16 %v4598, %v4590
    %5271 = vmatprep.subr.bf16.mxu0 %v4600
    %5272 = vmatpush1.bf16.msra.mxu0 %v4599
    %5273 = vmatprep.subr.bf16.mxu0 %v4608
    %5274 = vmatpush1.bf16.msra.mxu0 %v4607
    %5275 = vmatprep.subr.bf16.mxu0 %v4616
    %5276 = vmatpush1.bf16.msra.mxu0 %v4615
    %5277 = vmatprep.subr.bf16.mxu0 %v4624
    %5278 = vmatpush1.bf16.msra.mxu0 %v4623
    %5279 = vmatprep.subr.bf16.mxu0 %v4632
    %5280 = vmatpush1.bf16.msra.mxu0 %v4631
    %5281 = vmatprep.subr.bf16.mxu0 %v4640
    %5282 = vmatpush1.bf16.msra.mxu0 %v4639
    %5283 = vmatprep.subr.bf16.mxu0 %v4648
    %5284 = vmatpush1.bf16.msra.mxu0 %v4647
    %5285 = vmatprep.subr.bf16.mxu0 %v4656
    %5286 = vmatpush1.bf16.msra.mxu0 %v4655
    %5287 = vmatprep.subr.bf16.mxu0 %v4664
    %5288 = vmatpush1.bf16.msra.mxu0 %v4663
    %5289 = vmatprep.subr.bf16.mxu0 %v4672
    %5290 = vmatpush1.bf16.msra.mxu0 %v4671
    %5291 = vmatprep.subr.bf16.mxu0 %v4680
    %5292 = vmatpush1.bf16.msra.mxu0 %v4679
    %5293 = vmatprep.subr.bf16.mxu0 %v4688
    %5294 = vmatpush1.bf16.msra.mxu0 %v4687
    %5295 = vmatprep.subr.bf16.mxu0 %v4696
    %5296 = vmatpush1.bf16.msra.mxu0 %v4695
    %5297 = vmatprep.subr.bf16.mxu0 %v4704
    %5298 = vmatpush1.bf16.msra.mxu0 %v4703
    %5299 = vmatprep.subr.bf16.mxu0 %v4712
    %5300 = vmatpush1.bf16.msra.mxu0 %v4711
    %5301 = vmatprep.subr.bf16.mxu0 %v4720
    %5302 = vmatpush1.bf16.msra.mxu0 %v4719
    %5303 = vmatprep.mubr.bf16.mxu0 %v2740
    %5304 = vmatmul.mubr.bf16.gmra.mrb[0].mxu0 %v2739
    %v5305 = vpop.f32.mrb[0].mxu0
    %v5306 = vadd.f32 %v3554, %v5305
    %v5307 = vpop.f32.mrb[0].mxu0
    %v5308 = vadd.f32 %v3558, %v5307
    %v5309 = vpop.f32.mrb[0].mxu0
    %v5310 = vpop.f32.mrb[0].mxu0
    %5311 = vdwg.mxu0
    %5312 = vmatprep.subr.bf16.mxu0 %v4728
    %5313 = vmatpush1.bf16.msra.mxu0 %v4727
    %5314 = vmatprep.subr.bf16.mxu0 %v4736
    %5315 = vmatpush1.bf16.msra.mxu0 %v4735
    %5316 = vmatprep.subr.bf16.mxu0 %v4744
    %5317 = vmatpush1.bf16.msra.mxu0 %v4743
    %5318 = vmatprep.subr.bf16.mxu0 %v4752
    %5319 = vmatpush1.bf16.msra.mxu0 %v4751
    %5320 = vmatprep.subr.bf16.mxu0 %v4760
    %5321 = vmatpush1.bf16.msra.mxu0 %v4759
    %5322 = vmatprep.subr.bf16.mxu0 %v4768
    %5323 = vmatpush1.bf16.msra.mxu0 %v4767
    %5324 = vmatprep.subr.bf16.mxu0 %v4776
    %5325 = vmatpush1.bf16.msra.mxu0 %v4775
    %5326 = vmatprep.subr.bf16.mxu0 %v4784
    %5327 = vmatpush1.bf16.msra.mxu0 %v4783
    %5328 = vmatprep.subr.bf16.mxu0 %v4792
    %5329 = vmatpush1.bf16.msra.mxu0 %v4791
    %5330 = vmatprep.subr.bf16.mxu0 %v4800
    %5331 = vmatpush1.bf16.msra.mxu0 %v4799
    %5332 = vmatprep.subr.bf16.mxu0 %v4808
    %5333 = vmatpush1.bf16.msra.mxu0 %v4807
    %5334 = vmatprep.subr.bf16.mxu0 %v4816
    %5335 = vmatpush1.bf16.msra.mxu0 %v4815
    %5336 = vmatprep.subr.bf16.mxu0 %v4824
    %5337 = vmatpush1.bf16.msra.mxu0 %v4823
    %5338 = vmatprep.subr.bf16.mxu0 %v4832
    %5339 = vmatpush1.bf16.msra.mxu0 %v4831
    %5340 = vmatprep.subr.bf16.mxu0 %v4840
    %5341 = vmatpush1.bf16.msra.mxu0 %v4839
    %5342 = vmatprep.subr.bf16.mxu0 %v4848
    %5343 = vmatpush1.bf16.msra.mxu0 %v4847
    %5344 = vmatprep.mubr.bf16.mxu0 %v2742
    %5345 = vmatmul.mubr.bf16.gmra.mrb[0].mxu0 %v2741
    %v5346 = vpop.f32.mrb[0].mxu0
    %v5347 = vadd.f32 %v5306, %v5346
    %v5348 = vpop.f32.mrb[0].mxu0
    %v5349 = vadd.f32 %v5308, %v5348
    %v5350 = vpop.f32.mrb[0].mxu0
    %v5351 = vpop.f32.mrb[0].mxu0
    %5352 = vdwg.mxu0
    %5353 = vmatprep.subr.bf16.mxu0 %v4856
    %5354 = vmatpush1.bf16.msra.mxu0 %v4855
    %5355 = vmatprep.subr.bf16.mxu0 %v4864
    %5356 = vmatpush1.bf16.msra.mxu0 %v4863
    %5357 = vmatprep.subr.bf16.mxu0 %v4872
    %5358 = vmatpush1.bf16.msra.mxu0 %v4871
    %5359 = vmatprep.subr.bf16.mxu0 %v4880
    %5360 = vmatpush1.bf16.msra.mxu0 %v4879
    %5361 = vmatprep.subr.bf16.mxu0 %v4888
    %5362 = vmatpush1.bf16.msra.mxu0 %v4887
    %5363 = vmatprep.subr.bf16.mxu0 %v4896
    %5364 = vmatpush1.bf16.msra.mxu0 %v4895
    %5365 = vmatprep.subr.bf16.mxu0 %v4904
    %5366 = vmatpush1.bf16.msra.mxu0 %v4903
    %5367 = vmatprep.subr.bf16.mxu0 %v4912
    %5368 = vmatpush1.bf16.msra.mxu0 %v4911
    %5369 = vmatprep.subr.bf16.mxu0 %v4920
    %5370 = vmatpush1.bf16.msra.mxu0 %v4919
    %5371 = vmatprep.subr.bf16.mxu0 %v4928
    %5372 = vmatpush1.bf16.msra.mxu0 %v4927
    %5373 = vmatprep.subr.bf16.mxu0 0
    %5374 = vmatpush1.bf16.msra.mxu0 0
    %5375 = vmatprep.subr.bf16.mxu0 0
    %5376 = vmatpush1.bf16.msra.mxu0 0
    %5377 = vmatprep.subr.bf16.mxu0 0
    %5378 = vmatpush1.bf16.msra.mxu0 0
    %5379 = vmatprep.subr.bf16.mxu0 0
    %5380 = vmatpush1.bf16.msra.mxu0 0
    %5381 = vmatprep.subr.bf16.mxu0 0
    %5382 = vmatpush1.bf16.msra.mxu0 0
    %5383 = vmatprep.subr.bf16.mxu0 0
    %5384 = vmatpush1.bf16.msra.mxu0 0
    %5385 = vmatprep.mubr.bf16.mxu0 %v3089
    %5386 = vmatmul.mubr.bf16.gmra.mrb[0].mxu0 %v2743
    %v5387 = vpop.f32.mrb[0].mxu0
    %v5388 = vadd.f32 %v5347, %v5387
    %v5389 = vpop.f32.mrb[0].mxu0
    %v5390 = vadd.f32 %v5349, %v5389
    %v5391 = vpop.f32.mrb[0].mxu0
    %v5392 = vpop.f32.mrb[0].mxu0
    %5393 = vdwg.mxu0
    %5394 = vmatprep.subr.bf16.mxu0 %v4602
    %5395 = vmatpush1.bf16.msra.mxu0 %v4601
    %5396 = vmatprep.subr.bf16.mxu0 %v4610
    %5397 = vmatpush1.bf16.msra.mxu0 %v4609
    %5398 = vmatprep.subr.bf16.mxu0 %v4618
    %5399 = vmatpush1.bf16.msra.mxu0 %v4617
    %5400 = vmatprep.subr.bf16.mxu0 %v4626
    %5401 = vmatpush1.bf16.msra.mxu0 %v4625
    %5402 = vmatprep.subr.bf16.mxu0 %v4634
    %5403 = vmatpush1.bf16.msra.mxu0 %v4633
    %5404 = vmatprep.subr.bf16.mxu0 %v4642
    %5405 = vmatpush1.bf16.msra.mxu0 %v4641
    %5406 = vmatprep.subr.bf16.mxu0 %v4650
    %5407 = vmatpush1.bf16.msra.mxu0 %v4649
    %5408 = vmatprep.subr.bf16.mxu0 %v4658
    %5409 = vmatpush1.bf16.msra.mxu0 %v4657
    %5410 = vmatprep.subr.bf16.mxu0 %v4666
    %5411 = vmatpush1.bf16.msra.mxu0 %v4665
    %5412 = vmatprep.subr.bf16.mxu0 %v4674
    %5413 = vmatpush1.bf16.msra.mxu0 %v4673
    %5414 = vmatprep.subr.bf16.mxu0 %v4682
    %5415 = vmatpush1.bf16.msra.mxu0 %v4681
    %5416 = vmatprep.subr.bf16.mxu0 %v4690
    %5417 = vmatpush1.bf16.msra.mxu0 %v4689
    %5418 = vmatprep.subr.bf16.mxu0 %v4698
    %5419 = vmatpush1.bf16.msra.mxu0 %v4697
    %5420 = vmatprep.subr.bf16.mxu0 %v4706
    %5421 = vmatpush1.bf16.msra.mxu0 %v4705
    %5422 = vmatprep.subr.bf16.mxu0 %v4714
    %5423 = vmatpush1.bf16.msra.mxu0 %v4713
    %5424 = vmatprep.subr.bf16.mxu0 %v4722
    %5425 = vmatpush1.bf16.msra.mxu0 %v4721
    %5426 = vmatprep.mubr.bf16.mxu0 %v2740
    %5427 = vmatmul.mubr.bf16.gmra.mrb[0].mxu0 %v2739
    %v5428 = vpop.f32.mrb[0].mxu0
    %v5429 = vadd.f32 %v3562, %v5428
    %v5430 = vpop.f32.mrb[0].mxu0
    %v5431 = vadd.f32 %v3566, %v5430
    %v5432 = vpop.f32.mrb[0].mxu0
    %v5433 = vpop.f32.mrb[0].mxu0
    %5434 = vdwg.mxu0
    %5435 = vmatprep.subr.bf16.mxu0 %v4730
    %5436 = vmatpush1.bf16.msra.mxu0 %v4729
    %5437 = vmatprep.subr.bf16.mxu0 %v4738
    %5438 = vmatpush1.bf16.msra.mxu0 %v4737
    %5439 = vmatprep.subr.bf16.mxu0 %v4746
    %5440 = vmatpush1.bf16.msra.mxu0 %v4745
    %5441 = vmatprep.subr.bf16.mxu0 %v4754
    %5442 = vmatpush1.bf16.msra.mxu0 %v4753
    %5443 = vmatprep.subr.bf16.mxu0 %v4762
    %5444 = vmatpush1.bf16.msra.mxu0 %v4761
    %5445 = vmatprep.subr.bf16.mxu0 %v4770
    %5446 = vmatpush1.bf16.msra.mxu0 %v4769
    %5447 = vmatprep.subr.bf16.mxu0 %v4778
    %5448 = vmatpush1.bf16.msra.mxu0 %v4777
    %5449 = vmatprep.subr.bf16.mxu0 %v4786
    %5450 = vmatpush1.bf16.msra.mxu0 %v4785
    %5451 = vmatprep.subr.bf16.mxu0 %v4794
    %5452 = vmatpush1.bf16.msra.mxu0 %v4793
    %5453 = vmatprep.subr.bf16.mxu0 %v4802
    %5454 = vmatpush1.bf16.msra.mxu0 %v4801
    %5455 = vmatprep.subr.bf16.mxu0 %v4810
    %5456 = vmatpush1.bf16.msra.mxu0 %v4809
    %5457 = vmatprep.subr.bf16.mxu0 %v4818
    %5458 = vmatpush1.bf16.msra.mxu0 %v4817
    %5459 = vmatprep.subr.bf16.mxu0 %v4826
    %5460 = vmatpush1.bf16.msra.mxu0 %v4825
    %5461 = vmatprep.subr.bf16.mxu0 %v4834
    %5462 = vmatpush1.bf16.msra.mxu0 %v4833
    %5463 = vmatprep.subr.bf16.mxu0 %v4842
    %5464 = vmatpush1.bf16.msra.mxu0 %v4841
    %5465 = vmatprep.subr.bf16.mxu0 %v4850
    %5466 = vmatpush1.bf16.msra.mxu0 %v4849
    %5467 = vmatprep.mubr.bf16.mxu0 %v2742
    %5468 = vmatmul.mubr.bf16.gmra.mrb[0].mxu0 %v2741
    %v5469 = vpop.f32.mrb[0].mxu0
    %v5470 = vadd.f32 %v5429, %v5469
    %v5471 = vpop.f32.mrb[0].mxu0
    %v5472 = vadd.f32 %v5431, %v5471
    %v5473 = vpop.f32.mrb[0].mxu0
    %v5474 = vpop.f32.mrb[0].mxu0
    %5475 = vdwg.mxu0
    %5476 = vmatprep.subr.bf16.mxu0 %v4858
    %5477 = vmatpush1.bf16.msra.mxu0 %v4857
    %5478 = vmatprep.subr.bf16.mxu0 %v4866
    %5479 = vmatpush1.bf16.msra.mxu0 %v4865
    %5480 = vmatprep.subr.bf16.mxu0 %v4874
    %5481 = vmatpush1.bf16.msra.mxu0 %v4873
    %5482 = vmatprep.subr.bf16.mxu0 %v4882
    %5483 = vmatpush1.bf16.msra.mxu0 %v4881
    %5484 = vmatprep.subr.bf16.mxu0 %v4890
    %5485 = vmatpush1.bf16.msra.mxu0 %v4889
    %5486 = vmatprep.subr.bf16.mxu0 %v4898
    %5487 = vmatpush1.bf16.msra.mxu0 %v4897
    %5488 = vmatprep.subr.bf16.mxu0 %v4906
    %5489 = vmatpush1.bf16.msra.mxu0 %v4905
    %5490 = vmatprep.subr.bf16.mxu0 %v4914
    %5491 = vmatpush1.bf16.msra.mxu0 %v4913
    %5492 = vmatprep.subr.bf16.mxu0 %v4922
    %5493 = vmatpush1.bf16.msra.mxu0 %v4921
    %5494 = vmatprep.subr.bf16.mxu0 %v4930
    %5495 = vmatpush1.bf16.msra.mxu0 %v4929
    %5496 = vmatprep.subr.bf16.mxu0 0
    %5497 = vmatpush1.bf16.msra.mxu0 0
    %5498 = vmatprep.subr.bf16.mxu0 0
    %5499 = vmatpush1.bf16.msra.mxu0 0
    %5500 = vmatprep.subr.bf16.mxu0 0
    %5501 = vmatpush1.bf16.msra.mxu0 0
    %5502 = vmatprep.subr.bf16.mxu0 0
    %5503 = vmatpush1.bf16.msra.mxu0 0
    %5504 = vmatprep.subr.bf16.mxu0 0
    %5505 = vmatpush1.bf16.msra.mxu0 0
    %5506 = vmatprep.subr.bf16.mxu0 0
    %5507 = vmatpush1.bf16.msra.mxu0 0
    %5508 = vmatprep.mubr.bf16.mxu0 %v3089
    %5509 = vmatmul.mubr.bf16.gmra.mrb[0].mxu0 %v2743
    %v5510 = vpop.f32.mrb[0].mxu0
    %v5511 = vadd.f32 %v5470, %v5510
    %v5512 = vpop.f32.mrb[0].mxu0
    %v5513 = vadd.f32 %v5472, %v5512
    %v5514 = vpop.f32.mrb[0].mxu0
    %v5515 = vpop.f32.mrb[0].mxu0
    %5516 = vdwg.mxu0
    %5517 = vmatprep.subr.bf16.mxu0 %v4604
    %5518 = vmatpush1.bf16.msra.mxu0 %v4603
    %5519 = vmatprep.subr.bf16.mxu0 %v4612
    %5520 = vmatpush1.bf16.msra.mxu0 %v4611
    %5521 = vmatprep.subr.bf16.mxu0 %v4620
    %5522 = vmatpush1.bf16.msra.mxu0 %v4619
    %5523 = vmatprep.subr.bf16.mxu0 %v4628
    %5524 = vmatpush1.bf16.msra.mxu0 %v4627
    %5525 = vmatprep.subr.bf16.mxu0 %v4636
    %5526 = vmatpush1.bf16.msra.mxu0 %v4635
    %5527 = vmatprep.subr.bf16.mxu0 %v4644
    %5528 = vmatpush1.bf16.msra.mxu0 %v4643
    %5529 = vmatprep.subr.bf16.mxu0 %v4652
    %5530 = vmatpush1.bf16.msra.mxu0 %v4651
    %5531 = vmatprep.subr.bf16.mxu0 %v4660
    %5532 = vmatpush1.bf16.msra.mxu0 %v4659
    %5533 = vmatprep.subr.bf16.mxu0 %v4668
    %5534 = vmatpush1.bf16.msra.mxu0 %v4667
    %5535 = vmatprep.subr.bf16.mxu0 %v4676
    %5536 = vmatpush1.bf16.msra.mxu0 %v4675
    %5537 = vmatprep.subr.bf16.mxu0 %v4684
    %5538 = vmatpush1.bf16.msra.mxu0 %v4683
    %5539 = vmatprep.subr.bf16.mxu0 %v4692
    %5540 = vmatpush1.bf16.msra.mxu0 %v4691
    %5541 = vmatprep.subr.bf16.mxu0 %v4700
    %5542 = vmatpush1.bf16.msra.mxu0 %v4699
    %5543 = vmatprep.subr.bf16.mxu0 %v4708
    %5544 = vmatpush1.bf16.msra.mxu0 %v4707
    %5545 = vmatprep.subr.bf16.mxu0 %v4716
    %5546 = vmatpush1.bf16.msra.mxu0 %v4715
    %5547 = vmatprep.subr.bf16.mxu0 %v4724
    %5548 = vmatpush1.bf16.msra.mxu0 %v4723
    %5549 = vmatprep.mubr.bf16.mxu0 %v2740
    %5550 = vmatmul.mubr.bf16.gmra.mrb[0].mxu0 %v2739
    %v5551 = vpop.f32.mrb[0].mxu0
    %v5552 = vadd.f32 %v3570, %v5551
    %v5553 = vpop.f32.mrb[0].mxu0
    %v5554 = vadd.f32 %v3574, %v5553
    %v5555 = vpop.f32.mrb[0].mxu0
    %v5556 = vpop.f32.mrb[0].mxu0
    %5557 = vdwg.mxu0
    %5558 = vmatprep.subr.bf16.mxu0 %v4732
    %5559 = vmatpush1.bf16.msra.mxu0 %v4731
    %5560 = vmatprep.subr.bf16.mxu0 %v4740
    %5561 = vmatpush1.bf16.msra.mxu0 %v4739
    %5562 = vmatprep.subr.bf16.mxu0 %v4748
    %5563 = vmatpush1.bf16.msra.mxu0 %v4747
    %5564 = vmatprep.subr.bf16.mxu0 %v4756
    %5565 = vmatpush1.bf16.msra.mxu0 %v4755
    %5566 = vmatprep.subr.bf16.mxu0 %v4764
    %5567 = vmatpush1.bf16.msra.mxu0 %v4763
    %5568 = vmatprep.subr.bf16.mxu0 %v4772
    %5569 = vmatpush1.bf16.msra.mxu0 %v4771
    %5570 = vmatprep.subr.bf16.mxu0 %v4780
    %5571 = vmatpush1.bf16.msra.mxu0 %v4779
    %5572 = vmatprep.subr.bf16.mxu0 %v4788
    %5573 = vmatpush1.bf16.msra.mxu0 %v4787
    %5574 = vmatprep.subr.bf16.mxu0 %v4796
    %5575 = vmatpush1.bf16.msra.mxu0 %v4795
    %5576 = vmatprep.subr.bf16.mxu0 %v4804
    %5577 = vmatpush1.bf16.msra.mxu0 %v4803
    %5578 = vmatprep.subr.bf16.mxu0 %v4812
    %5579 = vmatpush1.bf16.msra.mxu0 %v4811
    %5580 = vmatprep.subr.bf16.mxu0 %v4820
    %5581 = vmatpush1.bf16.msra.mxu0 %v4819
    %5582 = vmatprep.subr.bf16.mxu0 %v4828
    %5583 = vmatpush1.bf16.msra.mxu0 %v4827
    %5584 = vmatprep.subr.bf16.mxu0 %v4836
    %5585 = vmatpush1.bf16.msra.mxu0 %v4835
    %5586 = vmatprep.subr.bf16.mxu0 %v4844
    %5587 = vmatpush1.bf16.msra.mxu0 %v4843
    %5588 = vmatprep.subr.bf16.mxu0 %v4852
    %5589 = vmatpush1.bf16.msra.mxu0 %v4851
    %5590 = vmatprep.mubr.bf16.mxu0 %v2742
    %5591 = vmatmul.mubr.bf16.gmra.mrb[0].mxu0 %v2741
    %v5592 = vpop.f32.mrb[0].mxu0
    %v5593 = vadd.f32 %v5552, %v5592
    %v5594 = vpop.f32.mrb[0].mxu0
    %v5595 = vadd.f32 %v5554, %v5594
    %v5596 = vpop.f32.mrb[0].mxu0
    %v5597 = vpop.f32.mrb[0].mxu0
    %5598 = vdwg.mxu0
    %5599 = vmatprep.subr.bf16.mxu0 %v4860
    %5600 = vmatpush1.bf16.msra.mxu0 %v4859
    %5601 = vmatprep.subr.bf16.mxu0 %v4868
    %5602 = vmatpush1.bf16.msra.mxu0 %v4867
    %5603 = vmatprep.subr.bf16.mxu0 %v4876
    %5604 = vmatpush1.bf16.msra.mxu0 %v4875
    %5605 = vmatprep.subr.bf16.mxu0 %v4884
    %5606 = vmatpush1.bf16.msra.mxu0 %v4883
    %5607 = vmatprep.subr.bf16.mxu0 %v4892
    %5608 = vmatpush1.bf16.msra.mxu0 %v4891
    %5609 = vmatprep.subr.bf16.mxu0 %v4900
    %5610 = vmatpush1.bf16.msra.mxu0 %v4899
    %5611 = vmatprep.subr.bf16.mxu0 %v4908
    %5612 = vmatpush1.bf16.msra.mxu0 %v4907
    %5613 = vmatprep.subr.bf16.mxu0 %v4916
    %5614 = vmatpush1.bf16.msra.mxu0 %v4915
    %5615 = vmatprep.subr.bf16.mxu0 %v4924
    %5616 = vmatpush1.bf16.msra.mxu0 %v4923
    %5617 = vmatprep.subr.bf16.mxu0 %v4932
    %5618 = vmatpush1.bf16.msra.mxu0 %v4931
    %5619 = vmatprep.subr.bf16.mxu0 0
    %5620 = vmatpush1.bf16.msra.mxu0 0
    %5621 = vmatprep.subr.bf16.mxu0 0
    %5622 = vmatpush1.bf16.msra.mxu0 0
    %5623 = vmatprep.subr.bf16.mxu0 0
    %5624 = vmatpush1.bf16.msra.mxu0 0
    %5625 = vmatprep.subr.bf16.mxu0 0
    %5626 = vmatpush1.bf16.msra.mxu0 0
    %5627 = vmatprep.subr.bf16.mxu0 0
    %5628 = vmatpush1.bf16.msra.mxu0 0
    %5629 = vmatprep.subr.bf16.mxu0 0
    %5630 = vmatpush1.bf16.msra.mxu0 0
    %5631 = vmatprep.mubr.bf16.mxu0 %v3089
    %5632 = vmatmul.mubr.bf16.gmra.mrb[0].mxu0 %v2743
    %v5633 = vpop.f32.mrb[0].mxu0
    %v5634 = vadd.f32 %v5593, %v5633
    %v5635 = vpop.f32.mrb[0].mxu0
    %v5636 = vadd.f32 %v5595, %v5635
    %v5637 = vpop.f32.mrb[0].mxu0
    %v5638 = vpop.f32.mrb[0].mxu0
    %5639 = vdwg.mxu0
    %5640 = vmatprep.subr.bf16.mxu0 %v4606
    %5641 = vmatpush1.bf16.msra.mxu0 %v4605
    %5642 = vmatprep.subr.bf16.mxu0 %v4614
    %5643 = vmatpush1.bf16.msra.mxu0 %v4613
    %5644 = vmatprep.subr.bf16.mxu0 %v4622
    %5645 = vmatpush1.bf16.msra.mxu0 %v4621
    %5646 = vmatprep.subr.bf16.mxu0 %v4630
    %5647 = vmatpush1.bf16.msra.mxu0 %v4629
    %5648 = vmatprep.subr.bf16.mxu0 %v4638
    %5649 = vmatpush1.bf16.msra.mxu0 %v4637
    %5650 = vmatprep.subr.bf16.mxu0 %v4646
    %5651 = vmatpush1.bf16.msra.mxu0 %v4645
    %5652 = vmatprep.subr.bf16.mxu0 %v4654
    %5653 = vmatpush1.bf16.msra.mxu0 %v4653
    %5654 = vmatprep.subr.bf16.mxu0 %v4662
    %5655 = vmatpush1.bf16.msra.mxu0 %v4661
    %5656 = vmatprep.subr.bf16.mxu0 %v4670
    %5657 = vmatpush1.bf16.msra.mxu0 %v4669
    %5658 = vmatprep.subr.bf16.mxu0 %v4678
    %5659 = vmatpush1.bf16.msra.mxu0 %v4677
    %5660 = vmatprep.subr.bf16.mxu0 %v4686
    %5661 = vmatpush1.bf16.msra.mxu0 %v4685
    %5662 = vmatprep.subr.bf16.mxu0 %v4694
    %5663 = vmatpush1.bf16.msra.mxu0 %v4693
    %5664 = vmatprep.subr.bf16.mxu0 %v4702
    %5665 = vmatpush1.bf16.msra.mxu0 %v4701
    %5666 = vmatprep.subr.bf16.mxu0 %v4710
    %5667 = vmatpush1.bf16.msra.mxu0 %v4709
    %5668 = vmatprep.subr.bf16.mxu0 %v4718
    %5669 = vmatpush1.bf16.msra.mxu0 %v4717
    %5670 = vmatprep.subr.bf16.mxu0 %v4726
    %5671 = vmatpush1.bf16.msra.mxu0 %v4725
    %5672 = vmatprep.mubr.bf16.mxu0 %v2740
    %5673 = vmatmul.mubr.bf16.gmra.mrb[0].mxu0 %v2739
    %v5674 = vpop.f32.mrb[0].mxu0
    %v5675 = vadd.f32 %v3578, %v5674
    %v5676 = vpop.f32.mrb[0].mxu0
    %v5677 = vadd.f32 %v3582, %v5676
    %v5678 = vpop.f32.mrb[0].mxu0
    %v5679 = vpop.f32.mrb[0].mxu0
    %5680 = vdwg.mxu0
    %5681 = vmatprep.subr.bf16.mxu0 %v4734
    %5682 = vmatpush1.bf16.msra.mxu0 %v4733
    %5683 = vmatprep.subr.bf16.mxu0 %v4742
    %5684 = vmatpush1.bf16.msra.mxu0 %v4741
    %5685 = vmatprep.subr.bf16.mxu0 %v4750
    %5686 = vmatpush1.bf16.msra.mxu0 %v4749
    %5687 = vmatprep.subr.bf16.mxu0 %v4758
    %5688 = vmatpush1.bf16.msra.mxu0 %v4757
    %5689 = vmatprep.subr.bf16.mxu0 %v4766
    %5690 = vmatpush1.bf16.msra.mxu0 %v4765
    %5691 = vmatprep.subr.bf16.mxu0 %v4774
    %5692 = vmatpush1.bf16.msra.mxu0 %v4773
    %5693 = vmatprep.subr.bf16.mxu0 %v4782
    %5694 = vmatpush1.bf16.msra.mxu0 %v4781
    %5695 = vmatprep.subr.bf16.mxu0 %v4790
    %5696 = vmatpush1.bf16.msra.mxu0 %v4789
    %5697 = vmatprep.subr.bf16.mxu0 %v4798
    %5698 = vmatpush1.bf16.msra.mxu0 %v4797
    %5699 = vmatprep.subr.bf16.mxu0 %v4806
    %5700 = vmatpush1.bf16.msra.mxu0 %v4805
    %5701 = vmatprep.subr.bf16.mxu0 %v4814
    %5702 = vmatpush1.bf16.msra.mxu0 %v4813
    %5703 = vmatprep.subr.bf16.mxu0 %v4822
    %5704 = vmatpush1.bf16.msra.mxu0 %v4821
    %5705 = vmatprep.subr.bf16.mxu0 %v4830
    %5706 = vmatpush1.bf16.msra.mxu0 %v4829
    %5707 = vmatprep.subr.bf16.mxu0 %v4838
    %5708 = vmatpush1.bf16.msra.mxu0 %v4837
    %5709 = vmatprep.subr.bf16.mxu0 %v4846
    %5710 = vmatpush1.bf16.msra.mxu0 %v4845
    %5711 = vmatprep.subr.bf16.mxu0 %v4854
    %5712 = vmatpush1.bf16.msra.mxu0 %v4853
    %5713 = vmatprep.mubr.bf16.mxu0 %v2742
    %5714 = vmatmul.mubr.bf16.gmra.mrb[0].mxu0 %v2741
    %v5715 = vpop.f32.mrb[0].mxu0
    %v5716 = vadd.f32 %v5675, %v5715
    %v5717 = vpop.f32.mrb[0].mxu0
    %v5718 = vadd.f32 %v5677, %v5717
    %v5719 = vpop.f32.mrb[0].mxu0
    %v5720 = vpop.f32.mrb[0].mxu0
    %5721 = vdwg.mxu0
    %5722 = vmatprep.subr.bf16.mxu0 %v4862
    %5723 = vmatpush1.bf16.msra.mxu0 %v4861
    %5724 = vmatprep.subr.bf16.mxu0 %v4870
    %5725 = vmatpush1.bf16.msra.mxu0 %v4869
    %5726 = vmatprep.subr.bf16.mxu0 %v4878
    %5727 = vmatpush1.bf16.msra.mxu0 %v4877
    %5728 = vmatprep.subr.bf16.mxu0 %v4886
    %5729 = vmatpush1.bf16.msra.mxu0 %v4885
    %5730 = vmatprep.subr.bf16.mxu0 %v4894
    %5731 = vmatpush1.bf16.msra.mxu0 %v4893
    %5732 = vmatprep.subr.bf16.mxu0 %v4902
    %5733 = vmatpush1.bf16.msra.mxu0 %v4901
    %5734 = vmatprep.subr.bf16.mxu0 %v4910
    %5735 = vmatpush1.bf16.msra.mxu0 %v4909
    %5736 = vmatprep.subr.bf16.mxu0 %v4918
    %5737 = vmatpush1.bf16.msra.mxu0 %v4917
    %5738 = vmatprep.subr.bf16.mxu0 %v4926
    %5739 = vmatpush1.bf16.msra.mxu0 %v4925
    %5740 = vmatprep.subr.bf16.mxu0 %v4934
    %5741 = vmatpush1.bf16.msra.mxu0 %v4933
    %5742 = vmatprep.subr.bf16.mxu0 0
    %5743 = vmatpush1.bf16.msra.mxu0 0
    %5744 = vmatprep.subr.bf16.mxu0 0
    %5745 = vmatpush1.bf16.msra.mxu0 0
    %5746 = vmatprep.subr.bf16.mxu0 0
    %5747 = vmatpush1.bf16.msra.mxu0 0
    %5748 = vmatprep.subr.bf16.mxu0 0
    %5749 = vmatpush1.bf16.msra.mxu0 0
    %5750 = vmatprep.subr.bf16.mxu0 0
    %5751 = vmatpush1.bf16.msra.mxu0 0
    %5752 = vmatprep.subr.bf16.mxu0 0
    %5753 = vmatpush1.bf16.msra.mxu0 0
    %5754 = vmatprep.mubr.bf16.mxu0 %v3089
    %5755 = vmatmul.mubr.bf16.gmra.mrb[0].mxu0 %v2743
    %v5756 = vpop.f32.mrb[0].mxu0
    %v5757 = vadd.f32 %v5716, %v5756
    %v5758 = vpop.f32.mrb[0].mxu0
    %v5759 = vadd.f32 %v5718, %v5758
    %v5760 = vpop.f32.mrb[0].mxu0
    %v5761 = vpop.f32.mrb[0].mxu0
    %5762 = vdwg.mxu0
    %v5763 = vmul.f32 %v5388, 0.2
    %v5764 = vmul.f32 %v5390, 0.2
    %v5765 = vmul.f32 %v5511, 0.2
    %v5766 = vmul.f32 %v5513, 0.2
    %v5767 = vmul.f32 %v5634, 0.2
    %v5768 = vmul.f32 %v5636, 0.2
    %v5769 = vmul.f32 %v5757, 0.2
    %v5770 = vmul.f32 %v5759, 0.2
    %v5771 = vmax.f32 %v5388, %v5763
    %v5772 = vmax.f32 %v5390, %v5764
    %v5773 = vmax.f32 %v5511, %v5765
    %v5774 = vmax.f32 %v5513, %v5766
    %v5775 = vmax.f32 %v5634, %v5767
    %v5776 = vmax.f32 %v5636, %v5768
    %v5777 = vmax.f32 %v5757, %v5769
    %v5778 = vmax.f32 %v5759, %v5770
    %v5779 = vpack.c.bf16 %v5771, %v5771
    %v5780 = vpack.c.bf16 %v5772, %v5772
    %v5781 = vpack.c.bf16 %v5773, %v5773
    %v5782 = vpack.c.bf16 %v5774, %v5774
    %v5783 = vpack.c.bf16 %v5775, %v5775
    %v5784 = vpack.c.bf16 %v5776, %v5776
    %v5785 = vpack.c.bf16 %v5777, %v5777
    %v5786 = vpack.c.bf16 %v5778, %v5778
    %v5787 = vld [vmem:[#allocation17] sm:$0xff]
    %v5788 = vld [vmem:[#allocation17 + $0x8] sm:$0xff]
    %v5789 = vld [vmem:[#allocation17 + $0x10] sm:$0xff]
    %v5790 = vld [vmem:[#allocation17 + $0x18] sm:$0xff]
    %v5791 = vld [vmem:[#allocation17 + $0x20] sm:$0xff]
    %v5792 = vld [vmem:[#allocation17 + $0x28] sm:$0xff]
    %v5793 = vld [vmem:[#allocation17 + $0x30] sm:$0xff]
    %v5794 = vld [vmem:[#allocation17 + $0x38] sm:$0xff]
    %v5795 = vld [vmem:[#allocation17 + $0x40] sm:$0xff]
    %v5796 = vld [vmem:[#allocation17 + $0x48] sm:$0xff]
    %v5797 = vld [vmem:[#allocation17 + $0x50] sm:$0xff]
    %v5798 = vld [vmem:[#allocation17 + $0x58] sm:$0xff]
    %v5799 = vld [vmem:[#allocation17 + $0x60] sm:$0xff]
    %v5800 = vld [vmem:[#allocation17 + $0x68] sm:$0xff]
    %v5801 = vld [vmem:[#allocation17 + $0x70] sm:$0xff]
    %v5802 = vld [vmem:[#allocation17 + $0x78] sm:$0xff]
    %v5803 = vld [vmem:[#allocation17 + $0x80] sm:$0xff]
    %v5804 = vld [vmem:[#allocation17 + $0x88] sm:$0xff]
    %v5805 = vld [vmem:[#allocation17 + $0x90] sm:$0xff]
    %v5806 = vld [vmem:[#allocation17 + $0x98] sm:$0xff]
    %v5807 = vld [vmem:[#allocation17 + $0xa0] sm:$0xff]
    %v5808 = vld [vmem:[#allocation17 + $0xa8] sm:$0xff]
    %v5809 = vld [vmem:[#allocation17 + $0xb0] sm:$0xff]
    %v5810 = vld [vmem:[#allocation17 + $0xb8] sm:$0xff]
    %v5811 = vld [vmem:[#allocation17 + $0xc0] sm:$0xff]
    %v5812 = vld [vmem:[#allocation17 + $0xc8] sm:$0xff]
    %v5813 = vld [vmem:[#allocation17 + $0xd0] sm:$0xff]
    %v5814 = vld [vmem:[#allocation17 + $0xd8] sm:$0xff]
    %v5815 = vld [vmem:[#allocation17 + $0xe0] sm:$0xff]
    %v5816 = vld [vmem:[#allocation17 + $0xe8] sm:$0xff]
    %v5817 = vld [vmem:[#allocation17 + $0xf0] sm:$0xff]
    %v5818 = vld [vmem:[#allocation17 + $0xf8] sm:$0xff]
    %v5819 = vld [vmem:[#allocation17 + $0x100] sm:$0xff]
    %v5820 = vld [vmem:[#allocation17 + $0x108] sm:$0xff]
    %v5821 = vld [vmem:[#allocation17 + $0x110] sm:$0xff]
    %v5822 = vld [vmem:[#allocation17 + $0x118] sm:$0xff]
    %v5823 = vld [vmem:[#allocation17 + $0x120] sm:$0xff]
    %v5824 = vld [vmem:[#allocation17 + $0x128] sm:$0xff]
    %v5825 = vld [vmem:[#allocation17 + $0x130] sm:$0xff]
    %v5826 = vld [vmem:[#allocation17 + $0x138] sm:$0xff]
    %v5827 = vld [vmem:[#allocation17 + $0x140] sm:$0xff]
    %v5828 = vld [vmem:[#allocation17 + $0x148] sm:$0xff]
    %v5829 = vld [vmem:[#allocation17 + $0x150] sm:$0xff]
    %v5830 = vld [vmem:[#allocation17 + $0x158] sm:$0xff]
    %v5831 = vld [vmem:[#allocation17 + $0x160] sm:$0xff]
    %v5832 = vld [vmem:[#allocation17 + $0x168] sm:$0xff]
    %v5833 = vld [vmem:[#allocation17 + $0x170] sm:$0xff]
    %v5834 = vld [vmem:[#allocation17 + $0x178] sm:$0xff]
    %v5835 = vld [vmem:[#allocation17 + $0x180] sm:$0xff]
    %v5836 = vld [vmem:[#allocation17 + $0x188] sm:$0xff]
    %v5837 = vld [vmem:[#allocation17 + $0x190] sm:$0xff]
    %v5838 = vld [vmem:[#allocation17 + $0x198] sm:$0xff]
    %v5839 = vld [vmem:[#allocation17 + $0x1a0] sm:$0xff]
    %v5840 = vld [vmem:[#allocation17 + $0x1a8] sm:$0xff]
    %v5841 = vld [vmem:[#allocation17 + $0x1b0] sm:$0xff]
    %v5842 = vld [vmem:[#allocation17 + $0x1b8] sm:$0xff]
    %v5843 = vld [vmem:[#allocation17 + $0x1c0] sm:$0xff]
    %v5844 = vld [vmem:[#allocation17 + $0x1c8] sm:$0xff]
    %v5845 = vld [vmem:[#allocation17 + $0x1d0] sm:$0xff]
    %v5846 = vld [vmem:[#allocation17 + $0x1d8] sm:$0xff]
    %v5847 = vld [vmem:[#allocation17 + $0x1e0] sm:$0xff]
    %v5848 = vld [vmem:[#allocation17 + $0x1e8] sm:$0xff]
    %v5849 = vld [vmem:[#allocation17 + $0x1f0] sm:$0xff]
    %v5850 = vld [vmem:[#allocation17 + $0x1f8] sm:$0xff]
    %v5851 = vld [vmem:[#allocation17 + $0x200] sm:$0xff]
    %v5852 = vld [vmem:[#allocation17 + $0x208] sm:$0xff]
    %v5853 = vld [vmem:[#allocation17 + $0x210] sm:$0xff]
    %v5854 = vld [vmem:[#allocation17 + $0x218] sm:$0xff]
    %v5855 = vld [vmem:[#allocation17 + $0x220] sm:$0xff]
    %v5856 = vld [vmem:[#allocation17 + $0x228] sm:$0xff]
    %v5857 = vld [vmem:[#allocation17 + $0x230] sm:$0xff]
    %v5858 = vld [vmem:[#allocation17 + $0x238] sm:$0xff]
    %v5859 = vld [vmem:[#allocation17 + $0x240] sm:$0xff]
    %v5860 = vld [vmem:[#allocation17 + $0x248] sm:$0xff]
    %v5861 = vld [vmem:[#allocation17 + $0x250] sm:$0xff]
    %v5862 = vld [vmem:[#allocation17 + $0x258] sm:$0xff]
    %v5863 = vld [vmem:[#allocation17 + $0x260] sm:$0xff]
    %v5864 = vld [vmem:[#allocation17 + $0x268] sm:$0xff]
    %v5865 = vld [vmem:[#allocation17 + $0x270] sm:$0xff]
    %v5866 = vld [vmem:[#allocation17 + $0x278] sm:$0xff]
    %v5867 = vld [vmem:[#allocation17 + $0x280] sm:$0xff]
    %v5868 = vld [vmem:[#allocation17 + $0x288] sm:$0xff]
    %v5869 = vld [vmem:[#allocation17 + $0x290] sm:$0xff]
    %v5870 = vld [vmem:[#allocation17 + $0x298] sm:$0xff]
    %v5871 = vld [vmem:[#allocation17 + $0x2a0] sm:$0xff]
    %v5872 = vld [vmem:[#allocation17 + $0x2a8] sm:$0xff]
    %v5873 = vld [vmem:[#allocation17 + $0x2b0] sm:$0xff]
    %v5874 = vld [vmem:[#allocation17 + $0x2b8] sm:$0xff]
    %v5875 = vld [vmem:[#allocation17 + $0x2c0] sm:$0xff]
    %v5876 = vld [vmem:[#allocation17 + $0x2c8] sm:$0xff]
    %v5877 = vld [vmem:[#allocation17 + $0x2d0] sm:$0xff]
    %v5878 = vld [vmem:[#allocation17 + $0x2d8] sm:$0xff]
    %v5879 = vld [vmem:[#allocation17 + $0x2e0] sm:$0xff]
    %v5880 = vld [vmem:[#allocation17 + $0x2e8] sm:$0xff]
    %v5881 = vld [vmem:[#allocation17 + $0x2f0] sm:$0xff]
    %v5882 = vld [vmem:[#allocation17 + $0x2f8] sm:$0xff]
    %v5883 = vld [vmem:[#allocation17 + $0x300] sm:$0xff]
    %v5884 = vld [vmem:[#allocation17 + $0x308] sm:$0xff]
    %v5885 = vld [vmem:[#allocation17 + $0x310] sm:$0xff]
    %v5886 = vld [vmem:[#allocation17 + $0x318] sm:$0xff]
    %v5887 = vld [vmem:[#allocation17 + $0x320] sm:$0xff]
    %v5888 = vld [vmem:[#allocation17 + $0x328] sm:$0xff]
    %v5889 = vld [vmem:[#allocation17 + $0x330] sm:$0xff]
    %v5890 = vld [vmem:[#allocation17 + $0x338] sm:$0xff]
    %v5891 = vld [vmem:[#allocation17 + $0x340] sm:$0xff]
    %v5892 = vld [vmem:[#allocation17 + $0x348] sm:$0xff]
    %v5893 = vld [vmem:[#allocation17 + $0x350] sm:$0xff]
    %v5894 = vld [vmem:[#allocation17 + $0x358] sm:$0xff]
    %v5895 = vld [vmem:[#allocation17 + $0x360] sm:$0xff]
    %v5896 = vld [vmem:[#allocation17 + $0x368] sm:$0xff]
    %v5897 = vld [vmem:[#allocation17 + $0x370] sm:$0xff]
    %v5898 = vld [vmem:[#allocation17 + $0x378] sm:$0xff]
    %v5899 = vld [vmem:[#allocation17 + $0x380] sm:$0xff]
    %v5900 = vld [vmem:[#allocation17 + $0x388] sm:$0xff]
    %v5901 = vld [vmem:[#allocation17 + $0x390] sm:$0xff]
    %v5902 = vld [vmem:[#allocation17 + $0x398] sm:$0xff]
    %v5903 = vld [vmem:[#allocation17 + $0x3a0] sm:$0xff]
    %v5904 = vld [vmem:[#allocation17 + $0x3a8] sm:$0xff]
    %v5905 = vld [vmem:[#allocation17 + $0x3b0] sm:$0xff]
    %v5906 = vld [vmem:[#allocation17 + $0x3b8] sm:$0xff]
    %v5907 = vld [vmem:[#allocation17 + $0x3c0] sm:$0xff]
    %v5908 = vld [vmem:[#allocation17 + $0x3c8] sm:$0xff]
    %v5909 = vld [vmem:[#allocation17 + $0x3d0] sm:$0xff]
    %v5910 = vld [vmem:[#allocation17 + $0x3d8] sm:$0xff]
    %v5911 = vld [vmem:[#allocation17 + $0x3e0] sm:$0xff]
    %v5912 = vld [vmem:[#allocation17 + $0x3e8] sm:$0xff]
    %v5913 = vld [vmem:[#allocation17 + $0x3f0] sm:$0xff]
    %v5914 = vld [vmem:[#allocation17 + $0x3f8] sm:$0xff]
    %v5915 = vld [vmem:[#allocation17 + $0x400] sm:$0xff]
    %v5916 = vld [vmem:[#allocation17 + $0x408] sm:$0xff]
    %v5917 = vld [vmem:[#allocation17 + $0x410] sm:$0xff]
    %v5918 = vld [vmem:[#allocation17 + $0x418] sm:$0xff]
    %v5919 = vld [vmem:[#allocation17 + $0x420] sm:$0xff]
    %v5920 = vld [vmem:[#allocation17 + $0x428] sm:$0xff]
    %v5921 = vld [vmem:[#allocation17 + $0x430] sm:$0xff]
    %v5922 = vld [vmem:[#allocation17 + $0x438] sm:$0xff]
    %v5923 = vld [vmem:[#allocation17 + $0x440] sm:$0xff]
    %v5924 = vld [vmem:[#allocation17 + $0x448] sm:$0xff]
    %v5925 = vld [vmem:[#allocation17 + $0x450] sm:$0xff]
    %v5926 = vld [vmem:[#allocation17 + $0x458] sm:$0xff]
    %v5927 = vld [vmem:[#allocation17 + $0x460] sm:$0xff]
    %v5928 = vld [vmem:[#allocation17 + $0x468] sm:$0xff]
    %v5929 = vld [vmem:[#allocation17 + $0x470] sm:$0xff]
    %v5930 = vld [vmem:[#allocation17 + $0x478] sm:$0xff]
    %v5931 = vld [vmem:[#allocation17 + $0x480] sm:$0xff]
    %v5932 = vld [vmem:[#allocation17 + $0x488] sm:$0xff]
    %v5933 = vld [vmem:[#allocation17 + $0x490] sm:$0xff]
    %v5934 = vld [vmem:[#allocation17 + $0x498] sm:$0xff]
    %v5935 = vld [vmem:[#allocation17 + $0x4a0] sm:$0xff]
    %v5936 = vld [vmem:[#allocation17 + $0x4a8] sm:$0xff]
    %v5937 = vld [vmem:[#allocation17 + $0x4b0] sm:$0xff]
    %v5938 = vld [vmem:[#allocation17 + $0x4b8] sm:$0xff]
    %v5939 = vld [vmem:[#allocation17 + $0x4c0] sm:$0xff]
    %v5940 = vld [vmem:[#allocation17 + $0x4c8] sm:$0xff]
    %v5941 = vld [vmem:[#allocation17 + $0x4d0] sm:$0xff]
    %v5942 = vld [vmem:[#allocation17 + $0x4d8] sm:$0xff]
    %v5943 = vld [vmem:[#allocation17 + $0x4e0] sm:$0xff]
    %v5944 = vld [vmem:[#allocation17 + $0x4e8] sm:$0xff]
    %v5945 = vld [vmem:[#allocation17 + $0x4f0] sm:$0xff]
    %v5946 = vld [vmem:[#allocation17 + $0x4f8] sm:$0xff]
    %v5947 = vld [vmem:[#allocation17 + $0x500] sm:$0xff]
    %v5948 = vld [vmem:[#allocation17 + $0x508] sm:$0xff]
    %v5949 = vld [vmem:[#allocation17 + $0x510] sm:$0xff]
    %v5950 = vld [vmem:[#allocation17 + $0x518] sm:$0xff]
    %v5951 = vld [vmem:[#allocation17 + $0x520] sm:$0xff]
    %v5952 = vld [vmem:[#allocation17 + $0x528] sm:$0xff]
    %v5953 = vld [vmem:[#allocation17 + $0x530] sm:$0xff]
    %v5954 = vld [vmem:[#allocation17 + $0x538] sm:$0xff]
    %v5955 = vld [vmem:[#allocation17 + $0x540] sm:$0xff]
    %v5956 = vld [vmem:[#allocation17 + $0x548] sm:$0xff]
    %v5957 = vld [vmem:[#allocation17 + $0x550] sm:$0xff]
    %v5958 = vld [vmem:[#allocation17 + $0x558] sm:$0xff]
    %v5959 = vld [vmem:[#allocation17 + $0x560] sm:$0xff]
    %v5960 = vld [vmem:[#allocation17 + $0x568] sm:$0xff]
    %v5961 = vld [vmem:[#allocation17 + $0x570] sm:$0xff]
    %v5962 = vld [vmem:[#allocation17 + $0x578] sm:$0xff]
    %v5963 = vld [vmem:[#allocation17 + $0x580] sm:$0xff]
    %v5964 = vld [vmem:[#allocation17 + $0x588] sm:$0xff]
    %v5965 = vld [vmem:[#allocation17 + $0x590] sm:$0xff]
    %v5966 = vld [vmem:[#allocation17 + $0x598] sm:$0xff]
    %v5967 = vld [vmem:[#allocation17 + $0x5a0] sm:$0xff]
    %v5968 = vld [vmem:[#allocation17 + $0x5a8] sm:$0xff]
    %v5969 = vld [vmem:[#allocation17 + $0x5b0] sm:$0xff]
    %v5970 = vld [vmem:[#allocation17 + $0x5b8] sm:$0xff]
    %v5971 = vld [vmem:[#allocation17 + $0x5c0] sm:$0xff]
    %v5972 = vld [vmem:[#allocation17 + $0x5c8] sm:$0xff]
    %v5973 = vld [vmem:[#allocation17 + $0x5d0] sm:$0xff]
    %v5974 = vld [vmem:[#allocation17 + $0x5d8] sm:$0xff]
    %v5975 = vld [vmem:[#allocation17 + $0x5e0] sm:$0xff]
    %v5976 = vld [vmem:[#allocation17 + $0x5e8] sm:$0xff]
    %v5977 = vld [vmem:[#allocation17 + $0x5f0] sm:$0xff]
    %v5978 = vld [vmem:[#allocation17 + $0x5f8] sm:$0xff]
    %v5979 = vld [vmem:[#allocation17 + $0x600] sm:$0xff]
    %v5980 = vld [vmem:[#allocation17 + $0x608] sm:$0xff]
    %v5981 = vld [vmem:[#allocation17 + $0x610] sm:$0xff]
    %v5982 = vld [vmem:[#allocation17 + $0x618] sm:$0xff]
    %v5983 = vld [vmem:[#allocation17 + $0x620] sm:$0xff]
    %v5984 = vld [vmem:[#allocation17 + $0x628] sm:$0xff]
    %v5985 = vld [vmem:[#allocation17 + $0x630] sm:$0xff]
    %v5986 = vld [vmem:[#allocation17 + $0x638] sm:$0xff]
    %v5987 = vld [vmem:[#allocation17 + $0x640] sm:$0xff]
    %v5988 = vld [vmem:[#allocation17 + $0x648] sm:$0xff]
    %v5989 = vld [vmem:[#allocation17 + $0x650] sm:$0xff]
    %v5990 = vld [vmem:[#allocation17 + $0x658] sm:$0xff]
    %v5991 = vld [vmem:[#allocation17 + $0x660] sm:$0xff]
    %v5992 = vld [vmem:[#allocation17 + $0x668] sm:$0xff]
    %v5993 = vld [vmem:[#allocation17 + $0x670] sm:$0xff]
    %v5994 = vld [vmem:[#allocation17 + $0x678] sm:$0xff]
    %v5995 = vld [vmem:[#allocation17 + $0x680] sm:$0xff]
    %v5996 = vld [vmem:[#allocation17 + $0x688] sm:$0xff]
    %v5997 = vld [vmem:[#allocation17 + $0x690] sm:$0xff]
    %v5998 = vld [vmem:[#allocation17 + $0x698] sm:$0xff]
    %v5999 = vld [vmem:[#allocation17 + $0x6a0] sm:$0xff]
    %v6000 = vld [vmem:[#allocation17 + $0x6a8] sm:$0xff]
    %v6001 = vld [vmem:[#allocation17 + $0x6b0] sm:$0xff]
    %v6002 = vld [vmem:[#allocation17 + $0x6b8] sm:$0xff]
    %v6003 = vld [vmem:[#allocation17 + $0x6c0] sm:$0xff]
    %v6004 = vld [vmem:[#allocation17 + $0x6c8] sm:$0xff]
    %v6005 = vld [vmem:[#allocation17 + $0x6d0] sm:$0xff]
    %v6006 = vld [vmem:[#allocation17 + $0x6d8] sm:$0xff]
    %v6007 = vld [vmem:[#allocation17 + $0x6e0] sm:$0xff]
    %v6008 = vld [vmem:[#allocation17 + $0x6e8] sm:$0xff]
    %v6009 = vld [vmem:[#allocation17 + $0x6f0] sm:$0xff]
    %v6010 = vld [vmem:[#allocation17 + $0x6f8] sm:$0xff]
    %v6011 = vld [vmem:[#allocation17 + $0x700] sm:$0xff]
    %v6012 = vld [vmem:[#allocation17 + $0x708] sm:$0xff]
    %v6013 = vld [vmem:[#allocation17 + $0x710] sm:$0xff]
    %v6014 = vld [vmem:[#allocation17 + $0x718] sm:$0xff]
    %v6015 = vld [vmem:[#allocation17 + $0x720] sm:$0xff]
    %v6016 = vld [vmem:[#allocation17 + $0x728] sm:$0xff]
    %v6017 = vld [vmem:[#allocation17 + $0x730] sm:$0xff]
    %v6018 = vld [vmem:[#allocation17 + $0x738] sm:$0xff]
    %v6019 = vld [vmem:[#allocation17 + $0x740] sm:$0xff]
    %v6020 = vld [vmem:[#allocation17 + $0x748] sm:$0xff]
    %v6021 = vld [vmem:[#allocation17 + $0x750] sm:$0xff]
    %v6022 = vld [vmem:[#allocation17 + $0x758] sm:$0xff]
    %v6023 = vld [vmem:[#allocation17 + $0x760] sm:$0xff]
    %v6024 = vld [vmem:[#allocation17 + $0x768] sm:$0xff]
    %v6025 = vld [vmem:[#allocation17 + $0x770] sm:$0xff]
    %v6026 = vld [vmem:[#allocation17 + $0x778] sm:$0xff]
    %v6027 = vld [vmem:[#allocation17 + $0x780] sm:$0xff]
    %v6028 = vld [vmem:[#allocation17 + $0x788] sm:$0xff]
    %v6029 = vld [vmem:[#allocation17 + $0x790] sm:$0xff]
    %v6030 = vld [vmem:[#allocation17 + $0x798] sm:$0xff]
    %v6031 = vld [vmem:[#allocation17 + $0x7a0] sm:$0xff]
    %v6032 = vld [vmem:[#allocation17 + $0x7a8] sm:$0xff]
    %v6033 = vld [vmem:[#allocation17 + $0x7b0] sm:$0xff]
    %v6034 = vld [vmem:[#allocation17 + $0x7b8] sm:$0xff]
    %v6035 = vld [vmem:[#allocation17 + $0x7c0] sm:$0xff]
    %v6036 = vld [vmem:[#allocation17 + $0x7c8] sm:$0xff]
    %v6037 = vld [vmem:[#allocation17 + $0x7d0] sm:$0xff]
    %v6038 = vld [vmem:[#allocation17 + $0x7d8] sm:$0xff]
    %v6039 = vld [vmem:[#allocation17 + $0x7e0] sm:$0xff]
    %v6040 = vld [vmem:[#allocation17 + $0x7e8] sm:$0xff]
    %v6041 = vld [vmem:[#allocation17 + $0x7f0] sm:$0xff]
    %v6042 = vld [vmem:[#allocation17 + $0x7f8] sm:$0xff]
    %v6043 = vld [vmem:[#allocation17 + $0x800] sm:$0xff]
    %v6044 = vld [vmem:[#allocation17 + $0x808] sm:$0xff]
    %v6045 = vld [vmem:[#allocation17 + $0x810] sm:$0xff]
    %v6046 = vld [vmem:[#allocation17 + $0x818] sm:$0xff]
    %v6047 = vld [vmem:[#allocation17 + $0x820] sm:$0xff]
    %v6048 = vld [vmem:[#allocation17 + $0x828] sm:$0xff]
    %v6049 = vld [vmem:[#allocation17 + $0x830] sm:$0xff]
    %v6050 = vld [vmem:[#allocation17 + $0x838] sm:$0xff]
    %v6051 = vld [vmem:[#allocation17 + $0x840] sm:$0xff]
    %v6052 = vld [vmem:[#allocation17 + $0x848] sm:$0xff]
    %v6053 = vld [vmem:[#allocation17 + $0x850] sm:$0xff]
    %v6054 = vld [vmem:[#allocation17 + $0x858] sm:$0xff]
    %v6055 = vld [vmem:[#allocation17 + $0x860] sm:$0xff]
    %v6056 = vld [vmem:[#allocation17 + $0x868] sm:$0xff]
    %v6057 = vld [vmem:[#allocation17 + $0x870] sm:$0xff]
    %v6058 = vld [vmem:[#allocation17 + $0x878] sm:$0xff]
    %v6059 = vld [vmem:[#allocation17 + $0x880] sm:$0xff]
    %v6060 = vld [vmem:[#allocation17 + $0x888] sm:$0xff]
    %v6061 = vld [vmem:[#allocation17 + $0x890] sm:$0xff]
    %v6062 = vld [vmem:[#allocation17 + $0x898] sm:$0xff]
    %v6063 = vld [vmem:[#allocation17 + $0x8a0] sm:$0xff]
    %v6064 = vld [vmem:[#allocation17 + $0x8a8] sm:$0xff]
    %v6065 = vld [vmem:[#allocation17 + $0x8b0] sm:$0xff]
    %v6066 = vld [vmem:[#allocation17 + $0x8b8] sm:$0xff]
    %v6067 = vld [vmem:[#allocation17 + $0x8c0] sm:$0xff]
    %v6068 = vld [vmem:[#allocation17 + $0x8c8] sm:$0xff]
    %v6069 = vld [vmem:[#allocation17 + $0x8d0] sm:$0xff]
    %v6070 = vld [vmem:[#allocation17 + $0x8d8] sm:$0xff]
    %v6071 = vld [vmem:[#allocation17 + $0x8e0] sm:$0xff]
    %v6072 = vld [vmem:[#allocation17 + $0x8e8] sm:$0xff]
    %v6073 = vld [vmem:[#allocation17 + $0x8f0] sm:$0xff]
    %v6074 = vld [vmem:[#allocation17 + $0x8f8] sm:$0xff]
    %v6075 = vld [vmem:[#allocation17 + $0x900] sm:$0xff]
    %v6076 = vld [vmem:[#allocation17 + $0x908] sm:$0xff]
    %v6077 = vld [vmem:[#allocation17 + $0x910] sm:$0xff]
    %v6078 = vld [vmem:[#allocation17 + $0x918] sm:$0xff]
    %v6079 = vld [vmem:[#allocation17 + $0x920] sm:$0xff]
    %v6080 = vld [vmem:[#allocation17 + $0x928] sm:$0xff]
    %v6081 = vld [vmem:[#allocation17 + $0x930] sm:$0xff]
    %v6082 = vld [vmem:[#allocation17 + $0x938] sm:$0xff]
    %v6083 = vld [vmem:[#allocation17 + $0x940] sm:$0xff]
    %v6084 = vld [vmem:[#allocation17 + $0x948] sm:$0xff]
    %v6085 = vld [vmem:[#allocation17 + $0x950] sm:$0xff]
    %v6086 = vld [vmem:[#allocation17 + $0x958] sm:$0xff]
    %v6087 = vld [vmem:[#allocation17 + $0x960] sm:$0xff]
    %v6088 = vld [vmem:[#allocation17 + $0x968] sm:$0xff]
    %v6089 = vld [vmem:[#allocation17 + $0x970] sm:$0xff]
    %v6090 = vld [vmem:[#allocation17 + $0x978] sm:$0xff]
    %v6091 = vld [vmem:[#allocation17 + $0x980] sm:$0xff]
    %v6092 = vld [vmem:[#allocation17 + $0x988] sm:$0xff]
    %v6093 = vld [vmem:[#allocation17 + $0x990] sm:$0xff]
    %v6094 = vld [vmem:[#allocation17 + $0x998] sm:$0xff]
    %v6095 = vld [vmem:[#allocation17 + $0x9a0] sm:$0xff]
    %v6096 = vld [vmem:[#allocation17 + $0x9a8] sm:$0xff]
    %v6097 = vld [vmem:[#allocation17 + $0x9b0] sm:$0xff]
    %v6098 = vld [vmem:[#allocation17 + $0x9b8] sm:$0xff]
    %v6099 = vld [vmem:[#allocation17 + $0x9c0] sm:$0xff]
    %v6100 = vld [vmem:[#allocation17 + $0x9c8] sm:$0xff]
    %v6101 = vld [vmem:[#allocation17 + $0x9d0] sm:$0xff]
    %v6102 = vld [vmem:[#allocation17 + $0x9d8] sm:$0xff]
    %v6103 = vld [vmem:[#allocation17 + $0x9e0] sm:$0xff]
    %v6104 = vld [vmem:[#allocation17 + $0x9e8] sm:$0xff]
    %v6105 = vld [vmem:[#allocation17 + $0x9f0] sm:$0xff]
    %v6106 = vld [vmem:[#allocation17 + $0x9f8] sm:$0xff]
    %v6107 = vld [vmem:[#allocation17 + $0xa00] sm:$0xff]
    %v6108 = vld [vmem:[#allocation17 + $0xa08] sm:$0xff]
    %v6109 = vld [vmem:[#allocation17 + $0xa10] sm:$0xff]
    %v6110 = vld [vmem:[#allocation17 + $0xa18] sm:$0xff]
    %v6111 = vld [vmem:[#allocation17 + $0xa20] sm:$0xff]
    %v6112 = vld [vmem:[#allocation17 + $0xa28] sm:$0xff]
    %v6113 = vld [vmem:[#allocation17 + $0xa30] sm:$0xff]
    %v6114 = vld [vmem:[#allocation17 + $0xa38] sm:$0xff]
    %v6115 = vld [vmem:[#allocation17 + $0xa40] sm:$0xff]
    %v6116 = vld [vmem:[#allocation17 + $0xa48] sm:$0xff]
    %v6117 = vld [vmem:[#allocation17 + $0xa50] sm:$0xff]
    %v6118 = vld [vmem:[#allocation17 + $0xa58] sm:$0xff]
    %v6119 = vld [vmem:[#allocation17 + $0xa60] sm:$0xff]
    %v6120 = vld [vmem:[#allocation17 + $0xa68] sm:$0xff]
    %v6121 = vld [vmem:[#allocation17 + $0xa70] sm:$0xff]
    %v6122 = vld [vmem:[#allocation17 + $0xa78] sm:$0xff]
    %v6123 = vld [vmem:[#allocation17 + $0xa80] sm:$0xff]
    %v6124 = vld [vmem:[#allocation17 + $0xa88] sm:$0xff]
    %v6125 = vld [vmem:[#allocation17 + $0xa90] sm:$0xff]
    %v6126 = vld [vmem:[#allocation17 + $0xa98] sm:$0xff]
    %v6127 = vld [vmem:[#allocation17 + $0xaa0] sm:$0xff]
    %v6128 = vld [vmem:[#allocation17 + $0xaa8] sm:$0xff]
    %v6129 = vld [vmem:[#allocation17 + $0xab0] sm:$0xff]
    %v6130 = vld [vmem:[#allocation17 + $0xab8] sm:$0xff]
    %v6131 = vld [vmem:[#allocation17 + $0xac0] sm:$0xff]
    %v6132 = vld [vmem:[#allocation17 + $0xac8] sm:$0xff]
    %v6133 = vld [vmem:[#allocation17 + $0xad0] sm:$0xff]
    %v6134 = vld [vmem:[#allocation17 + $0xad8] sm:$0xff]
    %v6135 = vld [vmem:[#allocation17 + $0xae0] sm:$0xff]
    %v6136 = vld [vmem:[#allocation17 + $0xae8] sm:$0xff]
    %v6137 = vld [vmem:[#allocation17 + $0xaf0] sm:$0xff]
    %v6138 = vld [vmem:[#allocation17 + $0xaf8] sm:$0xff]
    %v6139 = vld [vmem:[#allocation17 + $0xb00] sm:$0xff]
    %v6140 = vld [vmem:[#allocation17 + $0xb08] sm:$0xff]
    %v6141 = vld [vmem:[#allocation17 + $0xb10] sm:$0xff]
    %v6142 = vld [vmem:[#allocation17 + $0xb18] sm:$0xff]
    %v6143 = vld [vmem:[#allocation17 + $0xb20] sm:$0xff]
    %v6144 = vld [vmem:[#allocation17 + $0xb28] sm:$0xff]
    %v6145 = vld [vmem:[#allocation17 + $0xb30] sm:$0xff]
    %v6146 = vld [vmem:[#allocation17 + $0xb38] sm:$0xff]
    %v6147 = vld [vmem:[#allocation17 + $0xb40] sm:$0xff]
    %v6148 = vld [vmem:[#allocation17 + $0xb48] sm:$0xff]
    %v6149 = vld [vmem:[#allocation17 + $0xb50] sm:$0xff]
    %v6150 = vld [vmem:[#allocation17 + $0xb58] sm:$0xff]
    %v6151 = vld [vmem:[#allocation17 + $0xb60] sm:$0xff]
    %v6152 = vld [vmem:[#allocation17 + $0xb68] sm:$0xff]
    %v6153 = vld [vmem:[#allocation17 + $0xb70] sm:$0xff]
    %v6154 = vld [vmem:[#allocation17 + $0xb78] sm:$0xff]
    %v6155 = vld [vmem:[#allocation17 + $0xb80] sm:$0xff]
    %v6156 = vld [vmem:[#allocation17 + $0xb88] sm:$0xff]
    %v6157 = vld [vmem:[#allocation17 + $0xb90] sm:$0xff]
    %v6158 = vld [vmem:[#allocation17 + $0xb98] sm:$0xff]
    %v6159 = vld [vmem:[#allocation17 + $0xba0] sm:$0xff]
    %v6160 = vld [vmem:[#allocation17 + $0xba8] sm:$0xff]
    %v6161 = vld [vmem:[#allocation17 + $0xbb0] sm:$0xff]
    %v6162 = vld [vmem:[#allocation17 + $0xbb8] sm:$0xff]
    %v6163 = vld [vmem:[#allocation17 + $0xbc0] sm:$0xff]
    %v6164 = vld [vmem:[#allocation17 + $0xbc8] sm:$0xff]
    %v6165 = vld [vmem:[#allocation17 + $0xbd0] sm:$0xff]
    %v6166 = vld [vmem:[#allocation17 + $0xbd8] sm:$0xff]
    %v6167 = vld [vmem:[#allocation17 + $0xbe0] sm:$0xff]
    %v6168 = vld [vmem:[#allocation17 + $0xbe8] sm:$0xff]
    %v6169 = vld [vmem:[#allocation17 + $0xbf0] sm:$0xff]
    %v6170 = vld [vmem:[#allocation17 + $0xbf8] sm:$0xff]
    %v6171 = vld [vmem:[#allocation17 + $0xc00] sm:$0xff]
    %v6172 = vld [vmem:[#allocation17 + $0xc08] sm:$0xff]
    %v6173 = vld [vmem:[#allocation17 + $0xc10] sm:$0xff]
    %v6174 = vld [vmem:[#allocation17 + $0xc18] sm:$0xff]
    %v6175 = vld [vmem:[#allocation17 + $0xc20] sm:$0xff]
    %v6176 = vld [vmem:[#allocation17 + $0xc28] sm:$0xff]
    %v6177 = vld [vmem:[#allocation17 + $0xc30] sm:$0xff]
    %v6178 = vld [vmem:[#allocation17 + $0xc38] sm:$0xff]
    %v6179 = vld [vmem:[#allocation17 + $0xc40] sm:$0xff]
    %v6180 = vld [vmem:[#allocation17 + $0xc48] sm:$0xff]
    %v6181 = vld [vmem:[#allocation17 + $0xc50] sm:$0xff]
    %v6182 = vld [vmem:[#allocation17 + $0xc58] sm:$0xff]
    %v6183 = vld [vmem:[#allocation17 + $0xc60] sm:$0xff]
    %v6184 = vld [vmem:[#allocation17 + $0xc68] sm:$0xff]
    %v6185 = vld [vmem:[#allocation17 + $0xc70] sm:$0xff]
    %v6186 = vld [vmem:[#allocation17 + $0xc78] sm:$0xff]
    %v6187 = vld [vmem:[#allocation17 + $0xc80] sm:$0xff]
    %v6188 = vld [vmem:[#allocation17 + $0xc88] sm:$0xff]
    %v6189 = vld [vmem:[#allocation17 + $0xc90] sm:$0xff]
    %v6190 = vld [vmem:[#allocation17 + $0xc98] sm:$0xff]
    %v6191 = vld [vmem:[#allocation17 + $0xca0] sm:$0xff]
    %v6192 = vld [vmem:[#allocation17 + $0xca8] sm:$0xff]
    %v6193 = vld [vmem:[#allocation17 + $0xcb0] sm:$0xff]
    %v6194 = vld [vmem:[#allocation17 + $0xcb8] sm:$0xff]
    %v6195 = vld [vmem:[#allocation17 + $0xcc0] sm:$0xff]
    %v6196 = vld [vmem:[#allocation17 + $0xcc8] sm:$0xff]
    %v6197 = vld [vmem:[#allocation17 + $0xcd0] sm:$0xff]
    %v6198 = vld [vmem:[#allocation17 + $0xcd8] sm:$0xff]
    %v6199 = vld [vmem:[#allocation17 + $0xce0] sm:$0xff]
    %v6200 = vld [vmem:[#allocation17 + $0xce8] sm:$0xff]
    %v6201 = vld [vmem:[#allocation17 + $0xcf0] sm:$0xff]
    %v6202 = vld [vmem:[#allocation17 + $0xcf8] sm:$0xff]
    %v6203 = vld [vmem:[#allocation17 + $0xd00] sm:$0xff]
    %v6204 = vld [vmem:[#allocation17 + $0xd08] sm:$0xff]
    %v6205 = vld [vmem:[#allocation17 + $0xd10] sm:$0xff]
    %v6206 = vld [vmem:[#allocation17 + $0xd18] sm:$0xff]
    %v6207 = vld [vmem:[#allocation17 + $0xd20] sm:$0xff]
    %v6208 = vld [vmem:[#allocation17 + $0xd28] sm:$0xff]
    %v6209 = vld [vmem:[#allocation17 + $0xd30] sm:$0xff]
    %v6210 = vld [vmem:[#allocation17 + $0xd38] sm:$0xff]
    %v6211 = vld [vmem:[#allocation17 + $0xd40] sm:$0xff]
    %v6212 = vld [vmem:[#allocation17 + $0xd48] sm:$0xff]
    %v6213 = vld [vmem:[#allocation17 + $0xd50] sm:$0xff]
    %v6214 = vld [vmem:[#allocation17 + $0xd58] sm:$0xff]
    %v6215 = vld [vmem:[#allocation17 + $0xd60] sm:$0xff]
    %v6216 = vld [vmem:[#allocation17 + $0xd68] sm:$0xff]
    %v6217 = vld [vmem:[#allocation17 + $0xd70] sm:$0xff]
    %v6218 = vld [vmem:[#allocation17 + $0xd78] sm:$0xff]
    %v6219 = vld [vmem:[#allocation17 + $0xd80] sm:$0xff]
    %v6220 = vld [vmem:[#allocation17 + $0xd88] sm:$0xff]
    %v6221 = vld [vmem:[#allocation17 + $0xd90] sm:$0xff]
    %v6222 = vld [vmem:[#allocation17 + $0xd98] sm:$0xff]
    %v6223 = vld [vmem:[#allocation17 + $0xda0] sm:$0xff]
    %v6224 = vld [vmem:[#allocation17 + $0xda8] sm:$0xff]
    %v6225 = vld [vmem:[#allocation17 + $0xdb0] sm:$0xff]
    %v6226 = vld [vmem:[#allocation17 + $0xdb8] sm:$0xff]
    %v6227 = vld [vmem:[#allocation17 + $0xdc0] sm:$0xff]
    %v6228 = vld [vmem:[#allocation17 + $0xdc8] sm:$0xff]
    %v6229 = vld [vmem:[#allocation17 + $0xdd0] sm:$0xff]
    %v6230 = vld [vmem:[#allocation17 + $0xdd8] sm:$0xff]
    %v6231 = vld [vmem:[#allocation17 + $0xde0] sm:$0xff]
    %v6232 = vld [vmem:[#allocation17 + $0xde8] sm:$0xff]
    %v6233 = vld [vmem:[#allocation17 + $0xdf0] sm:$0xff]
    %v6234 = vld [vmem:[#allocation17 + $0xdf8] sm:$0xff]
    %v6235 = vld [vmem:[#allocation17 + $0xe00] sm:$0xff]
    %v6236 = vld [vmem:[#allocation17 + $0xe08] sm:$0xff]
    %v6237 = vld [vmem:[#allocation17 + $0xe10] sm:$0xff]
    %v6238 = vld [vmem:[#allocation17 + $0xe18] sm:$0xff]
    %v6239 = vld [vmem:[#allocation17 + $0xe20] sm:$0xff]
    %v6240 = vld [vmem:[#allocation17 + $0xe28] sm:$0xff]
    %v6241 = vld [vmem:[#allocation17 + $0xe30] sm:$0xff]
    %v6242 = vld [vmem:[#allocation17 + $0xe38] sm:$0xff]
    %v6243 = vld [vmem:[#allocation17 + $0xe40] sm:$0xff]
    %v6244 = vld [vmem:[#allocation17 + $0xe48] sm:$0xff]
    %v6245 = vld [vmem:[#allocation17 + $0xe50] sm:$0xff]
    %v6246 = vld [vmem:[#allocation17 + $0xe58] sm:$0xff]
    %v6247 = vld [vmem:[#allocation17 + $0xe60] sm:$0xff]
    %v6248 = vld [vmem:[#allocation17 + $0xe68] sm:$0xff]
    %v6249 = vld [vmem:[#allocation17 + $0xe70] sm:$0xff]
    %v6250 = vld [vmem:[#allocation17 + $0xe78] sm:$0xff]
    %v6251 = vld [vmem:[#allocation17 + $0xe80] sm:$0xff]
    %v6252 = vld [vmem:[#allocation17 + $0xe88] sm:$0xff]
    %v6253 = vld [vmem:[#allocation17 + $0xe90] sm:$0xff]
    %v6254 = vld [vmem:[#allocation17 + $0xe98] sm:$0xff]
    %v6255 = vld [vmem:[#allocation17 + $0xea0] sm:$0xff]
    %v6256 = vld [vmem:[#allocation17 + $0xea8] sm:$0xff]
    %v6257 = vld [vmem:[#allocation17 + $0xeb0] sm:$0xff]
    %v6258 = vld [vmem:[#allocation17 + $0xeb8] sm:$0xff]
    %v6259 = vld [vmem:[#allocation17 + $0xec0] sm:$0xff]
    %v6260 = vld [vmem:[#allocation17 + $0xec8] sm:$0xff]
    %v6261 = vld [vmem:[#allocation17 + $0xed0] sm:$0xff]
    %v6262 = vld [vmem:[#allocation17 + $0xed8] sm:$0xff]
    %v6263 = vld [vmem:[#allocation17 + $0xee0] sm:$0xff]
    %v6264 = vld [vmem:[#allocation17 + $0xee8] sm:$0xff]
    %v6265 = vld [vmem:[#allocation17 + $0xef0] sm:$0xff]
    %v6266 = vld [vmem:[#allocation17 + $0xef8] sm:$0xff]
    %v6267 = vld [vmem:[#allocation17 + $0xf00] sm:$0xff]
    %v6268 = vld [vmem:[#allocation17 + $0xf08] sm:$0xff]
    %v6269 = vld [vmem:[#allocation17 + $0xf10] sm:$0xff]
    %v6270 = vld [vmem:[#allocation17 + $0xf18] sm:$0xff]
    %v6271 = vld [vmem:[#allocation17 + $0xf20] sm:$0xff]
    %v6272 = vld [vmem:[#allocation17 + $0xf28] sm:$0xff]
    %v6273 = vld [vmem:[#allocation17 + $0xf30] sm:$0xff]
    %v6274 = vld [vmem:[#allocation17 + $0xf38] sm:$0xff]
    %v6275 = vld [vmem:[#allocation17 + $0xf40] sm:$0xff]
    %v6276 = vld [vmem:[#allocation17 + $0xf48] sm:$0xff]
    %v6277 = vld [vmem:[#allocation17 + $0xf50] sm:$0xff]
    %v6278 = vld [vmem:[#allocation17 + $0xf58] sm:$0xff]
    %v6279 = vld [vmem:[#allocation17 + $0xf60] sm:$0xff]
    %v6280 = vld [vmem:[#allocation17 + $0xf68] sm:$0xff]
    %v6281 = vld [vmem:[#allocation17 + $0xf70] sm:$0xff]
    %v6282 = vld [vmem:[#allocation17 + $0xf78] sm:$0xff]
    %v6283 = vld [vmem:[#allocation17 + $0xf80] sm:$0xff]
    %v6284 = vld [vmem:[#allocation17 + $0xf88] sm:$0xff]
    %v6285 = vld [vmem:[#allocation17 + $0xf90] sm:$0xff]
    %v6286 = vld [vmem:[#allocation17 + $0xf98] sm:$0xff]
    %v6287 = vld [vmem:[#allocation17 + $0xfa0] sm:$0xff]
    %v6288 = vld [vmem:[#allocation17 + $0xfa8] sm:$0xff]
    %v6289 = vld [vmem:[#allocation17 + $0xfb0] sm:$0xff]
    %v6290 = vld [vmem:[#allocation17 + $0xfb8] sm:$0xff]
    %v6291 = vld [vmem:[#allocation17 + $0xfc0] sm:$0xff]
    %v6292 = vld [vmem:[#allocation17 + $0xfc8] sm:$0xff]
    %v6293 = vld [vmem:[#allocation17 + $0xfd0] sm:$0xff]
    %v6294 = vld [vmem:[#allocation17 + $0xfd8] sm:$0xff]
    %v6295 = vld [vmem:[#allocation17 + $0xfe0] sm:$0xff]
    %v6296 = vld [vmem:[#allocation17 + $0xfe8] sm:$0xff]
    %v6297 = vld [vmem:[#allocation17 + $0xff0] sm:$0xff]
    %v6298 = vld [vmem:[#allocation17 + $0xff8] sm:$0xff]
    %v6299 = vld [vmem:[#allocation18] sm:$0xff]
    %v6301 = vlaneseq
    %v6302 = vshrl.u32 %v6301, 7
    %v6303 = vsub.s32 0, %v6302
    %v6304 = vrot.slane %v6299, %v6303
    %v6305 = vlaneseq
    %v6306 = vshrl.u32 %v6305, 7
    %v6307 = vsub.s32 1, %v6306
    %v6308 = vrot.slane %v6299, %v6307
    %v6309 = vlaneseq
    %v6310 = vshrl.u32 %v6309, 7
    %v6311 = vsub.s32 2, %v6310
    %v6312 = vrot.slane %v6299, %v6311
    %v6313 = vlaneseq
    %v6314 = vshrl.u32 %v6313, 7
    %v6315 = vsub.s32 3, %v6314
    %v6316 = vrot.slane %v6299, %v6315
    %v6317 = vlaneseq
    %v6318 = vshrl.u32 %v6317, 7
    %v6319 = vsub.s32 4, %v6318
    %v6320 = vrot.slane %v6299, %v6319
    %v6321 = vlaneseq
    %v6322 = vshrl.u32 %v6321, 7
    %v6323 = vsub.s32 5, %v6322
    %v6324 = vrot.slane %v6299, %v6323
    %v6325 = vlaneseq
    %v6326 = vshrl.u32 %v6325, 7
    %v6327 = vsub.s32 6, %v6326
    %v6328 = vrot.slane %v6299, %v6327
    %v6329 = vlaneseq
    %v6330 = vshrl.u32 %v6329, 7
    %v6331 = vsub.s32 7, %v6330
    %v6332 = vrot.slane %v6299, %v6331
    %v6853 = vunpack.c.l.b16 %v5787
    %v6854 = vunpack.c.h.b16 %v5787
    %v6855 = vunpack.c.l.b16 %v5788
    %v6856 = vunpack.c.h.b16 %v5788
    %v6857 = vunpack.c.l.b16 %v5789
    %v6858 = vunpack.c.h.b16 %v5789
    %v6859 = vunpack.c.l.b16 %v5790
    %v6860 = vunpack.c.h.b16 %v5790
    %v6861 = vunpack.c.l.b16 %v5791
    %v6862 = vunpack.c.h.b16 %v5791
    %v6863 = vunpack.c.l.b16 %v5792
    %v6864 = vunpack.c.h.b16 %v5792
    %v6865 = vunpack.c.l.b16 %v5793
    %v6866 = vunpack.c.h.b16 %v5793
    %v6867 = vunpack.c.l.b16 %v5794
    %v6868 = vunpack.c.h.b16 %v5794
    %v6869 = vunpack.c.l.b16 %v5795
    %v6870 = vunpack.c.h.b16 %v5795
    %v6871 = vunpack.c.l.b16 %v5796
    %v6872 = vunpack.c.h.b16 %v5796
    %v6873 = vunpack.c.l.b16 %v5797
    %v6874 = vunpack.c.h.b16 %v5797
    %v6875 = vunpack.c.l.b16 %v5798
    %v6876 = vunpack.c.h.b16 %v5798
    %v6877 = vunpack.c.l.b16 %v5799
    %v6878 = vunpack.c.h.b16 %v5799
    %v6879 = vunpack.c.l.b16 %v5800
    %v6880 = vunpack.c.h.b16 %v5800
    %v6881 = vunpack.c.l.b16 %v5801
    %v6882 = vunpack.c.h.b16 %v5801
    %v6883 = vunpack.c.l.b16 %v5802
    %v6884 = vunpack.c.h.b16 %v5802
    %v6885 = vunpack.c.l.b16 %v5803
    %v6886 = vunpack.c.h.b16 %v5803
    %v6887 = vunpack.c.l.b16 %v5804
    %v6888 = vunpack.c.h.b16 %v5804
    %v6889 = vunpack.c.l.b16 %v5805
    %v6890 = vunpack.c.h.b16 %v5805
    %v6891 = vunpack.c.l.b16 %v5806
    %v6892 = vunpack.c.h.b16 %v5806
    %v6893 = vunpack.c.l.b16 %v5807
    %v6894 = vunpack.c.h.b16 %v5807
    %v6895 = vunpack.c.l.b16 %v5808
    %v6896 = vunpack.c.h.b16 %v5808
    %v6897 = vunpack.c.l.b16 %v5809
    %v6898 = vunpack.c.h.b16 %v5809
    %v6899 = vunpack.c.l.b16 %v5810
    %v6900 = vunpack.c.h.b16 %v5810
    %v6901 = vunpack.c.l.b16 %v5811
    %v6902 = vunpack.c.h.b16 %v5811
    %v6903 = vunpack.c.l.b16 %v5812
    %v6904 = vunpack.c.h.b16 %v5812
    %v6905 = vunpack.c.l.b16 %v5813
    %v6906 = vunpack.c.h.b16 %v5813
    %v6907 = vunpack.c.l.b16 %v5814
    %v6908 = vunpack.c.h.b16 %v5814
    %v6909 = vunpack.c.l.b16 %v5815
    %v6910 = vunpack.c.h.b16 %v5815
    %v6911 = vunpack.c.l.b16 %v5816
    %v6912 = vunpack.c.h.b16 %v5816
    %v6913 = vunpack.c.l.b16 %v5817
    %v6914 = vunpack.c.h.b16 %v5817
    %v6915 = vunpack.c.l.b16 %v5818
    %v6916 = vunpack.c.h.b16 %v5818
    %v6917 = vunpack.c.l.b16 %v5819
    %v6918 = vunpack.c.h.b16 %v5819
    %v6919 = vunpack.c.l.b16 %v5820
    %v6920 = vunpack.c.h.b16 %v5820
    %v6921 = vunpack.c.l.b16 %v5821
    %v6922 = vunpack.c.h.b16 %v5821
    %v6923 = vunpack.c.l.b16 %v5822
    %v6924 = vunpack.c.h.b16 %v5822
    %v6925 = vunpack.c.l.b16 %v5823
    %v6926 = vunpack.c.h.b16 %v5823
    %v6927 = vunpack.c.l.b16 %v5824
    %v6928 = vunpack.c.h.b16 %v5824
    %v6929 = vunpack.c.l.b16 %v5825
    %v6930 = vunpack.c.h.b16 %v5825
    %v6931 = vunpack.c.l.b16 %v5826
    %v6932 = vunpack.c.h.b16 %v5826
    %v6933 = vunpack.c.l.b16 %v5827
    %v6934 = vunpack.c.h.b16 %v5827
    %v6935 = vunpack.c.l.b16 %v5828
    %v6936 = vunpack.c.h.b16 %v5828
    %v6937 = vunpack.c.l.b16 %v5829
    %v6938 = vunpack.c.h.b16 %v5829
    %v6939 = vunpack.c.l.b16 %v5830
    %v6940 = vunpack.c.h.b16 %v5830
    %v6941 = vunpack.c.l.b16 %v5831
    %v6942 = vunpack.c.h.b16 %v5831
    %v6943 = vunpack.c.l.b16 %v5832
    %v6944 = vunpack.c.h.b16 %v5832
    %v6945 = vunpack.c.l.b16 %v5833
    %v6946 = vunpack.c.h.b16 %v5833
    %v6947 = vunpack.c.l.b16 %v5834
    %v6948 = vunpack.c.h.b16 %v5834
    %v6949 = vunpack.c.l.b16 %v5835
    %v6950 = vunpack.c.h.b16 %v5835
    %v6951 = vunpack.c.l.b16 %v5836
    %v6952 = vunpack.c.h.b16 %v5836
    %v6953 = vunpack.c.l.b16 %v5837
    %v6954 = vunpack.c.h.b16 %v5837
    %v6955 = vunpack.c.l.b16 %v5838
    %v6956 = vunpack.c.h.b16 %v5838
    %v6957 = vunpack.c.l.b16 %v5839
    %v6958 = vunpack.c.h.b16 %v5839
    %v6959 = vunpack.c.l.b16 %v5840
    %v6960 = vunpack.c.h.b16 %v5840
    %v6961 = vunpack.c.l.b16 %v5841
    %v6962 = vunpack.c.h.b16 %v5841
    %v6963 = vunpack.c.l.b16 %v5842
    %v6964 = vunpack.c.h.b16 %v5842
    %v6965 = vunpack.c.l.b16 %v5843
    %v6966 = vunpack.c.h.b16 %v5843
    %v6967 = vunpack.c.l.b16 %v5844
    %v6968 = vunpack.c.h.b16 %v5844
    %v6969 = vunpack.c.l.b16 %v5845
    %v6970 = vunpack.c.h.b16 %v5845
    %v6971 = vunpack.c.l.b16 %v5846
    %v6972 = vunpack.c.h.b16 %v5846
    %v6973 = vunpack.c.l.b16 %v5847
    %v6974 = vunpack.c.h.b16 %v5847
    %v6975 = vunpack.c.l.b16 %v5848
    %v6976 = vunpack.c.h.b16 %v5848
    %v6977 = vunpack.c.l.b16 %v5849
    %v6978 = vunpack.c.h.b16 %v5849
    %v6979 = vunpack.c.l.b16 %v5850
    %v6980 = vunpack.c.h.b16 %v5850
    %v6981 = vunpack.c.l.b16 %v5851
    %v6982 = vunpack.c.h.b16 %v5851
    %v6983 = vunpack.c.l.b16 %v5852
    %v6984 = vunpack.c.h.b16 %v5852
    %v6985 = vunpack.c.l.b16 %v5853
    %v6986 = vunpack.c.h.b16 %v5853
    %v6987 = vunpack.c.l.b16 %v5854
    %v6988 = vunpack.c.h.b16 %v5854
    %v6989 = vunpack.c.l.b16 %v5855
    %v6990 = vunpack.c.h.b16 %v5855
    %v6991 = vunpack.c.l.b16 %v5856
    %v6992 = vunpack.c.h.b16 %v5856
    %v6993 = vunpack.c.l.b16 %v5857
    %v6994 = vunpack.c.h.b16 %v5857
    %v6995 = vunpack.c.l.b16 %v5858
    %v6996 = vunpack.c.h.b16 %v5858
    %v6997 = vunpack.c.l.b16 %v5859
    %v6998 = vunpack.c.h.b16 %v5859
    %v6999 = vunpack.c.l.b16 %v5860
    %v7000 = vunpack.c.h.b16 %v5860
    %v7001 = vunpack.c.l.b16 %v5861
    %v7002 = vunpack.c.h.b16 %v5861
    %v7003 = vunpack.c.l.b16 %v5862
    %v7004 = vunpack.c.h.b16 %v5862
    %v7005 = vunpack.c.l.b16 %v5863
    %v7006 = vunpack.c.h.b16 %v5863
    %v7007 = vunpack.c.l.b16 %v5864
    %v7008 = vunpack.c.h.b16 %v5864
    %v7009 = vunpack.c.l.b16 %v5865
    %v7010 = vunpack.c.h.b16 %v5865
    %v7011 = vunpack.c.l.b16 %v5866
    %v7012 = vunpack.c.h.b16 %v5866
    %v7013 = vunpack.c.l.b16 %v5867
    %v7014 = vunpack.c.h.b16 %v5867
    %v7015 = vunpack.c.l.b16 %v5868
    %v7016 = vunpack.c.h.b16 %v5868
    %v7017 = vunpack.c.l.b16 %v5869
    %v7018 = vunpack.c.h.b16 %v5869
    %v7019 = vunpack.c.l.b16 %v5870
    %v7020 = vunpack.c.h.b16 %v5870
    %v7021 = vunpack.c.l.b16 %v5871
    %v7022 = vunpack.c.h.b16 %v5871
    %v7023 = vunpack.c.l.b16 %v5872
    %v7024 = vunpack.c.h.b16 %v5872
    %v7025 = vunpack.c.l.b16 %v5873
    %v7026 = vunpack.c.h.b16 %v5873
    %v7027 = vunpack.c.l.b16 %v5874
    %v7028 = vunpack.c.h.b16 %v5874
    %v7029 = vunpack.c.l.b16 %v5875
    %v7030 = vunpack.c.h.b16 %v5875
    %v7031 = vunpack.c.l.b16 %v5876
    %v7032 = vunpack.c.h.b16 %v5876
    %v7033 = vunpack.c.l.b16 %v5877
    %v7034 = vunpack.c.h.b16 %v5877
    %v7035 = vunpack.c.l.b16 %v5878
    %v7036 = vunpack.c.h.b16 %v5878
    %v7037 = vunpack.c.l.b16 %v5879
    %v7038 = vunpack.c.h.b16 %v5879
    %v7039 = vunpack.c.l.b16 %v5880
    %v7040 = vunpack.c.h.b16 %v5880
    %v7041 = vunpack.c.l.b16 %v5881
    %v7042 = vunpack.c.h.b16 %v5881
    %v7043 = vunpack.c.l.b16 %v5882
    %v7044 = vunpack.c.h.b16 %v5882
    %v7045 = vunpack.c.l.b16 %v5883
    %v7046 = vunpack.c.h.b16 %v5883
    %v7047 = vunpack.c.l.b16 %v5884
    %v7048 = vunpack.c.h.b16 %v5884
    %v7049 = vunpack.c.l.b16 %v5885
    %v7050 = vunpack.c.h.b16 %v5885
    %v7051 = vunpack.c.l.b16 %v5886
    %v7052 = vunpack.c.h.b16 %v5886
    %v7053 = vunpack.c.l.b16 %v5887
    %v7054 = vunpack.c.h.b16 %v5887
    %v7055 = vunpack.c.l.b16 %v5888
    %v7056 = vunpack.c.h.b16 %v5888
    %v7057 = vunpack.c.l.b16 %v5889
    %v7058 = vunpack.c.h.b16 %v5889
    %v7059 = vunpack.c.l.b16 %v5890
    %v7060 = vunpack.c.h.b16 %v5890
    %v7061 = vunpack.c.l.b16 %v5891
    %v7062 = vunpack.c.h.b16 %v5891
    %v7063 = vunpack.c.l.b16 %v5892
    %v7064 = vunpack.c.h.b16 %v5892
    %v7065 = vunpack.c.l.b16 %v5893
    %v7066 = vunpack.c.h.b16 %v5893
    %v7067 = vunpack.c.l.b16 %v5894
    %v7068 = vunpack.c.h.b16 %v5894
    %v7069 = vunpack.c.l.b16 %v5895
    %v7070 = vunpack.c.h.b16 %v5895
    %v7071 = vunpack.c.l.b16 %v5896
    %v7072 = vunpack.c.h.b16 %v5896
    %v7073 = vunpack.c.l.b16 %v5897
    %v7074 = vunpack.c.h.b16 %v5897
    %v7075 = vunpack.c.l.b16 %v5898
    %v7076 = vunpack.c.h.b16 %v5898
    %v7077 = vunpack.c.l.b16 %v5899
    %v7078 = vunpack.c.h.b16 %v5899
    %v7079 = vunpack.c.l.b16 %v5900
    %v7080 = vunpack.c.h.b16 %v5900
    %v7081 = vunpack.c.l.b16 %v5901
    %v7082 = vunpack.c.h.b16 %v5901
    %v7083 = vunpack.c.l.b16 %v5902
    %v7084 = vunpack.c.h.b16 %v5902
    %v7085 = vunpack.c.l.b16 %v5903
    %v7086 = vunpack.c.h.b16 %v5903
    %v7087 = vunpack.c.l.b16 %v5904
    %v7088 = vunpack.c.h.b16 %v5904
    %v7089 = vunpack.c.l.b16 %v5905
    %v7090 = vunpack.c.h.b16 %v5905
    %v7091 = vunpack.c.l.b16 %v5906
    %v7092 = vunpack.c.h.b16 %v5906
    %v7093 = vunpack.c.l.b16 %v5907
    %v7094 = vunpack.c.h.b16 %v5907
    %v7095 = vunpack.c.l.b16 %v5908
    %v7096 = vunpack.c.h.b16 %v5908
    %v7097 = vunpack.c.l.b16 %v5909
    %v7098 = vunpack.c.h.b16 %v5909
    %v7099 = vunpack.c.l.b16 %v5910
    %v7100 = vunpack.c.h.b16 %v5910
    %v7101 = vunpack.c.l.b16 %v5911
    %v7102 = vunpack.c.h.b16 %v5911
    %v7103 = vunpack.c.l.b16 %v5912
    %v7104 = vunpack.c.h.b16 %v5912
    %v7105 = vunpack.c.l.b16 %v5913
    %v7106 = vunpack.c.h.b16 %v5913
    %v7107 = vunpack.c.l.b16 %v5914
    %v7108 = vunpack.c.h.b16 %v5914
    %v7109 = vunpack.c.l.b16 %v5915
    %v7110 = vunpack.c.h.b16 %v5915
    %v7111 = vunpack.c.l.b16 %v5916
    %v7112 = vunpack.c.h.b16 %v5916
    %v7113 = vunpack.c.l.b16 %v5917
    %v7114 = vunpack.c.h.b16 %v5917
    %v7115 = vunpack.c.l.b16 %v5918
    %v7116 = vunpack.c.h.b16 %v5918
    %v7117 = vunpack.c.l.b16 %v5919
    %v7118 = vunpack.c.h.b16 %v5919
    %v7119 = vunpack.c.l.b16 %v5920
    %v7120 = vunpack.c.h.b16 %v5920
    %v7121 = vunpack.c.l.b16 %v5921
    %v7122 = vunpack.c.h.b16 %v5921
    %v7123 = vunpack.c.l.b16 %v5922
    %v7124 = vunpack.c.h.b16 %v5922
    %v7125 = vunpack.c.l.b16 %v5923
    %v7126 = vunpack.c.h.b16 %v5923
    %v7127 = vunpack.c.l.b16 %v5924
    %v7128 = vunpack.c.h.b16 %v5924
    %v7129 = vunpack.c.l.b16 %v5925
    %v7130 = vunpack.c.h.b16 %v5925
    %v7131 = vunpack.c.l.b16 %v5926
    %v7132 = vunpack.c.h.b16 %v5926
    %v7133 = vunpack.c.l.b16 %v5927
    %v7134 = vunpack.c.h.b16 %v5927
    %v7135 = vunpack.c.l.b16 %v5928
    %v7136 = vunpack.c.h.b16 %v5928
    %v7137 = vunpack.c.l.b16 %v5929
    %v7138 = vunpack.c.h.b16 %v5929
    %v7139 = vunpack.c.l.b16 %v5930
    %v7140 = vunpack.c.h.b16 %v5930
    %v7141 = vunpack.c.l.b16 %v5931
    %v7142 = vunpack.c.h.b16 %v5931
    %v7143 = vunpack.c.l.b16 %v5932
    %v7144 = vunpack.c.h.b16 %v5932
    %v7145 = vunpack.c.l.b16 %v5933
    %v7146 = vunpack.c.h.b16 %v5933
    %v7147 = vunpack.c.l.b16 %v5934
    %v7148 = vunpack.c.h.b16 %v5934
    %v7149 = vunpack.c.l.b16 %v5935
    %v7150 = vunpack.c.h.b16 %v5935
    %v7151 = vunpack.c.l.b16 %v5936
    %v7152 = vunpack.c.h.b16 %v5936
    %v7153 = vunpack.c.l.b16 %v5937
    %v7154 = vunpack.c.h.b16 %v5937
    %v7155 = vunpack.c.l.b16 %v5938
    %v7156 = vunpack.c.h.b16 %v5938
    %v7157 = vunpack.c.l.b16 %v5939
    %v7158 = vunpack.c.h.b16 %v5939
    %v7159 = vunpack.c.l.b16 %v5940
    %v7160 = vunpack.c.h.b16 %v5940
    %v7161 = vunpack.c.l.b16 %v5941
    %v7162 = vunpack.c.h.b16 %v5941
    %v7163 = vunpack.c.l.b16 %v5942
    %v7164 = vunpack.c.h.b16 %v5942
    %v7165 = vunpack.c.l.b16 %v5943
    %v7166 = vunpack.c.h.b16 %v5943
    %v7167 = vunpack.c.l.b16 %v5944
    %v7168 = vunpack.c.h.b16 %v5944
    %v7169 = vunpack.c.l.b16 %v5945
    %v7170 = vunpack.c.h.b16 %v5945
    %v7171 = vunpack.c.l.b16 %v5946
    %v7172 = vunpack.c.h.b16 %v5946
    %v7173 = vunpack.c.l.b16 %v5947
    %v7174 = vunpack.c.h.b16 %v5947
    %v7175 = vunpack.c.l.b16 %v5948
    %v7176 = vunpack.c.h.b16 %v5948
    %v7177 = vunpack.c.l.b16 %v5949
    %v7178 = vunpack.c.h.b16 %v5949
    %v7179 = vunpack.c.l.b16 %v5950
    %v7180 = vunpack.c.h.b16 %v5950
    %v7181 = vunpack.c.l.b16 %v5951
    %v7182 = vunpack.c.h.b16 %v5951
    %v7183 = vunpack.c.l.b16 %v5952
    %v7184 = vunpack.c.h.b16 %v5952
    %v7185 = vunpack.c.l.b16 %v5953
    %v7186 = vunpack.c.h.b16 %v5953
    %v7187 = vunpack.c.l.b16 %v5954
    %v7188 = vunpack.c.h.b16 %v5954
    %v7189 = vunpack.c.l.b16 %v5955
    %v7190 = vunpack.c.h.b16 %v5955
    %v7191 = vunpack.c.l.b16 %v5956
    %v7192 = vunpack.c.h.b16 %v5956
    %v7193 = vunpack.c.l.b16 %v5957
    %v7194 = vunpack.c.h.b16 %v5957
    %v7195 = vunpack.c.l.b16 %v5958
    %v7196 = vunpack.c.h.b16 %v5958
    %v7197 = vunpack.c.l.b16 %v5959
    %v7198 = vunpack.c.h.b16 %v5959
    %v7199 = vunpack.c.l.b16 %v5960
    %v7200 = vunpack.c.h.b16 %v5960
    %v7201 = vunpack.c.l.b16 %v5961
    %v7202 = vunpack.c.h.b16 %v5961
    %v7203 = vunpack.c.l.b16 %v5962
    %v7204 = vunpack.c.h.b16 %v5962
    %v7205 = vunpack.c.l.b16 %v5963
    %v7206 = vunpack.c.h.b16 %v5963
    %v7207 = vunpack.c.l.b16 %v5964
    %v7208 = vunpack.c.h.b16 %v5964
    %v7209 = vunpack.c.l.b16 %v5965
    %v7210 = vunpack.c.h.b16 %v5965
    %v7211 = vunpack.c.l.b16 %v5966
    %v7212 = vunpack.c.h.b16 %v5966
    %v7213 = vunpack.c.l.b16 %v5967
    %v7214 = vunpack.c.h.b16 %v5967
    %v7215 = vunpack.c.l.b16 %v5968
    %v7216 = vunpack.c.h.b16 %v5968
    %v7217 = vunpack.c.l.b16 %v5969
    %v7218 = vunpack.c.h.b16 %v5969
    %v7219 = vunpack.c.l.b16 %v5970
    %v7220 = vunpack.c.h.b16 %v5970
    %v7221 = vunpack.c.l.b16 %v5971
    %v7222 = vunpack.c.h.b16 %v5971
    %v7223 = vunpack.c.l.b16 %v5972
    %v7224 = vunpack.c.h.b16 %v5972
    %v7225 = vunpack.c.l.b16 %v5973
    %v7226 = vunpack.c.h.b16 %v5973
    %v7227 = vunpack.c.l.b16 %v5974
    %v7228 = vunpack.c.h.b16 %v5974
    %v7229 = vunpack.c.l.b16 %v5975
    %v7230 = vunpack.c.h.b16 %v5975
    %v7231 = vunpack.c.l.b16 %v5976
    %v7232 = vunpack.c.h.b16 %v5976
    %v7233 = vunpack.c.l.b16 %v5977
    %v7234 = vunpack.c.h.b16 %v5977
    %v7235 = vunpack.c.l.b16 %v5978
    %v7236 = vunpack.c.h.b16 %v5978
    %v7237 = vunpack.c.l.b16 %v5979
    %v7238 = vunpack.c.h.b16 %v5979
    %v7239 = vunpack.c.l.b16 %v5980
    %v7240 = vunpack.c.h.b16 %v5980
    %v7241 = vunpack.c.l.b16 %v5981
    %v7242 = vunpack.c.h.b16 %v5981
    %v7243 = vunpack.c.l.b16 %v5982
    %v7244 = vunpack.c.h.b16 %v5982
    %v7245 = vunpack.c.l.b16 %v5983
    %v7246 = vunpack.c.h.b16 %v5983
    %v7247 = vunpack.c.l.b16 %v5984
    %v7248 = vunpack.c.h.b16 %v5984
    %v7249 = vunpack.c.l.b16 %v5985
    %v7250 = vunpack.c.h.b16 %v5985
    %v7251 = vunpack.c.l.b16 %v5986
    %v7252 = vunpack.c.h.b16 %v5986
    %v7253 = vunpack.c.l.b16 %v5987
    %v7254 = vunpack.c.h.b16 %v5987
    %v7255 = vunpack.c.l.b16 %v5988
    %v7256 = vunpack.c.h.b16 %v5988
    %v7257 = vunpack.c.l.b16 %v5989
    %v7258 = vunpack.c.h.b16 %v5989
    %v7259 = vunpack.c.l.b16 %v5990
    %v7260 = vunpack.c.h.b16 %v5990
    %v7261 = vunpack.c.l.b16 %v5991
    %v7262 = vunpack.c.h.b16 %v5991
    %v7263 = vunpack.c.l.b16 %v5992
    %v7264 = vunpack.c.h.b16 %v5992
    %v7265 = vunpack.c.l.b16 %v5993
    %v7266 = vunpack.c.h.b16 %v5993
    %v7267 = vunpack.c.l.b16 %v5994
    %v7268 = vunpack.c.h.b16 %v5994
    %v7269 = vunpack.c.l.b16 %v5995
    %v7270 = vunpack.c.h.b16 %v5995
    %v7271 = vunpack.c.l.b16 %v5996
    %v7272 = vunpack.c.h.b16 %v5996
    %v7273 = vunpack.c.l.b16 %v5997
    %v7274 = vunpack.c.h.b16 %v5997
    %v7275 = vunpack.c.l.b16 %v5998
    %v7276 = vunpack.c.h.b16 %v5998
    %v7277 = vunpack.c.l.b16 %v5999
    %v7278 = vunpack.c.h.b16 %v5999
    %v7279 = vunpack.c.l.b16 %v6000
    %v7280 = vunpack.c.h.b16 %v6000
    %v7281 = vunpack.c.l.b16 %v6001
    %v7282 = vunpack.c.h.b16 %v6001
    %v7283 = vunpack.c.l.b16 %v6002
    %v7284 = vunpack.c.h.b16 %v6002
    %v7285 = vunpack.c.l.b16 %v6003
    %v7286 = vunpack.c.h.b16 %v6003
    %v7287 = vunpack.c.l.b16 %v6004
    %v7288 = vunpack.c.h.b16 %v6004
    %v7289 = vunpack.c.l.b16 %v6005
    %v7290 = vunpack.c.h.b16 %v6005
    %v7291 = vunpack.c.l.b16 %v6006
    %v7292 = vunpack.c.h.b16 %v6006
    %v7293 = vunpack.c.l.b16 %v6007
    %v7294 = vunpack.c.h.b16 %v6007
    %v7295 = vunpack.c.l.b16 %v6008
    %v7296 = vunpack.c.h.b16 %v6008
    %v7297 = vunpack.c.l.b16 %v6009
    %v7298 = vunpack.c.h.b16 %v6009
    %v7299 = vunpack.c.l.b16 %v6010
    %v7300 = vunpack.c.h.b16 %v6010
    %v7301 = vunpack.c.l.b16 %v6011
    %v7302 = vunpack.c.h.b16 %v6011
    %v7303 = vunpack.c.l.b16 %v6012
    %v7304 = vunpack.c.h.b16 %v6012
    %v7305 = vunpack.c.l.b16 %v6013
    %v7306 = vunpack.c.h.b16 %v6013
    %v7307 = vunpack.c.l.b16 %v6014
    %v7308 = vunpack.c.h.b16 %v6014
    %v7309 = vunpack.c.l.b16 %v6015
    %v7310 = vunpack.c.h.b16 %v6015
    %v7311 = vunpack.c.l.b16 %v6016
    %v7312 = vunpack.c.h.b16 %v6016
    %v7313 = vunpack.c.l.b16 %v6017
    %v7314 = vunpack.c.h.b16 %v6017
    %v7315 = vunpack.c.l.b16 %v6018
    %v7316 = vunpack.c.h.b16 %v6018
    %v7317 = vunpack.c.l.b16 %v6019
    %v7318 = vunpack.c.h.b16 %v6019
    %v7319 = vunpack.c.l.b16 %v6020
    %v7320 = vunpack.c.h.b16 %v6020
    %v7321 = vunpack.c.l.b16 %v6021
    %v7322 = vunpack.c.h.b16 %v6021
    %v7323 = vunpack.c.l.b16 %v6022
    %v7324 = vunpack.c.h.b16 %v6022
    %v7325 = vunpack.c.l.b16 %v6023
    %v7326 = vunpack.c.h.b16 %v6023
    %v7327 = vunpack.c.l.b16 %v6024
    %v7328 = vunpack.c.h.b16 %v6024
    %v7329 = vunpack.c.l.b16 %v6025
    %v7330 = vunpack.c.h.b16 %v6025
    %v7331 = vunpack.c.l.b16 %v6026
    %v7332 = vunpack.c.h.b16 %v6026
    %v7333 = vunpack.c.l.b16 %v6027
    %v7334 = vunpack.c.h.b16 %v6027
    %v7335 = vunpack.c.l.b16 %v6028
    %v7336 = vunpack.c.h.b16 %v6028
    %v7337 = vunpack.c.l.b16 %v6029
    %v7338 = vunpack.c.h.b16 %v6029
    %v7339 = vunpack.c.l.b16 %v6030
    %v7340 = vunpack.c.h.b16 %v6030
    %v7341 = vunpack.c.l.b16 %v6031
    %v7342 = vunpack.c.h.b16 %v6031
    %v7343 = vunpack.c.l.b16 %v6032
    %v7344 = vunpack.c.h.b16 %v6032
    %v7345 = vunpack.c.l.b16 %v6033
    %v7346 = vunpack.c.h.b16 %v6033
    %v7347 = vunpack.c.l.b16 %v6034
    %v7348 = vunpack.c.h.b16 %v6034
    %v7349 = vunpack.c.l.b16 %v6035
    %v7350 = vunpack.c.h.b16 %v6035
    %v7351 = vunpack.c.l.b16 %v6036
    %v7352 = vunpack.c.h.b16 %v6036
    %v7353 = vunpack.c.l.b16 %v6037
    %v7354 = vunpack.c.h.b16 %v6037
    %v7355 = vunpack.c.l.b16 %v6038
    %v7356 = vunpack.c.h.b16 %v6038
    %v7357 = vunpack.c.l.b16 %v6039
    %v7358 = vunpack.c.h.b16 %v6039
    %v7359 = vunpack.c.l.b16 %v6040
    %v7360 = vunpack.c.h.b16 %v6040
    %v7361 = vunpack.c.l.b16 %v6041
    %v7362 = vunpack.c.h.b16 %v6041
    %v7363 = vunpack.c.l.b16 %v6042
    %v7364 = vunpack.c.h.b16 %v6042
    %v7365 = vunpack.c.l.b16 %v6043
    %v7366 = vunpack.c.h.b16 %v6043
    %v7367 = vunpack.c.l.b16 %v6044
    %v7368 = vunpack.c.h.b16 %v6044
    %v7369 = vunpack.c.l.b16 %v6045
    %v7370 = vunpack.c.h.b16 %v6045
    %v7371 = vunpack.c.l.b16 %v6046
    %v7372 = vunpack.c.h.b16 %v6046
    %v7373 = vunpack.c.l.b16 %v6047
    %v7374 = vunpack.c.h.b16 %v6047
    %v7375 = vunpack.c.l.b16 %v6048
    %v7376 = vunpack.c.h.b16 %v6048
    %v7377 = vunpack.c.l.b16 %v6049
    %v7378 = vunpack.c.h.b16 %v6049
    %v7379 = vunpack.c.l.b16 %v6050
    %v7380 = vunpack.c.h.b16 %v6050
    %v7381 = vunpack.c.l.b16 %v6051
    %v7382 = vunpack.c.h.b16 %v6051
    %v7383 = vunpack.c.l.b16 %v6052
    %v7384 = vunpack.c.h.b16 %v6052
    %v7385 = vunpack.c.l.b16 %v6053
    %v7386 = vunpack.c.h.b16 %v6053
    %v7387 = vunpack.c.l.b16 %v6054
    %v7388 = vunpack.c.h.b16 %v6054
    %v7389 = vunpack.c.l.b16 %v6055
    %v7390 = vunpack.c.h.b16 %v6055
    %v7391 = vunpack.c.l.b16 %v6056
    %v7392 = vunpack.c.h.b16 %v6056
    %v7393 = vunpack.c.l.b16 %v6057
    %v7394 = vunpack.c.h.b16 %v6057
    %v7395 = vunpack.c.l.b16 %v6058
    %v7396 = vunpack.c.h.b16 %v6058
    %v7397 = vunpack.c.l.b16 %v6059
    %v7398 = vunpack.c.h.b16 %v6059
    %v7399 = vunpack.c.l.b16 %v6060
    %v7400 = vunpack.c.h.b16 %v6060
    %v7401 = vunpack.c.l.b16 %v6061
    %v7402 = vunpack.c.h.b16 %v6061
    %v7403 = vunpack.c.l.b16 %v6062
    %v7404 = vunpack.c.h.b16 %v6062
    %v7405 = vunpack.c.l.b16 %v6063
    %v7406 = vunpack.c.h.b16 %v6063
    %v7407 = vunpack.c.l.b16 %v6064
    %v7408 = vunpack.c.h.b16 %v6064
    %v7409 = vunpack.c.l.b16 %v6065
    %v7410 = vunpack.c.h.b16 %v6065
    %v7411 = vunpack.c.l.b16 %v6066
    %v7412 = vunpack.c.h.b16 %v6066
    %v7413 = vunpack.c.l.b16 %v6067
    %v7414 = vunpack.c.h.b16 %v6067
    %v7415 = vunpack.c.l.b16 %v6068
    %v7416 = vunpack.c.h.b16 %v6068
    %v7417 = vunpack.c.l.b16 %v6069
    %v7418 = vunpack.c.h.b16 %v6069
    %v7419 = vunpack.c.l.b16 %v6070
    %v7420 = vunpack.c.h.b16 %v6070
    %v7421 = vunpack.c.l.b16 %v6071
    %v7422 = vunpack.c.h.b16 %v6071
    %v7423 = vunpack.c.l.b16 %v6072
    %v7424 = vunpack.c.h.b16 %v6072
    %v7425 = vunpack.c.l.b16 %v6073
    %v7426 = vunpack.c.h.b16 %v6073
    %v7427 = vunpack.c.l.b16 %v6074
    %v7428 = vunpack.c.h.b16 %v6074
    %v7429 = vunpack.c.l.b16 %v6075
    %v7430 = vunpack.c.h.b16 %v6075
    %v7431 = vunpack.c.l.b16 %v6076
    %v7432 = vunpack.c.h.b16 %v6076
    %v7433 = vunpack.c.l.b16 %v6077
    %v7434 = vunpack.c.h.b16 %v6077
    %v7435 = vunpack.c.l.b16 %v6078
    %v7436 = vunpack.c.h.b16 %v6078
    %v7437 = vunpack.c.l.b16 %v6079
    %v7438 = vunpack.c.h.b16 %v6079
    %v7439 = vunpack.c.l.b16 %v6080
    %v7440 = vunpack.c.h.b16 %v6080
    %v7441 = vunpack.c.l.b16 %v6081
    %v7442 = vunpack.c.h.b16 %v6081
    %v7443 = vunpack.c.l.b16 %v6082
    %v7444 = vunpack.c.h.b16 %v6082
    %v7445 = vunpack.c.l.b16 %v6083
    %v7446 = vunpack.c.h.b16 %v6083
    %v7447 = vunpack.c.l.b16 %v6084
    %v7448 = vunpack.c.h.b16 %v6084
    %v7449 = vunpack.c.l.b16 %v6085
    %v7450 = vunpack.c.h.b16 %v6085
    %v7451 = vunpack.c.l.b16 %v6086
    %v7452 = vunpack.c.h.b16 %v6086
    %v7453 = vunpack.c.l.b16 %v6087
    %v7454 = vunpack.c.h.b16 %v6087
    %v7455 = vunpack.c.l.b16 %v6088
    %v7456 = vunpack.c.h.b16 %v6088
    %v7457 = vunpack.c.l.b16 %v6089
    %v7458 = vunpack.c.h.b16 %v6089
    %v7459 = vunpack.c.l.b16 %v6090
    %v7460 = vunpack.c.h.b16 %v6090
    %v7461 = vunpack.c.l.b16 %v6091
    %v7462 = vunpack.c.h.b16 %v6091
    %v7463 = vunpack.c.l.b16 %v6092
    %v7464 = vunpack.c.h.b16 %v6092
    %v7465 = vunpack.c.l.b16 %v6093
    %v7466 = vunpack.c.h.b16 %v6093
    %v7467 = vunpack.c.l.b16 %v6094
    %v7468 = vunpack.c.h.b16 %v6094
    %v7469 = vunpack.c.l.b16 %v6095
    %v7470 = vunpack.c.h.b16 %v6095
    %v7471 = vunpack.c.l.b16 %v6096
    %v7472 = vunpack.c.h.b16 %v6096
    %v7473 = vunpack.c.l.b16 %v6097
    %v7474 = vunpack.c.h.b16 %v6097
    %v7475 = vunpack.c.l.b16 %v6098
    %v7476 = vunpack.c.h.b16 %v6098
    %v7477 = vunpack.c.l.b16 %v6099
    %v7478 = vunpack.c.h.b16 %v6099
    %v7479 = vunpack.c.l.b16 %v6100
    %v7480 = vunpack.c.h.b16 %v6100
    %v7481 = vunpack.c.l.b16 %v6101
    %v7482 = vunpack.c.h.b16 %v6101
    %v7483 = vunpack.c.l.b16 %v6102
    %v7484 = vunpack.c.h.b16 %v6102
    %v7485 = vunpack.c.l.b16 %v6103
    %v7486 = vunpack.c.h.b16 %v6103
    %v7487 = vunpack.c.l.b16 %v6104
    %v7488 = vunpack.c.h.b16 %v6104
    %v7489 = vunpack.c.l.b16 %v6105
    %v7490 = vunpack.c.h.b16 %v6105
    %v7491 = vunpack.c.l.b16 %v6106
    %v7492 = vunpack.c.h.b16 %v6106
    %v7493 = vunpack.c.l.b16 %v6107
    %v7494 = vunpack.c.h.b16 %v6107
    %v7495 = vunpack.c.l.b16 %v6108
    %v7496 = vunpack.c.h.b16 %v6108
    %v7497 = vunpack.c.l.b16 %v6109
    %v7498 = vunpack.c.h.b16 %v6109
    %v7499 = vunpack.c.l.b16 %v6110
    %v7500 = vunpack.c.h.b16 %v6110
    %v7501 = vunpack.c.l.b16 %v6111
    %v7502 = vunpack.c.h.b16 %v6111
    %v7503 = vunpack.c.l.b16 %v6112
    %v7504 = vunpack.c.h.b16 %v6112
    %v7505 = vunpack.c.l.b16 %v6113
    %v7506 = vunpack.c.h.b16 %v6113
    %v7507 = vunpack.c.l.b16 %v6114
    %v7508 = vunpack.c.h.b16 %v6114
    %v7509 = vunpack.c.l.b16 %v6115
    %v7510 = vunpack.c.h.b16 %v6115
    %v7511 = vunpack.c.l.b16 %v6116
    %v7512 = vunpack.c.h.b16 %v6116
    %v7513 = vunpack.c.l.b16 %v6117
    %v7514 = vunpack.c.h.b16 %v6117
    %v7515 = vunpack.c.l.b16 %v6118
    %v7516 = vunpack.c.h.b16 %v6118
    %v7517 = vunpack.c.l.b16 %v6119
    %v7518 = vunpack.c.h.b16 %v6119
    %v7519 = vunpack.c.l.b16 %v6120
    %v7520 = vunpack.c.h.b16 %v6120
    %v7521 = vunpack.c.l.b16 %v6121
    %v7522 = vunpack.c.h.b16 %v6121
    %v7523 = vunpack.c.l.b16 %v6122
    %v7524 = vunpack.c.h.b16 %v6122
    %v7525 = vunpack.c.l.b16 %v6123
    %v7526 = vunpack.c.h.b16 %v6123
    %v7527 = vunpack.c.l.b16 %v6124
    %v7528 = vunpack.c.h.b16 %v6124
    %v7529 = vunpack.c.l.b16 %v6125
    %v7530 = vunpack.c.h.b16 %v6125
    %v7531 = vunpack.c.l.b16 %v6126
    %v7532 = vunpack.c.h.b16 %v6126
    %v7533 = vunpack.c.l.b16 %v6127
    %v7534 = vunpack.c.h.b16 %v6127
    %v7535 = vunpack.c.l.b16 %v6128
    %v7536 = vunpack.c.h.b16 %v6128
    %v7537 = vunpack.c.l.b16 %v6129
    %v7538 = vunpack.c.h.b16 %v6129
    %v7539 = vunpack.c.l.b16 %v6130
    %v7540 = vunpack.c.h.b16 %v6130
    %v7541 = vunpack.c.l.b16 %v6131
    %v7542 = vunpack.c.h.b16 %v6131
    %v7543 = vunpack.c.l.b16 %v6132
    %v7544 = vunpack.c.h.b16 %v6132
    %v7545 = vunpack.c.l.b16 %v6133
    %v7546 = vunpack.c.h.b16 %v6133
    %v7547 = vunpack.c.l.b16 %v6134
    %v7548 = vunpack.c.h.b16 %v6134
    %v7549 = vunpack.c.l.b16 %v6135
    %v7550 = vunpack.c.h.b16 %v6135
    %v7551 = vunpack.c.l.b16 %v6136
    %v7552 = vunpack.c.h.b16 %v6136
    %v7553 = vunpack.c.l.b16 %v6137
    %v7554 = vunpack.c.h.b16 %v6137
    %v7555 = vunpack.c.l.b16 %v6138
    %v7556 = vunpack.c.h.b16 %v6138
    %v7557 = vunpack.c.l.b16 %v6139
    %v7558 = vunpack.c.h.b16 %v6139
    %v7559 = vunpack.c.l.b16 %v6140
    %v7560 = vunpack.c.h.b16 %v6140
    %v7561 = vunpack.c.l.b16 %v6141
    %v7562 = vunpack.c.h.b16 %v6141
    %v7563 = vunpack.c.l.b16 %v6142
    %v7564 = vunpack.c.h.b16 %v6142
    %v7565 = vunpack.c.l.b16 %v6143
    %v7566 = vunpack.c.h.b16 %v6143
    %v7567 = vunpack.c.l.b16 %v6144
    %v7568 = vunpack.c.h.b16 %v6144
    %v7569 = vunpack.c.l.b16 %v6145
    %v7570 = vunpack.c.h.b16 %v6145
    %v7571 = vunpack.c.l.b16 %v6146
    %v7572 = vunpack.c.h.b16 %v6146
    %v7573 = vunpack.c.l.b16 %v6147
    %v7574 = vunpack.c.h.b16 %v6147
    %v7575 = vunpack.c.l.b16 %v6148
    %v7576 = vunpack.c.h.b16 %v6148
    %v7577 = vunpack.c.l.b16 %v6149
    %v7578 = vunpack.c.h.b16 %v6149
    %v7579 = vunpack.c.l.b16 %v6150
    %v7580 = vunpack.c.h.b16 %v6150
    %v7581 = vunpack.c.l.b16 %v6151
    %v7582 = vunpack.c.h.b16 %v6151
    %v7583 = vunpack.c.l.b16 %v6152
    %v7584 = vunpack.c.h.b16 %v6152
    %v7585 = vunpack.c.l.b16 %v6153
    %v7586 = vunpack.c.h.b16 %v6153
    %v7587 = vunpack.c.l.b16 %v6154
    %v7588 = vunpack.c.h.b16 %v6154
    %v7589 = vunpack.c.l.b16 %v6155
    %v7590 = vunpack.c.h.b16 %v6155
    %v7591 = vunpack.c.l.b16 %v6156
    %v7592 = vunpack.c.h.b16 %v6156
    %v7593 = vunpack.c.l.b16 %v6157
    %v7594 = vunpack.c.h.b16 %v6157
    %v7595 = vunpack.c.l.b16 %v6158
    %v7596 = vunpack.c.h.b16 %v6158
    %v7597 = vunpack.c.l.b16 %v6159
    %v7598 = vunpack.c.h.b16 %v6159
    %v7599 = vunpack.c.l.b16 %v6160
    %v7600 = vunpack.c.h.b16 %v6160
    %v7601 = vunpack.c.l.b16 %v6161
    %v7602 = vunpack.c.h.b16 %v6161
    %v7603 = vunpack.c.l.b16 %v6162
    %v7604 = vunpack.c.h.b16 %v6162
    %v7605 = vunpack.c.l.b16 %v6163
    %v7606 = vunpack.c.h.b16 %v6163
    %v7607 = vunpack.c.l.b16 %v6164
    %v7608 = vunpack.c.h.b16 %v6164
    %v7609 = vunpack.c.l.b16 %v6165
    %v7610 = vunpack.c.h.b16 %v6165
    %v7611 = vunpack.c.l.b16 %v6166
    %v7612 = vunpack.c.h.b16 %v6166
    %v7613 = vunpack.c.l.b16 %v6167
    %v7614 = vunpack.c.h.b16 %v6167
    %v7615 = vunpack.c.l.b16 %v6168
    %v7616 = vunpack.c.h.b16 %v6168
    %v7617 = vunpack.c.l.b16 %v6169
    %v7618 = vunpack.c.h.b16 %v6169
    %v7619 = vunpack.c.l.b16 %v6170
    %v7620 = vunpack.c.h.b16 %v6170
    %v7621 = vunpack.c.l.b16 %v6171
    %v7622 = vunpack.c.h.b16 %v6171
    %v7623 = vunpack.c.l.b16 %v6172
    %v7624 = vunpack.c.h.b16 %v6172
    %v7625 = vunpack.c.l.b16 %v6173
    %v7626 = vunpack.c.h.b16 %v6173
    %v7627 = vunpack.c.l.b16 %v6174
    %v7628 = vunpack.c.h.b16 %v6174
    %v7629 = vunpack.c.l.b16 %v6175
    %v7630 = vunpack.c.h.b16 %v6175
    %v7631 = vunpack.c.l.b16 %v6176
    %v7632 = vunpack.c.h.b16 %v6176
    %v7633 = vunpack.c.l.b16 %v6177
    %v7634 = vunpack.c.h.b16 %v6177
    %v7635 = vunpack.c.l.b16 %v6178
    %v7636 = vunpack.c.h.b16 %v6178
    %v7637 = vunpack.c.l.b16 %v6179
    %v7638 = vunpack.c.h.b16 %v6179
    %v7639 = vunpack.c.l.b16 %v6180
    %v7640 = vunpack.c.h.b16 %v6180
    %v7641 = vunpack.c.l.b16 %v6181
    %v7642 = vunpack.c.h.b16 %v6181
    %v7643 = vunpack.c.l.b16 %v6182
    %v7644 = vunpack.c.h.b16 %v6182
    %v7645 = vunpack.c.l.b16 %v6183
    %v7646 = vunpack.c.h.b16 %v6183
    %v7647 = vunpack.c.l.b16 %v6184
    %v7648 = vunpack.c.h.b16 %v6184
    %v7649 = vunpack.c.l.b16 %v6185
    %v7650 = vunpack.c.h.b16 %v6185
    %v7651 = vunpack.c.l.b16 %v6186
    %v7652 = vunpack.c.h.b16 %v6186
    %v7653 = vunpack.c.l.b16 %v6187
    %v7654 = vunpack.c.h.b16 %v6187
    %v7655 = vunpack.c.l.b16 %v6188
    %v7656 = vunpack.c.h.b16 %v6188
    %v7657 = vunpack.c.l.b16 %v6189
    %v7658 = vunpack.c.h.b16 %v6189
    %v7659 = vunpack.c.l.b16 %v6190
    %v7660 = vunpack.c.h.b16 %v6190
    %v7661 = vunpack.c.l.b16 %v6191
    %v7662 = vunpack.c.h.b16 %v6191
    %v7663 = vunpack.c.l.b16 %v6192
    %v7664 = vunpack.c.h.b16 %v6192
    %v7665 = vunpack.c.l.b16 %v6193
    %v7666 = vunpack.c.h.b16 %v6193
    %v7667 = vunpack.c.l.b16 %v6194
    %v7668 = vunpack.c.h.b16 %v6194
    %v7669 = vunpack.c.l.b16 %v6195
    %v7670 = vunpack.c.h.b16 %v6195
    %v7671 = vunpack.c.l.b16 %v6196
    %v7672 = vunpack.c.h.b16 %v6196
    %v7673 = vunpack.c.l.b16 %v6197
    %v7674 = vunpack.c.h.b16 %v6197
    %v7675 = vunpack.c.l.b16 %v6198
    %v7676 = vunpack.c.h.b16 %v6198
    %v7677 = vunpack.c.l.b16 %v6199
    %v7678 = vunpack.c.h.b16 %v6199
    %v7679 = vunpack.c.l.b16 %v6200
    %v7680 = vunpack.c.h.b16 %v6200
    %v7681 = vunpack.c.l.b16 %v6201
    %v7682 = vunpack.c.h.b16 %v6201
    %v7683 = vunpack.c.l.b16 %v6202
    %v7684 = vunpack.c.h.b16 %v6202
    %v7685 = vunpack.c.l.b16 %v6203
    %v7686 = vunpack.c.h.b16 %v6203
    %v7687 = vunpack.c.l.b16 %v6204
    %v7688 = vunpack.c.h.b16 %v6204
    %v7689 = vunpack.c.l.b16 %v6205
    %v7690 = vunpack.c.h.b16 %v6205
    %v7691 = vunpack.c.l.b16 %v6206
    %v7692 = vunpack.c.h.b16 %v6206
    %v7693 = vunpack.c.l.b16 %v6207
    %v7694 = vunpack.c.h.b16 %v6207
    %v7695 = vunpack.c.l.b16 %v6208
    %v7696 = vunpack.c.h.b16 %v6208
    %v7697 = vunpack.c.l.b16 %v6209
    %v7698 = vunpack.c.h.b16 %v6209
    %v7699 = vunpack.c.l.b16 %v6210
    %v7700 = vunpack.c.h.b16 %v6210
    %v7701 = vunpack.c.l.b16 %v6211
    %v7702 = vunpack.c.h.b16 %v6211
    %v7703 = vunpack.c.l.b16 %v6212
    %v7704 = vunpack.c.h.b16 %v6212
    %v7705 = vunpack.c.l.b16 %v6213
    %v7706 = vunpack.c.h.b16 %v6213
    %v7707 = vunpack.c.l.b16 %v6214
    %v7708 = vunpack.c.h.b16 %v6214
    %v7709 = vunpack.c.l.b16 %v6215
    %v7710 = vunpack.c.h.b16 %v6215
    %v7711 = vunpack.c.l.b16 %v6216
    %v7712 = vunpack.c.h.b16 %v6216
    %v7713 = vunpack.c.l.b16 %v6217
    %v7714 = vunpack.c.h.b16 %v6217
    %v7715 = vunpack.c.l.b16 %v6218
    %v7716 = vunpack.c.h.b16 %v6218
    %v7717 = vunpack.c.l.b16 %v6219
    %v7718 = vunpack.c.h.b16 %v6219
    %v7719 = vunpack.c.l.b16 %v6220
    %v7720 = vunpack.c.h.b16 %v6220
    %v7721 = vunpack.c.l.b16 %v6221
    %v7722 = vunpack.c.h.b16 %v6221
    %v7723 = vunpack.c.l.b16 %v6222
    %v7724 = vunpack.c.h.b16 %v6222
    %v7725 = vunpack.c.l.b16 %v6223
    %v7726 = vunpack.c.h.b16 %v6223
    %v7727 = vunpack.c.l.b16 %v6224
    %v7728 = vunpack.c.h.b16 %v6224
    %v7729 = vunpack.c.l.b16 %v6225
    %v7730 = vunpack.c.h.b16 %v6225
    %v7731 = vunpack.c.l.b16 %v6226
    %v7732 = vunpack.c.h.b16 %v6226
    %v7733 = vunpack.c.l.b16 %v6227
    %v7734 = vunpack.c.h.b16 %v6227
    %v7735 = vunpack.c.l.b16 %v6228
    %v7736 = vunpack.c.h.b16 %v6228
    %v7737 = vunpack.c.l.b16 %v6229
    %v7738 = vunpack.c.h.b16 %v6229
    %v7739 = vunpack.c.l.b16 %v6230
    %v7740 = vunpack.c.h.b16 %v6230
    %v7741 = vunpack.c.l.b16 %v6231
    %v7742 = vunpack.c.h.b16 %v6231
    %v7743 = vunpack.c.l.b16 %v6232
    %v7744 = vunpack.c.h.b16 %v6232
    %v7745 = vunpack.c.l.b16 %v6233
    %v7746 = vunpack.c.h.b16 %v6233
    %v7747 = vunpack.c.l.b16 %v6234
    %v7748 = vunpack.c.h.b16 %v6234
    %v7749 = vunpack.c.l.b16 %v6235
    %v7750 = vunpack.c.h.b16 %v6235
    %v7751 = vunpack.c.l.b16 %v6236
    %v7752 = vunpack.c.h.b16 %v6236
    %v7753 = vunpack.c.l.b16 %v6237
    %v7754 = vunpack.c.h.b16 %v6237
    %v7755 = vunpack.c.l.b16 %v6238
    %v7756 = vunpack.c.h.b16 %v6238
    %v7757 = vunpack.c.l.b16 %v6239
    %v7758 = vunpack.c.h.b16 %v6239
    %v7759 = vunpack.c.l.b16 %v6240
    %v7760 = vunpack.c.h.b16 %v6240
    %v7761 = vunpack.c.l.b16 %v6241
    %v7762 = vunpack.c.h.b16 %v6241
    %v7763 = vunpack.c.l.b16 %v6242
    %v7764 = vunpack.c.h.b16 %v6242
    %v7765 = vunpack.c.l.b16 %v6243
    %v7766 = vunpack.c.h.b16 %v6243
    %v7767 = vunpack.c.l.b16 %v6244
    %v7768 = vunpack.c.h.b16 %v6244
    %v7769 = vunpack.c.l.b16 %v6245
    %v7770 = vunpack.c.h.b16 %v6245
    %v7771 = vunpack.c.l.b16 %v6246
    %v7772 = vunpack.c.h.b16 %v6246
    %v7773 = vunpack.c.l.b16 %v6247
    %v7774 = vunpack.c.h.b16 %v6247
    %v7775 = vunpack.c.l.b16 %v6248
    %v7776 = vunpack.c.h.b16 %v6248
    %v7777 = vunpack.c.l.b16 %v6249
    %v7778 = vunpack.c.h.b16 %v6249
    %v7779 = vunpack.c.l.b16 %v6250
    %v7780 = vunpack.c.h.b16 %v6250
    %v7781 = vunpack.c.l.b16 %v6251
    %v7782 = vunpack.c.h.b16 %v6251
    %v7783 = vunpack.c.l.b16 %v6252
    %v7784 = vunpack.c.h.b16 %v6252
    %v7785 = vunpack.c.l.b16 %v6253
    %v7786 = vunpack.c.h.b16 %v6253
    %v7787 = vunpack.c.l.b16 %v6254
    %v7788 = vunpack.c.h.b16 %v6254
    %v7789 = vunpack.c.l.b16 %v6255
    %v7790 = vunpack.c.h.b16 %v6255
    %v7791 = vunpack.c.l.b16 %v6256
    %v7792 = vunpack.c.h.b16 %v6256
    %v7793 = vunpack.c.l.b16 %v6257
    %v7794 = vunpack.c.h.b16 %v6257
    %v7795 = vunpack.c.l.b16 %v6258
    %v7796 = vunpack.c.h.b16 %v6258
    %v7797 = vunpack.c.l.b16 %v6259
    %v7798 = vunpack.c.h.b16 %v6259
    %v7799 = vunpack.c.l.b16 %v6260
    %v7800 = vunpack.c.h.b16 %v6260
    %v7801 = vunpack.c.l.b16 %v6261
    %v7802 = vunpack.c.h.b16 %v6261
    %v7803 = vunpack.c.l.b16 %v6262
    %v7804 = vunpack.c.h.b16 %v6262
    %v7805 = vunpack.c.l.b16 %v6263
    %v7806 = vunpack.c.h.b16 %v6263
    %v7807 = vunpack.c.l.b16 %v6264
    %v7808 = vunpack.c.h.b16 %v6264
    %v7809 = vunpack.c.l.b16 %v6265
    %v7810 = vunpack.c.h.b16 %v6265
    %v7811 = vunpack.c.l.b16 %v6266
    %v7812 = vunpack.c.h.b16 %v6266
    %v7813 = vunpack.c.l.b16 %v6267
    %v7814 = vunpack.c.h.b16 %v6267
    %v7815 = vunpack.c.l.b16 %v6268
    %v7816 = vunpack.c.h.b16 %v6268
    %v7817 = vunpack.c.l.b16 %v6269
    %v7818 = vunpack.c.h.b16 %v6269
    %v7819 = vunpack.c.l.b16 %v6270
    %v7820 = vunpack.c.h.b16 %v6270
    %v7821 = vunpack.c.l.b16 %v6271
    %v7822 = vunpack.c.h.b16 %v6271
    %v7823 = vunpack.c.l.b16 %v6272
    %v7824 = vunpack.c.h.b16 %v6272
    %v7825 = vunpack.c.l.b16 %v6273
    %v7826 = vunpack.c.h.b16 %v6273
    %v7827 = vunpack.c.l.b16 %v6274
    %v7828 = vunpack.c.h.b16 %v6274
    %v7829 = vunpack.c.l.b16 %v6275
    %v7830 = vunpack.c.h.b16 %v6275
    %v7831 = vunpack.c.l.b16 %v6276
    %v7832 = vunpack.c.h.b16 %v6276
    %v7833 = vunpack.c.l.b16 %v6277
    %v7834 = vunpack.c.h.b16 %v6277
    %v7835 = vunpack.c.l.b16 %v6278
    %v7836 = vunpack.c.h.b16 %v6278
    %v7837 = vunpack.c.l.b16 %v6279
    %v7838 = vunpack.c.h.b16 %v6279
    %v7839 = vunpack.c.l.b16 %v6280
    %v7840 = vunpack.c.h.b16 %v6280
    %v7841 = vunpack.c.l.b16 %v6281
    %v7842 = vunpack.c.h.b16 %v6281
    %v7843 = vunpack.c.l.b16 %v6282
    %v7844 = vunpack.c.h.b16 %v6282
    %v7845 = vunpack.c.l.b16 %v6283
    %v7846 = vunpack.c.h.b16 %v6283
    %v7847 = vunpack.c.l.b16 %v6284
    %v7848 = vunpack.c.h.b16 %v6284
    %v7849 = vunpack.c.l.b16 %v6285
    %v7850 = vunpack.c.h.b16 %v6285
    %v7851 = vunpack.c.l.b16 %v6286
    %v7852 = vunpack.c.h.b16 %v6286
    %v7853 = vunpack.c.l.b16 %v6287
    %v7854 = vunpack.c.h.b16 %v6287
    %v7855 = vunpack.c.l.b16 %v6288
    %v7856 = vunpack.c.h.b16 %v6288
    %v7857 = vunpack.c.l.b16 %v6289
    %v7858 = vunpack.c.h.b16 %v6289
    %v7859 = vunpack.c.l.b16 %v6290
    %v7860 = vunpack.c.h.b16 %v6290
    %v7861 = vunpack.c.l.b16 %v6291
    %v7862 = vunpack.c.h.b16 %v6291
    %v7863 = vunpack.c.l.b16 %v6292
    %v7864 = vunpack.c.h.b16 %v6292
    %v7865 = vunpack.c.l.b16 %v6293
    %v7866 = vunpack.c.h.b16 %v6293
    %v7867 = vunpack.c.l.b16 %v6294
    %v7868 = vunpack.c.h.b16 %v6294
    %v7869 = vunpack.c.l.b16 %v6295
    %v7870 = vunpack.c.h.b16 %v6295
    %v7871 = vunpack.c.l.b16 %v6296
    %v7872 = vunpack.c.h.b16 %v6296
    %v7873 = vunpack.c.l.b16 %v6297
    %v7874 = vunpack.c.h.b16 %v6297
    %v7875 = vunpack.c.l.b16 %v6298
    %v7876 = vunpack.c.h.b16 %v6298
    %v7877 = vpack.c.b16 %v6861, %v6853
    %v7878 = vpack.c.b16 %v6862, %v6854
    %v7879 = vpack.c.b16 %v6863, %v6855
    %v7880 = vpack.c.b16 %v6864, %v6856
    %v7881 = vpack.c.b16 %v6865, %v6857
    %v7882 = vpack.c.b16 %v6866, %v6858
    %v7883 = vpack.c.b16 %v6867, %v6859
    %v7884 = vpack.c.b16 %v6868, %v6860
    %v7885 = vpack.c.b16 %v6877, %v6869
    %v7886 = vpack.c.b16 %v6878, %v6870
    %v7887 = vpack.c.b16 %v6879, %v6871
    %v7888 = vpack.c.b16 %v6880, %v6872
    %v7889 = vpack.c.b16 %v6881, %v6873
    %v7890 = vpack.c.b16 %v6882, %v6874
    %v7891 = vpack.c.b16 %v6883, %v6875
    %v7892 = vpack.c.b16 %v6884, %v6876
    %v7893 = vpack.c.b16 %v6893, %v6885
    %v7894 = vpack.c.b16 %v6894, %v6886
    %v7895 = vpack.c.b16 %v6895, %v6887
    %v7896 = vpack.c.b16 %v6896, %v6888
    %v7897 = vpack.c.b16 %v6897, %v6889
    %v7898 = vpack.c.b16 %v6898, %v6890
    %v7899 = vpack.c.b16 %v6899, %v6891
    %v7900 = vpack.c.b16 %v6900, %v6892
    %v7901 = vpack.c.b16 %v6909, %v6901
    %v7902 = vpack.c.b16 %v6910, %v6902
    %v7903 = vpack.c.b16 %v6911, %v6903
    %v7904 = vpack.c.b16 %v6912, %v6904
    %v7905 = vpack.c.b16 %v6913, %v6905
    %v7906 = vpack.c.b16 %v6914, %v6906
    %v7907 = vpack.c.b16 %v6915, %v6907
    %v7908 = vpack.c.b16 %v6916, %v6908
    %v7909 = vpack.c.b16 %v6925, %v6917
    %v7910 = vpack.c.b16 %v6926, %v6918
    %v7911 = vpack.c.b16 %v6927, %v6919
    %v7912 = vpack.c.b16 %v6928, %v6920
    %v7913 = vpack.c.b16 %v6929, %v6921
    %v7914 = vpack.c.b16 %v6930, %v6922
    %v7915 = vpack.c.b16 %v6931, %v6923
    %v7916 = vpack.c.b16 %v6932, %v6924
    %v7917 = vpack.c.b16 %v6941, %v6933
    %v7918 = vpack.c.b16 %v6942, %v6934
    %v7919 = vpack.c.b16 %v6943, %v6935
    %v7920 = vpack.c.b16 %v6944, %v6936
    %v7921 = vpack.c.b16 %v6945, %v6937
    %v7922 = vpack.c.b16 %v6946, %v6938
    %v7923 = vpack.c.b16 %v6947, %v6939
    %v7924 = vpack.c.b16 %v6948, %v6940
    %v7925 = vpack.c.b16 %v6957, %v6949
    %v7926 = vpack.c.b16 %v6958, %v6950
    %v7927 = vpack.c.b16 %v6959, %v6951
    %v7928 = vpack.c.b16 %v6960, %v6952
    %v7929 = vpack.c.b16 %v6961, %v6953
    %v7930 = vpack.c.b16 %v6962, %v6954
    %v7931 = vpack.c.b16 %v6963, %v6955
    %v7932 = vpack.c.b16 %v6964, %v6956
    %v7933 = vpack.c.b16 %v6973, %v6965
    %v7934 = vpack.c.b16 %v6974, %v6966
    %v7935 = vpack.c.b16 %v6975, %v6967
    %v7936 = vpack.c.b16 %v6976, %v6968
    %v7937 = vpack.c.b16 %v6977, %v6969
    %v7938 = vpack.c.b16 %v6978, %v6970
    %v7939 = vpack.c.b16 %v6979, %v6971
    %v7940 = vpack.c.b16 %v6980, %v6972
    %v7941 = vpack.c.b16 %v6989, %v6981
    %v7942 = vpack.c.b16 %v6990, %v6982
    %v7943 = vpack.c.b16 %v6991, %v6983
    %v7944 = vpack.c.b16 %v6992, %v6984
    %v7945 = vpack.c.b16 %v6993, %v6985
    %v7946 = vpack.c.b16 %v6994, %v6986
    %v7947 = vpack.c.b16 %v6995, %v6987
    %v7948 = vpack.c.b16 %v6996, %v6988
    %v7949 = vpack.c.b16 %v7005, %v6997
    %v7950 = vpack.c.b16 %v7006, %v6998
    %v7951 = vpack.c.b16 %v7007, %v6999
    %v7952 = vpack.c.b16 %v7008, %v7000
    %v7953 = vpack.c.b16 %v7009, %v7001
    %v7954 = vpack.c.b16 %v7010, %v7002
    %v7955 = vpack.c.b16 %v7011, %v7003
    %v7956 = vpack.c.b16 %v7012, %v7004
    %v7957 = vpack.c.b16 %v7021, %v7013
    %v7958 = vpack.c.b16 %v7022, %v7014
    %v7959 = vpack.c.b16 %v7023, %v7015
    %v7960 = vpack.c.b16 %v7024, %v7016
    %v7961 = vpack.c.b16 %v7025, %v7017
    %v7962 = vpack.c.b16 %v7026, %v7018
    %v7963 = vpack.c.b16 %v7027, %v7019
    %v7964 = vpack.c.b16 %v7028, %v7020
    %v7965 = vpack.c.b16 %v7037, %v7029
    %v7966 = vpack.c.b16 %v7038, %v7030
    %v7967 = vpack.c.b16 %v7039, %v7031
    %v7968 = vpack.c.b16 %v7040, %v7032
    %v7969 = vpack.c.b16 %v7041, %v7033
    %v7970 = vpack.c.b16 %v7042, %v7034
    %v7971 = vpack.c.b16 %v7043, %v7035
    %v7972 = vpack.c.b16 %v7044, %v7036
    %v7973 = vpack.c.b16 %v7053, %v7045
    %v7974 = vpack.c.b16 %v7054, %v7046
    %v7975 = vpack.c.b16 %v7055, %v7047
    %v7976 = vpack.c.b16 %v7056, %v7048
    %v7977 = vpack.c.b16 %v7057, %v7049
    %v7978 = vpack.c.b16 %v7058, %v7050
    %v7979 = vpack.c.b16 %v7059, %v7051
    %v7980 = vpack.c.b16 %v7060, %v7052
    %v7981 = vpack.c.b16 %v7069, %v7061
    %v7982 = vpack.c.b16 %v7070, %v7062
    %v7983 = vpack.c.b16 %v7071, %v7063
    %v7984 = vpack.c.b16 %v7072, %v7064
    %v7985 = vpack.c.b16 %v7073, %v7065
    %v7986 = vpack.c.b16 %v7074, %v7066
    %v7987 = vpack.c.b16 %v7075, %v7067
    %v7988 = vpack.c.b16 %v7076, %v7068
    %v7989 = vpack.c.b16 %v7085, %v7077
    %v7990 = vpack.c.b16 %v7086, %v7078
    %v7991 = vpack.c.b16 %v7087, %v7079
    %v7992 = vpack.c.b16 %v7088, %v7080
    %v7993 = vpack.c.b16 %v7089, %v7081
    %v7994 = vpack.c.b16 %v7090, %v7082
    %v7995 = vpack.c.b16 %v7091, %v7083
    %v7996 = vpack.c.b16 %v7092, %v7084
    %v7997 = vpack.c.b16 %v7101, %v7093
    %v7998 = vpack.c.b16 %v7102, %v7094
    %v7999 = vpack.c.b16 %v7103, %v7095
    %v8000 = vpack.c.b16 %v7104, %v7096
    %v8001 = vpack.c.b16 %v7105, %v7097
    %v8002 = vpack.c.b16 %v7106, %v7098
    %v8003 = vpack.c.b16 %v7107, %v7099
    %v8004 = vpack.c.b16 %v7108, %v7100
    %v8005 = vpack.c.b16 %v7117, %v7109
    %v8006 = vpack.c.b16 %v7118, %v7110
    %v8007 = vpack.c.b16 %v7119, %v7111
    %v8008 = vpack.c.b16 %v7120, %v7112
    %v8009 = vpack.c.b16 %v7121, %v7113
    %v8010 = vpack.c.b16 %v7122, %v7114
    %v8011 = vpack.c.b16 %v7123, %v7115
    %v8012 = vpack.c.b16 %v7124, %v7116
    %v8013 = vpack.c.b16 %v7133, %v7125
    %v8014 = vpack.c.b16 %v7134, %v7126
    %v8015 = vpack.c.b16 %v7135, %v7127
    %v8016 = vpack.c.b16 %v7136, %v7128
    %v8017 = vpack.c.b16 %v7137, %v7129
    %v8018 = vpack.c.b16 %v7138, %v7130
    %v8019 = vpack.c.b16 %v7139, %v7131
    %v8020 = vpack.c.b16 %v7140, %v7132
    %v8021 = vpack.c.b16 %v7149, %v7141
    %v8022 = vpack.c.b16 %v7150, %v7142
    %v8023 = vpack.c.b16 %v7151, %v7143
    %v8024 = vpack.c.b16 %v7152, %v7144
    %v8025 = vpack.c.b16 %v7153, %v7145
    %v8026 = vpack.c.b16 %v7154, %v7146
    %v8027 = vpack.c.b16 %v7155, %v7147
    %v8028 = vpack.c.b16 %v7156, %v7148
    %v8029 = vpack.c.b16 %v7165, %v7157
    %v8030 = vpack.c.b16 %v7166, %v7158
    %v8031 = vpack.c.b16 %v7167, %v7159
    %v8032 = vpack.c.b16 %v7168, %v7160
    %v8033 = vpack.c.b16 %v7169, %v7161
    %v8034 = vpack.c.b16 %v7170, %v7162
    %v8035 = vpack.c.b16 %v7171, %v7163
    %v8036 = vpack.c.b16 %v7172, %v7164
    %v8037 = vpack.c.b16 %v7181, %v7173
    %v8038 = vpack.c.b16 %v7182, %v7174
    %v8039 = vpack.c.b16 %v7183, %v7175
    %v8040 = vpack.c.b16 %v7184, %v7176
    %v8041 = vpack.c.b16 %v7185, %v7177
    %v8042 = vpack.c.b16 %v7186, %v7178
    %v8043 = vpack.c.b16 %v7187, %v7179
    %v8044 = vpack.c.b16 %v7188, %v7180
    %v8045 = vpack.c.b16 %v7197, %v7189
    %v8046 = vpack.c.b16 %v7198, %v7190
    %v8047 = vpack.c.b16 %v7199, %v7191
    %v8048 = vpack.c.b16 %v7200, %v7192
    %v8049 = vpack.c.b16 %v7201, %v7193
    %v8050 = vpack.c.b16 %v7202, %v7194
    %v8051 = vpack.c.b16 %v7203, %v7195
    %v8052 = vpack.c.b16 %v7204, %v7196
    %v8053 = vpack.c.b16 %v7213, %v7205
    %v8054 = vpack.c.b16 %v7214, %v7206
    %v8055 = vpack.c.b16 %v7215, %v7207
    %v8056 = vpack.c.b16 %v7216, %v7208
    %v8057 = vpack.c.b16 %v7217, %v7209
    %v8058 = vpack.c.b16 %v7218, %v7210
    %v8059 = vpack.c.b16 %v7219, %v7211
    %v8060 = vpack.c.b16 %v7220, %v7212
    %v8061 = vpack.c.b16 %v7229, %v7221
    %v8062 = vpack.c.b16 %v7230, %v7222
    %v8063 = vpack.c.b16 %v7231, %v7223
    %v8064 = vpack.c.b16 %v7232, %v7224
    %v8065 = vpack.c.b16 %v7233, %v7225
    %v8066 = vpack.c.b16 %v7234, %v7226
    %v8067 = vpack.c.b16 %v7235, %v7227
    %v8068 = vpack.c.b16 %v7236, %v7228
    %v8069 = vpack.c.b16 %v7245, %v7237
    %v8070 = vpack.c.b16 %v7246, %v7238
    %v8071 = vpack.c.b16 %v7247, %v7239
    %v8072 = vpack.c.b16 %v7248, %v7240
    %v8073 = vpack.c.b16 %v7249, %v7241
    %v8074 = vpack.c.b16 %v7250, %v7242
    %v8075 = vpack.c.b16 %v7251, %v7243
    %v8076 = vpack.c.b16 %v7252, %v7244
    %v8077 = vpack.c.b16 %v7261, %v7253
    %v8078 = vpack.c.b16 %v7262, %v7254
    %v8079 = vpack.c.b16 %v7263, %v7255
    %v8080 = vpack.c.b16 %v7264, %v7256
    %v8081 = vpack.c.b16 %v7265, %v7257
    %v8082 = vpack.c.b16 %v7266, %v7258
    %v8083 = vpack.c.b16 %v7267, %v7259
    %v8084 = vpack.c.b16 %v7268, %v7260
    %v8085 = vpack.c.b16 %v7277, %v7269
    %v8086 = vpack.c.b16 %v7278, %v7270
    %v8087 = vpack.c.b16 %v7279, %v7271
    %v8088 = vpack.c.b16 %v7280, %v7272
    %v8089 = vpack.c.b16 %v7281, %v7273
    %v8090 = vpack.c.b16 %v7282, %v7274
    %v8091 = vpack.c.b16 %v7283, %v7275
    %v8092 = vpack.c.b16 %v7284, %v7276
    %v8093 = vpack.c.b16 %v7293, %v7285
    %v8094 = vpack.c.b16 %v7294, %v7286
    %v8095 = vpack.c.b16 %v7295, %v7287
    %v8096 = vpack.c.b16 %v7296, %v7288
    %v8097 = vpack.c.b16 %v7297, %v7289
    %v8098 = vpack.c.b16 %v7298, %v7290
    %v8099 = vpack.c.b16 %v7299, %v7291
    %v8100 = vpack.c.b16 %v7300, %v7292
    %v8101 = vpack.c.b16 %v7309, %v7301
    %v8102 = vpack.c.b16 %v7310, %v7302
    %v8103 = vpack.c.b16 %v7311, %v7303
    %v8104 = vpack.c.b16 %v7312, %v7304
    %v8105 = vpack.c.b16 %v7313, %v7305
    %v8106 = vpack.c.b16 %v7314, %v7306
    %v8107 = vpack.c.b16 %v7315, %v7307
    %v8108 = vpack.c.b16 %v7316, %v7308
    %v8109 = vpack.c.b16 %v7325, %v7317
    %v8110 = vpack.c.b16 %v7326, %v7318
    %v8111 = vpack.c.b16 %v7327, %v7319
    %v8112 = vpack.c.b16 %v7328, %v7320
    %v8113 = vpack.c.b16 %v7329, %v7321
    %v8114 = vpack.c.b16 %v7330, %v7322
    %v8115 = vpack.c.b16 %v7331, %v7323
    %v8116 = vpack.c.b16 %v7332, %v7324
    %v8117 = vpack.c.b16 %v7341, %v7333
    %v8118 = vpack.c.b16 %v7342, %v7334
    %v8119 = vpack.c.b16 %v7343, %v7335
    %v8120 = vpack.c.b16 %v7344, %v7336
    %v8121 = vpack.c.b16 %v7345, %v7337
    %v8122 = vpack.c.b16 %v7346, %v7338
    %v8123 = vpack.c.b16 %v7347, %v7339
    %v8124 = vpack.c.b16 %v7348, %v7340
    %v8125 = vpack.c.b16 %v7357, %v7349
    %v8126 = vpack.c.b16 %v7358, %v7350
    %v8127 = vpack.c.b16 %v7359, %v7351
    %v8128 = vpack.c.b16 %v7360, %v7352
    %v8129 = vpack.c.b16 %v7361, %v7353
    %v8130 = vpack.c.b16 %v7362, %v7354
    %v8131 = vpack.c.b16 %v7363, %v7355
    %v8132 = vpack.c.b16 %v7364, %v7356
    %v8133 = vpack.c.b16 %v7373, %v7365
    %v8134 = vpack.c.b16 %v7374, %v7366
    %v8135 = vpack.c.b16 %v7375, %v7367
    %v8136 = vpack.c.b16 %v7376, %v7368
    %v8137 = vpack.c.b16 %v7377, %v7369
    %v8138 = vpack.c.b16 %v7378, %v7370
    %v8139 = vpack.c.b16 %v7379, %v7371
    %v8140 = vpack.c.b16 %v7380, %v7372
    %v8141 = vpack.c.b16 %v7389, %v7381
    %v8142 = vpack.c.b16 %v7390, %v7382
    %v8143 = vpack.c.b16 %v7391, %v7383
    %v8144 = vpack.c.b16 %v7392, %v7384
    %v8145 = vpack.c.b16 %v7393, %v7385
    %v8146 = vpack.c.b16 %v7394, %v7386
    %v8147 = vpack.c.b16 %v7395, %v7387
    %v8148 = vpack.c.b16 %v7396, %v7388
    %v8149 = vpack.c.b16 %v7405, %v7397
    %v8150 = vpack.c.b16 %v7406, %v7398
    %v8151 = vpack.c.b16 %v7407, %v7399
    %v8152 = vpack.c.b16 %v7408, %v7400
    %v8153 = vpack.c.b16 %v7409, %v7401
    %v8154 = vpack.c.b16 %v7410, %v7402
    %v8155 = vpack.c.b16 %v7411, %v7403
    %v8156 = vpack.c.b16 %v7412, %v7404
    %v8157 = vpack.c.b16 %v7421, %v7413
    %v8158 = vpack.c.b16 %v7422, %v7414
    %v8159 = vpack.c.b16 %v7423, %v7415
    %v8160 = vpack.c.b16 %v7424, %v7416
    %v8161 = vpack.c.b16 %v7425, %v7417
    %v8162 = vpack.c.b16 %v7426, %v7418
    %v8163 = vpack.c.b16 %v7427, %v7419
    %v8164 = vpack.c.b16 %v7428, %v7420
    %v8165 = vpack.c.b16 %v7437, %v7429
    %v8166 = vpack.c.b16 %v7438, %v7430
    %v8167 = vpack.c.b16 %v7439, %v7431
    %v8168 = vpack.c.b16 %v7440, %v7432
    %v8169 = vpack.c.b16 %v7441, %v7433
    %v8170 = vpack.c.b16 %v7442, %v7434
    %v8171 = vpack.c.b16 %v7443, %v7435
    %v8172 = vpack.c.b16 %v7444, %v7436
    %v8173 = vpack.c.b16 %v7453, %v7445
    %v8174 = vpack.c.b16 %v7454, %v7446
    %v8175 = vpack.c.b16 %v7455, %v7447
    %v8176 = vpack.c.b16 %v7456, %v7448
    %v8177 = vpack.c.b16 %v7457, %v7449
    %v8178 = vpack.c.b16 %v7458, %v7450
    %v8179 = vpack.c.b16 %v7459, %v7451
    %v8180 = vpack.c.b16 %v7460, %v7452
    %v8181 = vpack.c.b16 %v7469, %v7461
    %v8182 = vpack.c.b16 %v7470, %v7462
    %v8183 = vpack.c.b16 %v7471, %v7463
    %v8184 = vpack.c.b16 %v7472, %v7464
    %v8185 = vpack.c.b16 %v7473, %v7465
    %v8186 = vpack.c.b16 %v7474, %v7466
    %v8187 = vpack.c.b16 %v7475, %v7467
    %v8188 = vpack.c.b16 %v7476, %v7468
    %v8189 = vpack.c.b16 %v7485, %v7477
    %v8190 = vpack.c.b16 %v7486, %v7478
    %v8191 = vpack.c.b16 %v7487, %v7479
    %v8192 = vpack.c.b16 %v7488, %v7480
    %v8193 = vpack.c.b16 %v7489, %v7481
    %v8194 = vpack.c.b16 %v7490, %v7482
    %v8195 = vpack.c.b16 %v7491, %v7483
    %v8196 = vpack.c.b16 %v7492, %v7484
    %v8197 = vpack.c.b16 %v7501, %v7493
    %v8198 = vpack.c.b16 %v7502, %v7494
    %v8199 = vpack.c.b16 %v7503, %v7495
    %v8200 = vpack.c.b16 %v7504, %v7496
    %v8201 = vpack.c.b16 %v7505, %v7497
    %v8202 = vpack.c.b16 %v7506, %v7498
    %v8203 = vpack.c.b16 %v7507, %v7499
    %v8204 = vpack.c.b16 %v7508, %v7500
    %v8205 = vpack.c.b16 %v7517, %v7509
    %v8206 = vpack.c.b16 %v7518, %v7510
    %v8207 = vpack.c.b16 %v7519, %v7511
    %v8208 = vpack.c.b16 %v7520, %v7512
    %v8209 = vpack.c.b16 %v7521, %v7513
    %v8210 = vpack.c.b16 %v7522, %v7514
    %v8211 = vpack.c.b16 %v7523, %v7515
    %v8212 = vpack.c.b16 %v7524, %v7516
    %v8213 = vpack.c.b16 %v7533, %v7525
    %v8214 = vpack.c.b16 %v7534, %v7526
    %v8215 = vpack.c.b16 %v7535, %v7527
    %v8216 = vpack.c.b16 %v7536, %v7528
    %v8217 = vpack.c.b16 %v7537, %v7529
    %v8218 = vpack.c.b16 %v7538, %v7530
    %v8219 = vpack.c.b16 %v7539, %v7531
    %v8220 = vpack.c.b16 %v7540, %v7532
    %v8221 = vpack.c.b16 %v7549, %v7541
    %v8222 = vpack.c.b16 %v7550, %v7542
    %v8223 = vpack.c.b16 %v7551, %v7543
    %v8224 = vpack.c.b16 %v7552, %v7544
    %v8225 = vpack.c.b16 %v7553, %v7545
    %v8226 = vpack.c.b16 %v7554, %v7546
    %v8227 = vpack.c.b16 %v7555, %v7547
    %v8228 = vpack.c.b16 %v7556, %v7548
    %v8229 = vpack.c.b16 %v7565, %v7557
    %v8230 = vpack.c.b16 %v7566, %v7558
    %v8231 = vpack.c.b16 %v7567, %v7559
    %v8232 = vpack.c.b16 %v7568, %v7560
    %v8233 = vpack.c.b16 %v7569, %v7561
    %v8234 = vpack.c.b16 %v7570, %v7562
    %v8235 = vpack.c.b16 %v7571, %v7563
    %v8236 = vpack.c.b16 %v7572, %v7564
    %v8237 = vpack.c.b16 %v7581, %v7573
    %v8238 = vpack.c.b16 %v7582, %v7574
    %v8239 = vpack.c.b16 %v7583, %v7575
    %v8240 = vpack.c.b16 %v7584, %v7576
    %v8241 = vpack.c.b16 %v7585, %v7577
    %v8242 = vpack.c.b16 %v7586, %v7578
    %v8243 = vpack.c.b16 %v7587, %v7579
    %v8244 = vpack.c.b16 %v7588, %v7580
    %v8245 = vpack.c.b16 %v7597, %v7589
    %v8246 = vpack.c.b16 %v7598, %v7590
    %v8247 = vpack.c.b16 %v7599, %v7591
    %v8248 = vpack.c.b16 %v7600, %v7592
    %v8249 = vpack.c.b16 %v7601, %v7593
    %v8250 = vpack.c.b16 %v7602, %v7594
    %v8251 = vpack.c.b16 %v7603, %v7595
    %v8252 = vpack.c.b16 %v7604, %v7596
    %v8253 = vpack.c.b16 %v7613, %v7605
    %v8254 = vpack.c.b16 %v7614, %v7606
    %v8255 = vpack.c.b16 %v7615, %v7607
    %v8256 = vpack.c.b16 %v7616, %v7608
    %v8257 = vpack.c.b16 %v7617, %v7609
    %v8258 = vpack.c.b16 %v7618, %v7610
    %v8259 = vpack.c.b16 %v7619, %v7611
    %v8260 = vpack.c.b16 %v7620, %v7612
    %v8261 = vpack.c.b16 %v7629, %v7621
    %v8262 = vpack.c.b16 %v7630, %v7622
    %v8263 = vpack.c.b16 %v7631, %v7623
    %v8264 = vpack.c.b16 %v7632, %v7624
    %v8265 = vpack.c.b16 %v7633, %v7625
    %v8266 = vpack.c.b16 %v7634, %v7626
    %v8267 = vpack.c.b16 %v7635, %v7627
    %v8268 = vpack.c.b16 %v7636, %v7628
    %v8269 = vpack.c.b16 %v7645, %v7637
    %v8270 = vpack.c.b16 %v7646, %v7638
    %v8271 = vpack.c.b16 %v7647, %v7639
    %v8272 = vpack.c.b16 %v7648, %v7640
    %v8273 = vpack.c.b16 %v7649, %v7641
    %v8274 = vpack.c.b16 %v7650, %v7642
    %v8275 = vpack.c.b16 %v7651, %v7643
    %v8276 = vpack.c.b16 %v7652, %v7644
    %v8277 = vpack.c.b16 %v7661, %v7653
    %v8278 = vpack.c.b16 %v7662, %v7654
    %v8279 = vpack.c.b16 %v7663, %v7655
    %v8280 = vpack.c.b16 %v7664, %v7656
    %v8281 = vpack.c.b16 %v7665, %v7657
    %v8282 = vpack.c.b16 %v7666, %v7658
    %v8283 = vpack.c.b16 %v7667, %v7659
    %v8284 = vpack.c.b16 %v7668, %v7660
    %v8285 = vpack.c.b16 %v7677, %v7669
    %v8286 = vpack.c.b16 %v7678, %v7670
    %v8287 = vpack.c.b16 %v7679, %v7671
    %v8288 = vpack.c.b16 %v7680, %v7672
    %v8289 = vpack.c.b16 %v7681, %v7673
    %v8290 = vpack.c.b16 %v7682, %v7674
    %v8291 = vpack.c.b16 %v7683, %v7675
    %v8292 = vpack.c.b16 %v7684, %v7676
    %v8293 = vpack.c.b16 %v7693, %v7685
    %v8294 = vpack.c.b16 %v7694, %v7686
    %v8295 = vpack.c.b16 %v7695, %v7687
    %v8296 = vpack.c.b16 %v7696, %v7688
    %v8297 = vpack.c.b16 %v7697, %v7689
    %v8298 = vpack.c.b16 %v7698, %v7690
    %v8299 = vpack.c.b16 %v7699, %v7691
    %v8300 = vpack.c.b16 %v7700, %v7692
    %v8301 = vpack.c.b16 %v7709, %v7701
    %v8302 = vpack.c.b16 %v7710, %v7702
    %v8303 = vpack.c.b16 %v7711, %v7703
    %v8304 = vpack.c.b16 %v7712, %v7704
    %v8305 = vpack.c.b16 %v7713, %v7705
    %v8306 = vpack.c.b16 %v7714, %v7706
    %v8307 = vpack.c.b16 %v7715, %v7707
    %v8308 = vpack.c.b16 %v7716, %v7708
    %v8309 = vpack.c.b16 %v7725, %v7717
    %v8310 = vpack.c.b16 %v7726, %v7718
    %v8311 = vpack.c.b16 %v7727, %v7719
    %v8312 = vpack.c.b16 %v7728, %v7720
    %v8313 = vpack.c.b16 %v7729, %v7721
    %v8314 = vpack.c.b16 %v7730, %v7722
    %v8315 = vpack.c.b16 %v7731, %v7723
    %v8316 = vpack.c.b16 %v7732, %v7724
    %v8317 = vpack.c.b16 %v7741, %v7733
    %v8318 = vpack.c.b16 %v7742, %v7734
    %v8319 = vpack.c.b16 %v7743, %v7735
    %v8320 = vpack.c.b16 %v7744, %v7736
    %v8321 = vpack.c.b16 %v7745, %v7737
    %v8322 = vpack.c.b16 %v7746, %v7738
    %v8323 = vpack.c.b16 %v7747, %v7739
    %v8324 = vpack.c.b16 %v7748, %v7740
    %v8325 = vpack.c.b16 %v7757, %v7749
    %v8326 = vpack.c.b16 %v7758, %v7750
    %v8327 = vpack.c.b16 %v7759, %v7751
    %v8328 = vpack.c.b16 %v7760, %v7752
    %v8329 = vpack.c.b16 %v7761, %v7753
    %v8330 = vpack.c.b16 %v7762, %v7754
    %v8331 = vpack.c.b16 %v7763, %v7755
    %v8332 = vpack.c.b16 %v7764, %v7756
    %v8333 = vpack.c.b16 %v7773, %v7765
    %v8334 = vpack.c.b16 %v7774, %v7766
    %v8335 = vpack.c.b16 %v7775, %v7767
    %v8336 = vpack.c.b16 %v7776, %v7768
    %v8337 = vpack.c.b16 %v7777, %v7769
    %v8338 = vpack.c.b16 %v7778, %v7770
    %v8339 = vpack.c.b16 %v7779, %v7771
    %v8340 = vpack.c.b16 %v7780, %v7772
    %v8341 = vpack.c.b16 %v7789, %v7781
    %v8342 = vpack.c.b16 %v7790, %v7782
    %v8343 = vpack.c.b16 %v7791, %v7783
    %v8344 = vpack.c.b16 %v7792, %v7784
    %v8345 = vpack.c.b16 %v7793, %v7785
    %v8346 = vpack.c.b16 %v7794, %v7786
    %v8347 = vpack.c.b16 %v7795, %v7787
    %v8348 = vpack.c.b16 %v7796, %v7788
    %v8349 = vpack.c.b16 %v7805, %v7797
    %v8350 = vpack.c.b16 %v7806, %v7798
    %v8351 = vpack.c.b16 %v7807, %v7799
    %v8352 = vpack.c.b16 %v7808, %v7800
    %v8353 = vpack.c.b16 %v7809, %v7801
    %v8354 = vpack.c.b16 %v7810, %v7802
    %v8355 = vpack.c.b16 %v7811, %v7803
    %v8356 = vpack.c.b16 %v7812, %v7804
    %v8357 = vpack.c.b16 %v7821, %v7813
    %v8358 = vpack.c.b16 %v7822, %v7814
    %v8359 = vpack.c.b16 %v7823, %v7815
    %v8360 = vpack.c.b16 %v7824, %v7816
    %v8361 = vpack.c.b16 %v7825, %v7817
    %v8362 = vpack.c.b16 %v7826, %v7818
    %v8363 = vpack.c.b16 %v7827, %v7819
    %v8364 = vpack.c.b16 %v7828, %v7820
    %v8365 = vpack.c.b16 %v7837, %v7829
    %v8366 = vpack.c.b16 %v7838, %v7830
    %v8367 = vpack.c.b16 %v7839, %v7831
    %v8368 = vpack.c.b16 %v7840, %v7832
    %v8369 = vpack.c.b16 %v7841, %v7833
    %v8370 = vpack.c.b16 %v7842, %v7834
    %v8371 = vpack.c.b16 %v7843, %v7835
    %v8372 = vpack.c.b16 %v7844, %v7836
    %v8373 = vpack.c.b16 %v7853, %v7845
    %v8374 = vpack.c.b16 %v7854, %v7846
    %v8375 = vpack.c.b16 %v7855, %v7847
    %v8376 = vpack.c.b16 %v7856, %v7848
    %v8377 = vpack.c.b16 %v7857, %v7849
    %v8378 = vpack.c.b16 %v7858, %v7850
    %v8379 = vpack.c.b16 %v7859, %v7851
    %v8380 = vpack.c.b16 %v7860, %v7852
    %v8381 = vpack.c.b16 %v7869, %v7861
    %v8382 = vpack.c.b16 %v7870, %v7862
    %v8383 = vpack.c.b16 %v7871, %v7863
    %v8384 = vpack.c.b16 %v7872, %v7864
    %v8385 = vpack.c.b16 %v7873, %v7865
    %v8386 = vpack.c.b16 %v7874, %v7866
    %v8387 = vpack.c.b16 %v7875, %v7867
    %v8388 = vpack.c.b16 %v7876, %v7868
    %8901 = vmatprep.subr.bf16.mxu0 %v7878
    %8902 = vmatpush1.bf16.msra.mxu0 %v7877
    %8903 = vmatprep.subr.bf16.mxu0 %v7886
    %8904 = vmatpush1.bf16.msra.mxu0 %v7885
    %8905 = vmatprep.subr.bf16.mxu0 %v7894
    %8906 = vmatpush1.bf16.msra.mxu0 %v7893
    %8907 = vmatprep.subr.bf16.mxu0 %v7902
    %8908 = vmatpush1.bf16.msra.mxu0 %v7901
    %8909 = vmatprep.subr.bf16.mxu0 %v7910
    %8910 = vmatpush1.bf16.msra.mxu0 %v7909
    %8911 = vmatprep.subr.bf16.mxu0 %v7918
    %8912 = vmatpush1.bf16.msra.mxu0 %v7917
    %8913 = vmatprep.subr.bf16.mxu0 %v7926
    %8914 = vmatpush1.bf16.msra.mxu0 %v7925
    %8915 = vmatprep.subr.bf16.mxu0 %v7934
    %8916 = vmatpush1.bf16.msra.mxu0 %v7933
    %8917 = vmatprep.subr.bf16.mxu0 %v7942
    %8918 = vmatpush1.bf16.msra.mxu0 %v7941
    %8919 = vmatprep.subr.bf16.mxu0 %v7950
    %8920 = vmatpush1.bf16.msra.mxu0 %v7949
    %8921 = vmatprep.subr.bf16.mxu0 %v7958
    %8922 = vmatpush1.bf16.msra.mxu0 %v7957
    %8923 = vmatprep.subr.bf16.mxu0 %v7966
    %8924 = vmatpush1.bf16.msra.mxu0 %v7965
    %8925 = vmatprep.subr.bf16.mxu0 %v7974
    %8926 = vmatpush1.bf16.msra.mxu0 %v7973
    %8927 = vmatprep.subr.bf16.mxu0 %v7982
    %8928 = vmatpush1.bf16.msra.mxu0 %v7981
    %8929 = vmatprep.subr.bf16.mxu0 %v7990
    %8930 = vmatpush1.bf16.msra.mxu0 %v7989
    %8931 = vmatprep.subr.bf16.mxu0 %v7998
    %8932 = vmatpush1.bf16.msra.mxu0 %v7997
    %8933 = vmatprep.mubr.bf16.mxu0 %v5780
    %8934 = vmatmul.mubr.bf16.gmra.mrb[0].mxu0 %v5779
    %v8935 = vpop.f32.mrb[0].mxu0
    %v8936 = vadd.f32 %v6304, %v8935
    %v8937 = vpop.f32.mrb[0].mxu0
    %v8938 = vadd.f32 %v6308, %v8937
    %v8939 = vpop.f32.mrb[0].mxu0
    %v8940 = vpop.f32.mrb[0].mxu0
    %8941 = vdwg.mxu0
    %8942 = vmatprep.subr.bf16.mxu0 %v8006
    %8943 = vmatpush1.bf16.msra.mxu0 %v8005
    %8944 = vmatprep.subr.bf16.mxu0 %v8014
    %8945 = vmatpush1.bf16.msra.mxu0 %v8013
    %8946 = vmatprep.subr.bf16.mxu0 %v8022
    %8947 = vmatpush1.bf16.msra.mxu0 %v8021
    %8948 = vmatprep.subr.bf16.mxu0 %v8030
    %8949 = vmatpush1.bf16.msra.mxu0 %v8029
    %8950 = vmatprep.subr.bf16.mxu0 %v8038
    %8951 = vmatpush1.bf16.msra.mxu0 %v8037
    %8952 = vmatprep.subr.bf16.mxu0 %v8046
    %8953 = vmatpush1.bf16.msra.mxu0 %v8045
    %8954 = vmatprep.subr.bf16.mxu0 %v8054
    %8955 = vmatpush1.bf16.msra.mxu0 %v8053
    %8956 = vmatprep.subr.bf16.mxu0 %v8062
    %8957 = vmatpush1.bf16.msra.mxu0 %v8061
    %8958 = vmatprep.subr.bf16.mxu0 %v8070
    %8959 = vmatpush1.bf16.msra.mxu0 %v8069
    %8960 = vmatprep.subr.bf16.mxu0 %v8078
    %8961 = vmatpush1.bf16.msra.mxu0 %v8077
    %8962 = vmatprep.subr.bf16.mxu0 %v8086
    %8963 = vmatpush1.bf16.msra.mxu0 %v8085
    %8964 = vmatprep.subr.bf16.mxu0 %v8094
    %8965 = vmatpush1.bf16.msra.mxu0 %v8093
    %8966 = vmatprep.subr.bf16.mxu0 %v8102
    %8967 = vmatpush1.bf16.msra.mxu0 %v8101
    %8968 = vmatprep.subr.bf16.mxu0 %v8110
    %8969 = vmatpush1.bf16.msra.mxu0 %v8109
    %8970 = vmatprep.subr.bf16.mxu0 %v8118
    %8971 = vmatpush1.bf16.msra.mxu0 %v8117
    %8972 = vmatprep.subr.bf16.mxu0 %v8126
    %8973 = vmatpush1.bf16.msra.mxu0 %v8125
    %8974 = vmatprep.mubr.bf16.mxu0 %v5782
    %8975 = vmatmul.mubr.bf16.gmra.mrb[0].mxu0 %v5781
    %v8976 = vpop.f32.mrb[0].mxu0
    %v8977 = vadd.f32 %v8936, %v8976
    %v8978 = vpop.f32.mrb[0].mxu0
    %v8979 = vadd.f32 %v8938, %v8978
    %v8980 = vpop.f32.mrb[0].mxu0
    %v8981 = vpop.f32.mrb[0].mxu0
    %8982 = vdwg.mxu0
    %8983 = vmatprep.subr.bf16.mxu0 %v8134
    %8984 = vmatpush1.bf16.msra.mxu0 %v8133
    %8985 = vmatprep.subr.bf16.mxu0 %v8142
    %8986 = vmatpush1.bf16.msra.mxu0 %v8141
    %8987 = vmatprep.subr.bf16.mxu0 %v8150
    %8988 = vmatpush1.bf16.msra.mxu0 %v8149
    %8989 = vmatprep.subr.bf16.mxu0 %v8158
    %8990 = vmatpush1.bf16.msra.mxu0 %v8157
    %8991 = vmatprep.subr.bf16.mxu0 %v8166
    %8992 = vmatpush1.bf16.msra.mxu0 %v8165
    %8993 = vmatprep.subr.bf16.mxu0 %v8174
    %8994 = vmatpush1.bf16.msra.mxu0 %v8173
    %8995 = vmatprep.subr.bf16.mxu0 %v8182
    %8996 = vmatpush1.bf16.msra.mxu0 %v8181
    %8997 = vmatprep.subr.bf16.mxu0 %v8190
    %8998 = vmatpush1.bf16.msra.mxu0 %v8189
    %8999 = vmatprep.subr.bf16.mxu0 %v8198
    %9000 = vmatpush1.bf16.msra.mxu0 %v8197
    %9001 = vmatprep.subr.bf16.mxu0 %v8206
    %9002 = vmatpush1.bf16.msra.mxu0 %v8205
    %9003 = vmatprep.subr.bf16.mxu0 %v8214
    %9004 = vmatpush1.bf16.msra.mxu0 %v8213
    %9005 = vmatprep.subr.bf16.mxu0 %v8222
    %9006 = vmatpush1.bf16.msra.mxu0 %v8221
    %9007 = vmatprep.subr.bf16.mxu0 %v8230
    %9008 = vmatpush1.bf16.msra.mxu0 %v8229
    %9009 = vmatprep.subr.bf16.mxu0 %v8238
    %9010 = vmatpush1.bf16.msra.mxu0 %v8237
    %9011 = vmatprep.subr.bf16.mxu0 %v8246
    %9012 = vmatpush1.bf16.msra.mxu0 %v8245
    %9013 = vmatprep.subr.bf16.mxu0 %v8254
    %9014 = vmatpush1.bf16.msra.mxu0 %v8253
    %9015 = vmatprep.mubr.bf16.mxu0 %v5784
    %9016 = vmatmul.mubr.bf16.gmra.mrb[0].mxu0 %v5783
    %v9017 = vpop.f32.mrb[0].mxu0
    %v9018 = vadd.f32 %v8977, %v9017
    %v9019 = vpop.f32.mrb[0].mxu0
    %v9020 = vadd.f32 %v8979, %v9019
    %v9021 = vpop.f32.mrb[0].mxu0
    %v9022 = vpop.f32.mrb[0].mxu0
    %9023 = vdwg.mxu0
    %9024 = vmatprep.subr.bf16.mxu0 %v8262
    %9025 = vmatpush1.bf16.msra.mxu0 %v8261
    %9026 = vmatprep.subr.bf16.mxu0 %v8270
    %9027 = vmatpush1.bf16.msra.mxu0 %v8269
    %9028 = vmatprep.subr.bf16.mxu0 %v8278
    %9029 = vmatpush1.bf16.msra.mxu0 %v8277
    %9030 = vmatprep.subr.bf16.mxu0 %v8286
    %9031 = vmatpush1.bf16.msra.mxu0 %v8285
    %9032 = vmatprep.subr.bf16.mxu0 %v8294
    %9033 = vmatpush1.bf16.msra.mxu0 %v8293
    %9034 = vmatprep.subr.bf16.mxu0 %v8302
    %9035 = vmatpush1.bf16.msra.mxu0 %v8301
    %9036 = vmatprep.subr.bf16.mxu0 %v8310
    %9037 = vmatpush1.bf16.msra.mxu0 %v8309
    %9038 = vmatprep.subr.bf16.mxu0 %v8318
    %9039 = vmatpush1.bf16.msra.mxu0 %v8317
    %9040 = vmatprep.subr.bf16.mxu0 %v8326
    %9041 = vmatpush1.bf16.msra.mxu0 %v8325
    %9042 = vmatprep.subr.bf16.mxu0 %v8334
    %9043 = vmatpush1.bf16.msra.mxu0 %v8333
    %9044 = vmatprep.subr.bf16.mxu0 %v8342
    %9045 = vmatpush1.bf16.msra.mxu0 %v8341
    %9046 = vmatprep.subr.bf16.mxu0 %v8350
    %9047 = vmatpush1.bf16.msra.mxu0 %v8349
    %9048 = vmatprep.subr.bf16.mxu0 %v8358
    %9049 = vmatpush1.bf16.msra.mxu0 %v8357
    %9050 = vmatprep.subr.bf16.mxu0 %v8366
    %9051 = vmatpush1.bf16.msra.mxu0 %v8365
    %9052 = vmatprep.subr.bf16.mxu0 %v8374
    %9053 = vmatpush1.bf16.msra.mxu0 %v8373
    %9054 = vmatprep.subr.bf16.mxu0 %v8382
    %9055 = vmatpush1.bf16.msra.mxu0 %v8381
    %9056 = vmatprep.mubr.bf16.mxu0 %v5786
    %9057 = vmatmul.mubr.bf16.gmra.mrb[0].mxu0 %v5785
    %v9058 = vpop.f32.mrb[0].mxu0
    %v9059 = vadd.f32 %v9018, %v9058
    %v9060 = vpop.f32.mrb[0].mxu0
    %v9061 = vadd.f32 %v9020, %v9060
    %v9062 = vpop.f32.mrb[0].mxu0
    %v9063 = vpop.f32.mrb[0].mxu0
    %9064 = vdwg.mxu0
    %9065 = vmatprep.subr.bf16.mxu0 %v7880
    %9066 = vmatpush1.bf16.msra.mxu0 %v7879
    %9067 = vmatprep.subr.bf16.mxu0 %v7888
    %9068 = vmatpush1.bf16.msra.mxu0 %v7887
    %9069 = vmatprep.subr.bf16.mxu0 %v7896
    %9070 = vmatpush1.bf16.msra.mxu0 %v7895
    %9071 = vmatprep.subr.bf16.mxu0 %v7904
    %9072 = vmatpush1.bf16.msra.mxu0 %v7903
    %9073 = vmatprep.subr.bf16.mxu0 %v7912
    %9074 = vmatpush1.bf16.msra.mxu0 %v7911
    %9075 = vmatprep.subr.bf16.mxu0 %v7920
    %9076 = vmatpush1.bf16.msra.mxu0 %v7919
    %9077 = vmatprep.subr.bf16.mxu0 %v7928
    %9078 = vmatpush1.bf16.msra.mxu0 %v7927
    %9079 = vmatprep.subr.bf16.mxu0 %v7936
    %9080 = vmatpush1.bf16.msra.mxu0 %v7935
    %9081 = vmatprep.subr.bf16.mxu0 %v7944
    %9082 = vmatpush1.bf16.msra.mxu0 %v7943
    %9083 = vmatprep.subr.bf16.mxu0 %v7952
    %9084 = vmatpush1.bf16.msra.mxu0 %v7951
    %9085 = vmatprep.subr.bf16.mxu0 %v7960
    %9086 = vmatpush1.bf16.msra.mxu0 %v7959
    %9087 = vmatprep.subr.bf16.mxu0 %v7968
    %9088 = vmatpush1.bf16.msra.mxu0 %v7967
    %9089 = vmatprep.subr.bf16.mxu0 %v7976
    %9090 = vmatpush1.bf16.msra.mxu0 %v7975
    %9091 = vmatprep.subr.bf16.mxu0 %v7984
    %9092 = vmatpush1.bf16.msra.mxu0 %v7983
    %9093 = vmatprep.subr.bf16.mxu0 %v7992
    %9094 = vmatpush1.bf16.msra.mxu0 %v7991
    %9095 = vmatprep.subr.bf16.mxu0 %v8000
    %9096 = vmatpush1.bf16.msra.mxu0 %v7999
    %9097 = vmatprep.mubr.bf16.mxu0 %v5780
    %9098 = vmatmul.mubr.bf16.gmra.mrb[0].mxu0 %v5779
    %v9099 = vpop.f32.mrb[0].mxu0
    %v9100 = vadd.f32 %v6312, %v9099
    %v9101 = vpop.f32.mrb[0].mxu0
    %v9102 = vadd.f32 %v6316, %v9101
    %v9103 = vpop.f32.mrb[0].mxu0
    %v9104 = vpop.f32.mrb[0].mxu0
    %9105 = vdwg.mxu0
    %9106 = vmatprep.subr.bf16.mxu0 %v8008
    %9107 = vmatpush1.bf16.msra.mxu0 %v8007
    %9108 = vmatprep.subr.bf16.mxu0 %v8016
    %9109 = vmatpush1.bf16.msra.mxu0 %v8015
    %9110 = vmatprep.subr.bf16.mxu0 %v8024
    %9111 = vmatpush1.bf16.msra.mxu0 %v8023
    %9112 = vmatprep.subr.bf16.mxu0 %v8032
    %9113 = vmatpush1.bf16.msra.mxu0 %v8031
    %9114 = vmatprep.subr.bf16.mxu0 %v8040
    %9115 = vmatpush1.bf16.msra.mxu0 %v8039
    %9116 = vmatprep.subr.bf16.mxu0 %v8048
    %9117 = vmatpush1.bf16.msra.mxu0 %v8047
    %9118 = vmatprep.subr.bf16.mxu0 %v8056
    %9119 = vmatpush1.bf16.msra.mxu0 %v8055
    %9120 = vmatprep.subr.bf16.mxu0 %v8064
    %9121 = vmatpush1.bf16.msra.mxu0 %v8063
    %9122 = vmatprep.subr.bf16.mxu0 %v8072
    %9123 = vmatpush1.bf16.msra.mxu0 %v8071
    %9124 = vmatprep.subr.bf16.mxu0 %v8080
    %9125 = vmatpush1.bf16.msra.mxu0 %v8079
    %9126 = vmatprep.subr.bf16.mxu0 %v8088
    %9127 = vmatpush1.bf16.msra.mxu0 %v8087
    %9128 = vmatprep.subr.bf16.mxu0 %v8096
    %9129 = vmatpush1.bf16.msra.mxu0 %v8095
    %9130 = vmatprep.subr.bf16.mxu0 %v8104
    %9131 = vmatpush1.bf16.msra.mxu0 %v8103
    %9132 = vmatprep.subr.bf16.mxu0 %v8112
    %9133 = vmatpush1.bf16.msra.mxu0 %v8111
    %9134 = vmatprep.subr.bf16.mxu0 %v8120
    %9135 = vmatpush1.bf16.msra.mxu0 %v8119
    %9136 = vmatprep.subr.bf16.mxu0 %v8128
    %9137 = vmatpush1.bf16.msra.mxu0 %v8127
    %9138 = vmatprep.mubr.bf16.mxu0 %v5782
    %9139 = vmatmul.mubr.bf16.gmra.mrb[0].mxu0 %v5781
    %v9140 = vpop.f32.mrb[0].mxu0
    %v9141 = vadd.f32 %v9100, %v9140
    %v9142 = vpop.f32.mrb[0].mxu0
    %v9143 = vadd.f32 %v9102, %v9142
    %v9144 = vpop.f32.mrb[0].mxu0
    %v9145 = vpop.f32.mrb[0].mxu0
    %9146 = vdwg.mxu0
    %9147 = vmatprep.subr.bf16.mxu0 %v8136
    %9148 = vmatpush1.bf16.msra.mxu0 %v8135
    %9149 = vmatprep.subr.bf16.mxu0 %v8144
    %9150 = vmatpush1.bf16.msra.mxu0 %v8143
    %9151 = vmatprep.subr.bf16.mxu0 %v8152
    %9152 = vmatpush1.bf16.msra.mxu0 %v8151
    %9153 = vmatprep.subr.bf16.mxu0 %v8160
    %9154 = vmatpush1.bf16.msra.mxu0 %v8159
    %9155 = vmatprep.subr.bf16.mxu0 %v8168
    %9156 = vmatpush1.bf16.msra.mxu0 %v8167
    %9157 = vmatprep.subr.bf16.mxu0 %v8176
    %9158 = vmatpush1.bf16.msra.mxu0 %v8175
    %9159 = vmatprep.subr.bf16.mxu0 %v8184
    %9160 = vmatpush1.bf16.msra.mxu0 %v8183
    %9161 = vmatprep.subr.bf16.mxu0 %v8192
    %9162 = vmatpush1.bf16.msra.mxu0 %v8191
    %9163 = vmatprep.subr.bf16.mxu0 %v8200
    %9164 = vmatpush1.bf16.msra.mxu0 %v8199
    %9165 = vmatprep.subr.bf16.mxu0 %v8208
    %9166 = vmatpush1.bf16.msra.mxu0 %v8207
    %9167 = vmatprep.subr.bf16.mxu0 %v8216
    %9168 = vmatpush1.bf16.msra.mxu0 %v8215
    %9169 = vmatprep.subr.bf16.mxu0 %v8224
    %9170 = vmatpush1.bf16.msra.mxu0 %v8223
    %9171 = vmatprep.subr.bf16.mxu0 %v8232
    %9172 = vmatpush1.bf16.msra.mxu0 %v8231
    %9173 = vmatprep.subr.bf16.mxu0 %v8240
    %9174 = vmatpush1.bf16.msra.mxu0 %v8239
    %9175 = vmatprep.subr.bf16.mxu0 %v8248
    %9176 = vmatpush1.bf16.msra.mxu0 %v8247
    %9177 = vmatprep.subr.bf16.mxu0 %v8256
    %9178 = vmatpush1.bf16.msra.mxu0 %v8255
    %9179 = vmatprep.mubr.bf16.mxu0 %v5784
    %9180 = vmatmul.mubr.bf16.gmra.mrb[0].mxu0 %v5783
    %v9181 = vpop.f32.mrb[0].mxu0
    %v9182 = vadd.f32 %v9141, %v9181
    %v9183 = vpop.f32.mrb[0].mxu0
    %v9184 = vadd.f32 %v9143, %v9183
    %v9185 = vpop.f32.mrb[0].mxu0
    %v9186 = vpop.f32.mrb[0].mxu0
    %9187 = vdwg.mxu0
    %9188 = vmatprep.subr.bf16.mxu0 %v8264
    %9189 = vmatpush1.bf16.msra.mxu0 %v8263
    %9190 = vmatprep.subr.bf16.mxu0 %v8272
    %9191 = vmatpush1.bf16.msra.mxu0 %v8271
    %9192 = vmatprep.subr.bf16.mxu0 %v8280
    %9193 = vmatpush1.bf16.msra.mxu0 %v8279
    %9194 = vmatprep.subr.bf16.mxu0 %v8288
    %9195 = vmatpush1.bf16.msra.mxu0 %v8287
    %9196 = vmatprep.subr.bf16.mxu0 %v8296
    %9197 = vmatpush1.bf16.msra.mxu0 %v8295
    %9198 = vmatprep.subr.bf16.mxu0 %v8304
    %9199 = vmatpush1.bf16.msra.mxu0 %v8303
    %9200 = vmatprep.subr.bf16.mxu0 %v8312
    %9201 = vmatpush1.bf16.msra.mxu0 %v8311
    %9202 = vmatprep.subr.bf16.mxu0 %v8320
    %9203 = vmatpush1.bf16.msra.mxu0 %v8319
    %9204 = vmatprep.subr.bf16.mxu0 %v8328
    %9205 = vmatpush1.bf16.msra.mxu0 %v8327
    %9206 = vmatprep.subr.bf16.mxu0 %v8336
    %9207 = vmatpush1.bf16.msra.mxu0 %v8335
    %9208 = vmatprep.subr.bf16.mxu0 %v8344
    %9209 = vmatpush1.bf16.msra.mxu0 %v8343
    %9210 = vmatprep.subr.bf16.mxu0 %v8352
    %9211 = vmatpush1.bf16.msra.mxu0 %v8351
    %9212 = vmatprep.subr.bf16.mxu0 %v8360
    %9213 = vmatpush1.bf16.msra.mxu0 %v8359
    %9214 = vmatprep.subr.bf16.mxu0 %v8368
    %9215 = vmatpush1.bf16.msra.mxu0 %v8367
    %9216 = vmatprep.subr.bf16.mxu0 %v8376
    %9217 = vmatpush1.bf16.msra.mxu0 %v8375
    %9218 = vmatprep.subr.bf16.mxu0 %v8384
    %9219 = vmatpush1.bf16.msra.mxu0 %v8383
    %9220 = vmatprep.mubr.bf16.mxu0 %v5786
    %9221 = vmatmul.mubr.bf16.gmra.mrb[0].mxu0 %v5785
    %v9222 = vpop.f32.mrb[0].mxu0
    %v9223 = vadd.f32 %v9182, %v9222
    %v9224 = vpop.f32.mrb[0].mxu0
    %v9225 = vadd.f32 %v9184, %v9224
    %v9226 = vpop.f32.mrb[0].mxu0
    %v9227 = vpop.f32.mrb[0].mxu0
    %9228 = vdwg.mxu0
    %9229 = vmatprep.subr.bf16.mxu0 %v7882
    %9230 = vmatpush1.bf16.msra.mxu0 %v7881
    %9231 = vmatprep.subr.bf16.mxu0 %v7890
    %9232 = vmatpush1.bf16.msra.mxu0 %v7889
    %9233 = vmatprep.subr.bf16.mxu0 %v7898
    %9234 = vmatpush1.bf16.msra.mxu0 %v7897
    %9235 = vmatprep.subr.bf16.mxu0 %v7906
    %9236 = vmatpush1.bf16.msra.mxu0 %v7905
    %9237 = vmatprep.subr.bf16.mxu0 %v7914
    %9238 = vmatpush1.bf16.msra.mxu0 %v7913
    %9239 = vmatprep.subr.bf16.mxu0 %v7922
    %9240 = vmatpush1.bf16.msra.mxu0 %v7921
    %9241 = vmatprep.subr.bf16.mxu0 %v7930
    %9242 = vmatpush1.bf16.msra.mxu0 %v7929
    %9243 = vmatprep.subr.bf16.mxu0 %v7938
    %9244 = vmatpush1.bf16.msra.mxu0 %v7937
    %9245 = vmatprep.subr.bf16.mxu0 %v7946
    %9246 = vmatpush1.bf16.msra.mxu0 %v7945
    %9247 = vmatprep.subr.bf16.mxu0 %v7954
    %9248 = vmatpush1.bf16.msra.mxu0 %v7953
    %9249 = vmatprep.subr.bf16.mxu0 %v7962
    %9250 = vmatpush1.bf16.msra.mxu0 %v7961
    %9251 = vmatprep.subr.bf16.mxu0 %v7970
    %9252 = vmatpush1.bf16.msra.mxu0 %v7969
    %9253 = vmatprep.subr.bf16.mxu0 %v7978
    %9254 = vmatpush1.bf16.msra.mxu0 %v7977
    %9255 = vmatprep.subr.bf16.mxu0 %v7986
    %9256 = vmatpush1.bf16.msra.mxu0 %v7985
    %9257 = vmatprep.subr.bf16.mxu0 %v7994
    %9258 = vmatpush1.bf16.msra.mxu0 %v7993
    %9259 = vmatprep.subr.bf16.mxu0 %v8002
    %9260 = vmatpush1.bf16.msra.mxu0 %v8001
    %9261 = vmatprep.mubr.bf16.mxu0 %v5780
    %9262 = vmatmul.mubr.bf16.gmra.mrb[0].mxu0 %v5779
    %v9263 = vpop.f32.mrb[0].mxu0
    %v9264 = vadd.f32 %v6320, %v9263
    %v9265 = vpop.f32.mrb[0].mxu0
    %v9266 = vadd.f32 %v6324, %v9265
    %v9267 = vpop.f32.mrb[0].mxu0
    %v9268 = vpop.f32.mrb[0].mxu0
    %9269 = vdwg.mxu0
    %9270 = vmatprep.subr.bf16.mxu0 %v8010
    %9271 = vmatpush1.bf16.msra.mxu0 %v8009
    %9272 = vmatprep.subr.bf16.mxu0 %v8018
    %9273 = vmatpush1.bf16.msra.mxu0 %v8017
    %9274 = vmatprep.subr.bf16.mxu0 %v8026
    %9275 = vmatpush1.bf16.msra.mxu0 %v8025
    %9276 = vmatprep.subr.bf16.mxu0 %v8034
    %9277 = vmatpush1.bf16.msra.mxu0 %v8033
    %9278 = vmatprep.subr.bf16.mxu0 %v8042
    %9279 = vmatpush1.bf16.msra.mxu0 %v8041
    %9280 = vmatprep.subr.bf16.mxu0 %v8050
    %9281 = vmatpush1.bf16.msra.mxu0 %v8049
    %9282 = vmatprep.subr.bf16.mxu0 %v8058
    %9283 = vmatpush1.bf16.msra.mxu0 %v8057
    %9284 = vmatprep.subr.bf16.mxu0 %v8066
    %9285 = vmatpush1.bf16.msra.mxu0 %v8065
    %9286 = vmatprep.subr.bf16.mxu0 %v8074
    %9287 = vmatpush1.bf16.msra.mxu0 %v8073
    %9288 = vmatprep.subr.bf16.mxu0 %v8082
    %9289 = vmatpush1.bf16.msra.mxu0 %v8081
    %9290 = vmatprep.subr.bf16.mxu0 %v8090
    %9291 = vmatpush1.bf16.msra.mxu0 %v8089
    %9292 = vmatprep.subr.bf16.mxu0 %v8098
    %9293 = vmatpush1.bf16.msra.mxu0 %v8097
    %9294 = vmatprep.subr.bf16.mxu0 %v8106
    %9295 = vmatpush1.bf16.msra.mxu0 %v8105
    %9296 = vmatprep.subr.bf16.mxu0 %v8114
    %9297 = vmatpush1.bf16.msra.mxu0 %v8113
    %9298 = vmatprep.subr.bf16.mxu0 %v8122
    %9299 = vmatpush1.bf16.msra.mxu0 %v8121
    %9300 = vmatprep.subr.bf16.mxu0 %v8130
    %9301 = vmatpush1.bf16.msra.mxu0 %v8129
    %9302 = vmatprep.mubr.bf16.mxu0 %v5782
    %9303 = vmatmul.mubr.bf16.gmra.mrb[0].mxu0 %v5781
    %v9304 = vpop.f32.mrb[0].mxu0
    %v9305 = vadd.f32 %v9264, %v9304
    %v9306 = vpop.f32.mrb[0].mxu0
    %v9307 = vadd.f32 %v9266, %v9306
    %v9308 = vpop.f32.mrb[0].mxu0
    %v9309 = vpop.f32.mrb[0].mxu0
    %9310 = vdwg.mxu0
    %9311 = vmatprep.subr.bf16.mxu0 %v8138
    %9312 = vmatpush1.bf16.msra.mxu0 %v8137
    %9313 = vmatprep.subr.bf16.mxu0 %v8146
    %9314 = vmatpush1.bf16.msra.mxu0 %v8145
    %9315 = vmatprep.subr.bf16.mxu0 %v8154
    %9316 = vmatpush1.bf16.msra.mxu0 %v8153
    %9317 = vmatprep.subr.bf16.mxu0 %v8162
    %9318 = vmatpush1.bf16.msra.mxu0 %v8161
    %9319 = vmatprep.subr.bf16.mxu0 %v8170
    %9320 = vmatpush1.bf16.msra.mxu0 %v8169
    %9321 = vmatprep.subr.bf16.mxu0 %v8178
    %9322 = vmatpush1.bf16.msra.mxu0 %v8177
    %9323 = vmatprep.subr.bf16.mxu0 %v8186
    %9324 = vmatpush1.bf16.msra.mxu0 %v8185
    %9325 = vmatprep.subr.bf16.mxu0 %v8194
    %9326 = vmatpush1.bf16.msra.mxu0 %v8193
    %9327 = vmatprep.subr.bf16.mxu0 %v8202
    %9328 = vmatpush1.bf16.msra.mxu0 %v8201
    %9329 = vmatprep.subr.bf16.mxu0 %v8210
    %9330 = vmatpush1.bf16.msra.mxu0 %v8209
    %9331 = vmatprep.subr.bf16.mxu0 %v8218
    %9332 = vmatpush1.bf16.msra.mxu0 %v8217
    %9333 = vmatprep.subr.bf16.mxu0 %v8226
    %9334 = vmatpush1.bf16.msra.mxu0 %v8225
    %9335 = vmatprep.subr.bf16.mxu0 %v8234
    %9336 = vmatpush1.bf16.msra.mxu0 %v8233
    %9337 = vmatprep.subr.bf16.mxu0 %v8242
    %9338 = vmatpush1.bf16.msra.mxu0 %v8241
    %9339 = vmatprep.subr.bf16.mxu0 %v8250
    %9340 = vmatpush1.bf16.msra.mxu0 %v8249
    %9341 = vmatprep.subr.bf16.mxu0 %v8258
    %9342 = vmatpush1.bf16.msra.mxu0 %v8257
    %9343 = vmatprep.mubr.bf16.mxu0 %v5784
    %9344 = vmatmul.mubr.bf16.gmra.mrb[0].mxu0 %v5783
    %v9345 = vpop.f32.mrb[0].mxu0
    %v9346 = vadd.f32 %v9305, %v9345
    %v9347 = vpop.f32.mrb[0].mxu0
    %v9348 = vadd.f32 %v9307, %v9347
    %v9349 = vpop.f32.mrb[0].mxu0
    %v9350 = vpop.f32.mrb[0].mxu0
    %9351 = vdwg.mxu0
    %9352 = vmatprep.subr.bf16.mxu0 %v8266
    %9353 = vmatpush1.bf16.msra.mxu0 %v8265
    %9354 = vmatprep.subr.bf16.mxu0 %v8274
    %9355 = vmatpush1.bf16.msra.mxu0 %v8273
    %9356 = vmatprep.subr.bf16.mxu0 %v8282
    %9357 = vmatpush1.bf16.msra.mxu0 %v8281
    %9358 = vmatprep.subr.bf16.mxu0 %v8290
    %9359 = vmatpush1.bf16.msra.mxu0 %v8289
    %9360 = vmatprep.subr.bf16.mxu0 %v8298
    %9361 = vmatpush1.bf16.msra.mxu0 %v8297
    %9362 = vmatprep.subr.bf16.mxu0 %v8306
    %9363 = vmatpush1.bf16.msra.mxu0 %v8305
    %9364 = vmatprep.subr.bf16.mxu0 %v8314
    %9365 = vmatpush1.bf16.msra.mxu0 %v8313
    %9366 = vmatprep.subr.bf16.mxu0 %v8322
    %9367 = vmatpush1.bf16.msra.mxu0 %v8321
    %9368 = vmatprep.subr.bf16.mxu0 %v8330
    %9369 = vmatpush1.bf16.msra.mxu0 %v8329
    %9370 = vmatprep.subr.bf16.mxu0 %v8338
    %9371 = vmatpush1.bf16.msra.mxu0 %v8337
    %9372 = vmatprep.subr.bf16.mxu0 %v8346
    %9373 = vmatpush1.bf16.msra.mxu0 %v8345
    %9374 = vmatprep.subr.bf16.mxu0 %v8354
    %9375 = vmatpush1.bf16.msra.mxu0 %v8353
    %9376 = vmatprep.subr.bf16.mxu0 %v8362
    %9377 = vmatpush1.bf16.msra.mxu0 %v8361
    %9378 = vmatprep.subr.bf16.mxu0 %v8370
    %9379 = vmatpush1.bf16.msra.mxu0 %v8369
    %9380 = vmatprep.subr.bf16.mxu0 %v8378
    %9381 = vmatpush1.bf16.msra.mxu0 %v8377
    %9382 = vmatprep.subr.bf16.mxu0 %v8386
    %9383 = vmatpush1.bf16.msra.mxu0 %v8385
    %9384 = vmatprep.mubr.bf16.mxu0 %v5786
    %9385 = vmatmul.mubr.bf16.gmra.mrb[0].mxu0 %v5785
    %v9386 = vpop.f32.mrb[0].mxu0
    %v9387 = vadd.f32 %v9346, %v9386
    %v9388 = vpop.f32.mrb[0].mxu0
    %v9389 = vadd.f32 %v9348, %v9388
    %v9390 = vpop.f32.mrb[0].mxu0
    %v9391 = vpop.f32.mrb[0].mxu0
    %9392 = vdwg.mxu0
    %9393 = vmatprep.subr.bf16.mxu0 %v7884
    %9394 = vmatpush1.bf16.msra.mxu0 %v7883
    %9395 = vmatprep.subr.bf16.mxu0 %v7892
    %9396 = vmatpush1.bf16.msra.mxu0 %v7891
    %9397 = vmatprep.subr.bf16.mxu0 %v7900
    %9398 = vmatpush1.bf16.msra.mxu0 %v7899
    %9399 = vmatprep.subr.bf16.mxu0 %v7908
    %9400 = vmatpush1.bf16.msra.mxu0 %v7907
    %9401 = vmatprep.subr.bf16.mxu0 %v7916
    %9402 = vmatpush1.bf16.msra.mxu0 %v7915
    %9403 = vmatprep.subr.bf16.mxu0 %v7924
    %9404 = vmatpush1.bf16.msra.mxu0 %v7923
    %9405 = vmatprep.subr.bf16.mxu0 %v7932
    %9406 = vmatpush1.bf16.msra.mxu0 %v7931
    %9407 = vmatprep.subr.bf16.mxu0 %v7940
    %9408 = vmatpush1.bf16.msra.mxu0 %v7939
    %9409 = vmatprep.subr.bf16.mxu0 %v7948
    %9410 = vmatpush1.bf16.msra.mxu0 %v7947
    %9411 = vmatprep.subr.bf16.mxu0 %v7956
    %9412 = vmatpush1.bf16.msra.mxu0 %v7955
    %9413 = vmatprep.subr.bf16.mxu0 %v7964
    %9414 = vmatpush1.bf16.msra.mxu0 %v7963
    %9415 = vmatprep.subr.bf16.mxu0 %v7972
    %9416 = vmatpush1.bf16.msra.mxu0 %v7971
    %9417 = vmatprep.subr.bf16.mxu0 %v7980
    %9418 = vmatpush1.bf16.msra.mxu0 %v7979
    %9419 = vmatprep.subr.bf16.mxu0 %v7988
    %9420 = vmatpush1.bf16.msra.mxu0 %v7987
    %9421 = vmatprep.subr.bf16.mxu0 %v7996
    %9422 = vmatpush1.bf16.msra.mxu0 %v7995
    %9423 = vmatprep.subr.bf16.mxu0 %v8004
    %9424 = vmatpush1.bf16.msra.mxu0 %v8003
    %9425 = vmatprep.mubr.bf16.mxu0 %v5780
    %9426 = vmatmul.mubr.bf16.gmra.mrb[0].mxu0 %v5779
    %v9427 = vpop.f32.mrb[0].mxu0
    %v9428 = vadd.f32 %v6328, %v9427
    %v9429 = vpop.f32.mrb[0].mxu0
    %v9430 = vadd.f32 %v6332, %v9429
    %v9431 = vpop.f32.mrb[0].mxu0
    %v9432 = vpop.f32.mrb[0].mxu0
    %9433 = vdwg.mxu0
    %9434 = vmatprep.subr.bf16.mxu0 %v8012
    %9435 = vmatpush1.bf16.msra.mxu0 %v8011
    %9436 = vmatprep.subr.bf16.mxu0 %v8020
    %9437 = vmatpush1.bf16.msra.mxu0 %v8019
    %9438 = vmatprep.subr.bf16.mxu0 %v8028
    %9439 = vmatpush1.bf16.msra.mxu0 %v8027
    %9440 = vmatprep.subr.bf16.mxu0 %v8036
    %9441 = vmatpush1.bf16.msra.mxu0 %v8035
    %9442 = vmatprep.subr.bf16.mxu0 %v8044
    %9443 = vmatpush1.bf16.msra.mxu0 %v8043
    %9444 = vmatprep.subr.bf16.mxu0 %v8052
    %9445 = vmatpush1.bf16.msra.mxu0 %v8051
    %9446 = vmatprep.subr.bf16.mxu0 %v8060
    %9447 = vmatpush1.bf16.msra.mxu0 %v8059
    %9448 = vmatprep.subr.bf16.mxu0 %v8068
    %9449 = vmatpush1.bf16.msra.mxu0 %v8067
    %9450 = vmatprep.subr.bf16.mxu0 %v8076
    %9451 = vmatpush1.bf16.msra.mxu0 %v8075
    %9452 = vmatprep.subr.bf16.mxu0 %v8084
    %9453 = vmatpush1.bf16.msra.mxu0 %v8083
    %9454 = vmatprep.subr.bf16.mxu0 %v8092
    %9455 = vmatpush1.bf16.msra.mxu0 %v8091
    %9456 = vmatprep.subr.bf16.mxu0 %v8100
    %9457 = vmatpush1.bf16.msra.mxu0 %v8099
    %9458 = vmatprep.subr.bf16.mxu0 %v8108
    %9459 = vmatpush1.bf16.msra.mxu0 %v8107
    %9460 = vmatprep.subr.bf16.mxu0 %v8116
    %9461 = vmatpush1.bf16.msra.mxu0 %v8115
    %9462 = vmatprep.subr.bf16.mxu0 %v8124
    %9463 = vmatpush1.bf16.msra.mxu0 %v8123
    %9464 = vmatprep.subr.bf16.mxu0 %v8132
    %9465 = vmatpush1.bf16.msra.mxu0 %v8131
    %9466 = vmatprep.mubr.bf16.mxu0 %v5782
    %9467 = vmatmul.mubr.bf16.gmra.mrb[0].mxu0 %v5781
    %v9468 = vpop.f32.mrb[0].mxu0
    %v9469 = vadd.f32 %v9428, %v9468
    %v9470 = vpop.f32.mrb[0].mxu0
    %v9471 = vadd.f32 %v9430, %v9470
    %v9472 = vpop.f32.mrb[0].mxu0
    %v9473 = vpop.f32.mrb[0].mxu0
    %9474 = vdwg.mxu0
    %9475 = vmatprep.subr.bf16.mxu0 %v8140
    %9476 = vmatpush1.bf16.msra.mxu0 %v8139
    %9477 = vmatprep.subr.bf16.mxu0 %v8148
    %9478 = vmatpush1.bf16.msra.mxu0 %v8147
    %9479 = vmatprep.subr.bf16.mxu0 %v8156
    %9480 = vmatpush1.bf16.msra.mxu0 %v8155
    %9481 = vmatprep.subr.bf16.mxu0 %v8164
    %9482 = vmatpush1.bf16.msra.mxu0 %v8163
    %9483 = vmatprep.subr.bf16.mxu0 %v8172
    %9484 = vmatpush1.bf16.msra.mxu0 %v8171
    %9485 = vmatprep.subr.bf16.mxu0 %v8180
    %9486 = vmatpush1.bf16.msra.mxu0 %v8179
    %9487 = vmatprep.subr.bf16.mxu0 %v8188
    %9488 = vmatpush1.bf16.msra.mxu0 %v8187
    %9489 = vmatprep.subr.bf16.mxu0 %v8196
    %9490 = vmatpush1.bf16.msra.mxu0 %v8195
    %9491 = vmatprep.subr.bf16.mxu0 %v8204
    %9492 = vmatpush1.bf16.msra.mxu0 %v8203
    %9493 = vmatprep.subr.bf16.mxu0 %v8212
    %9494 = vmatpush1.bf16.msra.mxu0 %v8211
    %9495 = vmatprep.subr.bf16.mxu0 %v8220
    %9496 = vmatpush1.bf16.msra.mxu0 %v8219
    %9497 = vmatprep.subr.bf16.mxu0 %v8228
    %9498 = vmatpush1.bf16.msra.mxu0 %v8227
    %9499 = vmatprep.subr.bf16.mxu0 %v8236
    %9500 = vmatpush1.bf16.msra.mxu0 %v8235
    %9501 = vmatprep.subr.bf16.mxu0 %v8244
    %9502 = vmatpush1.bf16.msra.mxu0 %v8243
    %9503 = vmatprep.subr.bf16.mxu0 %v8252
    %9504 = vmatpush1.bf16.msra.mxu0 %v8251
    %9505 = vmatprep.subr.bf16.mxu0 %v8260
    %9506 = vmatpush1.bf16.msra.mxu0 %v8259
    %9507 = vmatprep.mubr.bf16.mxu0 %v5784
    %9508 = vmatmul.mubr.bf16.gmra.mrb[0].mxu0 %v5783
    %v9509 = vpop.f32.mrb[0].mxu0
    %v9510 = vadd.f32 %v9469, %v9509
    %v9511 = vpop.f32.mrb[0].mxu0
    %v9512 = vadd.f32 %v9471, %v9511
    %v9513 = vpop.f32.mrb[0].mxu0
    %v9514 = vpop.f32.mrb[0].mxu0
    %9515 = vdwg.mxu0
    %9516 = vmatprep.subr.bf16.mxu0 %v8268
    %9517 = vmatpush1.bf16.msra.mxu0 %v8267
    %9518 = vmatprep.subr.bf16.mxu0 %v8276
    %9519 = vmatpush1.bf16.msra.mxu0 %v8275
    %9520 = vmatprep.subr.bf16.mxu0 %v8284
    %9521 = vmatpush1.bf16.msra.mxu0 %v8283
    %9522 = vmatprep.subr.bf16.mxu0 %v8292
    %9523 = vmatpush1.bf16.msra.mxu0 %v8291
    %9524 = vmatprep.subr.bf16.mxu0 %v8300
    %9525 = vmatpush1.bf16.msra.mxu0 %v8299
    %9526 = vmatprep.subr.bf16.mxu0 %v8308
    %9527 = vmatpush1.bf16.msra.mxu0 %v8307
    %9528 = vmatprep.subr.bf16.mxu0 %v8316
    %9529 = vmatpush1.bf16.msra.mxu0 %v8315
    %9530 = vmatprep.subr.bf16.mxu0 %v8324
    %9531 = vmatpush1.bf16.msra.mxu0 %v8323
    %9532 = vmatprep.subr.bf16.mxu0 %v8332
    %9533 = vmatpush1.bf16.msra.mxu0 %v8331
    %9534 = vmatprep.subr.bf16.mxu0 %v8340
    %9535 = vmatpush1.bf16.msra.mxu0 %v8339
    %9536 = vmatprep.subr.bf16.mxu0 %v8348
    %9537 = vmatpush1.bf16.msra.mxu0 %v8347
    %9538 = vmatprep.subr.bf16.mxu0 %v8356
    %9539 = vmatpush1.bf16.msra.mxu0 %v8355
    %9540 = vmatprep.subr.bf16.mxu0 %v8364
    %9541 = vmatpush1.bf16.msra.mxu0 %v8363
    %9542 = vmatprep.subr.bf16.mxu0 %v8372
    %9543 = vmatpush1.bf16.msra.mxu0 %v8371
    %9544 = vmatprep.subr.bf16.mxu0 %v8380
    %9545 = vmatpush1.bf16.msra.mxu0 %v8379
    %9546 = vmatprep.subr.bf16.mxu0 %v8388
    %9547 = vmatpush1.bf16.msra.mxu0 %v8387
    %9548 = vmatprep.mubr.bf16.mxu0 %v5786
    %9549 = vmatmul.mubr.bf16.gmra.mrb[0].mxu0 %v5785
    %v9550 = vpop.f32.mrb[0].mxu0
    %v9551 = vadd.f32 %v9510, %v9550
    %v9552 = vpop.f32.mrb[0].mxu0
    %v9553 = vadd.f32 %v9512, %v9552
    %v9554 = vpop.f32.mrb[0].mxu0
    %v9555 = vpop.f32.mrb[0].mxu0
    %9556 = vdwg.mxu0
    %v9557 = vmul.f32 %v9059, 0.2
    %v9558 = vmul.f32 %v9061, 0.2
    %v9559 = vmul.f32 %v9223, 0.2
    %v9560 = vmul.f32 %v9225, 0.2
    %v9561 = vmul.f32 %v9387, 0.2
    %v9562 = vmul.f32 %v9389, 0.2
    %v9563 = vmul.f32 %v9551, 0.2
    %v9564 = vmul.f32 %v9553, 0.2
    %v9565 = vmax.f32 %v9059, %v9557
    %v9566 = vmax.f32 %v9061, %v9558
    %v9567 = vmax.f32 %v9223, %v9559
    %v9568 = vmax.f32 %v9225, %v9560
    %v9569 = vmax.f32 %v9387, %v9561
    %v9570 = vmax.f32 %v9389, %v9562
    %v9571 = vmax.f32 %v9551, %v9563
    %v9572 = vmax.f32 %v9553, %v9564
    %v9573 = vpack.c.bf16 %v9565, %v9565
    %v9574 = vpack.c.bf16 %v9566, %v9566
    %v9575 = vpack.c.bf16 %v9567, %v9567
    %v9576 = vpack.c.bf16 %v9568, %v9568
    %v9577 = vpack.c.bf16 %v9569, %v9569
    %v9578 = vpack.c.bf16 %v9570, %v9570
    %v9579 = vpack.c.bf16 %v9571, %v9571
    %v9580 = vpack.c.bf16 %v9572, %v9572
    %v9581 = vld [vmem:[%s11] sm:$0xf]
    %v9582 = vld [vmem:[%s11 + $0x4] sm:$0xf]
    %v9583 = vld [vmem:[%s11 + $0x8] sm:$0xf]
    %v9584 = vld [vmem:[%s11 + $0xc] sm:$0xf]
    %v9585 = vld [vmem:[%s11 + $0x10] sm:$0xf]
    %v9586 = vld [vmem:[%s11 + $0x14] sm:$0xf]
    %v9587 = vld [vmem:[%s11 + $0x18] sm:$0xf]
    %v9588 = vld [vmem:[%s11 + $0x1c] sm:$0xf]
    %v9589 = vld [vmem:[%s11 + $0x20] sm:$0xf]
    %v9590 = vld [vmem:[%s11 + $0x24] sm:$0xf]
    %v9591 = vld [vmem:[%s11 + $0x28] sm:$0xf]
    %v9592 = vld [vmem:[%s11 + $0x2c] sm:$0xf]
    %v9593 = vld [vmem:[%s11 + $0x30] sm:$0xf]
    %v9594 = vld [vmem:[%s11 + $0x34] sm:$0xf]
    %v9595 = vld [vmem:[%s11 + $0x38] sm:$0xf]
    %v9596 = vld [vmem:[%s11 + $0x3c] sm:$0xf]
    %v9597 = vld [vmem:[%s11 + $0x40] sm:$0xf]
    %v9598 = vld [vmem:[%s11 + $0x44] sm:$0xf]
    %v9599 = vld [vmem:[%s11 + $0x48] sm:$0xf]
    %v9600 = vld [vmem:[%s11 + $0x4c] sm:$0xf]
    %v9601 = vld [vmem:[%s11 + $0x50] sm:$0xf]
    %v9602 = vld [vmem:[%s11 + $0x54] sm:$0xf]
    %v9603 = vld [vmem:[%s11 + $0x58] sm:$0xf]
    %v9604 = vld [vmem:[%s11 + $0x5c] sm:$0xf]
    %v9605 = vld [vmem:[%s11 + $0x60] sm:$0xf]
    %v9606 = vld [vmem:[%s11 + $0x64] sm:$0xf]
    %v9607 = vld [vmem:[%s11 + $0x68] sm:$0xf]
    %v9608 = vld [vmem:[%s11 + $0x6c] sm:$0xf]
    %v9609 = vld [vmem:[%s11 + $0x70] sm:$0xf]
    %v9610 = vld [vmem:[%s11 + $0x74] sm:$0xf]
    %v9611 = vld [vmem:[%s11 + $0x78] sm:$0xf]
    %v9612 = vld [vmem:[%s11 + $0x7c] sm:$0xf]
    %v9613 = vld [vmem:[%s11 + $0x80] sm:$0xf]
    %v9614 = vld [vmem:[%s11 + $0x84] sm:$0xf]
    %v9615 = vld [vmem:[%s11 + $0x88] sm:$0xf]
    %v9616 = vld [vmem:[%s11 + $0x8c] sm:$0xf]
    %v9617 = vld [vmem:[%s11 + $0x90] sm:$0xf]
    %v9618 = vld [vmem:[%s11 + $0x94] sm:$0xf]
    %v9619 = vld [vmem:[%s11 + $0x98] sm:$0xf]
    %v9620 = vld [vmem:[%s11 + $0x9c] sm:$0xf]
    %v9621 = vld [vmem:[%s11 + $0xa0] sm:$0xf]
    %v9622 = vld [vmem:[%s11 + $0xa4] sm:$0xf]
    %v9623 = vld [vmem:[%s11 + $0xa8] sm:$0xf]
    %v9624 = vld [vmem:[%s11 + $0xac] sm:$0xf]
    %v9625 = vld [vmem:[%s11 + $0xb0] sm:$0xf]
    %v9626 = vld [vmem:[%s11 + $0xb4] sm:$0xf]
    %v9627 = vld [vmem:[%s11 + $0xb8] sm:$0xf]
    %v9628 = vld [vmem:[%s11 + $0xbc] sm:$0xf]
    %v9629 = vld [vmem:[%s11 + $0xc0] sm:$0xf]
    %v9630 = vld [vmem:[%s11 + $0xc4] sm:$0xf]
    %v9631 = vld [vmem:[%s11 + $0xc8] sm:$0xf]
    %v9632 = vld [vmem:[%s11 + $0xcc] sm:$0xf]
    %v9633 = vld [vmem:[%s11 + $0xd0] sm:$0xf]
    %v9634 = vld [vmem:[%s11 + $0xd4] sm:$0xf]
    %v9635 = vld [vmem:[%s11 + $0xd8] sm:$0xf]
    %v9636 = vld [vmem:[%s11 + $0xdc] sm:$0xf]
    %v9637 = vld [vmem:[%s11 + $0xe0] sm:$0xf]
    %v9638 = vld [vmem:[%s11 + $0xe4] sm:$0xf]
    %v9639 = vld [vmem:[%s11 + $0xe8] sm:$0xf]
    %v9640 = vld [vmem:[%s11 + $0xec] sm:$0xf]
    %v9641 = vld [vmem:[%s11 + $0xf0] sm:$0xf]
    %v9642 = vld [vmem:[%s11 + $0xf4] sm:$0xf]
    %v9643 = vld [vmem:[%s11 + $0xf8] sm:$0xf]
    %v9644 = vld [vmem:[%s11 + $0xfc] sm:$0xf]
    %v9645 = vld [vmem:[%s11 + $0x100] sm:$0xf]
    %v9646 = vld [vmem:[%s11 + $0x104] sm:$0xf]
    %v9647 = vld [vmem:[%s11 + $0x108] sm:$0xf]
    %v9648 = vld [vmem:[%s11 + $0x10c] sm:$0xf]
    %v9649 = vld [vmem:[%s11 + $0x110] sm:$0xf]
    %v9650 = vld [vmem:[%s11 + $0x114] sm:$0xf]
    %v9651 = vld [vmem:[%s11 + $0x118] sm:$0xf]
    %v9652 = vld [vmem:[%s11 + $0x11c] sm:$0xf]
    %v9653 = vld [vmem:[%s11 + $0x120] sm:$0xf]
    %v9654 = vld [vmem:[%s11 + $0x124] sm:$0xf]
    %v9655 = vld [vmem:[%s11 + $0x128] sm:$0xf]
    %v9656 = vld [vmem:[%s11 + $0x12c] sm:$0xf]
    %v9657 = vld [vmem:[%s11 + $0x130] sm:$0xf]
    %v9658 = vld [vmem:[%s11 + $0x134] sm:$0xf]
    %v9659 = vld [vmem:[%s11 + $0x138] sm:$0xf]
    %v9660 = vld [vmem:[%s11 + $0x13c] sm:$0xf]
    %v9661 = vld [vmem:[%s11 + $0x140] sm:$0xf]
    %v9662 = vld [vmem:[%s11 + $0x144] sm:$0xf]
    %v9663 = vld [vmem:[%s11 + $0x148] sm:$0xf]
    %v9664 = vld [vmem:[%s11 + $0x14c] sm:$0xf]
    %v9665 = vld [vmem:[%s11 + $0x150] sm:$0xf]
    %v9666 = vld [vmem:[%s11 + $0x154] sm:$0xf]
    %v9667 = vld [vmem:[%s11 + $0x158] sm:$0xf]
    %v9668 = vld [vmem:[%s11 + $0x15c] sm:$0xf]
    %v9669 = vld [vmem:[%s11 + $0x160] sm:$0xf]
    %v9670 = vld [vmem:[%s11 + $0x164] sm:$0xf]
    %v9671 = vld [vmem:[%s11 + $0x168] sm:$0xf]
    %v9672 = vld [vmem:[%s11 + $0x16c] sm:$0xf]
    %v9673 = vld [vmem:[%s11 + $0x170] sm:$0xf]
    %v9674 = vld [vmem:[%s11 + $0x174] sm:$0xf]
    %v9675 = vld [vmem:[%s11 + $0x178] sm:$0xf]
    %v9676 = vld [vmem:[%s11 + $0x17c] sm:$0xf]
    %v9677 = vld [vmem:[%s11 + $0x180] sm:$0xf]
    %v9678 = vld [vmem:[%s11 + $0x184] sm:$0xf]
    %v9679 = vld [vmem:[%s11 + $0x188] sm:$0xf]
    %v9680 = vld [vmem:[%s11 + $0x18c] sm:$0xf]
    %v9681 = vld [vmem:[%s11 + $0x190] sm:$0xf]
    %v9682 = vld [vmem:[%s11 + $0x194] sm:$0xf]
    %v9683 = vld [vmem:[%s11 + $0x198] sm:$0xf]
    %v9684 = vld [vmem:[%s11 + $0x19c] sm:$0xf]
    %v9685 = vld [vmem:[%s11 + $0x1a0] sm:$0xf]
    %v9686 = vld [vmem:[%s11 + $0x1a4] sm:$0xf]
    %v9687 = vld [vmem:[%s11 + $0x1a8] sm:$0xf]
    %v9688 = vld [vmem:[%s11 + $0x1ac] sm:$0xf]
    %v9689 = vld [vmem:[%s11 + $0x1b0] sm:$0xf]
    %v9690 = vld [vmem:[%s11 + $0x1b4] sm:$0xf]
    %v9691 = vld [vmem:[%s11 + $0x1b8] sm:$0xf]
    %v9692 = vld [vmem:[%s11 + $0x1bc] sm:$0xf]
    %v9693 = vld [vmem:[%s11 + $0x1c0] sm:$0xf]
    %v9694 = vld [vmem:[%s11 + $0x1c4] sm:$0xf]
    %v9695 = vld [vmem:[%s11 + $0x1c8] sm:$0xf]
    %v9696 = vld [vmem:[%s11 + $0x1cc] sm:$0xf]
    %v9697 = vld [vmem:[%s11 + $0x1d0] sm:$0xf]
    %v9698 = vld [vmem:[%s11 + $0x1d4] sm:$0xf]
    %v9699 = vld [vmem:[%s11 + $0x1d8] sm:$0xf]
    %v9700 = vld [vmem:[%s11 + $0x1dc] sm:$0xf]
    %v9701 = vld [vmem:[%s11 + $0x1e0] sm:$0xf]
    %v9702 = vld [vmem:[%s11 + $0x1e4] sm:$0xf]
    %v9703 = vld [vmem:[%s11 + $0x1e8] sm:$0xf]
    %v9704 = vld [vmem:[%s11 + $0x1ec] sm:$0xf]
    %v9705 = vld [vmem:[%s11 + $0x1f0] sm:$0xf]
    %v9706 = vld [vmem:[%s11 + $0x1f4] sm:$0xf]
    %v9707 = vld [vmem:[%s11 + $0x1f8] sm:$0xf]
    %v9708 = vld [vmem:[%s11 + $0x1fc] sm:$0xf]
    %v9709 = vld [vmem:[#allocation2] sm:$0x1]
    %v9711 = vlaneseq
    %v9712 = vshrl.u32 %v9711, 7
    %v9713 = vsub.s32 0, %v9712
    %v9714 = vrot.slane %v9709, %v9713
    %v9844 = vunpack.c.l.b16 %v9581
    %v9845 = vunpack.c.l.b16 %v9582
    %v9846 = vunpack.c.l.b16 %v9583
    %v9847 = vunpack.c.l.b16 %v9584
    %v9848 = vunpack.c.l.b16 %v9585
    %v9849 = vunpack.c.l.b16 %v9586
    %v9850 = vunpack.c.l.b16 %v9587
    %v9851 = vunpack.c.l.b16 %v9588
    %v9852 = vunpack.c.l.b16 %v9589
    %v9853 = vunpack.c.l.b16 %v9590
    %v9854 = vunpack.c.l.b16 %v9591
    %v9855 = vunpack.c.l.b16 %v9592
    %v9856 = vunpack.c.l.b16 %v9593
    %v9857 = vunpack.c.l.b16 %v9594
    %v9858 = vunpack.c.l.b16 %v9595
    %v9859 = vunpack.c.l.b16 %v9596
    %v9860 = vunpack.c.l.b16 %v9597
    %v9861 = vunpack.c.l.b16 %v9598
    %v9862 = vunpack.c.l.b16 %v9599
    %v9863 = vunpack.c.l.b16 %v9600
    %v9864 = vunpack.c.l.b16 %v9601
    %v9865 = vunpack.c.l.b16 %v9602
    %v9866 = vunpack.c.l.b16 %v9603
    %v9867 = vunpack.c.l.b16 %v9604
    %v9868 = vunpack.c.l.b16 %v9605
    %v9869 = vunpack.c.l.b16 %v9606
    %v9870 = vunpack.c.l.b16 %v9607
    %v9871 = vunpack.c.l.b16 %v9608
    %v9872 = vunpack.c.l.b16 %v9609
    %v9873 = vunpack.c.l.b16 %v9610
    %v9874 = vunpack.c.l.b16 %v9611
    %v9875 = vunpack.c.l.b16 %v9612
    %v9876 = vunpack.c.l.b16 %v9613
    %v9877 = vunpack.c.l.b16 %v9614
    %v9878 = vunpack.c.l.b16 %v9615
    %v9879 = vunpack.c.l.b16 %v9616
    %v9880 = vunpack.c.l.b16 %v9617
    %v9881 = vunpack.c.l.b16 %v9618
    %v9882 = vunpack.c.l.b16 %v9619
    %v9883 = vunpack.c.l.b16 %v9620
    %v9884 = vunpack.c.l.b16 %v9621
    %v9885 = vunpack.c.l.b16 %v9622
    %v9886 = vunpack.c.l.b16 %v9623
    %v9887 = vunpack.c.l.b16 %v9624
    %v9888 = vunpack.c.l.b16 %v9625
    %v9889 = vunpack.c.l.b16 %v9626
    %v9890 = vunpack.c.l.b16 %v9627
    %v9891 = vunpack.c.l.b16 %v9628
    %v9892 = vunpack.c.l.b16 %v9629
    %v9893 = vunpack.c.l.b16 %v9630
    %v9894 = vunpack.c.l.b16 %v9631
    %v9895 = vunpack.c.l.b16 %v9632
    %v9896 = vunpack.c.l.b16 %v9633
    %v9897 = vunpack.c.l.b16 %v9634
    %v9898 = vunpack.c.l.b16 %v9635
    %v9899 = vunpack.c.l.b16 %v9636
    %v9900 = vunpack.c.l.b16 %v9637
    %v9901 = vunpack.c.l.b16 %v9638
    %v9902 = vunpack.c.l.b16 %v9639
    %v9903 = vunpack.c.l.b16 %v9640
    %v9904 = vunpack.c.l.b16 %v9641
    %v9905 = vunpack.c.l.b16 %v9642
    %v9906 = vunpack.c.l.b16 %v9643
    %v9907 = vunpack.c.l.b16 %v9644
    %v9908 = vunpack.c.l.b16 %v9645
    %v9909 = vunpack.c.l.b16 %v9646
    %v9910 = vunpack.c.l.b16 %v9647
    %v9911 = vunpack.c.l.b16 %v9648
    %v9912 = vunpack.c.l.b16 %v9649
    %v9913 = vunpack.c.l.b16 %v9650
    %v9914 = vunpack.c.l.b16 %v9651
    %v9915 = vunpack.c.l.b16 %v9652
    %v9916 = vunpack.c.l.b16 %v9653
    %v9917 = vunpack.c.l.b16 %v9654
    %v9918 = vunpack.c.l.b16 %v9655
    %v9919 = vunpack.c.l.b16 %v9656
    %v9920 = vunpack.c.l.b16 %v9657
    %v9921 = vunpack.c.l.b16 %v9658
    %v9922 = vunpack.c.l.b16 %v9659
    %v9923 = vunpack.c.l.b16 %v9660
    %v9924 = vunpack.c.l.b16 %v9661
    %v9925 = vunpack.c.l.b16 %v9662
    %v9926 = vunpack.c.l.b16 %v9663
    %v9927 = vunpack.c.l.b16 %v9664
    %v9928 = vunpack.c.l.b16 %v9665
    %v9929 = vunpack.c.l.b16 %v9666
    %v9930 = vunpack.c.l.b16 %v9667
    %v9931 = vunpack.c.l.b16 %v9668
    %v9932 = vunpack.c.l.b16 %v9669
    %v9933 = vunpack.c.l.b16 %v9670
    %v9934 = vunpack.c.l.b16 %v9671
    %v9935 = vunpack.c.l.b16 %v9672
    %v9936 = vunpack.c.l.b16 %v9673
    %v9937 = vunpack.c.l.b16 %v9674
    %v9938 = vunpack.c.l.b16 %v9675
    %v9939 = vunpack.c.l.b16 %v9676
    %v9940 = vunpack.c.l.b16 %v9677
    %v9941 = vunpack.c.l.b16 %v9678
    %v9942 = vunpack.c.l.b16 %v9679
    %v9943 = vunpack.c.l.b16 %v9680
    %v9944 = vunpack.c.l.b16 %v9681
    %v9945 = vunpack.c.l.b16 %v9682
    %v9946 = vunpack.c.l.b16 %v9683
    %v9947 = vunpack.c.l.b16 %v9684
    %v9948 = vunpack.c.l.b16 %v9685
    %v9949 = vunpack.c.l.b16 %v9686
    %v9950 = vunpack.c.l.b16 %v9687
    %v9951 = vunpack.c.l.b16 %v9688
    %v9952 = vunpack.c.l.b16 %v9689
    %v9953 = vunpack.c.l.b16 %v9690
    %v9954 = vunpack.c.l.b16 %v9691
    %v9955 = vunpack.c.l.b16 %v9692
    %v9956 = vunpack.c.l.b16 %v9693
    %v9957 = vunpack.c.l.b16 %v9694
    %v9958 = vunpack.c.l.b16 %v9695
    %v9959 = vunpack.c.l.b16 %v9696
    %v9960 = vunpack.c.l.b16 %v9697
    %v9961 = vunpack.c.l.b16 %v9698
    %v9962 = vunpack.c.l.b16 %v9699
    %v9963 = vunpack.c.l.b16 %v9700
    %v9964 = vunpack.c.l.b16 %v9701
    %v9965 = vunpack.c.l.b16 %v9702
    %v9966 = vunpack.c.l.b16 %v9703
    %v9967 = vunpack.c.l.b16 %v9704
    %v9968 = vunpack.c.l.b16 %v9705
    %v9969 = vunpack.c.l.b16 %v9706
    %v9970 = vunpack.c.l.b16 %v9707
    %v9971 = vunpack.c.l.b16 %v9708
    %v9972 = vpack.c.b16 %v9845, %v9844
    %v9973 = vpack.c.b16 %v9847, %v9846
    %v9974 = vpack.c.b16 %v9849, %v9848
    %v9975 = vpack.c.b16 %v9851, %v9850
    %v9976 = vpack.c.b16 %v9853, %v9852
    %v9977 = vpack.c.b16 %v9855, %v9854
    %v9978 = vpack.c.b16 %v9857, %v9856
    %v9979 = vpack.c.b16 %v9859, %v9858
    %v9980 = vpack.c.b16 %v9861, %v9860
    %v9981 = vpack.c.b16 %v9863, %v9862
    %v9982 = vpack.c.b16 %v9865, %v9864
    %v9983 = vpack.c.b16 %v9867, %v9866
    %v9984 = vpack.c.b16 %v9869, %v9868
    %v9985 = vpack.c.b16 %v9871, %v9870
    %v9986 = vpack.c.b16 %v9873, %v9872
    %v9987 = vpack.c.b16 %v9875, %v9874
    %v9988 = vpack.c.b16 %v9877, %v9876
    %v9989 = vpack.c.b16 %v9879, %v9878
    %v9990 = vpack.c.b16 %v9881, %v9880
    %v9991 = vpack.c.b16 %v9883, %v9882
    %v9992 = vpack.c.b16 %v9885, %v9884
    %v9993 = vpack.c.b16 %v9887, %v9886
    %v9994 = vpack.c.b16 %v9889, %v9888
    %v9995 = vpack.c.b16 %v9891, %v9890
    %v9996 = vpack.c.b16 %v9893, %v9892
    %v9997 = vpack.c.b16 %v9895, %v9894
    %v9998 = vpack.c.b16 %v9897, %v9896
    %v9999 = vpack.c.b16 %v9899, %v9898
    %v10000 = vpack.c.b16 %v9901, %v9900
    %v10001 = vpack.c.b16 %v9903, %v9902
    %v10002 = vpack.c.b16 %v9905, %v9904
    %v10003 = vpack.c.b16 %v9907, %v9906
    %v10004 = vpack.c.b16 %v9909, %v9908
    %v10005 = vpack.c.b16 %v9911, %v9910
    %v10006 = vpack.c.b16 %v9913, %v9912
    %v10007 = vpack.c.b16 %v9915, %v9914
    %v10008 = vpack.c.b16 %v9917, %v9916
    %v10009 = vpack.c.b16 %v9919, %v9918
    %v10010 = vpack.c.b16 %v9921, %v9920
    %v10011 = vpack.c.b16 %v9923, %v9922
    %v10012 = vpack.c.b16 %v9925, %v9924
    %v10013 = vpack.c.b16 %v9927, %v9926
    %v10014 = vpack.c.b16 %v9929, %v9928
    %v10015 = vpack.c.b16 %v9931, %v9930
    %v10016 = vpack.c.b16 %v9933, %v9932
    %v10017 = vpack.c.b16 %v9935, %v9934
    %v10018 = vpack.c.b16 %v9937, %v9936
    %v10019 = vpack.c.b16 %v9939, %v9938
    %v10020 = vpack.c.b16 %v9941, %v9940
    %v10021 = vpack.c.b16 %v9943, %v9942
    %v10022 = vpack.c.b16 %v9945, %v9944
    %v10023 = vpack.c.b16 %v9947, %v9946
    %v10024 = vpack.c.b16 %v9949, %v9948
    %v10025 = vpack.c.b16 %v9951, %v9950
    %v10026 = vpack.c.b16 %v9953, %v9952
    %v10027 = vpack.c.b16 %v9955, %v9954
    %v10028 = vpack.c.b16 %v9957, %v9956
    %v10029 = vpack.c.b16 %v9959, %v9958
    %v10030 = vpack.c.b16 %v9961, %v9960
    %v10031 = vpack.c.b16 %v9963, %v9962
    %v10032 = vpack.c.b16 %v9965, %v9964
    %v10033 = vpack.c.b16 %v9967, %v9966
    %v10034 = vpack.c.b16 %v9969, %v9968
    %v10035 = vpack.c.b16 %v9971, %v9970
    %10100 = vmatprep.subr.bf16.mxu0 0
    %10101 = vmatpush1.bf16.msra.mxu0 %v9972
    %10102 = vmatprep.subr.bf16.mxu0 0
    %10103 = vmatpush1.bf16.msra.mxu0 %v9973
    %10104 = vmatprep.subr.bf16.mxu0 0
    %10105 = vmatpush1.bf16.msra.mxu0 %v9974
    %10106 = vmatprep.subr.bf16.mxu0 0
    %10107 = vmatpush1.bf16.msra.mxu0 %v9975
    %10108 = vmatprep.subr.bf16.mxu0 0
    %10109 = vmatpush1.bf16.msra.mxu0 %v9976
    %10110 = vmatprep.subr.bf16.mxu0 0
    %10111 = vmatpush1.bf16.msra.mxu0 %v9977
    %10112 = vmatprep.subr.bf16.mxu0 0
    %10113 = vmatpush1.bf16.msra.mxu0 %v9978
    %10114 = vmatprep.subr.bf16.mxu0 0
    %10115 = vmatpush1.bf16.msra.mxu0 %v9979
    %10116 = vmatprep.subr.bf16.mxu0 0
    %10117 = vmatpush1.bf16.msra.mxu0 %v9980
    %10118 = vmatprep.subr.bf16.mxu0 0
    %10119 = vmatpush1.bf16.msra.mxu0 %v9981
    %10120 = vmatprep.subr.bf16.mxu0 0
    %10121 = vmatpush1.bf16.msra.mxu0 %v9982
    %10122 = vmatprep.subr.bf16.mxu0 0
    %10123 = vmatpush1.bf16.msra.mxu0 %v9983
    %10124 = vmatprep.subr.bf16.mxu0 0
    %10125 = vmatpush1.bf16.msra.mxu0 %v9984
    %10126 = vmatprep.subr.bf16.mxu0 0
    %10127 = vmatpush1.bf16.msra.mxu0 %v9985
    %10128 = vmatprep.subr.bf16.mxu0 0
    %10129 = vmatpush1.bf16.msra.mxu0 %v9986
    %10130 = vmatprep.subr.bf16.mxu0 0
    %10131 = vmatpush1.bf16.msra.mxu0 %v9987
    %10132 = vmatprep.mubr.bf16.mxu0 %v9574
    %10133 = vmatmul.mubr.bf16.gmra.mrb[0].mxu0 %v9573
    %v10134 = vpop.f32.mrb[0].mxu0
    %v10135 = vadd.f32 %v9714, %v10134
    %v10136 = vpop.f32.mrb[0].mxu0
    %v10137 = vpop.f32.mrb[0].mxu0
    %v10138 = vpop.f32.mrb[0].mxu0
    %10139 = vdwg.mxu0
    %10140 = vmatprep.subr.bf16.mxu0 0
    %10141 = vmatpush1.bf16.msra.mxu0 %v9988
    %10142 = vmatprep.subr.bf16.mxu0 0
    %10143 = vmatpush1.bf16.msra.mxu0 %v9989
    %10144 = vmatprep.subr.bf16.mxu0 0
    %10145 = vmatpush1.bf16.msra.mxu0 %v9990
    %10146 = vmatprep.subr.bf16.mxu0 0
    %10147 = vmatpush1.bf16.msra.mxu0 %v9991
    %10148 = vmatprep.subr.bf16.mxu0 0
    %10149 = vmatpush1.bf16.msra.mxu0 %v9992
    %10150 = vmatprep.subr.bf16.mxu0 0
    %10151 = vmatpush1.bf16.msra.mxu0 %v9993
    %10152 = vmatprep.subr.bf16.mxu0 0
    %10153 = vmatpush1.bf16.msra.mxu0 %v9994
    %10154 = vmatprep.subr.bf16.mxu0 0
    %10155 = vmatpush1.bf16.msra.mxu0 %v9995
    %10156 = vmatprep.subr.bf16.mxu0 0
    %10157 = vmatpush1.bf16.msra.mxu0 %v9996
    %10158 = vmatprep.subr.bf16.mxu0 0
    %10159 = vmatpush1.bf16.msra.mxu0 %v9997
    %10160 = vmatprep.subr.bf16.mxu0 0
    %10161 = vmatpush1.bf16.msra.mxu0 %v9998
    %10162 = vmatprep.subr.bf16.mxu0 0
    %10163 = vmatpush1.bf16.msra.mxu0 %v9999
    %10164 = vmatprep.subr.bf16.mxu0 0
    %10165 = vmatpush1.bf16.msra.mxu0 %v10000
    %10166 = vmatprep.subr.bf16.mxu0 0
    %10167 = vmatpush1.bf16.msra.mxu0 %v10001
    %10168 = vmatprep.subr.bf16.mxu0 0
    %10169 = vmatpush1.bf16.msra.mxu0 %v10002
    %10170 = vmatprep.subr.bf16.mxu0 0
    %10171 = vmatpush1.bf16.msra.mxu0 %v10003
    %10172 = vmatprep.mubr.bf16.mxu0 %v9576
    %10173 = vmatmul.mubr.bf16.gmra.mrb[0].mxu0 %v9575
    %v10174 = vpop.f32.mrb[0].mxu0
    %v10175 = vadd.f32 %v10135, %v10174
    %v10176 = vpop.f32.mrb[0].mxu0
    %v10177 = vpop.f32.mrb[0].mxu0
    %v10178 = vpop.f32.mrb[0].mxu0
    %10179 = vdwg.mxu0
    %10180 = vmatprep.subr.bf16.mxu0 0
    %10181 = vmatpush1.bf16.msra.mxu0 %v10004
    %10182 = vmatprep.subr.bf16.mxu0 0
    %10183 = vmatpush1.bf16.msra.mxu0 %v10005
    %10184 = vmatprep.subr.bf16.mxu0 0
    %10185 = vmatpush1.bf16.msra.mxu0 %v10006
    %10186 = vmatprep.subr.bf16.mxu0 0
    %10187 = vmatpush1.bf16.msra.mxu0 %v10007
    %10188 = vmatprep.subr.bf16.mxu0 0
    %10189 = vmatpush1.bf16.msra.mxu0 %v10008
    %10190 = vmatprep.subr.bf16.mxu0 0
    %10191 = vmatpush1.bf16.msra.mxu0 %v10009
    %10192 = vmatprep.subr.bf16.mxu0 0
    %10193 = vmatpush1.bf16.msra.mxu0 %v10010
    %10194 = vmatprep.subr.bf16.mxu0 0
    %10195 = vmatpush1.bf16.msra.mxu0 %v10011
    %10196 = vmatprep.subr.bf16.mxu0 0
    %10197 = vmatpush1.bf16.msra.mxu0 %v10012
    %10198 = vmatprep.subr.bf16.mxu0 0
    %10199 = vmatpush1.bf16.msra.mxu0 %v10013
    %10200 = vmatprep.subr.bf16.mxu0 0
    %10201 = vmatpush1.bf16.msra.mxu0 %v10014
    %10202 = vmatprep.subr.bf16.mxu0 0
    %10203 = vmatpush1.bf16.msra.mxu0 %v10015
    %10204 = vmatprep.subr.bf16.mxu0 0
    %10205 = vmatpush1.bf16.msra.mxu0 %v10016
    %10206 = vmatprep.subr.bf16.mxu0 0
    %10207 = vmatpush1.bf16.msra.mxu0 %v10017
    %10208 = vmatprep.subr.bf16.mxu0 0
    %10209 = vmatpush1.bf16.msra.mxu0 %v10018
    %10210 = vmatprep.subr.bf16.mxu0 0
    %10211 = vmatpush1.bf16.msra.mxu0 %v10019
    %10212 = vmatprep.mubr.bf16.mxu0 %v9578
    %10213 = vmatmul.mubr.bf16.gmra.mrb[0].mxu0 %v9577
    %v10214 = vpop.f32.mrb[0].mxu0
    %v10215 = vadd.f32 %v10175, %v10214
    %v10216 = vpop.f32.mrb[0].mxu0
    %v10217 = vpop.f32.mrb[0].mxu0
    %v10218 = vpop.f32.mrb[0].mxu0
    %10219 = vdwg.mxu0
    %10220 = vmatprep.subr.bf16.mxu0 0
    %10221 = vmatpush1.bf16.msra.mxu0 %v10020
    %10222 = vmatprep.subr.bf16.mxu0 0
    %10223 = vmatpush1.bf16.msra.mxu0 %v10021
    %10224 = vmatprep.subr.bf16.mxu0 0
    %10225 = vmatpush1.bf16.msra.mxu0 %v10022
    %10226 = vmatprep.subr.bf16.mxu0 0
    %10227 = vmatpush1.bf16.msra.mxu0 %v10023
    %10228 = vmatprep.subr.bf16.mxu0 0
    %10229 = vmatpush1.bf16.msra.mxu0 %v10024
    %10230 = vmatprep.subr.bf16.mxu0 0
    %10231 = vmatpush1.bf16.msra.mxu0 %v10025
    %10232 = vmatprep.subr.bf16.mxu0 0
    %10233 = vmatpush1.bf16.msra.mxu0 %v10026
    %10234 = vmatprep.subr.bf16.mxu0 0
    %10235 = vmatpush1.bf16.msra.mxu0 %v10027
    %10236 = vmatprep.subr.bf16.mxu0 0
    %10237 = vmatpush1.bf16.msra.mxu0 %v10028
    %10238 = vmatprep.subr.bf16.mxu0 0
    %10239 = vmatpush1.bf16.msra.mxu0 %v10029
    %10240 = vmatprep.subr.bf16.mxu0 0
    %10241 = vmatpush1.bf16.msra.mxu0 %v10030
    %10242 = vmatprep.subr.bf16.mxu0 0
    %10243 = vmatpush1.bf16.msra.mxu0 %v10031
    %10244 = vmatprep.subr.bf16.mxu0 0
    %10245 = vmatpush1.bf16.msra.mxu0 %v10032
    %10246 = vmatprep.subr.bf16.mxu0 0
    %10247 = vmatpush1.bf16.msra.mxu0 %v10033
    %10248 = vmatprep.subr.bf16.mxu0 0
    %10249 = vmatpush1.bf16.msra.mxu0 %v10034
    %10250 = vmatprep.subr.bf16.mxu0 0
    %10251 = vmatpush1.bf16.msra.mxu0 %v10035
    %10252 = vmatprep.mubr.bf16.mxu0 %v9580
    %10253 = vmatmul.mubr.bf16.gmra.mrb[0].mxu0 %v9579
    %v10254 = vpop.f32.mrb[0].mxu0
    %v10255 = vadd.f32 %v10215, %v10254
    %v10256 = vpop.f32.mrb[0].mxu0
    %v10257 = vpop.f32.mrb[0].mxu0
    %v10258 = vpop.f32.mrb[0].mxu0
    %10259 = vdwg.mxu0
    %vm10260 = vcmask 3072
    %10261 = vst.msk [vmem:[%s14] sm:$0xf] %vm10260, %v10255
    // Predicated region
    $region94: #{tpu_custom_call.1} parent=1 // pred_check
      _
    $region95: #{tpu_custom_call.1} parent=1 // pred_check_branch
      %10263 = sbr.rel (0) target = $region97
    $region96: #{tpu_custom_call.1} parent=1 // pred_region
      %s10265 = ssub.s32 64, 64
      %10266 = vsyncadd [#allocation5], %s10265
      %s10268 = sshll.u32 [#allocation20], 4
      %s10269 = int_to_ptr.vmem [resolvable:$true] %s10268
      %10271 = dma.vmem_to_hbm [thread:$0]  %s10269, 64, %s13, [#allocation5]
    $region97: #{tpu_custom_call.1} parent=1 // pred_fallthru
      _
    // Predicated region
    $region98: #{tpu_custom_call.1} parent=1 // pred_check
      _
    $region99: #{tpu_custom_call.1} parent=1 // pred_check_branch
      %10273 = sbr.rel (0) target = $region101
    $region100: #{tpu_custom_call.1} parent=1 // pred_region
      _
    $region101: #{tpu_custom_call.1} parent=1 // pred_fallthru
      _
    // Predicated region
    $region102: #{tpu_custom_call.1} parent=1 // pred_check
      _
    $region103: #{tpu_custom_call.1} parent=1 // pred_check_branch
      %10275 = sbr.rel (0) target = $region105
    $region104: #{tpu_custom_call.1} parent=1 // pred_region
      %10276 = dma.done [#allocation5], 64
    $region105: #{tpu_custom_call.1} parent=1 // pred_fallthru
      _
    // Predicated region
    $region106: #{tpu_custom_call.1} parent=1 // pred_check
      _
    $region107: #{tpu_custom_call.1} parent=1 // pred_check_branch
      %10278 = sbr.rel (0) target = $region109
    $region108: #{tpu_custom_call.1} parent=1 // pred_region
      _
    $region109: #{tpu_custom_call.1} parent=1 // pred_fallthru
      _
    %10279 = vsyncpa [#allocation4], 1
    %10280 = vsyncpa [#allocation7], 1
    %10281 = vsyncpa [#allocation10], 1
    %10282 = vsyncpa [#allocation13], 1
    %10283 = vsyncpa [#allocation16], 1
    %10284 = vsyncpa [#allocation19], 1
    %10285 = vsyncpa [#allocation5], 1

</llo_original>
